<compile_context>
chip_gen: v7x
topology: tpu7x:2x2x1
jax: 0.10.0
libtpu: 0.0.40
codegen_flags: <defaults>
</compile_context>

<pallas_src>
import functools

import jax
import jax.numpy as jnp
from jax.experimental import pallas as pl
from jax.experimental.pallas import tpu as pltpu


# exp-decay adaptation constants (one alpha/beta per adaptation module)
ALPHAS = (0.96, 0.96, 0.96, 0.96)
BETAS = (0.70, 0.70, 0.70, 0.70)

_VMEM = pl.BlockSpec(memory_space=pltpu.MemorySpace.VMEM)


# ----------------------------------------------------------------------------
# Pallas kernels (matmul + fused epilogues)
# ----------------------------------------------------------------------------
def _mm_kernel(a_ref, w_ref, b_ref, o_ref, *, apply_relu):
    acc = jnp.dot(a_ref[...], w_ref[...], preferred_element_type=jnp.float32)
    acc = acc + b_ref[...]
    if apply_relu:
        acc = jnp.maximum(acc, 0.0)
    o_ref[...] = acc


def _mm_decay_kernel(a_ref, w_ref, b_ref, prev_ref, s_ref, y_ref, s_out_ref,
                     *, alpha, beta, apply_relu):
    acc = jnp.dot(a_ref[...], w_ref[...], preferred_element_type=jnp.float32)
    acc = acc + b_ref[...]
    s_new = alpha * s_ref[...] + (1.0 - alpha) * prev_ref[...]
    s_out_ref[...] = s_new
    y = acc - beta * s_new
    if apply_relu:
        y = jnp.maximum(y, 0.0)
    y_ref[...] = y


def _mm_decay_decoder_kernel(a_ref, w_ref, b_ref, prev_ref, s_ref,
                             wd_ref, bd_ref, y_ref, s_out_ref, o_ref,
                             *, alpha, beta):
    # fc1 matmul + exp-decay epilogue + decoder matmul in one kernel.
    acc = jnp.dot(a_ref[...], w_ref[...], preferred_element_type=jnp.float32)
    acc = acc + b_ref[...]
    s_new = alpha * s_ref[...] + (1.0 - alpha) * prev_ref[...]
    s_out_ref[...] = s_new
    y = acc - beta * s_new
    y_ref[...] = y
    o_ref[...] = (jnp.dot(y.astype(wd_ref.dtype), wd_ref[...],
                          preferred_element_type=jnp.float32) + bd_ref[...])


def _decay_kernel(x_ref, prev_ref, s_ref, y_ref, s_out_ref,
                  *, alpha, beta, apply_relu):
    # Elementwise epilogue for the time-batched conv1 output.
    s_new = alpha * s_ref[...] + (1.0 - alpha) * prev_ref[...]
    s_out_ref[...] = s_new
    y = x_ref[...] - beta * s_new
    if apply_relu:
        y = jnp.maximum(y, 0.0)
    y_ref[...] = y


# ----------------------------------------------------------------------------
# Kernel wrappers
# ----------------------------------------------------------------------------
def _pick_tile_m(m, cap=1024):
    """Largest divisor of m that is <= cap and a multiple of 32 (else m)."""
    if m <= cap:
        return m
    for tm in range(cap, 31, -32):
        if m % tm == 0:
            return tm
    return m


def matmul_fused(a, w, b2, *, apply_relu=False):
    """(M,K)@(K,N) + bias, optional relu epilogue. a/w bf16, f32 accumulate."""
    m, k = a.shape
    _, n = w.shape
    tm = _pick_tile_m(m)
    kern = functools.partial(_mm_kernel, apply_relu=bool(apply_relu))
    return pl.pallas_call(
        kern,
        out_shape=jax.ShapeDtypeStruct((m, n), jnp.float32),
        grid=(m // tm,),
        in_specs=[pl.BlockSpec((tm, k), lambda i: (i, 0)),
                  pl.BlockSpec((k, n), lambda i: (0, 0)),
                  pl.BlockSpec((1, n), lambda i: (0, 0))],
        out_specs=pl.BlockSpec((tm, n), lambda i: (i, 0)),
        compiler_params=pltpu.CompilerParams(
            dimension_semantics=("parallel",)),
    )(a, w, b2)


def matmul_decay_fused(a, w, b2, prev, s, *, alpha, beta, apply_relu):
    """(M,K)@(K,N) + bias, then fused exp-decay (+ optional relu) epilogue."""
    m, k = a.shape
    _, n = w.shape
    tm = _pick_tile_m(m)
    kern = functools.partial(_mm_decay_kernel, alpha=float(alpha),
                             beta=float(beta), apply_relu=bool(apply_relu))
    y, s_new = pl.pallas_call(
        kern,
        out_shape=(jax.ShapeDtypeStruct((m, n), jnp.float32),
                   jax.ShapeDtypeStruct((m, n), jnp.float32)),
        grid=(m // tm,),
        in_specs=[pl.BlockSpec((tm, k), lambda i: (i, 0)),
                  pl.BlockSpec((k, n), lambda i: (0, 0)),
                  pl.BlockSpec((1, n), lambda i: (0, 0)),
                  pl.BlockSpec((tm, n), lambda i: (i, 0)),
                  pl.BlockSpec((tm, n), lambda i: (i, 0))],
        out_specs=(pl.BlockSpec((tm, n), lambda i: (i, 0)),
                   pl.BlockSpec((tm, n), lambda i: (i, 0))),
        compiler_params=pltpu.CompilerParams(
            dimension_semantics=("parallel",)),
    )(a, w, b2, prev, s)
    return y, s_new


def matmul_decay_decoder(a, w, b2, prev, s, wd, bd2, *, alpha, beta):
    """fc1 + exp-decay + decoder, single pallas_call (last time step only)."""
    m, _ = a.shape
    n = w.shape[1]
    nd = wd.shape[1]
    kern = functools.partial(_mm_decay_decoder_kernel,
                             alpha=float(alpha), beta=float(beta))
    y, s_new, logits = pl.pallas_call(
        kern,
        out_shape=(jax.ShapeDtypeStruct((m, n), jnp.float32),
                   jax.ShapeDtypeStruct((m, n), jnp.float32),
                   jax.ShapeDtypeStruct((m, nd), jnp.float32)),
        in_specs=[_VMEM] * 7,
        out_specs=(_VMEM, _VMEM, _VMEM),
    )(a, w, b2, prev, s, wd, bd2)
    return y, s_new, logits


def decay_step(x, prev, s, *, alpha, beta, apply_relu):
    """Standalone fused exp-decay (+relu) — conv1 epilogue (conv1 is batched)."""
    kern = functools.partial(_decay_kernel, alpha=float(alpha),
                             beta=float(beta), apply_relu=bool(apply_relu))
    y, s_new = pl.pallas_call(
        kern,
        out_shape=(jax.ShapeDtypeStruct(x.shape, jnp.float32),
                   jax.ShapeDtypeStruct(x.shape, jnp.float32)),
        in_specs=[_VMEM, _VMEM, _VMEM],
        out_specs=(_VMEM, _VMEM),
    )(x, prev, s)
    return y, s_new


# ----------------------------------------------------------------------------
# Conv / pool glue (compiled under jit; activations stay in packed NHWC layout)
# ----------------------------------------------------------------------------
def _im2col_nhwc(x, kh, kw):
    """x: (B,H,W,C) -> (B*oh*ow, kh*kw*C) with (kh, kw, C) minor ordering."""
    b, h, w, c = x.shape
    oh, ow = h - kh + 1, w - kw + 1
    cols = []
    for i in range(kh):
        for j in range(kw):
            cols.append(x[:, i:i + oh, j:j + ow, :])
    p = jnp.concatenate(cols, axis=-1)               # (B, oh, ow, kh*kw*C)
    return p.reshape(b * oh * ow, kh * kw * c), oh, ow


def _conv_cols(x, wmat, kh, kw):
    cols, oh, ow = _im2col_nhwc(x, kh, kw)
    k_w = wmat.shape[0]
    if cols.shape[1] < k_w:                          # conv1: K=25 padded to 32
        cols = jnp.pad(cols, ((0, 0), (0, k_w - cols.shape[1])))
    return cols.astype(jnp.bfloat16), oh, ow


def conv2d(x, wmat, b2, *, kh, kw, apply_relu=False):
    cols, oh, ow = _conv_cols(x, wmat, kh, kw)
    out = matmul_fused(cols, wmat, b2, apply_relu=apply_relu)
    return out, oh, ow                               # packed (B*oh*ow, Cout)


def conv2d_decay(x, wmat, b2, prev, s, *, kh, kw, alpha, beta, apply_relu):
    cols, oh, ow = _conv_cols(x, wmat, kh, kw)
    y, s_new = matmul_decay_fused(cols, wmat, b2, prev, s, alpha=alpha,
                                  beta=beta, apply_relu=apply_relu)
    return y, s_new, oh, ow


def maxpool2_packed(x_packed, b, oh, ow):
    """2x2 stride-2 max-pool on a packed (B*oh*ow, C) map -> NHWC output."""
    c = x_packed.shape[-1]
    x = x_packed.reshape(b, oh, ow, c)
    return x.reshape(b, oh // 2, 2, ow // 2, 2, c).max(axis=(2, 4))


# ----------------------------------------------------------------------------
# Parameters (deterministic, synthetic) — stored pre-laid-out for the kernels
# ----------------------------------------------------------------------------
def init_params(key):
    ks = jax.random.split(key, 10)

    def conv_w(k, cout, cin, kh, kw):
        bound = 1.0 / float((cin * kh * kw) ** 0.5)
        w = jax.random.uniform(k, (cout, cin, kh, kw), jnp.float32,
                               -bound, bound)
        # (Cout,Cin,kh,kw) -> (kh*kw*Cin, Cout); matches im2col (kh,kw,C) order
        return jnp.transpose(w, (2, 3, 1, 0)).reshape(kh * kw * cin, cout)

    def lin_w(k, cout, cin):
        bound = 1.0 / float(cin ** 0.5)
        w = jax.random.uniform(k, (cout, cin), jnp.float32, -bound, bound)
        return w.T                                   # (in, out)

    def bias(k, n, fan_in):
        bound = 1.0 / float(fan_in ** 0.5)
        return jax.random.uniform(k, (1, n), jnp.float32, -bound, bound)

    conv1_w = conv_w(ks[0], 32, 1, 5, 5)             # (25, 32)
    conv1_w = jnp.pad(conv1_w, ((0, 32 - 25), (0, 0)))   # pad K 25 -> 32

    return {
        "conv1_w": conv1_w.astype(jnp.bfloat16),
        "conv1_b": bias(ks[1], 32, 25),
        "conv2_w": conv_w(ks[2], 32, 32, 5, 5).astype(jnp.bfloat16),
        "conv2_b": bias(ks[3], 32, 800),
        "conv3_w": conv_w(ks[4], 32, 32, 3, 3).astype(jnp.bfloat16),
        "conv3_b": bias(ks[5], 32, 288),
        "fc1_w": lin_w(ks[6], 1024, 128).astype(jnp.bfloat16),
        "fc1_b": bias(ks[7], 1024, 128),
        "dec_w": lin_w(ks[8], 10, 1024).astype(jnp.bfloat16),
        "dec_b": bias(ks[9], 10, 1024),
    }


# ----------------------------------------------------------------------------
# Forward pass (mirrors the PyTorch module)
# ----------------------------------------------------------------------------
@functools.partial(jax.jit, static_argnames=("t_steps",))
def forward(params, inputs, t_steps=3):
    """inputs: (t_steps, B, 1, H, W) NCHW frame sequence."""
    p = params
    t_total, b = inputs.shape[0], inputs.shape[1]

    # ---- conv1 batched across ALL T frames (independent of the recurrence) --
    x_all = jnp.transpose(inputs, (0, 1, 3, 4, 2))           # (T, B, H, W, 1)
    x_all = x_all.reshape((t_total * b,) + x_all.shape[2:])
    cols1, oh1, ow1 = _conv_cols(x_all, p["conv1_w"], 5, 5)
    x1_all = matmul_fused(cols1, p["conv1_w"], p["conv1_b"])  # (T*B*oh1*ow1,32)
    m1 = b * oh1 * ow1
    x1_all = x1_all.reshape(t_total, m1, x1_all.shape[-1])

    a0, a1, a2, a3 = {}, {}, {}, {}
    s0, s1, s2, s3 = {}, {}, {}, {}

    # ---- t = 0 ---------------------------------------------------------------
    # PRE-relu conv outputs are pooled at t=0 (matches the PyTorch reference).
    x1 = x1_all[0]
    a0[0] = jnp.maximum(x1, 0.0)                     # store-only relu (XLA glue)
    s0[0] = jnp.zeros_like(x1)
    xp = maxpool2_packed(x1, b, oh1, ow1)

    x2, oh2, ow2 = conv2d(xp, p["conv2_w"], p["conv2_b"], kh=5, kw=5)
    a1[0] = jnp.maximum(x2, 0.0)
    s1[0] = jnp.zeros_like(x2)
    xp = maxpool2_packed(x2, b, oh2, ow2)

    x3, oh3, ow3 = conv2d(xp, p["conv3_w"], p["conv3_b"], kh=3, kw=3,
                          apply_relu=True)
    a2[0] = x3
    s2[0] = jnp.zeros_like(x3)

    # dropout == identity (eval); flatten packed (B*oh3*ow3, C) -> (B, 128)
    xf_in = x3.reshape(b, -1).astype(jnp.bfloat16)
    xf = matmul_fused(xf_in, p["fc1_w"], p["fc1_b"])
    a3[0] = xf
    s3[0] = jnp.zeros_like(xf)

    logits = None
    # ---- t = 1 .. t_steps-1 ----------------------------------------------------
    for t in range(t_steps - 1):
        # conv1 (pre-computed, batched) + fused exp-decay/relu epilogue
        y1, s_new = decay_step(x1_all[t + 1], a0[t], s0[t],
                               alpha=ALPHAS[0], beta=BETAS[0], apply_relu=True)
        s0[t + 1] = s_new
        a0[t + 1] = y1
        xp = maxpool2_packed(y1, b, oh1, ow1)

        y2, s_new, _, _ = conv2d_decay(xp, p["conv2_w"], p["conv2_b"],
                                       a1[t], s1[t], kh=5, kw=5,
                                       alpha=ALPHAS[1], beta=BETAS[1],
                                       apply_relu=True)
        s1[t + 1] = s_new
        a1[t + 1] = y2
        xp = maxpool2_packed(y2, b, oh2, ow2)

        y3, s_new, _, _ = conv2d_decay(xp, p["conv3_w"], p["conv3_b"],
                                       a2[t], s2[t], kh=3, kw=3,
                                       alpha=ALPHAS[2], beta=BETAS[2],
                                       apply_relu=True)
        s2[t + 1] = s_new
        a2[t + 1] = y3

        xf_in = y3.reshape(b, -1).astype(jnp.bfloat16)   # dropout == identity
        if t == t_steps - 2:
            # last step: decoder fused into the fc1 + decay kernel
            y4, s_new, logits = matmul_decay_decoder(
                xf_in, p["fc1_w"], p["fc1_b"], a3[t], s3[t],
                p["dec_w"], p["dec_b"], alpha=ALPHAS[3], beta=BETAS[3])
        else:
            y4, s_new = matmul_decay_fused(
                xf_in, p["fc1_w"], p["fc1_b"], a3[t], s3[t],
                alpha=ALPHAS[3], beta=BETAS[3], apply_relu=False)
        s3[t + 1] = s_new
        a3[t + 1] = y4

    if logits is None:                                   # t_steps <= 1
        logits = matmul_fused(a3[0].astype(jnp.bfloat16),
                              p["dec_w"], p["dec_b"])

    # ---- package activations in the PyTorch NCHW layout -----------------------
    def to_nchw(xp_, oh, ow):
        c = xp_.shape[-1]
        return xp_.reshape(b, oh, ow, c).transpose(0, 3, 1, 2)

    actvs = {
        0: {k: to_nchw(v, oh1, ow1) for k, v in a0.items()},
        1: {k: to_nchw(v, oh2, ow2) for k, v in a1.items()},
        2: {k: to_nchw(v, oh3, ow3) for k, v in a2.items()},
        3: dict(a3),
        4: logits,
    }
    return actvs


# ----------------------------------------------------------------------------
if __name__ == "__main__":
    T_STEPS, B = 3, 2
    key = jax.random.PRNGKey(0)
    k_par, k_in = jax.random.split(key)
    params = init_params(k_par)
    # layout: (t_steps, B, C=1, H=28, W=28) NCHW per-frame sequence
    x_seq = jax.random.normal(k_in, (T_STEPS, B, 1, 28, 28), jnp.float32)

    actvs = forward(params, x_seq, t_steps=T_STEPS)
    out = jax.block_until_ready(actvs[4])

    assert out.shape == (B, 10)
    assert bool(jnp.all(jnp.isfinite(out)))
    print("KERNEL_OK")
</pallas_src>

<mosaic_0001>
module attributes {stable_mosaic.version = 11 : i64} {
  func.func @_mm_kernel(%arg0: i32, %arg1: memref<864x32xbf16, #tpu.memory_space<vmem>>, %arg2: memref<32x32xbf16, #tpu.memory_space<vmem>>, %arg3: memref<1x32xf32, #tpu.memory_space<vmem>>, %arg4: memref<864x32xf32, #tpu.memory_space<vmem>>) attributes {dimension_semantics = [#tpu.dimension_semantics<parallel>], iteration_bounds = array<i64: 4>, scalar_prefetch = 0 : i64, scratch_operands = 0 : i64, tpu.core_type = #tpu.core_type<tc>, window_params = [{transform_indices = @transform_0, window_bounds = array<i64: 864, 32>}, {pipeline_mode = #tpu.pipeline_mode<synchronous>, transform_indices = @transform_1, window_bounds = array<i64: 32, 32>}, {pipeline_mode = #tpu.pipeline_mode<synchronous>, transform_indices = @transform_2, window_bounds = array<i64: 1, 32>}, {transform_indices = @transform_3, window_bounds = array<i64: 864, 32>}]} {
    %c0 = arith.constant 0 : index
    %c0_0 = arith.constant 0 : index
    %0 = vector.load %arg1[%c0, %c0_0] : memref<864x32xbf16, #tpu.memory_space<vmem>>, vector<864x32xbf16>
    %c0_1 = arith.constant 0 : index
    %c0_2 = arith.constant 0 : index
    %1 = vector.load %arg2[%c0_1, %c0_2] : memref<32x32xbf16, #tpu.memory_space<vmem>>, vector<32x32xbf16>
    %cst = arith.constant dense<0.000000e+00> : vector<864x32xf32>
    %2 = tpu.matmul %0, %1, %cst {dimension_numbers = #tpu.dot_dimension_numbers<[1], [0], [0], [1], [0, 0, 1, 1], [], []>} : vector<864x32xbf16>, vector<32x32xbf16>, vector<864x32xf32> -> vector<864x32xf32>
    %c0_3 = arith.constant 0 : index
    %c0_4 = arith.constant 0 : index
    %3 = vector.load %arg3[%c0_3, %c0_4] : memref<1x32xf32, #tpu.memory_space<vmem>>, vector<1x32xf32>
    %4 = vector.broadcast %3 : vector<1x32xf32> to vector<864x32xf32>
    %5 = arith.addf %2, %4 : vector<864x32xf32>
    %c0_5 = arith.constant 0 : index
    %c0_6 = arith.constant 0 : index
    %6 = vector.load %arg4[%c0_5, %c0_6] : memref<864x32xf32, #tpu.memory_space<vmem>>, vector<864x32xf32>
    tpu.vector_store %arg4[%c0_5, %c0_6], %5 {strides = array<i32>} : memref<864x32xf32, #tpu.memory_space<vmem>>, vector<864x32xf32>,
    return
  }
  func.func @transform_0(%arg0: i32) -> (i32, i32) {
    %c0_i32 = arith.constant 0 : i32
    %c0_i32_0 = arith.constant 0 : i32
    return %arg0, %c0_i32 : i32, i32
  }
  func.func @transform_1(%arg0: i32) -> (i32, i32) {
    %c0_i32 = arith.constant 0 : i32
    %c0_i32_0 = arith.constant 0 : i32
    %c0_i32_1 = arith.constant 0 : i32
    return %c0_i32, %c0_i32_0 : i32, i32
  }
  func.func @transform_2(%arg0: i32) -> (i32, i32) {
    %c0_i32 = arith.constant 0 : i32
    %c0_i32_0 = arith.constant 0 : i32
    %c0_i32_1 = arith.constant 0 : i32
    return %c0_i32, %c0_i32_0 : i32, i32
  }
  func.func @transform_3(%arg0: i32) -> (i32, i32) {
    %c0_i32 = arith.constant 0 : i32
    %c0_i32_0 = arith.constant 0 : i32
    return %arg0, %c0_i32 : i32, i32
  }
}

module attributes {stable_mosaic.version = 11 : i64} {
  func.func @_decay_kernel(%arg0: memref<1152x32xf32, #tpu.memory_space<vmem>>, %arg1: memref<1152x32xf32, #tpu.memory_space<vmem>>, %arg2: memref<1152x32xf32, #tpu.memory_space<vmem>>, %arg3: memref<1152x32xf32, #tpu.memory_space<vmem>>, %arg4: memref<1152x32xf32, #tpu.memory_space<vmem>>) attributes {dimension_semantics = [], scalar_prefetch = 0 : i64, scratch_operands = 0 : i64, tpu.core_type = #tpu.core_type<tc>} {
    %c0 = arith.constant 0 : index
    %c0_0 = arith.constant 0 : index
    %0 = vector.load %arg2[%c0, %c0_0] : memref<1152x32xf32, #tpu.memory_space<vmem>>, vector<1152x32xf32>
    %cst = arith.constant 0.959999978 : f32
    %1 = vector.broadcast %cst : f32 to vector<1152x32xf32>
    %2 = arith.mulf %1, %0 : vector<1152x32xf32>
    %c0_1 = arith.constant 0 : index
    %c0_2 = arith.constant 0 : index
    %3 = vector.load %arg1[%c0_1, %c0_2] : memref<1152x32xf32, #tpu.memory_space<vmem>>, vector<1152x32xf32>
    %cst_3 = arith.constant 4.000000e-02 : f32
    %4 = vector.broadcast %cst_3 : f32 to vector<1152x32xf32>
    %5 = arith.mulf %4, %3 : vector<1152x32xf32>
    %6 = arith.addf %2, %5 : vector<1152x32xf32>
    %c0_4 = arith.constant 0 : index
    %c0_5 = arith.constant 0 : index
    %7 = vector.load %arg4[%c0_4, %c0_5] : memref<1152x32xf32, #tpu.memory_space<vmem>>, vector<1152x32xf32>
    tpu.vector_store %arg4[%c0_4, %c0_5], %6 {strides = array<i32>} : memref<1152x32xf32, #tpu.memory_space<vmem>>, vector<1152x32xf32>,
    %c0_6 = arith.constant 0 : index
    %c0_7 = arith.constant 0 : index
    %8 = vector.load %arg0[%c0_6, %c0_7] : memref<1152x32xf32, #tpu.memory_space<vmem>>, vector<1152x32xf32>
    %cst_8 = arith.constant 0.699999988 : f32
    %9 = vector.broadcast %cst_8 : f32 to vector<1152x32xf32>
    %10 = arith.mulf %9, %6 : vector<1152x32xf32>
    %11 = arith.subf %8, %10 : vector<1152x32xf32>
    %cst_9 = arith.constant 0.000000e+00 : f32
    %12 = vector.broadcast %cst_9 : f32 to vector<1152x32xf32>
    %13 = arith.maximumf %11, %12 : vector<1152x32xf32>
    %c0_10 = arith.constant 0 : index
    %c0_11 = arith.constant 0 : index
    %14 = vector.load %arg3[%c0_10, %c0_11] : memref<1152x32xf32, #tpu.memory_space<vmem>>, vector<1152x32xf32>
    tpu.vector_store %arg3[%c0_10, %c0_11], %13 {strides = array<i32>} : memref<1152x32xf32, #tpu.memory_space<vmem>>, vector<1152x32xf32>,
    return
  }
}

module attributes {stable_mosaic.version = 11 : i64} {
  func.func @_mm_kernel(%arg0: i32, %arg1: memref<128x800xbf16, #tpu.memory_space<vmem>>, %arg2: memref<800x32xbf16, #tpu.memory_space<vmem>>, %arg3: memref<1x32xf32, #tpu.memory_space<vmem>>, %arg4: memref<128x32xf32, #tpu.memory_space<vmem>>) attributes {dimension_semantics = [#tpu.dimension_semantics<parallel>], iteration_bounds = array<i64: 1>, scalar_prefetch = 0 : i64, scratch_operands = 0 : i64, tpu.core_type = #tpu.core_type<tc>, window_params = [{transform_indices = @transform_0, window_bounds = array<i64: 128, 800>}, {pipeline_mode = #tpu.pipeline_mode<synchronous>, transform_indices = @transform_1, window_bounds = array<i64: 800, 32>}, {pipeline_mode = #tpu.pipeline_mode<synchronous>, transform_indices = @transform_2, window_bounds = array<i64: 1, 32>}, {transform_indices = @transform_3, window_bounds = array<i64: 128, 32>}]} {
    %c0 = arith.constant 0 : index
    %c0_0 = arith.constant 0 : index
    %0 = vector.load %arg1[%c0, %c0_0] : memref<128x800xbf16, #tpu.memory_space<vmem>>, vector<128x800xbf16>
    %c0_1 = arith.constant 0 : index
    %c0_2 = arith.constant 0 : index
    %1 = vector.load %arg2[%c0_1, %c0_2] : memref<800x32xbf16, #tpu.memory_space<vmem>>, vector<800x32xbf16>
    %cst = arith.constant dense<0.000000e+00> : vector<128x32xf32>
    %2 = tpu.matmul %0, %1, %cst {dimension_numbers = #tpu.dot_dimension_numbers<[1], [0], [0], [1], [0, 0, 1, 1], [], []>} : vector<128x800xbf16>, vector<800x32xbf16>, vector<128x32xf32> -> vector<128x32xf32>
    %c0_3 = arith.constant 0 : index
    %c0_4 = arith.constant 0 : index
    %3 = vector.load %arg3[%c0_3, %c0_4] : memref<1x32xf32, #tpu.memory_space<vmem>>, vector<1x32xf32>
    %4 = vector.broadcast %3 : vector<1x32xf32> to vector<128x32xf32>
    %5 = arith.addf %2, %4 : vector<128x32xf32>
    %c0_5 = arith.constant 0 : index
    %c0_6 = arith.constant 0 : index
    %6 = vector.load %arg4[%c0_5, %c0_6] : memref<128x32xf32, #tpu.memory_space<vmem>>, vector<128x32xf32>
    tpu.vector_store %arg4[%c0_5, %c0_6], %5 {strides = array<i32>} : memref<128x32xf32, #tpu.memory_space<vmem>>, vector<128x32xf32>,
    return
  }
  func.func @transform_0(%arg0: i32) -> (i32, i32) {
    %c0_i32 = arith.constant 0 : i32
    %c0_i32_0 = arith.constant 0 : i32
    return %arg0, %c0_i32 : i32, i32
  }
  func.func @transform_1(%arg0: i32) -> (i32, i32) {
    %c0_i32 = arith.constant 0 : i32
    %c0_i32_0 = arith.constant 0 : i32
    %c0_i32_1 = arith.constant 0 : i32
    return %c0_i32, %c0_i32_0 : i32, i32
  }
  func.func @transform_2(%arg0: i32) -> (i32, i32) {
    %c0_i32 = arith.constant 0 : i32
    %c0_i32_0 = arith.constant 0 : i32
    %c0_i32_1 = arith.constant 0 : i32
    return %c0_i32, %c0_i32_0 : i32, i32
  }
  func.func @transform_3(%arg0: i32) -> (i32, i32) {
    %c0_i32 = arith.constant 0 : i32
    %c0_i32_0 = arith.constant 0 : i32
    return %arg0, %c0_i32 : i32, i32
  }
}

module attributes {stable_mosaic.version = 11 : i64} {
  func.func @_mm_decay_kernel(%arg0: i32, %arg1: memref<128x800xbf16, #tpu.memory_space<vmem>>, %arg2: memref<800x32xbf16, #tpu.memory_space<vmem>>, %arg3: memref<1x32xf32, #tpu.memory_space<vmem>>, %arg4: memref<128x32xf32, #tpu.memory_space<vmem>>, %arg5: memref<128x32xf32, #tpu.memory_space<vmem>>, %arg6: memref<128x32xf32, #tpu.memory_space<vmem>>, %arg7: memref<128x32xf32, #tpu.memory_space<vmem>>) attributes {dimension_semantics = [#tpu.dimension_semantics<parallel>], iteration_bounds = array<i64: 1>, scalar_prefetch = 0 : i64, scratch_operands = 0 : i64, tpu.core_type = #tpu.core_type<tc>, window_params = [{transform_indices = @transform_0, window_bounds = array<i64: 128, 800>}, {pipeline_mode = #tpu.pipeline_mode<synchronous>, transform_indices = @transform_1, window_bounds = array<i64: 800, 32>}, {pipeline_mode = #tpu.pipeline_mode<synchronous>, transform_indices = @transform_2, window_bounds = array<i64: 1, 32>}, {transform_indices = @transform_3, window_bounds = array<i64: 128, 32>}, {transform_indices = @transform_4, window_bounds = array<i64: 128, 32>}, {transform_indices = @transform_5, window_bounds = array<i64: 128, 32>}, {transform_indices = @transform_6, window_bounds = array<i64: 128, 32>}]} {
    %c0 = arith.constant 0 : index
    %c0_0 = arith.constant 0 : index
    %0 = vector.load %arg1[%c0, %c0_0] : memref<128x800xbf16, #tpu.memory_space<vmem>>, vector<128x800xbf16>
    %c0_1 = arith.constant 0 : index
    %c0_2 = arith.constant 0 : index
    %1 = vector.load %arg2[%c0_1, %c0_2] : memref<800x32xbf16, #tpu.memory_space<vmem>>, vector<800x32xbf16>
    %cst = arith.constant dense<0.000000e+00> : vector<128x32xf32>
    %2 = tpu.matmul %0, %1, %cst {dimension_numbers = #tpu.dot_dimension_numbers<[1], [0], [0], [1], [0, 0, 1, 1], [], []>} : vector<128x800xbf16>, vector<800x32xbf16>, vector<128x32xf32> -> vector<128x32xf32>
    %c0_3 = arith.constant 0 : index
    %c0_4 = arith.constant 0 : index
    %3 = vector.load %arg3[%c0_3, %c0_4] : memref<1x32xf32, #tpu.memory_space<vmem>>, vector<1x32xf32>
    %4 = vector.broadcast %3 : vector<1x32xf32> to vector<128x32xf32>
    %5 = arith.addf %2, %4 : vector<128x32xf32>
    %c0_5 = arith.constant 0 : index
    %c0_6 = arith.constant 0 : index
    %6 = vector.load %arg5[%c0_5, %c0_6] : memref<128x32xf32, #tpu.memory_space<vmem>>, vector<128x32xf32>
    %cst_7 = arith.constant 0.959999978 : f32
    %7 = vector.broadcast %cst_7 : f32 to vector<128x32xf32>
    %8 = arith.mulf %7, %6 : vector<128x32xf32>
    %c0_8 = arith.constant 0 : index
    %c0_9 = arith.constant 0 : index
    %9 = vector.load %arg4[%c0_8, %c0_9] : memref<128x32xf32, #tpu.memory_space<vmem>>, vector<128x32xf32>
    %cst_10 = arith.constant 4.000000e-02 : f32
    %10 = vector.broadcast %cst_10 : f32 to vector<128x32xf32>
    %11 = arith.mulf %10, %9 : vector<128x32xf32>
    %12 = arith.addf %8, %11 : vector<128x32xf32>
    %c0_11 = arith.constant 0 : index
    %c0_12 = arith.constant 0 : index
    %13 = vector.load %arg7[%c0_11, %c0_12] : memref<128x32xf32, #tpu.memory_space<vmem>>, vector<128x32xf32>
    tpu.vector_store %arg7[%c0_11, %c0_12], %12 {strides = array<i32>} : memref<128x32xf32, #tpu.memory_space<vmem>>, vector<128x32xf32>,
    %cst_13 = arith.constant 0.699999988 : f32
    %14 = vector.broadcast %cst_13 : f32 to vector<128x32xf32>
    %15 = arith.mulf %14, %12 : vector<128x32xf32>
    %16 = arith.subf %5, %15 : vector<128x32xf32>
    %cst_14 = arith.constant 0.000000e+00 : f32
    %17 = vector.broadcast %cst_14 : f32 to vector<128x32xf32>
    %18 = arith.maximumf %16, %17 : vector<128x32xf32>
    %c0_15 = arith.constant 0 : index
    %c0_16 = arith.constant 0 : index
    %19 = vector.load %arg6[%c0_15, %c0_16] : memref<128x32xf32, #tpu.memory_space<vmem>>, vector<128x32xf32>
    tpu.vector_store %arg6[%c0_15, %c0_16], %18 {strides = array<i32>} : memref<128x32xf32, #tpu.memory_space<vmem>>, vector<128x32xf32>,
    return
  }
  func.func @transform_0(%arg0: i32) -> (i32, i32) {
    %c0_i32 = arith.constant 0 : i32
    %c0_i32_0 = arith.constant 0 : i32
    return %arg0, %c0_i32 : i32, i32
  }
  func.func @transform_1(%arg0: i32) -> (i32, i32) {
    %c0_i32 = arith.constant 0 : i32
    %c0_i32_0 = arith.constant 0 : i32
    %c0_i32_1 = arith.constant 0 : i32
    return %c0_i32, %c0_i32_0 : i32, i32
  }
  func.func @transform_2(%arg0: i32) -> (i32, i32) {
    %c0_i32 = arith.constant 0 : i32
    %c0_i32_0 = arith.constant 0 : i32
    %c0_i32_1 = arith.constant 0 : i32
    return %c0_i32, %c0_i32_0 : i32, i32
  }
  func.func @transform_3(%arg0: i32) -> (i32, i32) {
    %c0_i32 = arith.constant 0 : i32
    %c0_i32_0 = arith.constant 0 : i32
    return %arg0, %c0_i32 : i32, i32
  }
  func.func @transform_4(%arg0: i32) -> (i32, i32) {
    %c0_i32 = arith.constant 0 : i32
    %c0_i32_0 = arith.constant 0 : i32
    return %arg0, %c0_i32 : i32, i32
  }
  func.func @transform_5(%arg0: i32) -> (i32, i32) {
    %c0_i32 = arith.constant 0 : i32
    %c0_i32_0 = arith.constant 0 : i32
    return %arg0, %c0_i32 : i32, i32
  }
  func.func @transform_6(%arg0: i32) -> (i32, i32) {
    %c0_i32 = arith.constant 0 : i32
    %c0_i32_0 = arith.constant 0 : i32
    return %arg0, %c0_i32 : i32, i32
  }
}

module attributes {stable_mosaic.version = 11 : i64} {
  func.func @_mm_kernel(%arg0: i32, %arg1: memref<8x288xbf16, #tpu.memory_space<vmem>>, %arg2: memref<288x32xbf16, #tpu.memory_space<vmem>>, %arg3: memref<1x32xf32, #tpu.memory_space<vmem>>, %arg4: memref<8x32xf32, #tpu.memory_space<vmem>>) attributes {dimension_semantics = [#tpu.dimension_semantics<parallel>], iteration_bounds = array<i64: 1>, scalar_prefetch = 0 : i64, scratch_operands = 0 : i64, tpu.core_type = #tpu.core_type<tc>, window_params = [{transform_indices = @transform_0, window_bounds = array<i64: 8, 288>}, {pipeline_mode = #tpu.pipeline_mode<synchronous>, transform_indices = @transform_1, window_bounds = array<i64: 288, 32>}, {pipeline_mode = #tpu.pipeline_mode<synchronous>, transform_indices = @transform_2, window_bounds = array<i64: 1, 32>}, {transform_indices = @transform_3, window_bounds = array<i64: 8, 32>}]} {
    %c0 = arith.constant 0 : index
    %c0_0 = arith.constant 0 : index
    %0 = vector.load %arg1[%c0, %c0_0] : memref<8x288xbf16, #tpu.memory_space<vmem>>, vector<8x288xbf16>
    %c0_1 = arith.constant 0 : index
    %c0_2 = arith.constant 0 : index
    %1 = vector.load %arg2[%c0_1, %c0_2] : memref<288x32xbf16, #tpu.memory_space<vmem>>, vector<288x32xbf16>
    %cst = arith.constant dense<0.000000e+00> : vector<8x32xf32>
    %2 = tpu.matmul %0, %1, %cst {dimension_numbers = #tpu.dot_dimension_numbers<[1], [0], [0], [1], [0, 0, 1, 1], [], []>} : vector<8x288xbf16>, vector<288x32xbf16>, vector<8x32xf32> -> vector<8x32xf32>
    %c0_3 = arith.constant 0 : index
    %c0_4 = arith.constant 0 : index
    %3 = vector.load %arg3[%c0_3, %c0_4] : memref<1x32xf32, #tpu.memory_space<vmem>>, vector<1x32xf32>
    %4 = vector.broadcast %3 : vector<1x32xf32> to vector<8x32xf32>
    %5 = arith.addf %2, %4 : vector<8x32xf32>
    %cst_5 = arith.constant 0.000000e+00 : f32
    %6 = vector.broadcast %cst_5 : f32 to vector<8x32xf32>
    %7 = arith.maximumf %5, %6 : vector<8x32xf32>
    %c0_6 = arith.constant 0 : index
    %c0_7 = arith.constant 0 : index
    %8 = vector.load %arg4[%c0_6, %c0_7] : memref<8x32xf32, #tpu.memory_space<vmem>>, vector<8x32xf32>
    tpu.vector_store %arg4[%c0_6, %c0_7], %7 {strides = array<i32>} : memref<8x32xf32, #tpu.memory_space<vmem>>, vector<8x32xf32>,
    return
  }
  func.func @transform_0(%arg0: i32) -> (i32, i32) {
    %c0_i32 = arith.constant 0 : i32
    %c0_i32_0 = arith.constant 0 : i32
    return %arg0, %c0_i32 : i32, i32
  }
  func.func @transform_1(%arg0: i32) -> (i32, i32) {
    %c0_i32 = arith.constant 0 : i32
    %c0_i32_0 = arith.constant 0 : i32
    %c0_i32_1 = arith.constant 0 : i32
    return %c0_i32, %c0_i32_0 : i32, i32
  }
  func.func @transform_2(%arg0: i32) -> (i32, i32) {
    %c0_i32 = arith.constant 0 : i32
    %c0_i32_0 = arith.constant 0 : i32
    %c0_i32_1 = arith.constant 0 : i32
    return %c0_i32, %c0_i32_0 : i32, i32
  }
  func.func @transform_3(%arg0: i32) -> (i32, i32) {
    %c0_i32 = arith.constant 0 : i32
    %c0_i32_0 = arith.constant 0 : i32
    return %arg0, %c0_i32 : i32, i32
  }
}

module attributes {stable_mosaic.version = 11 : i64} {
  func.func @_mm_decay_kernel(%arg0: i32, %arg1: memref<8x288xbf16, #tpu.memory_space<vmem>>, %arg2: memref<288x32xbf16, #tpu.memory_space<vmem>>, %arg3: memref<1x32xf32, #tpu.memory_space<vmem>>, %arg4: memref<8x32xf32, #tpu.memory_space<vmem>>, %arg5: memref<8x32xf32, #tpu.memory_space<vmem>>, %arg6: memref<8x32xf32, #tpu.memory_space<vmem>>, %arg7: memref<8x32xf32, #tpu.memory_space<vmem>>) attributes {dimension_semantics = [#tpu.dimension_semantics<parallel>], iteration_bounds = array<i64: 1>, scalar_prefetch = 0 : i64, scratch_operands = 0 : i64, tpu.core_type = #tpu.core_type<tc>, window_params = [{transform_indices = @transform_0, window_bounds = array<i64: 8, 288>}, {pipeline_mode = #tpu.pipeline_mode<synchronous>, transform_indices = @transform_1, window_bounds = array<i64: 288, 32>}, {pipeline_mode = #tpu.pipeline_mode<synchronous>, transform_indices = @transform_2, window_bounds = array<i64: 1, 32>}, {transform_indices = @transform_3, window_bounds = array<i64: 8, 32>}, {transform_indices = @transform_4, window_bounds = array<i64: 8, 32>}, {transform_indices = @transform_5, window_bounds = array<i64: 8, 32>}, {transform_indices = @transform_6, window_bounds = array<i64: 8, 32>}]} {
    %c0 = arith.constant 0 : index
    %c0_0 = arith.constant 0 : index
    %0 = vector.load %arg1[%c0, %c0_0] : memref<8x288xbf16, #tpu.memory_space<vmem>>, vector<8x288xbf16>
    %c0_1 = arith.constant 0 : index
    %c0_2 = arith.constant 0 : index
    %1 = vector.load %arg2[%c0_1, %c0_2] : memref<288x32xbf16, #tpu.memory_space<vmem>>, vector<288x32xbf16>
    %cst = arith.constant dense<0.000000e+00> : vector<8x32xf32>
    %2 = tpu.matmul %0, %1, %cst {dimension_numbers = #tpu.dot_dimension_numbers<[1], [0], [0], [1], [0, 0, 1, 1], [], []>} : vector<8x288xbf16>, vector<288x32xbf16>, vector<8x32xf32> -> vector<8x32xf32>
    %c0_3 = arith.constant 0 : index
    %c0_4 = arith.constant 0 : index
    %3 = vector.load %arg3[%c0_3, %c0_4] : memref<1x32xf32, #tpu.memory_space<vmem>>, vector<1x32xf32>
    %4 = vector.broadcast %3 : vector<1x32xf32> to vector<8x32xf32>
    %5 = arith.addf %2, %4 : vector<8x32xf32>
    %c0_5 = arith.constant 0 : index
    %c0_6 = arith.constant 0 : index
    %6 = vector.load %arg5[%c0_5, %c0_6] : memref<8x32xf32, #tpu.memory_space<vmem>>, vector<8x32xf32>
    %cst_7 = arith.constant 0.959999978 : f32
    %7 = vector.broadcast %cst_7 : f32 to vector<8x32xf32>
    %8 = arith.mulf %7, %6 : vector<8x32xf32>
    %c0_8 = arith.constant 0 : index
    %c0_9 = arith.constant 0 : index
    %9 = vector.load %arg4[%c0_8, %c0_9] : memref<8x32xf32, #tpu.memory_space<vmem>>, vector<8x32xf32>
    %cst_10 = arith.constant 4.000000e-02 : f32
    %10 = vector.broadcast %cst_10 : f32 to vector<8x32xf32>
    %11 = arith.mulf %10, %9 : vector<8x32xf32>
    %12 = arith.addf %8, %11 : vector<8x32xf32>
    %c0_11 = arith.constant 0 : index
    %c0_12 = arith.constant 0 : index
    %13 = vector.load %arg7[%c0_11, %c0_12] : memref<8x32xf32, #tpu.memory_space<vmem>>, vector<8x32xf32>
    tpu.vector_store %arg7[%c0_11, %c0_12], %12 {strides = array<i32>} : memref<8x32xf32, #tpu.memory_space<vmem>>, vector<8x32xf32>,
    %cst_13 = arith.constant 0.699999988 : f32
    %14 = vector.broadcast %cst_13 : f32 to vector<8x32xf32>
    %15 = arith.mulf %14, %12 : vector<8x32xf32>
    %16 = arith.subf %5, %15 : vector<8x32xf32>
    %cst_14 = arith.constant 0.000000e+00 : f32
    %17 = vector.broadcast %cst_14 : f32 to vector<8x32xf32>
    %18 = arith.maximumf %16, %17 : vector<8x32xf32>
    %c0_15 = arith.constant 0 : index
    %c0_16 = arith.constant 0 : index
    %19 = vector.load %arg6[%c0_15, %c0_16] : memref<8x32xf32, #tpu.memory_space<vmem>>, vector<8x32xf32>
    tpu.vector_store %arg6[%c0_15, %c0_16], %18 {strides = array<i32>} : memref<8x32xf32, #tpu.memory_space<vmem>>, vector<8x32xf32>,
    return
  }
  func.func @transform_0(%arg0: i32) -> (i32, i32) {
    %c0_i32 = arith.constant 0 : i32
    %c0_i32_0 = arith.constant 0 : i32
    return %arg0, %c0_i32 : i32, i32
  }
  func.func @transform_1(%arg0: i32) -> (i32, i32) {
    %c0_i32 = arith.constant 0 : i32
    %c0_i32_0 = arith.constant 0 : i32
    %c0_i32_1 = arith.constant 0 : i32
    return %c0_i32, %c0_i32_0 : i32, i32
  }
  func.func @transform_2(%arg0: i32) -> (i32, i32) {
    %c0_i32 = arith.constant 0 : i32
    %c0_i32_0 = arith.constant 0 : i32
    %c0_i32_1 = arith.constant 0 : i32
    return %c0_i32, %c0_i32_0 : i32, i32
  }
  func.func @transform_3(%arg0: i32) -> (i32, i32) {
    %c0_i32 = arith.constant 0 : i32
    %c0_i32_0 = arith.constant 0 : i32
    return %arg0, %c0_i32 : i32, i32
  }
  func.func @transform_4(%arg0: i32) -> (i32, i32) {
    %c0_i32 = arith.constant 0 : i32
    %c0_i32_0 = arith.constant 0 : i32
    return %arg0, %c0_i32 : i32, i32
  }
  func.func @transform_5(%arg0: i32) -> (i32, i32) {
    %c0_i32 = arith.constant 0 : i32
    %c0_i32_0 = arith.constant 0 : i32
    return %arg0, %c0_i32 : i32, i32
  }
  func.func @transform_6(%arg0: i32) -> (i32, i32) {
    %c0_i32 = arith.constant 0 : i32
    %c0_i32_0 = arith.constant 0 : i32
    return %arg0, %c0_i32 : i32, i32
  }
}

module attributes {stable_mosaic.version = 11 : i64} {
  func.func @_mm_kernel(%arg0: i32, %arg1: memref<2x128xbf16, #tpu.memory_space<vmem>>, %arg2: memref<128x1024xbf16, #tpu.memory_space<vmem>>, %arg3: memref<1x1024xf32, #tpu.memory_space<vmem>>, %arg4: memref<2x1024xf32, #tpu.memory_space<vmem>>) attributes {dimension_semantics = [#tpu.dimension_semantics<parallel>], iteration_bounds = array<i64: 1>, scalar_prefetch = 0 : i64, scratch_operands = 0 : i64, tpu.core_type = #tpu.core_type<tc>, window_params = [{transform_indices = @transform_0, window_bounds = array<i64: 2, 128>}, {pipeline_mode = #tpu.pipeline_mode<synchronous>, transform_indices = @transform_1, window_bounds = array<i64: 128, 1024>}, {pipeline_mode = #tpu.pipeline_mode<synchronous>, transform_indices = @transform_2, window_bounds = array<i64: 1, 1024>}, {transform_indices = @transform_3, window_bounds = array<i64: 2, 1024>}]} {
    %c0 = arith.constant 0 : index
    %c0_0 = arith.constant 0 : index
    %0 = vector.load %arg1[%c0, %c0_0] : memref<2x128xbf16, #tpu.memory_space<vmem>>, vector<2x128xbf16>
    %c0_1 = arith.constant 0 : index
    %c0_2 = arith.constant 0 : index
    %1 = vector.load %arg2[%c0_1, %c0_2] : memref<128x1024xbf16, #tpu.memory_space<vmem>>, vector<128x1024xbf16>
    %cst = arith.constant dense<0.000000e+00> : vector<2x1024xf32>
    %2 = tpu.matmul %0, %1, %cst {dimension_numbers = #tpu.dot_dimension_numbers<[1], [0], [0], [1], [0, 0, 1, 1], [], []>} : vector<2x128xbf16>, vector<128x1024xbf16>, vector<2x1024xf32> -> vector<2x1024xf32>
    %c0_3 = arith.constant 0 : index
    %c0_4 = arith.constant 0 : index
    %3 = vector.load %arg3[%c0_3, %c0_4] : memref<1x1024xf32, #tpu.memory_space<vmem>>, vector<1x1024xf32>
    %4 = vector.broadcast %3 : vector<1x1024xf32> to vector<2x1024xf32>
    %5 = arith.addf %2, %4 : vector<2x1024xf32>
    %c0_5 = arith.constant 0 : index
    %c0_6 = arith.constant 0 : index
    %6 = vector.load %arg4[%c0_5, %c0_6] : memref<2x1024xf32, #tpu.memory_space<vmem>>, vector<2x1024xf32>
    tpu.vector_store %arg4[%c0_5, %c0_6], %5 {strides = array<i32>} : memref<2x1024xf32, #tpu.memory_space<vmem>>, vector<2x1024xf32>,
    return
  }
  func.func @transform_0(%arg0: i32) -> (i32, i32) {
    %c0_i32 = arith.constant 0 : i32
    %c0_i32_0 = arith.constant 0 : i32
    return %arg0, %c0_i32 : i32, i32
  }
  func.func @transform_1(%arg0: i32) -> (i32, i32) {
    %c0_i32 = arith.constant 0 : i32
    %c0_i32_0 = arith.constant 0 : i32
    %c0_i32_1 = arith.constant 0 : i32
    return %c0_i32, %c0_i32_0 : i32, i32
  }
  func.func @transform_2(%arg0: i32) -> (i32, i32) {
    %c0_i32 = arith.constant 0 : i32
    %c0_i32_0 = arith.constant 0 : i32
    %c0_i32_1 = arith.constant 0 : i32
    return %c0_i32, %c0_i32_0 : i32, i32
  }
  func.func @transform_3(%arg0: i32) -> (i32, i32) {
    %c0_i32 = arith.constant 0 : i32
    %c0_i32_0 = arith.constant 0 : i32
    return %arg0, %c0_i32 : i32, i32
  }
}

module attributes {stable_mosaic.version = 11 : i64} {
  func.func @_mm_decay_kernel(%arg0: i32, %arg1: memref<2x128xbf16, #tpu.memory_space<vmem>>, %arg2: memref<128x1024xbf16, #tpu.memory_space<vmem>>, %arg3: memref<1x1024xf32, #tpu.memory_space<vmem>>, %arg4: memref<2x1024xf32, #tpu.memory_space<vmem>>, %arg5: memref<2x1024xf32, #tpu.memory_space<vmem>>, %arg6: memref<2x1024xf32, #tpu.memory_space<vmem>>, %arg7: memref<2x1024xf32, #tpu.memory_space<vmem>>) attributes {dimension_semantics = [#tpu.dimension_semantics<parallel>], iteration_bounds = array<i64: 1>, scalar_prefetch = 0 : i64, scratch_operands = 0 : i64, tpu.core_type = #tpu.core_type<tc>, window_params = [{transform_indices = @transform_0, window_bounds = array<i64: 2, 128>}, {pipeline_mode = #tpu.pipeline_mode<synchronous>, transform_indices = @transform_1, window_bounds = array<i64: 128, 1024>}, {pipeline_mode = #tpu.pipeline_mode<synchronous>, transform_indices = @transform_2, window_bounds = array<i64: 1, 1024>}, {transform_indices = @transform_3, window_bounds = array<i64: 2, 1024>}, {transform_indices = @transform_4, window_bounds = array<i64: 2, 1024>}, {transform_indices = @transform_5, window_bounds = array<i64: 2, 1024>}, {transform_indices = @transform_6, window_bounds = array<i64: 2, 1024>}]} {
    %c0 = arith.constant 0 : index
    %c0_0 = arith.constant 0 : index
    %0 = vector.load %arg1[%c0, %c0_0] : memref<2x128xbf16, #tpu.memory_space<vmem>>, vector<2x128xbf16>
    %c0_1 = arith.constant 0 : index
    %c0_2 = arith.constant 0 : index
    %1 = vector.load %arg2[%c0_1, %c0_2] : memref<128x1024xbf16, #tpu.memory_space<vmem>>, vector<128x1024xbf16>
    %cst = arith.constant dense<0.000000e+00> : vector<2x1024xf32>
    %2 = tpu.matmul %0, %1, %cst {dimension_numbers = #tpu.dot_dimension_numbers<[1], [0], [0], [1], [0, 0, 1, 1], [], []>} : vector<2x128xbf16>, vector<128x1024xbf16>, vector<2x1024xf32> -> vector<2x1024xf32>
    %c0_3 = arith.constant 0 : index
    %c0_4 = arith.constant 0 : index
    %3 = vector.load %arg3[%c0_3, %c0_4] : memref<1x1024xf32, #tpu.memory_space<vmem>>, vector<1x1024xf32>
    %4 = vector.broadcast %3 : vector<1x1024xf32> to vector<2x1024xf32>
    %5 = arith.addf %2, %4 : vector<2x1024xf32>
    %c0_5 = arith.constant 0 : index
    %c0_6 = arith.constant 0 : index
    %6 = vector.load %arg5[%c0_5, %c0_6] : memref<2x1024xf32, #tpu.memory_space<vmem>>, vector<2x1024xf32>
    %cst_7 = arith.constant 0.959999978 : f32
    %7 = vector.broadcast %cst_7 : f32 to vector<2x1024xf32>
    %8 = arith.mulf %7, %6 : vector<2x1024xf32>
    %c0_8 = arith.constant 0 : index
    %c0_9 = arith.constant 0 : index
    %9 = vector.load %arg4[%c0_8, %c0_9] : memref<2x1024xf32, #tpu.memory_space<vmem>>, vector<2x1024xf32>
    %cst_10 = arith.constant 4.000000e-02 : f32
    %10 = vector.broadcast %cst_10 : f32 to vector<2x1024xf32>
    %11 = arith.mulf %10, %9 : vector<2x1024xf32>
    %12 = arith.addf %8, %11 : vector<2x1024xf32>
    %c0_11 = arith.constant 0 : index
    %c0_12 = arith.constant 0 : index
    %13 = vector.load %arg7[%c0_11, %c0_12] : memref<2x1024xf32, #tpu.memory_space<vmem>>, vector<2x1024xf32>
    tpu.vector_store %arg7[%c0_11, %c0_12], %12 {strides = array<i32>} : memref<2x1024xf32, #tpu.memory_space<vmem>>, vector<2x1024xf32>,
    %cst_13 = arith.constant 0.699999988 : f32
    %14 = vector.broadcast %cst_13 : f32 to vector<2x1024xf32>
    %15 = arith.mulf %14, %12 : vector<2x1024xf32>
    %16 = arith.subf %5, %15 : vector<2x1024xf32>
    %c0_14 = arith.constant 0 : index
    %c0_15 = arith.constant 0 : index
    %17 = vector.load %arg6[%c0_14, %c0_15] : memref<2x1024xf32, #tpu.memory_space<vmem>>, vector<2x1024xf32>
    tpu.vector_store %arg6[%c0_14, %c0_15], %16 {strides = array<i32>} : memref<2x1024xf32, #tpu.memory_space<vmem>>, vector<2x1024xf32>,
    return
  }
  func.func @transform_0(%arg0: i32) -> (i32, i32) {
    %c0_i32 = arith.constant 0 : i32
    %c0_i32_0 = arith.constant 0 : i32
    return %arg0, %c0_i32 : i32, i32
  }
  func.func @transform_1(%arg0: i32) -> (i32, i32) {
    %c0_i32 = arith.constant 0 : i32
    %c0_i32_0 = arith.constant 0 : i32
    %c0_i32_1 = arith.constant 0 : i32
    return %c0_i32, %c0_i32_0 : i32, i32
  }
  func.func @transform_2(%arg0: i32) -> (i32, i32) {
    %c0_i32 = arith.constant 0 : i32
    %c0_i32_0 = arith.constant 0 : i32
    %c0_i32_1 = arith.constant 0 : i32
    return %c0_i32, %c0_i32_0 : i32, i32
  }
  func.func @transform_3(%arg0: i32) -> (i32, i32) {
    %c0_i32 = arith.constant 0 : i32
    %c0_i32_0 = arith.constant 0 : i32
    return %arg0, %c0_i32 : i32, i32
  }
  func.func @transform_4(%arg0: i32) -> (i32, i32) {
    %c0_i32 = arith.constant 0 : i32
    %c0_i32_0 = arith.constant 0 : i32
    return %arg0, %c0_i32 : i32, i32
  }
  func.func @transform_5(%arg0: i32) -> (i32, i32) {
    %c0_i32 = arith.constant 0 : i32
    %c0_i32_0 = arith.constant 0 : i32
    return %arg0, %c0_i32 : i32, i32
  }
  func.func @transform_6(%arg0: i32) -> (i32, i32) {
    %c0_i32 = arith.constant 0 : i32
    %c0_i32_0 = arith.constant 0 : i32
    return %arg0, %c0_i32 : i32, i32
  }
}

module attributes {stable_mosaic.version = 11 : i64} {
  func.func @_decay_kernel(%arg0: memref<1152x32xf32, #tpu.memory_space<vmem>>, %arg1: memref<1152x32xf32, #tpu.memory_space<vmem>>, %arg2: memref<1152x32xf32, #tpu.memory_space<vmem>>, %arg3: memref<1152x32xf32, #tpu.memory_space<vmem>>, %arg4: memref<1152x32xf32, #tpu.memory_space<vmem>>) attributes {dimension_semantics = [], scalar_prefetch = 0 : i64, scratch_operands = 0 : i64, tpu.core_type = #tpu.core_type<tc>} {
    %c0 = arith.constant 0 : index
    %c0_0 = arith.constant 0 : index
    %0 = vector.load %arg2[%c0, %c0_0] : memref<1152x32xf32, #tpu.memory_space<vmem>>, vector<1152x32xf32>
    %cst = arith.constant 0.959999978 : f32
    %1 = vector.broadcast %cst : f32 to vector<1152x32xf32>
    %2 = arith.mulf %1, %0 : vector<1152x32xf32>
    %c0_1 = arith.constant 0 : index
    %c0_2 = arith.constant 0 : index
    %3 = vector.load %arg1[%c0_1, %c0_2] : memref<1152x32xf32, #tpu.memory_space<vmem>>, vector<1152x32xf32>
    %cst_3 = arith.constant 4.000000e-02 : f32
    %4 = vector.broadcast %cst_3 : f32 to vector<1152x32xf32>
    %5 = arith.mulf %4, %3 : vector<1152x32xf32>
    %6 = arith.addf %2, %5 : vector<1152x32xf32>
    %c0_4 = arith.constant 0 : index
    %c0_5 = arith.constant 0 : index
    %7 = vector.load %arg4[%c0_4, %c0_5] : memref<1152x32xf32, #tpu.memory_space<vmem>>, vector<1152x32xf32>
    tpu.vector_store %arg4[%c0_4, %c0_5], %6 {strides = array<i32>} : memref<1152x32xf32, #tpu.memory_space<vmem>>, vector<1152x32xf32>,
    %c0_6 = arith.constant 0 : index
    %c0_7 = arith.constant 0 : index
    %8 = vector.load %arg0[%c0_6, %c0_7] : memref<1152x32xf32, #tpu.memory_space<vmem>>, vector<1152x32xf32>
    %cst_8 = arith.constant 0.699999988 : f32
    %9 = vector.broadcast %cst_8 : f32 to vector<1152x32xf32>
    %10 = arith.mulf %9, %6 : vector<1152x32xf32>
    %11 = arith.subf %8, %10 : vector<1152x32xf32>
    %cst_9 = arith.constant 0.000000e+00 : f32
    %12 = vector.broadcast %cst_9 : f32 to vector<1152x32xf32>
    %13 = arith.maximumf %11, %12 : vector<1152x32xf32>
    %c0_10 = arith.constant 0 : index
    %c0_11 = arith.constant 0 : index
    %14 = vector.load %arg3[%c0_10, %c0_11] : memref<1152x32xf32, #tpu.memory_space<vmem>>, vector<1152x32xf32>
    tpu.vector_store %arg3[%c0_10, %c0_11], %13 {strides = array<i32>} : memref<1152x32xf32, #tpu.memory_space<vmem>>, vector<1152x32xf32>,
    return
  }
}

module attributes {stable_mosaic.version = 11 : i64} {
  func.func @_mm_decay_kernel(%arg0: i32, %arg1: memref<128x800xbf16, #tpu.memory_space<vmem>>, %arg2: memref<800x32xbf16, #tpu.memory_space<vmem>>, %arg3: memref<1x32xf32, #tpu.memory_space<vmem>>, %arg4: memref<128x32xf32, #tpu.memory_space<vmem>>, %arg5: memref<128x32xf32, #tpu.memory_space<vmem>>, %arg6: memref<128x32xf32, #tpu.memory_space<vmem>>, %arg7: memref<128x32xf32, #tpu.memory_space<vmem>>) attributes {dimension_semantics = [#tpu.dimension_semantics<parallel>], iteration_bounds = array<i64: 1>, scalar_prefetch = 0 : i64, scratch_operands = 0 : i64, tpu.core_type = #tpu.core_type<tc>, window_params = [{transform_indices = @transform_0, window_bounds = array<i64: 128, 800>}, {pipeline_mode = #tpu.pipeline_mode<synchronous>, transform_indices = @transform_1, window_bounds = array<i64: 800, 32>}, {pipeline_mode = #tpu.pipeline_mode<synchronous>, transform_indices = @transform_2, window_bounds = array<i64: 1, 32>}, {transform_indices = @transform_3, window_bounds = array<i64: 128, 32>}, {transform_indices = @transform_4, window_bounds = array<i64: 128, 32>}, {transform_indices = @transform_5, window_bounds = array<i64: 128, 32>}, {transform_indices = @transform_6, window_bounds = array<i64: 128, 32>}]} {
    %c0 = arith.constant 0 : index
    %c0_0 = arith.constant 0 : index
    %0 = vector.load %arg1[%c0, %c0_0] : memref<128x800xbf16, #tpu.memory_space<vmem>>, vector<128x800xbf16>
    %c0_1 = arith.constant 0 : index
    %c0_2 = arith.constant 0 : index
    %1 = vector.load %arg2[%c0_1, %c0_2] : memref<800x32xbf16, #tpu.memory_space<vmem>>, vector<800x32xbf16>
    %cst = arith.constant dense<0.000000e+00> : vector<128x32xf32>
    %2 = tpu.matmul %0, %1, %cst {dimension_numbers = #tpu.dot_dimension_numbers<[1], [0], [0], [1], [0, 0, 1, 1], [], []>} : vector<128x800xbf16>, vector<800x32xbf16>, vector<128x32xf32> -> vector<128x32xf32>
    %c0_3 = arith.constant 0 : index
    %c0_4 = arith.constant 0 : index
    %3 = vector.load %arg3[%c0_3, %c0_4] : memref<1x32xf32, #tpu.memory_space<vmem>>, vector<1x32xf32>
    %4 = vector.broadcast %3 : vector<1x32xf32> to vector<128x32xf32>
    %5 = arith.addf %2, %4 : vector<128x32xf32>
    %c0_5 = arith.constant 0 : index
    %c0_6 = arith.constant 0 : index
    %6 = vector.load %arg5[%c0_5, %c0_6] : memref<128x32xf32, #tpu.memory_space<vmem>>, vector<128x32xf32>
    %cst_7 = arith.constant 0.959999978 : f32
    %7 = vector.broadcast %cst_7 : f32 to vector<128x32xf32>
    %8 = arith.mulf %7, %6 : vector<128x32xf32>
    %c0_8 = arith.constant 0 : index
    %c0_9 = arith.constant 0 : index
    %9 = vector.load %arg4[%c0_8, %c0_9] : memref<128x32xf32, #tpu.memory_space<vmem>>, vector<128x32xf32>
    %cst_10 = arith.constant 4.000000e-02 : f32
    %10 = vector.broadcast %cst_10 : f32 to vector<128x32xf32>
    %11 = arith.mulf %10, %9 : vector<128x32xf32>
    %12 = arith.addf %8, %11 : vector<128x32xf32>
    %c0_11 = arith.constant 0 : index
    %c0_12 = arith.constant 0 : index
    %13 = vector.load %arg7[%c0_11, %c0_12] : memref<128x32xf32, #tpu.memory_space<vmem>>, vector<128x32xf32>
    tpu.vector_store %arg7[%c0_11, %c0_12], %12 {strides = array<i32>} : memref<128x32xf32, #tpu.memory_space<vmem>>, vector<128x32xf32>,
    %cst_13 = arith.constant 0.699999988 : f32
    %14 = vector.broadcast %cst_13 : f32 to vector<128x32xf32>
    %15 = arith.mulf %14, %12 : vector<128x32xf32>
    %16 = arith.subf %5, %15 : vector<128x32xf32>
    %cst_14 = arith.constant 0.000000e+00 : f32
    %17 = vector.broadcast %cst_14 : f32 to vector<128x32xf32>
    %18 = arith.maximumf %16, %17 : vector<128x32xf32>
    %c0_15 = arith.constant 0 : index
    %c0_16 = arith.constant 0 : index
    %19 = vector.load %arg6[%c0_15, %c0_16] : memref<128x32xf32, #tpu.memory_space<vmem>>, vector<128x32xf32>
    tpu.vector_store %arg6[%c0_15, %c0_16], %18 {strides = array<i32>} : memref<128x32xf32, #tpu.memory_space<vmem>>, vector<128x32xf32>,
    return
  }
  func.func @transform_0(%arg0: i32) -> (i32, i32) {
    %c0_i32 = arith.constant 0 : i32
    %c0_i32_0 = arith.constant 0 : i32
    return %arg0, %c0_i32 : i32, i32
  }
  func.func @transform_1(%arg0: i32) -> (i32, i32) {
    %c0_i32 = arith.constant 0 : i32
    %c0_i32_0 = arith.constant 0 : i32
    %c0_i32_1 = arith.constant 0 : i32
    return %c0_i32, %c0_i32_0 : i32, i32
  }
  func.func @transform_2(%arg0: i32) -> (i32, i32) {
    %c0_i32 = arith.constant 0 : i32
    %c0_i32_0 = arith.constant 0 : i32
    %c0_i32_1 = arith.constant 0 : i32
    return %c0_i32, %c0_i32_0 : i32, i32
  }
  func.func @transform_3(%arg0: i32) -> (i32, i32) {
    %c0_i32 = arith.constant 0 : i32
    %c0_i32_0 = arith.constant 0 : i32
    return %arg0, %c0_i32 : i32, i32
  }
  func.func @transform_4(%arg0: i32) -> (i32, i32) {
    %c0_i32 = arith.constant 0 : i32
    %c0_i32_0 = arith.constant 0 : i32
    return %arg0, %c0_i32 : i32, i32
  }
  func.func @transform_5(%arg0: i32) -> (i32, i32) {
    %c0_i32 = arith.constant 0 : i32
    %c0_i32_0 = arith.constant 0 : i32
    return %arg0, %c0_i32 : i32, i32
  }
  func.func @transform_6(%arg0: i32) -> (i32, i32) {
    %c0_i32 = arith.constant 0 : i32
    %c0_i32_0 = arith.constant 0 : i32
    return %arg0, %c0_i32 : i32, i32
  }
}

module attributes {stable_mosaic.version = 11 : i64} {
  func.func @_mm_decay_kernel(%arg0: i32, %arg1: memref<8x288xbf16, #tpu.memory_space<vmem>>, %arg2: memref<288x32xbf16, #tpu.memory_space<vmem>>, %arg3: memref<1x32xf32, #tpu.memory_space<vmem>>, %arg4: memref<8x32xf32, #tpu.memory_space<vmem>>, %arg5: memref<8x32xf32, #tpu.memory_space<vmem>>, %arg6: memref<8x32xf32, #tpu.memory_space<vmem>>, %arg7: memref<8x32xf32, #tpu.memory_space<vmem>>) attributes {dimension_semantics = [#tpu.dimension_semantics<parallel>], iteration_bounds = array<i64: 1>, scalar_prefetch = 0 : i64, scratch_operands = 0 : i64, tpu.core_type = #tpu.core_type<tc>, window_params = [{transform_indices = @transform_0, window_bounds = array<i64: 8, 288>}, {pipeline_mode = #tpu.pipeline_mode<synchronous>, transform_indices = @transform_1, window_bounds = array<i64: 288, 32>}, {pipeline_mode = #tpu.pipeline_mode<synchronous>, transform_indices = @transform_2, window_bounds = array<i64: 1, 32>}, {transform_indices = @transform_3, window_bounds = array<i64: 8, 32>}, {transform_indices = @transform_4, window_bounds = array<i64: 8, 32>}, {transform_indices = @transform_5, window_bounds = array<i64: 8, 32>}, {transform_indices = @transform_6, window_bounds = array<i64: 8, 32>}]} {
    %c0 = arith.constant 0 : index
    %c0_0 = arith.constant 0 : index
    %0 = vector.load %arg1[%c0, %c0_0] : memref<8x288xbf16, #tpu.memory_space<vmem>>, vector<8x288xbf16>
    %c0_1 = arith.constant 0 : index
    %c0_2 = arith.constant 0 : index
    %1 = vector.load %arg2[%c0_1, %c0_2] : memref<288x32xbf16, #tpu.memory_space<vmem>>, vector<288x32xbf16>
    %cst = arith.constant dense<0.000000e+00> : vector<8x32xf32>
    %2 = tpu.matmul %0, %1, %cst {dimension_numbers = #tpu.dot_dimension_numbers<[1], [0], [0], [1], [0, 0, 1, 1], [], []>} : vector<8x288xbf16>, vector<288x32xbf16>, vector<8x32xf32> -> vector<8x32xf32>
    %c0_3 = arith.constant 0 : index
    %c0_4 = arith.constant 0 : index
    %3 = vector.load %arg3[%c0_3, %c0_4] : memref<1x32xf32, #tpu.memory_space<vmem>>, vector<1x32xf32>
    %4 = vector.broadcast %3 : vector<1x32xf32> to vector<8x32xf32>
    %5 = arith.addf %2, %4 : vector<8x32xf32>
    %c0_5 = arith.constant 0 : index
    %c0_6 = arith.constant 0 : index
    %6 = vector.load %arg5[%c0_5, %c0_6] : memref<8x32xf32, #tpu.memory_space<vmem>>, vector<8x32xf32>
    %cst_7 = arith.constant 0.959999978 : f32
    %7 = vector.broadcast %cst_7 : f32 to vector<8x32xf32>
    %8 = arith.mulf %7, %6 : vector<8x32xf32>
    %c0_8 = arith.constant 0 : index
    %c0_9 = arith.constant 0 : index
    %9 = vector.load %arg4[%c0_8, %c0_9] : memref<8x32xf32, #tpu.memory_space<vmem>>, vector<8x32xf32>
    %cst_10 = arith.constant 4.000000e-02 : f32
    %10 = vector.broadcast %cst_10 : f32 to vector<8x32xf32>
    %11 = arith.mulf %10, %9 : vector<8x32xf32>
    %12 = arith.addf %8, %11 : vector<8x32xf32>
    %c0_11 = arith.constant 0 : index
    %c0_12 = arith.constant 0 : index
    %13 = vector.load %arg7[%c0_11, %c0_12] : memref<8x32xf32, #tpu.memory_space<vmem>>, vector<8x32xf32>
    tpu.vector_store %arg7[%c0_11, %c0_12], %12 {strides = array<i32>} : memref<8x32xf32, #tpu.memory_space<vmem>>, vector<8x32xf32>,
    %cst_13 = arith.constant 0.699999988 : f32
    %14 = vector.broadcast %cst_13 : f32 to vector<8x32xf32>
    %15 = arith.mulf %14, %12 : vector<8x32xf32>
    %16 = arith.subf %5, %15 : vector<8x32xf32>
    %cst_14 = arith.constant 0.000000e+00 : f32
    %17 = vector.broadcast %cst_14 : f32 to vector<8x32xf32>
    %18 = arith.maximumf %16, %17 : vector<8x32xf32>
    %c0_15 = arith.constant 0 : index
    %c0_16 = arith.constant 0 : index
    %19 = vector.load %arg6[%c0_15, %c0_16] : memref<8x32xf32, #tpu.memory_space<vmem>>, vector<8x32xf32>
    tpu.vector_store %arg6[%c0_15, %c0_16], %18 {strides = array<i32>} : memref<8x32xf32, #tpu.memory_space<vmem>>, vector<8x32xf32>,
    return
  }
  func.func @transform_0(%arg0: i32) -> (i32, i32) {
    %c0_i32 = arith.constant 0 : i32
    %c0_i32_0 = arith.constant 0 : i32
    return %arg0, %c0_i32 : i32, i32
  }
  func.func @transform_1(%arg0: i32) -> (i32, i32) {
    %c0_i32 = arith.constant 0 : i32
    %c0_i32_0 = arith.constant 0 : i32
    %c0_i32_1 = arith.constant 0 : i32
    return %c0_i32, %c0_i32_0 : i32, i32
  }
  func.func @transform_2(%arg0: i32) -> (i32, i32) {
    %c0_i32 = arith.constant 0 : i32
    %c0_i32_0 = arith.constant 0 : i32
    %c0_i32_1 = arith.constant 0 : i32
    return %c0_i32, %c0_i32_0 : i32, i32
  }
  func.func @transform_3(%arg0: i32) -> (i32, i32) {
    %c0_i32 = arith.constant 0 : i32
    %c0_i32_0 = arith.constant 0 : i32
    return %arg0, %c0_i32 : i32, i32
  }
  func.func @transform_4(%arg0: i32) -> (i32, i32) {
    %c0_i32 = arith.constant 0 : i32
    %c0_i32_0 = arith.constant 0 : i32
    return %arg0, %c0_i32 : i32, i32
  }
  func.func @transform_5(%arg0: i32) -> (i32, i32) {
    %c0_i32 = arith.constant 0 : i32
    %c0_i32_0 = arith.constant 0 : i32
    return %arg0, %c0_i32 : i32, i32
  }
  func.func @transform_6(%arg0: i32) -> (i32, i32) {
    %c0_i32 = arith.constant 0 : i32
    %c0_i32_0 = arith.constant 0 : i32
    return %arg0, %c0_i32 : i32, i32
  }
}

module attributes {stable_mosaic.version = 11 : i64} {
  func.func @_mm_decay_decoder_kernel(%arg0: memref<2x128xbf16, #tpu.memory_space<vmem>>, %arg1: memref<128x1024xbf16, #tpu.memory_space<vmem>>, %arg2: memref<1x1024xf32, #tpu.memory_space<vmem>>, %arg3: memref<2x1024xf32, #tpu.memory_space<vmem>>, %arg4: memref<2x1024xf32, #tpu.memory_space<vmem>>, %arg5: memref<1024x10xbf16, #tpu.memory_space<vmem>>, %arg6: memref<1x10xf32, #tpu.memory_space<vmem>>, %arg7: memref<2x1024xf32, #tpu.memory_space<vmem>>, %arg8: memref<2x1024xf32, #tpu.memory_space<vmem>>, %arg9: memref<2x10xf32, #tpu.memory_space<vmem>>) attributes {dimension_semantics = [], scalar_prefetch = 0 : i64, scratch_operands = 0 : i64, tpu.core_type = #tpu.core_type<tc>} {
    %c0 = arith.constant 0 : index
    %c0_0 = arith.constant 0 : index
    %0 = vector.load %arg0[%c0, %c0_0] : memref<2x128xbf16, #tpu.memory_space<vmem>>, vector<2x128xbf16>
    %c0_1 = arith.constant 0 : index
    %c0_2 = arith.constant 0 : index
    %1 = vector.load %arg1[%c0_1, %c0_2] : memref<128x1024xbf16, #tpu.memory_space<vmem>>, vector<128x1024xbf16>
    %cst = arith.constant dense<0.000000e+00> : vector<2x1024xf32>
    %2 = tpu.matmul %0, %1, %cst {dimension_numbers = #tpu.dot_dimension_numbers<[1], [0], [0], [1], [0, 0, 1, 1], [], []>} : vector<2x128xbf16>, vector<128x1024xbf16>, vector<2x1024xf32> -> vector<2x1024xf32>
    %c0_3 = arith.constant 0 : index
    %c0_4 = arith.constant 0 : index
    %3 = vector.load %arg2[%c0_3, %c0_4] : memref<1x1024xf32, #tpu.memory_space<vmem>>, vector<1x1024xf32>
    %4 = vector.broadcast %3 : vector<1x1024xf32> to vector<2x1024xf32>
    %5 = arith.addf %2, %4 : vector<2x1024xf32>
    %c0_5 = arith.constant 0 : index
    %c0_6 = arith.constant 0 : index
    %6 = vector.load %arg4[%c0_5, %c0_6] : memref<2x1024xf32, #tpu.memory_space<vmem>>, vector<2x1024xf32>
    %cst_7 = arith.constant 0.959999978 : f32
    %7 = vector.broadcast %cst_7 : f32 to vector<2x1024xf32>
    %8 = arith.mulf %7, %6 : vector<2x1024xf32>
    %c0_8 = arith.constant 0 : index
    %c0_9 = arith.constant 0 : index
    %9 = vector.load %arg3[%c0_8, %c0_9] : memref<2x1024xf32, #tpu.memory_space<vmem>>, vector<2x1024xf32>
    %cst_10 = arith.constant 4.000000e-02 : f32
    %10 = vector.broadcast %cst_10 : f32 to vector<2x1024xf32>
    %11 = arith.mulf %10, %9 : vector<2x1024xf32>
    %12 = arith.addf %8, %11 : vector<2x1024xf32>
    %c0_11 = arith.constant 0 : index
    %c0_12 = arith.constant 0 : index
    %13 = vector.load %arg8[%c0_11, %c0_12] : memref<2x1024xf32, #tpu.memory_space<vmem>>, vector<2x1024xf32>
    tpu.vector_store %arg8[%c0_11, %c0_12], %12 {strides = array<i32>} : memref<2x1024xf32, #tpu.memory_space<vmem>>, vector<2x1024xf32>,
    %cst_13 = arith.constant 0.699999988 : f32
    %14 = vector.broadcast %cst_13 : f32 to vector<2x1024xf32>
    %15 = arith.mulf %14, %12 : vector<2x1024xf32>
    %16 = arith.subf %5, %15 : vector<2x1024xf32>
    %c0_14 = arith.constant 0 : index
    %c0_15 = arith.constant 0 : index
    %17 = vector.load %arg7[%c0_14, %c0_15] : memref<2x1024xf32, #tpu.memory_space<vmem>>, vector<2x1024xf32>
    tpu.vector_store %arg7[%c0_14, %c0_15], %16 {strides = array<i32>} : memref<2x1024xf32, #tpu.memory_space<vmem>>, vector<2x1024xf32>,
    %18 = arith.truncf %16 : vector<2x1024xf32> to vector<2x1024xbf16>
    %c0_16 = arith.constant 0 : index
    %c0_17 = arith.constant 0 : index
    %19 = vector.load %arg5[%c0_16, %c0_17] : memref<1024x10xbf16, #tpu.memory_space<vmem>>, vector<1024x10xbf16>
    %cst_18 = arith.constant dense<0.000000e+00> : vector<2x10xf32>
    %20 = tpu.matmul %18, %19, %cst_18 {dimension_numbers = #tpu.dot_dimension_numbers<[1], [0], [0], [1], [0, 0, 1, 1], [], []>} : vector<2x1024xbf16>, vector<1024x10xbf16>, vector<2x10xf32> -> vector<2x10xf32>
    %c0_19 = arith.constant 0 : index
    %c0_20 = arith.constant 0 : index
    %21 = vector.load %arg6[%c0_19, %c0_20] : memref<1x10xf32, #tpu.memory_space<vmem>>, vector<1x10xf32>
    %22 = vector.broadcast %21 : vector<1x10xf32> to vector<2x10xf32>
    %23 = arith.addf %20, %22 : vector<2x10xf32>
    %c0_21 = arith.constant 0 : index
    %c0_22 = arith.constant 0 : index
    %24 = vector.load %arg9[%c0_21, %c0_22] : memref<2x10xf32, #tpu.memory_space<vmem>>, vector<2x10xf32>
    tpu.vector_store %arg9[%c0_21, %c0_22], %23 {strides = array<i32>} : memref<2x10xf32, #tpu.memory_space<vmem>>, vector<2x10xf32>,
    return
  }
}

</mosaic_0001>

<llo_original>
// kernel: forward.12
$region0: #{forward.12}
  #allocation0 [shape = 'u32[]', space=smem, size = 0x4, offset = 0x4, fixed_abs, tag = 'smem constant byte address 0x4 - core index']
  #allocation1 [shape = 'u32[144,128]{1,0:T(1,128)}', space=vmem, size = 0x12000, scoped, tag = 'internal scratch']
  %s0 = inlined_call_operand.vmem [shape: bf16[3456,32], index: 0, kind: input, shape index: {}]
  %s1 = inlined_call_operand.vmem [shape: bf16[32,32], index: 1, kind: input, shape index: {}]
  %s2 = inlined_call_operand.vmem [shape: f32[1,32], index: 2, kind: input, shape index: {}]
  %s3 = inlined_call_operand.vmem [shape: f32[3456,32], index: 3, kind: output, shape index: {}]
  %s4 = sld [smem:[#allocation0]]
  $region45: #{forward.12} parent=0
    _
  %s6 = ssub.s32 1, %s4
  %s7 = scalar_select 0, %s6, %s4
  loop: start=0, step=1, limit=6
  $region2: #{forward.12} parent=0 // loop_pre_header
    _
  $region3: #{forward.12} parent=0 // loop_header
    %s9 = sphi 0, %s13
    %p10 = scmp.ge.s32.totalorder %s9, 6
    %s19 = sphi 0, %s21
    %s22 = sphi 0, %s19
    %s23 = sphi 0, %s22
    %s39 = sphi 0, %s23
    %s43 = sphi 0, %s43
    %s45 = sphi 0, %s43
    %s46 = sphi 0, %s45
    %s60 = sphi 0, %s46
    %s64 = sphi 0, %s64
    %s66 = sphi 0, %s64
    %s67 = sphi 0, %s66
    %s81 = sphi 0, %s67
    %s87 = sphi 0, %s89
    %s90 = sphi 0, %s87
    %s91 = sphi 0, %s90
    %s107 = sphi 0, %s91
  $region4: #{forward.12} parent=0 // loop_header_branch
    %12 = sbr.rel (%p10) target = $region8
  $region5: #{forward.12} parent=0 // loop_body
    %s14 = ssub.s32 %s9, 1
    %s15 = ssub.s32 %s9, 2
    %s16 = sadd.s32 %s9, 1
    %s17 = ssub.s32 %s9, %s16
    %p18 = scmp.eq.s32.totalorder %s17, 0
    %s20 = sadd.s32 %s19, 1
    %s21 = scalar_select %p18, %s19, %s20
    %p24 = pneg %p18
    %p25 = scmp.eq.s32.totalorder %s9, 3
    %p26 = por %p24, %p25
    %p27 = scmp.ne.s32.totalorder %s19, %s22
    %p28 = scmp.eq.s32.totalorder %s9, 0
    %p29 = por %p27, %p28
    %p30 = scmp.ne.s32.totalorder %s19, %s22
    %p31 = scmp.eq.s32.totalorder %s14, 3
    %p32 = por %p30, %p31
    %p33 = scmp.ne.s32.totalorder %s22, %s23
    %p34 = scmp.eq.s32.totalorder %s14, 0
    %p35 = por %p33, %p34
    %p36 = scmp.ne.s32.totalorder %s22, %s23
    %p37 = scmp.eq.s32.totalorder %s15, 3
    %p38 = por %p36, %p37
    %p40 = scmp.ne.s32.totalorder %s23, %s39
    %p41 = scmp.eq.s32.totalorder %s15, 0
    %p42 = por %p40, %p41
    %s44 = sadd.s32 %s43, 1
    %p47 = scmp.eq.s32.totalorder %s9, 3
    %p48 = scmp.ne.s32.totalorder %s43, %s45
    %p49 = scmp.eq.s32.totalorder %s9, 0
    %p50 = por %p48, %p49
    %p51 = scmp.ne.s32.totalorder %s43, %s45
    %p52 = scmp.eq.s32.totalorder %s14, 3
    %p53 = por %p51, %p52
    %p54 = scmp.ne.s32.totalorder %s45, %s46
    %p55 = scmp.eq.s32.totalorder %s14, 0
    %p56 = por %p54, %p55
    %p57 = scmp.ne.s32.totalorder %s45, %s46
    %p58 = scmp.eq.s32.totalorder %s15, 3
    %p59 = por %p57, %p58
    %p61 = scmp.ne.s32.totalorder %s46, %s60
    %p62 = scmp.eq.s32.totalorder %s15, 0
    %p63 = por %p61, %p62
    %s65 = sadd.s32 %s64, 1
    %p68 = scmp.eq.s32.totalorder %s9, 3
    %p69 = scmp.ne.s32.totalorder %s64, %s66
    %p70 = scmp.eq.s32.totalorder %s9, 0
    %p71 = por %p69, %p70
    %p72 = scmp.ne.s32.totalorder %s64, %s66
    %p73 = scmp.eq.s32.totalorder %s14, 3
    %p74 = por %p72, %p73
    %p75 = scmp.ne.s32.totalorder %s66, %s67
    %p76 = scmp.eq.s32.totalorder %s14, 0
    %p77 = por %p75, %p76
    %p78 = scmp.ne.s32.totalorder %s66, %s67
    %p79 = scmp.eq.s32.totalorder %s15, 3
    %p80 = por %p78, %p79
    %p82 = scmp.ne.s32.totalorder %s67, %s81
    %p83 = scmp.eq.s32.totalorder %s15, 0
    %p84 = por %p82, %p83
    %s85 = ssub.s32 %s9, %s16
    %p86 = scmp.eq.s32.totalorder %s85, 0
    %s88 = sadd.s32 %s87, 1
    %s89 = scalar_select %p86, %s87, %s88
    %p92 = pneg %p86
    %p93 = scmp.eq.s32.totalorder %s9, 3
    %p94 = por %p92, %p93
    %p95 = scmp.ne.s32.totalorder %s87, %s90
    %p96 = scmp.eq.s32.totalorder %s9, 0
    %p97 = por %p95, %p96
    %p98 = scmp.ne.s32.totalorder %s87, %s90
    %p99 = scmp.eq.s32.totalorder %s14, 3
    %p100 = por %p98, %p99
    %p101 = scmp.ne.s32.totalorder %s90, %s91
    %p102 = scmp.eq.s32.totalorder %s14, 0
    %p103 = por %p101, %p102
    %p104 = scmp.ne.s32.totalorder %s90, %s91
    %p105 = scmp.eq.s32.totalorder %s15, 3
    %p106 = por %p104, %p105
    %p108 = scmp.ne.s32.totalorder %s91, %s107
    %p109 = scmp.eq.s32.totalorder %s15, 0
    %p110 = por %p108, %p109
    %p111 = scmp.le.s32.totalorder 1, %s9
    %p112 = scmp.lt.s32.totalorder %s9, 5
    %p113 = pnand %p111, %p112
    %p114 = pneg %p113
    // Predicated region
    $region9: #{forward.12} parent=5 // pred_check
      _
    $region10: #{forward.12} parent=5 // pred_check_branch
      %116 = sbr.rel (%p113) target = $region12
    $region11: #{forward.12} parent=5 // pred_region
      %s117 = ssub.s32 %s9, 1
      // Predicated region
      $region13: #{forward.12} parent=11 // pred_check
        %p118 = pneg %p56
      $region14: #{forward.12} parent=11 // pred_check_branch
        %120 = sbr.rel (%p118) target = $region16
      $region15: #{forward.12} parent=11 // pred_region
        _
      $region16: #{forward.12} parent=11 // pred_fallthru
        _
      // Predicated region
      $region17: #{forward.12} parent=11 // pred_check
        %p121 = pneg %p77
      $region18: #{forward.12} parent=11 // pred_check_branch
        %123 = sbr.rel (%p121) target = $region20
      $region19: #{forward.12} parent=11 // pred_region
        _
      $region20: #{forward.12} parent=11 // pred_fallthru
        _
    $region12: #{forward.12} parent=5 // pred_fallthru
      _
    %p124 = scmp.lt.s32.totalorder %s9, 4
    // Predicated region
    $region21: #{forward.12} parent=5 // pred_check
      %p125 = pneg %p124
    $region22: #{forward.12} parent=5 // pred_check_branch
      %127 = sbr.rel (%p125) target = $region24
    $region23: #{forward.12} parent=5 // pred_region
      // Predicated region
      $region25: #{forward.12} parent=23 // pred_check
        %p128 = pneg %p29
      $region26: #{forward.12} parent=23 // pred_check_branch
        %130 = sbr.rel (%p128) target = $region28
      $region27: #{forward.12} parent=23 // pred_region
        %s131 = smul.u32 108, %s9
        %p132 = scmp.lt.s32.totalorder %s131, 431
        %s133 = scalar_select %p132, %s131, 431
        %s134 = smul.addr %s133, 4
        %s135 = scalar_lea.vmem %s0, %s134
        %s136 = smul.u32 108, %s9
      $region28: #{forward.12} parent=23 // pred_fallthru
        _
    $region24: #{forward.12} parent=5 // pred_fallthru
      _
    %p137 = scmp.le.s32.totalorder 1, %s9
    %p138 = scmp.lt.s32.totalorder %s9, 5
    %p139 = pnand %p137, %p138
    %p140 = pneg %p139
    // Predicated region
    $region29: #{forward.12} parent=5 // pred_check
      _
    $region30: #{forward.12} parent=5 // pred_check_branch
      %142 = sbr.rel (%p139) target = $region32
    $region31: #{forward.12} parent=5 // pred_region
      %s143 = ssub.s32 %s9, 1
      %s144 = smul.u32 108, %s14
      %p145 = scmp.lt.s32.totalorder %s144, 431
      %s146 = scalar_select %p145, %s144, 431
      %s147 = smul.addr %s146, 4
      %s148 = scalar_lea.vmem %s0, %s147
      %p149 = pneg %p35
      %p150 = pneg %p32
      %p151 = pneg %p56
      %p152 = pneg %p53
      %p153 = pneg %p77
      %p154 = pneg %p74
      %p155 = pneg %p103
      %p156 = pneg %p100
      %s157 = smul.u32 108, %s14
      %p158 = scmp.lt.s32.totalorder %s157, 431
      %s159 = scalar_select %p158, %s157, 431
      %s160 = smul.addr %s159, 8
      %s161 = scalar_lea.vmem %s3, %s160
      %s162 = smul.u32 108, %s14
      %p163 = scmp.lt.s32.totalorder %s162, 431
      %s164 = scalar_select %p163, %s162, 431
      %s165 = smul.addr %s164, 4
      %s166 = scalar_lea.vmem %s0, %s165
      %s167 = smul.u32 108, %s14
      %s168 = smul.u32 108, %s14
      %p169 = scmp.lt.s32.totalorder %s168, 431
      %s170 = scalar_select %p169, %s168, 431
      %s171 = smul.addr %s170, 8
      %s172 = scalar_lea.vmem %s3, %s171
      %s173 = smul.u32 108, %s14
      %v175 = vld [vmem:[%s166] sm:$0xf]
      %v176 = vld [vmem:[%s166 + $0x4] sm:$0xf]
      %v177 = vld [vmem:[%s166 + $0x8] sm:$0xf]
      %v178 = vld [vmem:[%s166 + $0xc] sm:$0xf]
      %v179 = vld [vmem:[%s166 + $0x10] sm:$0xf]
      %v180 = vld [vmem:[%s166 + $0x14] sm:$0xf]
      %v181 = vld [vmem:[%s166 + $0x18] sm:$0xf]
      %v182 = vld [vmem:[%s166 + $0x1c] sm:$0xf]
      %v183 = vld [vmem:[%s166 + $0x20] sm:$0xf]
      %v184 = vld [vmem:[%s166 + $0x24] sm:$0xf]
      %v185 = vld [vmem:[%s166 + $0x28] sm:$0xf]
      %v186 = vld [vmem:[%s166 + $0x2c] sm:$0xf]
      %v187 = vld [vmem:[%s166 + $0x30] sm:$0xf]
      %v188 = vld [vmem:[%s166 + $0x34] sm:$0xf]
      %v189 = vld [vmem:[%s166 + $0x38] sm:$0xf]
      %v190 = vld [vmem:[%s166 + $0x3c] sm:$0xf]
      %v191 = vld [vmem:[%s166 + $0x40] sm:$0xf]
      %v192 = vld [vmem:[%s166 + $0x44] sm:$0xf]
      %v193 = vld [vmem:[%s166 + $0x48] sm:$0xf]
      %v194 = vld [vmem:[%s166 + $0x4c] sm:$0xf]
      %v195 = vld [vmem:[%s166 + $0x50] sm:$0xf]
      %v196 = vld [vmem:[%s166 + $0x54] sm:$0xf]
      %v197 = vld [vmem:[%s166 + $0x58] sm:$0xf]
      %v198 = vld [vmem:[%s166 + $0x5c] sm:$0xf]
      %v199 = vld [vmem:[%s166 + $0x60] sm:$0xf]
      %v200 = vld [vmem:[%s166 + $0x64] sm:$0xf]
      %v201 = vld [vmem:[%s166 + $0x68] sm:$0xf]
      %v202 = vld [vmem:[%s166 + $0x6c] sm:$0xf]
      %v203 = vld [vmem:[%s166 + $0x70] sm:$0xf]
      %v204 = vld [vmem:[%s166 + $0x74] sm:$0xf]
      %v205 = vld [vmem:[%s166 + $0x78] sm:$0xf]
      %v206 = vld [vmem:[%s166 + $0x7c] sm:$0xf]
      %v207 = vld [vmem:[%s166 + $0x80] sm:$0xf]
      %v208 = vld [vmem:[%s166 + $0x84] sm:$0xf]
      %v209 = vld [vmem:[%s166 + $0x88] sm:$0xf]
      %v210 = vld [vmem:[%s166 + $0x8c] sm:$0xf]
      %v211 = vld [vmem:[%s166 + $0x90] sm:$0xf]
      %v212 = vld [vmem:[%s166 + $0x94] sm:$0xf]
      %v213 = vld [vmem:[%s166 + $0x98] sm:$0xf]
      %v214 = vld [vmem:[%s166 + $0x9c] sm:$0xf]
      %v215 = vld [vmem:[%s166 + $0xa0] sm:$0xf]
      %v216 = vld [vmem:[%s166 + $0xa4] sm:$0xf]
      %v217 = vld [vmem:[%s166 + $0xa8] sm:$0xf]
      %v218 = vld [vmem:[%s166 + $0xac] sm:$0xf]
      %v219 = vld [vmem:[%s166 + $0xb0] sm:$0xf]
      %v220 = vld [vmem:[%s166 + $0xb4] sm:$0xf]
      %v221 = vld [vmem:[%s166 + $0xb8] sm:$0xf]
      %v222 = vld [vmem:[%s166 + $0xbc] sm:$0xf]
      %v223 = vld [vmem:[%s166 + $0xc0] sm:$0xf]
      %v224 = vld [vmem:[%s166 + $0xc4] sm:$0xf]
      %v225 = vld [vmem:[%s166 + $0xc8] sm:$0xf]
      %v226 = vld [vmem:[%s166 + $0xcc] sm:$0xf]
      %v227 = vld [vmem:[%s166 + $0xd0] sm:$0xf]
      %v228 = vld [vmem:[%s166 + $0xd4] sm:$0xf]
      %v229 = vld [vmem:[%s166 + $0xd8] sm:$0xf]
      %v230 = vld [vmem:[%s166 + $0xdc] sm:$0xf]
      %v231 = vld [vmem:[%s166 + $0xe0] sm:$0xf]
      %v232 = vld [vmem:[%s166 + $0xe4] sm:$0xf]
      %v233 = vld [vmem:[%s166 + $0xe8] sm:$0xf]
      %v234 = vld [vmem:[%s166 + $0xec] sm:$0xf]
      %v235 = vld [vmem:[%s166 + $0xf0] sm:$0xf]
      %v236 = vld [vmem:[%s166 + $0xf4] sm:$0xf]
      %v237 = vld [vmem:[%s166 + $0xf8] sm:$0xf]
      %v238 = vld [vmem:[%s166 + $0xfc] sm:$0xf]
      %v239 = vld [vmem:[%s166 + $0x100] sm:$0xf]
      %v240 = vld [vmem:[%s166 + $0x104] sm:$0xf]
      %v241 = vld [vmem:[%s166 + $0x108] sm:$0xf]
      %v242 = vld [vmem:[%s166 + $0x10c] sm:$0xf]
      %v243 = vld [vmem:[%s166 + $0x110] sm:$0xf]
      %v244 = vld [vmem:[%s166 + $0x114] sm:$0xf]
      %v245 = vld [vmem:[%s166 + $0x118] sm:$0xf]
      %v246 = vld [vmem:[%s166 + $0x11c] sm:$0xf]
      %v247 = vld [vmem:[%s166 + $0x120] sm:$0xf]
      %v248 = vld [vmem:[%s166 + $0x124] sm:$0xf]
      %v249 = vld [vmem:[%s166 + $0x128] sm:$0xf]
      %v250 = vld [vmem:[%s166 + $0x12c] sm:$0xf]
      %v251 = vld [vmem:[%s166 + $0x130] sm:$0xf]
      %v252 = vld [vmem:[%s166 + $0x134] sm:$0xf]
      %v253 = vld [vmem:[%s166 + $0x138] sm:$0xf]
      %v254 = vld [vmem:[%s166 + $0x13c] sm:$0xf]
      %v255 = vld [vmem:[%s166 + $0x140] sm:$0xf]
      %v256 = vld [vmem:[%s166 + $0x144] sm:$0xf]
      %v257 = vld [vmem:[%s166 + $0x148] sm:$0xf]
      %v258 = vld [vmem:[%s166 + $0x14c] sm:$0xf]
      %v259 = vld [vmem:[%s166 + $0x150] sm:$0xf]
      %v260 = vld [vmem:[%s166 + $0x154] sm:$0xf]
      %v261 = vld [vmem:[%s166 + $0x158] sm:$0xf]
      %v262 = vld [vmem:[%s166 + $0x15c] sm:$0xf]
      %v263 = vld [vmem:[%s166 + $0x160] sm:$0xf]
      %v264 = vld [vmem:[%s166 + $0x164] sm:$0xf]
      %v265 = vld [vmem:[%s166 + $0x168] sm:$0xf]
      %v266 = vld [vmem:[%s166 + $0x16c] sm:$0xf]
      %v267 = vld [vmem:[%s166 + $0x170] sm:$0xf]
      %v268 = vld [vmem:[%s166 + $0x174] sm:$0xf]
      %v269 = vld [vmem:[%s166 + $0x178] sm:$0xf]
      %v270 = vld [vmem:[%s166 + $0x17c] sm:$0xf]
      %v271 = vld [vmem:[%s166 + $0x180] sm:$0xf]
      %v272 = vld [vmem:[%s166 + $0x184] sm:$0xf]
      %v273 = vld [vmem:[%s166 + $0x188] sm:$0xf]
      %v274 = vld [vmem:[%s166 + $0x18c] sm:$0xf]
      %v275 = vld [vmem:[%s166 + $0x190] sm:$0xf]
      %v276 = vld [vmem:[%s166 + $0x194] sm:$0xf]
      %v277 = vld [vmem:[%s166 + $0x198] sm:$0xf]
      %v278 = vld [vmem:[%s166 + $0x19c] sm:$0xf]
      %v279 = vld [vmem:[%s166 + $0x1a0] sm:$0xf]
      %v280 = vld [vmem:[%s166 + $0x1a4] sm:$0xf]
      %v281 = vld [vmem:[%s166 + $0x1a8] sm:$0xf]
      %v282 = vld [vmem:[%s166 + $0x1ac] sm:$0xf]
      %v283 = vld [vmem:[%s1] sm:$0xf]
      %v284 = vld [vmem:[%s1 + $0x4] sm:$0xf]
      %v285 = vld [vmem:[%s1 + $0x8] sm:$0xf]
      %v286 = vld [vmem:[%s1 + $0xc] sm:$0xf]
      %v287 = vld [vmem:[%s2] sm:$0x1]
      %v289 = vlaneseq
      %v290 = vshrl.u32 %v289, 7
      %v291 = vsub.s32 0, %v290
      %v292 = vrot.slane %v287, %v291
      %v402 = vunpack.c.l.b16 %v175
      %v403 = vunpack.c.l.b16 %v176
      %v404 = vunpack.c.l.b16 %v177
      %v405 = vunpack.c.l.b16 %v178
      %v406 = vunpack.c.l.b16 %v179
      %v407 = vunpack.c.l.b16 %v180
      %v408 = vunpack.c.l.b16 %v181
      %v409 = vunpack.c.l.b16 %v182
      %v410 = vunpack.c.l.b16 %v183
      %v411 = vunpack.c.l.b16 %v184
      %v412 = vunpack.c.l.b16 %v185
      %v413 = vunpack.c.l.b16 %v186
      %v414 = vunpack.c.l.b16 %v187
      %v415 = vunpack.c.l.b16 %v188
      %v416 = vunpack.c.l.b16 %v189
      %v417 = vunpack.c.l.b16 %v190
      %v418 = vunpack.c.l.b16 %v191
      %v419 = vunpack.c.l.b16 %v192
      %v420 = vunpack.c.l.b16 %v193
      %v421 = vunpack.c.l.b16 %v194
      %v422 = vunpack.c.l.b16 %v195
      %v423 = vunpack.c.l.b16 %v196
      %v424 = vunpack.c.l.b16 %v197
      %v425 = vunpack.c.l.b16 %v198
      %v426 = vunpack.c.l.b16 %v199
      %v427 = vunpack.c.l.b16 %v200
      %v428 = vunpack.c.l.b16 %v201
      %v429 = vunpack.c.l.b16 %v202
      %v430 = vunpack.c.l.b16 %v203
      %v431 = vunpack.c.l.b16 %v204
      %v432 = vunpack.c.l.b16 %v205
      %v433 = vunpack.c.l.b16 %v206
      %v434 = vunpack.c.l.b16 %v207
      %v435 = vunpack.c.l.b16 %v208
      %v436 = vunpack.c.l.b16 %v209
      %v437 = vunpack.c.l.b16 %v210
      %v438 = vunpack.c.l.b16 %v211
      %v439 = vunpack.c.l.b16 %v212
      %v440 = vunpack.c.l.b16 %v213
      %v441 = vunpack.c.l.b16 %v214
      %v442 = vunpack.c.l.b16 %v215
      %v443 = vunpack.c.l.b16 %v216
      %v444 = vunpack.c.l.b16 %v217
      %v445 = vunpack.c.l.b16 %v218
      %v446 = vunpack.c.l.b16 %v219
      %v447 = vunpack.c.l.b16 %v220
      %v448 = vunpack.c.l.b16 %v221
      %v449 = vunpack.c.l.b16 %v222
      %v450 = vunpack.c.l.b16 %v223
      %v451 = vunpack.c.l.b16 %v224
      %v452 = vunpack.c.l.b16 %v225
      %v453 = vunpack.c.l.b16 %v226
      %v454 = vunpack.c.l.b16 %v227
      %v455 = vunpack.c.l.b16 %v228
      %v456 = vunpack.c.l.b16 %v229
      %v457 = vunpack.c.l.b16 %v230
      %v458 = vunpack.c.l.b16 %v231
      %v459 = vunpack.c.l.b16 %v232
      %v460 = vunpack.c.l.b16 %v233
      %v461 = vunpack.c.l.b16 %v234
      %v462 = vunpack.c.l.b16 %v235
      %v463 = vunpack.c.l.b16 %v236
      %v464 = vunpack.c.l.b16 %v237
      %v465 = vunpack.c.l.b16 %v238
      %v466 = vunpack.c.l.b16 %v239
      %v467 = vunpack.c.l.b16 %v240
      %v468 = vunpack.c.l.b16 %v241
      %v469 = vunpack.c.l.b16 %v242
      %v470 = vunpack.c.l.b16 %v243
      %v471 = vunpack.c.l.b16 %v244
      %v472 = vunpack.c.l.b16 %v245
      %v473 = vunpack.c.l.b16 %v246
      %v474 = vunpack.c.l.b16 %v247
      %v475 = vunpack.c.l.b16 %v248
      %v476 = vunpack.c.l.b16 %v249
      %v477 = vunpack.c.l.b16 %v250
      %v478 = vunpack.c.l.b16 %v251
      %v479 = vunpack.c.l.b16 %v252
      %v480 = vunpack.c.l.b16 %v253
      %v481 = vunpack.c.l.b16 %v254
      %v482 = vunpack.c.l.b16 %v255
      %v483 = vunpack.c.l.b16 %v256
      %v484 = vunpack.c.l.b16 %v257
      %v485 = vunpack.c.l.b16 %v258
      %v486 = vunpack.c.l.b16 %v259
      %v487 = vunpack.c.l.b16 %v260
      %v488 = vunpack.c.l.b16 %v261
      %v489 = vunpack.c.l.b16 %v262
      %v490 = vunpack.c.l.b16 %v263
      %v491 = vunpack.c.l.b16 %v264
      %v492 = vunpack.c.l.b16 %v265
      %v493 = vunpack.c.l.b16 %v266
      %v494 = vunpack.c.l.b16 %v267
      %v495 = vunpack.c.l.b16 %v268
      %v496 = vunpack.c.l.b16 %v269
      %v497 = vunpack.c.l.b16 %v270
      %v498 = vunpack.c.l.b16 %v271
      %v499 = vunpack.c.l.b16 %v272
      %v500 = vunpack.c.l.b16 %v273
      %v501 = vunpack.c.l.b16 %v274
      %v502 = vunpack.c.l.b16 %v275
      %v503 = vunpack.c.l.b16 %v276
      %v504 = vunpack.c.l.b16 %v277
      %v505 = vunpack.c.l.b16 %v278
      %v506 = vunpack.c.l.b16 %v279
      %v507 = vunpack.c.l.b16 %v280
      %v508 = vunpack.c.l.b16 %v281
      %v509 = vunpack.c.l.b16 %v282
      %v510 = vpack.c.b16 %v403, %v402
      %v511 = vpack.c.b16 %v405, %v404
      %v512 = vpack.c.b16 %v407, %v406
      %v513 = vpack.c.b16 %v409, %v408
      %v514 = vpack.c.b16 %v411, %v410
      %v515 = vpack.c.b16 %v413, %v412
      %v516 = vpack.c.b16 %v415, %v414
      %v517 = vpack.c.b16 %v417, %v416
      %v518 = vpack.c.b16 %v419, %v418
      %v519 = vpack.c.b16 %v421, %v420
      %v520 = vpack.c.b16 %v423, %v422
      %v521 = vpack.c.b16 %v425, %v424
      %v522 = vpack.c.b16 %v427, %v426
      %v523 = vpack.c.b16 %v429, %v428
      %v524 = vpack.c.b16 %v431, %v430
      %v525 = vpack.c.b16 %v433, %v432
      %v526 = vpack.c.b16 %v435, %v434
      %v527 = vpack.c.b16 %v437, %v436
      %v528 = vpack.c.b16 %v439, %v438
      %v529 = vpack.c.b16 %v441, %v440
      %v530 = vpack.c.b16 %v443, %v442
      %v531 = vpack.c.b16 %v445, %v444
      %v532 = vpack.c.b16 %v447, %v446
      %v533 = vpack.c.b16 %v449, %v448
      %v534 = vpack.c.b16 %v451, %v450
      %v535 = vpack.c.b16 %v453, %v452
      %v536 = vpack.c.b16 %v455, %v454
      %v537 = vpack.c.b16 %v457, %v456
      %v538 = vpack.c.b16 %v459, %v458
      %v539 = vpack.c.b16 %v461, %v460
      %v540 = vpack.c.b16 %v463, %v462
      %v541 = vpack.c.b16 %v465, %v464
      %v542 = vpack.c.b16 %v467, %v466
      %v543 = vpack.c.b16 %v469, %v468
      %v544 = vpack.c.b16 %v471, %v470
      %v545 = vpack.c.b16 %v473, %v472
      %v546 = vpack.c.b16 %v475, %v474
      %v547 = vpack.c.b16 %v477, %v476
      %v548 = vpack.c.b16 %v479, %v478
      %v549 = vpack.c.b16 %v481, %v480
      %v550 = vpack.c.b16 %v483, %v482
      %v551 = vpack.c.b16 %v485, %v484
      %v552 = vpack.c.b16 %v487, %v486
      %v553 = vpack.c.b16 %v489, %v488
      %v554 = vpack.c.b16 %v491, %v490
      %v555 = vpack.c.b16 %v493, %v492
      %v556 = vpack.c.b16 %v495, %v494
      %v557 = vpack.c.b16 %v497, %v496
      %v558 = vpack.c.b16 %v499, %v498
      %v559 = vpack.c.b16 %v501, %v500
      %v560 = vpack.c.b16 %v503, %v502
      %v561 = vpack.c.b16 %v505, %v504
      %v562 = vpack.c.b16 %v507, %v506
      %v563 = vpack.c.b16 %v509, %v508
      %v568 = vunpack.c.l.b16 %v283
      %v569 = vunpack.c.l.b16 %v284
      %v570 = vunpack.c.l.b16 %v285
      %v571 = vunpack.c.l.b16 %v286
      %v572 = vpack.c.b16 %v569, %v568
      %v573 = vpack.c.b16 %v571, %v570
      %vm576 = vcmask 261120
      %v578 = vsel %vm576, %v510, 0
      %v581 = vsel %vm576, %v511, 0
      %v584 = vsel %vm576, %v512, 0
      %v587 = vsel %vm576, %v513, 0
      %v590 = vsel %vm576, %v514, 0
      %v593 = vsel %vm576, %v515, 0
      %v596 = vsel %vm576, %v516, 0
      %v599 = vsel %vm576, %v517, 0
      %v602 = vsel %vm576, %v518, 0
      %v605 = vsel %vm576, %v519, 0
      %v608 = vsel %vm576, %v520, 0
      %v611 = vsel %vm576, %v521, 0
      %v614 = vsel %vm576, %v522, 0
      %v617 = vsel %vm576, %v523, 0
      %v620 = vsel %vm576, %v524, 0
      %v623 = vsel %vm576, %v525, 0
      %v626 = vsel %vm576, %v526, 0
      %v629 = vsel %vm576, %v527, 0
      %v632 = vsel %vm576, %v528, 0
      %v635 = vsel %vm576, %v529, 0
      %v638 = vsel %vm576, %v530, 0
      %v641 = vsel %vm576, %v531, 0
      %v644 = vsel %vm576, %v532, 0
      %v647 = vsel %vm576, %v533, 0
      %v650 = vsel %vm576, %v534, 0
      %v653 = vsel %vm576, %v535, 0
      %v656 = vsel %vm576, %v536, 0
      %v659 = vsel %vm576, %v537, 0
      %v662 = vsel %vm576, %v538, 0
      %v665 = vsel %vm576, %v539, 0
      %v668 = vsel %vm576, %v540, 0
      %v671 = vsel %vm576, %v541, 0
      %v674 = vsel %vm576, %v542, 0
      %v677 = vsel %vm576, %v543, 0
      %v680 = vsel %vm576, %v544, 0
      %v683 = vsel %vm576, %v545, 0
      %v686 = vsel %vm576, %v546, 0
      %v689 = vsel %vm576, %v547, 0
      %v692 = vsel %vm576, %v548, 0
      %v695 = vsel %vm576, %v549, 0
      %v698 = vsel %vm576, %v550, 0
      %v701 = vsel %vm576, %v551, 0
      %v704 = vsel %vm576, %v552, 0
      %v707 = vsel %vm576, %v553, 0
      %v710 = vsel %vm576, %v554, 0
      %v713 = vsel %vm576, %v555, 0
      %v716 = vsel %vm576, %v556, 0
      %v719 = vsel %vm576, %v557, 0
      %v722 = vsel %vm576, %v558, 0
      %v725 = vsel %vm576, %v559, 0
      %v728 = vsel %vm576, %v560, 0
      %v731 = vsel %vm576, %v561, 0
      %v734 = vsel %vm576, %v562, 0
      %v737 = vsel %vm576, %v563, 0
      %739 = vmatprep.subr.bf16.mxu0 0
      %740 = vmatpush1.bf16.msra.mxu0 %v572
      %741 = vmatprep.subr.bf16.mxu0 0
      %742 = vmatpush1.bf16.msra.mxu0 %v573
      %743 = vmatprep.subr.bf16.mxu0 0
      %744 = vmatpush1.bf16.msra.mxu0 0
      %745 = vmatprep.subr.bf16.mxu0 0
      %746 = vmatpush1.bf16.msra.mxu0 0
      %747 = vmatprep.subr.bf16.mxu0 0
      %748 = vmatpush1.bf16.msra.mxu0 0
      %749 = vmatprep.subr.bf16.mxu0 0
      %750 = vmatpush1.bf16.msra.mxu0 0
      %751 = vmatprep.subr.bf16.mxu0 0
      %752 = vmatpush1.bf16.msra.mxu0 0
      %753 = vmatprep.subr.bf16.mxu0 0
      %754 = vmatpush1.bf16.msra.mxu0 0
      %755 = vmatprep.subr.bf16.mxu0 0
      %756 = vmatpush1.bf16.msra.mxu0 0
      %757 = vmatprep.subr.bf16.mxu0 0
      %758 = vmatpush1.bf16.msra.mxu0 0
      %759 = vmatprep.subr.bf16.mxu0 0
      %760 = vmatpush1.bf16.msra.mxu0 0
      %761 = vmatprep.subr.bf16.mxu0 0
      %762 = vmatpush1.bf16.msra.mxu0 0
      %763 = vmatprep.subr.bf16.mxu0 0
      %764 = vmatpush1.bf16.msra.mxu0 0
      %765 = vmatprep.subr.bf16.mxu0 0
      %766 = vmatpush1.bf16.msra.mxu0 0
      %767 = vmatprep.subr.bf16.mxu0 0
      %768 = vmatpush1.bf16.msra.mxu0 0
      %769 = vmatprep.subr.bf16.mxu0 0
      %770 = vmatpush1.bf16.msra.mxu0 0
      %771 = vmatprep.mubr.bf16.mxu0 0
      %772 = vmatmul.mubr.bf16.gmra.mrb[0].mxu0 %v578
      %v773 = vpop.f32.mrb[0].mxu0
      %v774 = vadd.f32 %v292, %v773
      %v775 = vpop.f32.mrb[0].mxu0
      %v776 = vpop.f32.mrb[0].mxu0
      %v777 = vadd.f32 %v292, %v776
      %v778 = vpop.f32.mrb[0].mxu0
      %779 = vmatprep.mubr.bf16.mxu0 0
      %780 = vmatmul.mubr.bf16.gmra.mrb[0].mxu0 %v581
      %v781 = vpop.f32.mrb[0].mxu0
      %v782 = vadd.f32 %v292, %v781
      %v783 = vpop.f32.mrb[0].mxu0
      %v784 = vpop.f32.mrb[0].mxu0
      %v785 = vadd.f32 %v292, %v784
      %v786 = vpop.f32.mrb[0].mxu0
      %787 = vmatprep.mubr.bf16.mxu0 0
      %788 = vmatmul.mubr.bf16.gmra.mrb[0].mxu0 %v584
      %v789 = vpop.f32.mrb[0].mxu0
      %v790 = vadd.f32 %v292, %v789
      %v791 = vpop.f32.mrb[0].mxu0
      %v792 = vpop.f32.mrb[0].mxu0
      %v793 = vadd.f32 %v292, %v792
      %v794 = vpop.f32.mrb[0].mxu0
      %795 = vmatprep.mubr.bf16.mxu0 0
      %796 = vmatmul.mubr.bf16.gmra.mrb[0].mxu0 %v587
      %v797 = vpop.f32.mrb[0].mxu0
      %v798 = vadd.f32 %v292, %v797
      %v799 = vpop.f32.mrb[0].mxu0
      %v800 = vpop.f32.mrb[0].mxu0
      %v801 = vadd.f32 %v292, %v800
      %v802 = vpop.f32.mrb[0].mxu0
      %803 = vmatprep.mubr.bf16.mxu0 0
      %804 = vmatmul.mubr.bf16.gmra.mrb[0].mxu0 %v590
      %v805 = vpop.f32.mrb[0].mxu0
      %v806 = vadd.f32 %v292, %v805
      %v807 = vpop.f32.mrb[0].mxu0
      %v808 = vpop.f32.mrb[0].mxu0
      %v809 = vadd.f32 %v292, %v808
      %v810 = vpop.f32.mrb[0].mxu0
      %811 = vmatprep.mubr.bf16.mxu0 0
      %812 = vmatmul.mubr.bf16.gmra.mrb[0].mxu0 %v593
      %v813 = vpop.f32.mrb[0].mxu0
      %v814 = vadd.f32 %v292, %v813
      %v815 = vpop.f32.mrb[0].mxu0
      %v816 = vpop.f32.mrb[0].mxu0
      %v817 = vadd.f32 %v292, %v816
      %v818 = vpop.f32.mrb[0].mxu0
      %819 = vmatprep.mubr.bf16.mxu0 0
      %820 = vmatmul.mubr.bf16.gmra.mrb[0].mxu0 %v596
      %v821 = vpop.f32.mrb[0].mxu0
      %v822 = vadd.f32 %v292, %v821
      %v823 = vpop.f32.mrb[0].mxu0
      %v824 = vpop.f32.mrb[0].mxu0
      %v825 = vadd.f32 %v292, %v824
      %v826 = vpop.f32.mrb[0].mxu0
      %827 = vmatprep.mubr.bf16.mxu0 0
      %828 = vmatmul.mubr.bf16.gmra.mrb[0].mxu0 %v599
      %v829 = vpop.f32.mrb[0].mxu0
      %v830 = vadd.f32 %v292, %v829
      %v831 = vpop.f32.mrb[0].mxu0
      %v832 = vpop.f32.mrb[0].mxu0
      %v833 = vadd.f32 %v292, %v832
      %v834 = vpop.f32.mrb[0].mxu0
      %835 = vmatprep.mubr.bf16.mxu0 0
      %836 = vmatmul.mubr.bf16.gmra.mrb[0].mxu0 %v602
      %v837 = vpop.f32.mrb[0].mxu0
      %v838 = vadd.f32 %v292, %v837
      %v839 = vpop.f32.mrb[0].mxu0
      %v840 = vpop.f32.mrb[0].mxu0
      %v841 = vadd.f32 %v292, %v840
      %v842 = vpop.f32.mrb[0].mxu0
      %843 = vmatprep.mubr.bf16.mxu0 0
      %844 = vmatmul.mubr.bf16.gmra.mrb[0].mxu0 %v605
      %v845 = vpop.f32.mrb[0].mxu0
      %v846 = vadd.f32 %v292, %v845
      %v847 = vpop.f32.mrb[0].mxu0
      %v848 = vpop.f32.mrb[0].mxu0
      %v849 = vadd.f32 %v292, %v848
      %v850 = vpop.f32.mrb[0].mxu0
      %851 = vmatprep.mubr.bf16.mxu0 0
      %852 = vmatmul.mubr.bf16.gmra.mrb[0].mxu0 %v608
      %v853 = vpop.f32.mrb[0].mxu0
      %v854 = vadd.f32 %v292, %v853
      %v855 = vpop.f32.mrb[0].mxu0
      %v856 = vpop.f32.mrb[0].mxu0
      %v857 = vadd.f32 %v292, %v856
      %v858 = vpop.f32.mrb[0].mxu0
      %859 = vmatprep.mubr.bf16.mxu0 0
      %860 = vmatmul.mubr.bf16.gmra.mrb[0].mxu0 %v611
      %v861 = vpop.f32.mrb[0].mxu0
      %v862 = vadd.f32 %v292, %v861
      %v863 = vpop.f32.mrb[0].mxu0
      %v864 = vpop.f32.mrb[0].mxu0
      %v865 = vadd.f32 %v292, %v864
      %v866 = vpop.f32.mrb[0].mxu0
      %867 = vmatprep.mubr.bf16.mxu0 0
      %868 = vmatmul.mubr.bf16.gmra.mrb[0].mxu0 %v614
      %v869 = vpop.f32.mrb[0].mxu0
      %v870 = vadd.f32 %v292, %v869
      %v871 = vpop.f32.mrb[0].mxu0
      %v872 = vpop.f32.mrb[0].mxu0
      %v873 = vadd.f32 %v292, %v872
      %v874 = vpop.f32.mrb[0].mxu0
      %875 = vmatprep.mubr.bf16.mxu0 0
      %876 = vmatmul.mubr.bf16.gmra.mrb[0].mxu0 %v617
      %v877 = vpop.f32.mrb[0].mxu0
      %v878 = vadd.f32 %v292, %v877
      %v879 = vpop.f32.mrb[0].mxu0
      %v880 = vpop.f32.mrb[0].mxu0
      %v881 = vadd.f32 %v292, %v880
      %v882 = vpop.f32.mrb[0].mxu0
      %883 = vmatprep.mubr.bf16.mxu0 0
      %884 = vmatmul.mubr.bf16.gmra.mrb[0].mxu0 %v620
      %v885 = vpop.f32.mrb[0].mxu0
      %v886 = vadd.f32 %v292, %v885
      %v887 = vpop.f32.mrb[0].mxu0
      %v888 = vpop.f32.mrb[0].mxu0
      %v889 = vadd.f32 %v292, %v888
      %v890 = vpop.f32.mrb[0].mxu0
      %891 = vmatprep.mubr.bf16.mxu0 0
      %892 = vmatmul.mubr.bf16.gmra.mrb[0].mxu0 %v623
      %v893 = vpop.f32.mrb[0].mxu0
      %v894 = vadd.f32 %v292, %v893
      %v895 = vpop.f32.mrb[0].mxu0
      %v896 = vpop.f32.mrb[0].mxu0
      %v897 = vadd.f32 %v292, %v896
      %v898 = vpop.f32.mrb[0].mxu0
      %899 = vmatprep.mubr.bf16.mxu0 0
      %900 = vmatmul.mubr.bf16.gmra.mrb[0].mxu0 %v626
      %v901 = vpop.f32.mrb[0].mxu0
      %v902 = vadd.f32 %v292, %v901
      %v903 = vpop.f32.mrb[0].mxu0
      %v904 = vpop.f32.mrb[0].mxu0
      %v905 = vadd.f32 %v292, %v904
      %v906 = vpop.f32.mrb[0].mxu0
      %907 = vmatprep.mubr.bf16.mxu0 0
      %908 = vmatmul.mubr.bf16.gmra.mrb[0].mxu0 %v629
      %v909 = vpop.f32.mrb[0].mxu0
      %v910 = vadd.f32 %v292, %v909
      %v911 = vpop.f32.mrb[0].mxu0
      %v912 = vpop.f32.mrb[0].mxu0
      %v913 = vadd.f32 %v292, %v912
      %v914 = vpop.f32.mrb[0].mxu0
      %915 = vmatprep.mubr.bf16.mxu0 0
      %916 = vmatmul.mubr.bf16.gmra.mrb[0].mxu0 %v632
      %v917 = vpop.f32.mrb[0].mxu0
      %v918 = vadd.f32 %v292, %v917
      %v919 = vpop.f32.mrb[0].mxu0
      %v920 = vpop.f32.mrb[0].mxu0
      %v921 = vadd.f32 %v292, %v920
      %v922 = vpop.f32.mrb[0].mxu0
      %923 = vmatprep.mubr.bf16.mxu0 0
      %924 = vmatmul.mubr.bf16.gmra.mrb[0].mxu0 %v635
      %v925 = vpop.f32.mrb[0].mxu0
      %v926 = vadd.f32 %v292, %v925
      %v927 = vpop.f32.mrb[0].mxu0
      %v928 = vpop.f32.mrb[0].mxu0
      %v929 = vadd.f32 %v292, %v928
      %v930 = vpop.f32.mrb[0].mxu0
      %931 = vmatprep.mubr.bf16.mxu0 0
      %932 = vmatmul.mubr.bf16.gmra.mrb[0].mxu0 %v638
      %v933 = vpop.f32.mrb[0].mxu0
      %v934 = vadd.f32 %v292, %v933
      %v935 = vpop.f32.mrb[0].mxu0
      %v936 = vpop.f32.mrb[0].mxu0
      %v937 = vadd.f32 %v292, %v936
      %v938 = vpop.f32.mrb[0].mxu0
      %939 = vmatprep.mubr.bf16.mxu0 0
      %940 = vmatmul.mubr.bf16.gmra.mrb[0].mxu0 %v641
      %v941 = vpop.f32.mrb[0].mxu0
      %v942 = vadd.f32 %v292, %v941
      %v943 = vpop.f32.mrb[0].mxu0
      %v944 = vpop.f32.mrb[0].mxu0
      %v945 = vadd.f32 %v292, %v944
      %v946 = vpop.f32.mrb[0].mxu0
      %947 = vmatprep.mubr.bf16.mxu0 0
      %948 = vmatmul.mubr.bf16.gmra.mrb[0].mxu0 %v644
      %v949 = vpop.f32.mrb[0].mxu0
      %v950 = vadd.f32 %v292, %v949
      %v951 = vpop.f32.mrb[0].mxu0
      %v952 = vpop.f32.mrb[0].mxu0
      %v953 = vadd.f32 %v292, %v952
      %v954 = vpop.f32.mrb[0].mxu0
      %955 = vmatprep.mubr.bf16.mxu0 0
      %956 = vmatmul.mubr.bf16.gmra.mrb[0].mxu0 %v647
      %v957 = vpop.f32.mrb[0].mxu0
      %v958 = vadd.f32 %v292, %v957
      %v959 = vpop.f32.mrb[0].mxu0
      %v960 = vpop.f32.mrb[0].mxu0
      %v961 = vadd.f32 %v292, %v960
      %v962 = vpop.f32.mrb[0].mxu0
      %963 = vmatprep.mubr.bf16.mxu0 0
      %964 = vmatmul.mubr.bf16.gmra.mrb[0].mxu0 %v650
      %v965 = vpop.f32.mrb[0].mxu0
      %v966 = vadd.f32 %v292, %v965
      %v967 = vpop.f32.mrb[0].mxu0
      %v968 = vpop.f32.mrb[0].mxu0
      %v969 = vadd.f32 %v292, %v968
      %v970 = vpop.f32.mrb[0].mxu0
      %971 = vmatprep.mubr.bf16.mxu0 0
      %972 = vmatmul.mubr.bf16.gmra.mrb[0].mxu0 %v653
      %v973 = vpop.f32.mrb[0].mxu0
      %v974 = vadd.f32 %v292, %v973
      %v975 = vpop.f32.mrb[0].mxu0
      %v976 = vpop.f32.mrb[0].mxu0
      %v977 = vadd.f32 %v292, %v976
      %v978 = vpop.f32.mrb[0].mxu0
      %979 = vmatprep.mubr.bf16.mxu0 0
      %980 = vmatmul.mubr.bf16.gmra.mrb[0].mxu0 %v656
      %v981 = vpop.f32.mrb[0].mxu0
      %v982 = vadd.f32 %v292, %v981
      %v983 = vpop.f32.mrb[0].mxu0
      %v984 = vpop.f32.mrb[0].mxu0
      %v985 = vadd.f32 %v292, %v984
      %v986 = vpop.f32.mrb[0].mxu0
      %987 = vmatprep.mubr.bf16.mxu0 0
      %988 = vmatmul.mubr.bf16.gmra.mrb[0].mxu0 %v659
      %v989 = vpop.f32.mrb[0].mxu0
      %v990 = vadd.f32 %v292, %v989
      %v991 = vpop.f32.mrb[0].mxu0
      %v992 = vpop.f32.mrb[0].mxu0
      %v993 = vadd.f32 %v292, %v992
      %v994 = vpop.f32.mrb[0].mxu0
      %995 = vmatprep.mubr.bf16.mxu0 0
      %996 = vmatmul.mubr.bf16.gmra.mrb[0].mxu0 %v662
      %v997 = vpop.f32.mrb[0].mxu0
      %v998 = vadd.f32 %v292, %v997
      %v999 = vpop.f32.mrb[0].mxu0
      %v1000 = vpop.f32.mrb[0].mxu0
      %v1001 = vadd.f32 %v292, %v1000
      %v1002 = vpop.f32.mrb[0].mxu0
      %1003 = vmatprep.mubr.bf16.mxu0 0
      %1004 = vmatmul.mubr.bf16.gmra.mrb[0].mxu0 %v665
      %v1005 = vpop.f32.mrb[0].mxu0
      %v1006 = vadd.f32 %v292, %v1005
      %v1007 = vpop.f32.mrb[0].mxu0
      %v1008 = vpop.f32.mrb[0].mxu0
      %v1009 = vadd.f32 %v292, %v1008
      %v1010 = vpop.f32.mrb[0].mxu0
      %1011 = vmatprep.mubr.bf16.mxu0 0
      %1012 = vmatmul.mubr.bf16.gmra.mrb[0].mxu0 %v668
      %v1013 = vpop.f32.mrb[0].mxu0
      %v1014 = vadd.f32 %v292, %v1013
      %v1015 = vpop.f32.mrb[0].mxu0
      %v1016 = vpop.f32.mrb[0].mxu0
      %v1017 = vadd.f32 %v292, %v1016
      %v1018 = vpop.f32.mrb[0].mxu0
      %1019 = vmatprep.mubr.bf16.mxu0 0
      %1020 = vmatmul.mubr.bf16.gmra.mrb[0].mxu0 %v671
      %v1021 = vpop.f32.mrb[0].mxu0
      %v1022 = vadd.f32 %v292, %v1021
      %v1023 = vpop.f32.mrb[0].mxu0
      %v1024 = vpop.f32.mrb[0].mxu0
      %v1025 = vadd.f32 %v292, %v1024
      %v1026 = vpop.f32.mrb[0].mxu0
      %1027 = vmatprep.mubr.bf16.mxu0 0
      %1028 = vmatmul.mubr.bf16.gmra.mrb[0].mxu0 %v674
      %v1029 = vpop.f32.mrb[0].mxu0
      %v1030 = vadd.f32 %v292, %v1029
      %v1031 = vpop.f32.mrb[0].mxu0
      %v1032 = vpop.f32.mrb[0].mxu0
      %v1033 = vadd.f32 %v292, %v1032
      %v1034 = vpop.f32.mrb[0].mxu0
      %1035 = vmatprep.mubr.bf16.mxu0 0
      %1036 = vmatmul.mubr.bf16.gmra.mrb[0].mxu0 %v677
      %v1037 = vpop.f32.mrb[0].mxu0
      %v1038 = vadd.f32 %v292, %v1037
      %v1039 = vpop.f32.mrb[0].mxu0
      %v1040 = vpop.f32.mrb[0].mxu0
      %v1041 = vadd.f32 %v292, %v1040
      %v1042 = vpop.f32.mrb[0].mxu0
      %1043 = vmatprep.mubr.bf16.mxu0 0
      %1044 = vmatmul.mubr.bf16.gmra.mrb[0].mxu0 %v680
      %v1045 = vpop.f32.mrb[0].mxu0
      %v1046 = vadd.f32 %v292, %v1045
      %v1047 = vpop.f32.mrb[0].mxu0
      %v1048 = vpop.f32.mrb[0].mxu0
      %v1049 = vadd.f32 %v292, %v1048
      %v1050 = vpop.f32.mrb[0].mxu0
      %1051 = vmatprep.mubr.bf16.mxu0 0
      %1052 = vmatmul.mubr.bf16.gmra.mrb[0].mxu0 %v683
      %v1053 = vpop.f32.mrb[0].mxu0
      %v1054 = vadd.f32 %v292, %v1053
      %v1055 = vpop.f32.mrb[0].mxu0
      %v1056 = vpop.f32.mrb[0].mxu0
      %v1057 = vadd.f32 %v292, %v1056
      %v1058 = vpop.f32.mrb[0].mxu0
      %1059 = vmatprep.mubr.bf16.mxu0 0
      %1060 = vmatmul.mubr.bf16.gmra.mrb[0].mxu0 %v686
      %v1061 = vpop.f32.mrb[0].mxu0
      %v1062 = vadd.f32 %v292, %v1061
      %v1063 = vpop.f32.mrb[0].mxu0
      %v1064 = vpop.f32.mrb[0].mxu0
      %v1065 = vadd.f32 %v292, %v1064
      %v1066 = vpop.f32.mrb[0].mxu0
      %1067 = vmatprep.mubr.bf16.mxu0 0
      %1068 = vmatmul.mubr.bf16.gmra.mrb[0].mxu0 %v689
      %v1069 = vpop.f32.mrb[0].mxu0
      %v1070 = vadd.f32 %v292, %v1069
      %v1071 = vpop.f32.mrb[0].mxu0
      %v1072 = vpop.f32.mrb[0].mxu0
      %v1073 = vadd.f32 %v292, %v1072
      %v1074 = vpop.f32.mrb[0].mxu0
      %1075 = vmatprep.mubr.bf16.mxu0 0
      %1076 = vmatmul.mubr.bf16.gmra.mrb[0].mxu0 %v692
      %v1077 = vpop.f32.mrb[0].mxu0
      %v1078 = vadd.f32 %v292, %v1077
      %v1079 = vpop.f32.mrb[0].mxu0
      %v1080 = vpop.f32.mrb[0].mxu0
      %v1081 = vadd.f32 %v292, %v1080
      %v1082 = vpop.f32.mrb[0].mxu0
      %1083 = vmatprep.mubr.bf16.mxu0 0
      %1084 = vmatmul.mubr.bf16.gmra.mrb[0].mxu0 %v695
      %v1085 = vpop.f32.mrb[0].mxu0
      %v1086 = vadd.f32 %v292, %v1085
      %v1087 = vpop.f32.mrb[0].mxu0
      %v1088 = vpop.f32.mrb[0].mxu0
      %v1089 = vadd.f32 %v292, %v1088
      %v1090 = vpop.f32.mrb[0].mxu0
      %1091 = vmatprep.mubr.bf16.mxu0 0
      %1092 = vmatmul.mubr.bf16.gmra.mrb[0].mxu0 %v698
      %v1093 = vpop.f32.mrb[0].mxu0
      %v1094 = vadd.f32 %v292, %v1093
      %v1095 = vpop.f32.mrb[0].mxu0
      %v1096 = vpop.f32.mrb[0].mxu0
      %v1097 = vadd.f32 %v292, %v1096
      %v1098 = vpop.f32.mrb[0].mxu0
      %1099 = vmatprep.mubr.bf16.mxu0 0
      %1100 = vmatmul.mubr.bf16.gmra.mrb[0].mxu0 %v701
      %v1101 = vpop.f32.mrb[0].mxu0
      %v1102 = vadd.f32 %v292, %v1101
      %v1103 = vpop.f32.mrb[0].mxu0
      %v1104 = vpop.f32.mrb[0].mxu0
      %v1105 = vadd.f32 %v292, %v1104
      %v1106 = vpop.f32.mrb[0].mxu0
      %1107 = vmatprep.mubr.bf16.mxu0 0
      %1108 = vmatmul.mubr.bf16.gmra.mrb[0].mxu0 %v704
      %v1109 = vpop.f32.mrb[0].mxu0
      %v1110 = vadd.f32 %v292, %v1109
      %v1111 = vpop.f32.mrb[0].mxu0
      %v1112 = vpop.f32.mrb[0].mxu0
      %v1113 = vadd.f32 %v292, %v1112
      %v1114 = vpop.f32.mrb[0].mxu0
      %1115 = vmatprep.mubr.bf16.mxu0 0
      %1116 = vmatmul.mubr.bf16.gmra.mrb[0].mxu0 %v707
      %v1117 = vpop.f32.mrb[0].mxu0
      %v1118 = vadd.f32 %v292, %v1117
      %v1119 = vpop.f32.mrb[0].mxu0
      %v1120 = vpop.f32.mrb[0].mxu0
      %v1121 = vadd.f32 %v292, %v1120
      %v1122 = vpop.f32.mrb[0].mxu0
      %1123 = vmatprep.mubr.bf16.mxu0 0
      %1124 = vmatmul.mubr.bf16.gmra.mrb[0].mxu0 %v710
      %v1125 = vpop.f32.mrb[0].mxu0
      %v1126 = vadd.f32 %v292, %v1125
      %v1127 = vpop.f32.mrb[0].mxu0
      %v1128 = vpop.f32.mrb[0].mxu0
      %v1129 = vadd.f32 %v292, %v1128
      %v1130 = vpop.f32.mrb[0].mxu0
      %1131 = vmatprep.mubr.bf16.mxu0 0
      %1132 = vmatmul.mubr.bf16.gmra.mrb[0].mxu0 %v713
      %v1133 = vpop.f32.mrb[0].mxu0
      %v1134 = vadd.f32 %v292, %v1133
      %v1135 = vpop.f32.mrb[0].mxu0
      %v1136 = vpop.f32.mrb[0].mxu0
      %v1137 = vadd.f32 %v292, %v1136
      %v1138 = vpop.f32.mrb[0].mxu0
      %1139 = vmatprep.mubr.bf16.mxu0 0
      %1140 = vmatmul.mubr.bf16.gmra.mrb[0].mxu0 %v716
      %v1141 = vpop.f32.mrb[0].mxu0
      %v1142 = vadd.f32 %v292, %v1141
      %v1143 = vpop.f32.mrb[0].mxu0
      %v1144 = vpop.f32.mrb[0].mxu0
      %v1145 = vadd.f32 %v292, %v1144
      %v1146 = vpop.f32.mrb[0].mxu0
      %1147 = vmatprep.mubr.bf16.mxu0 0
      %1148 = vmatmul.mubr.bf16.gmra.mrb[0].mxu0 %v719
      %v1149 = vpop.f32.mrb[0].mxu0
      %v1150 = vadd.f32 %v292, %v1149
      %v1151 = vpop.f32.mrb[0].mxu0
      %v1152 = vpop.f32.mrb[0].mxu0
      %v1153 = vadd.f32 %v292, %v1152
      %v1154 = vpop.f32.mrb[0].mxu0
      %1155 = vmatprep.mubr.bf16.mxu0 0
      %1156 = vmatmul.mubr.bf16.gmra.mrb[0].mxu0 %v722
      %v1157 = vpop.f32.mrb[0].mxu0
      %v1158 = vadd.f32 %v292, %v1157
      %v1159 = vpop.f32.mrb[0].mxu0
      %v1160 = vpop.f32.mrb[0].mxu0
      %v1161 = vadd.f32 %v292, %v1160
      %v1162 = vpop.f32.mrb[0].mxu0
      %1163 = vmatprep.mubr.bf16.mxu0 0
      %1164 = vmatmul.mubr.bf16.gmra.mrb[0].mxu0 %v725
      %v1165 = vpop.f32.mrb[0].mxu0
      %v1166 = vadd.f32 %v292, %v1165
      %v1167 = vpop.f32.mrb[0].mxu0
      %v1168 = vpop.f32.mrb[0].mxu0
      %v1169 = vadd.f32 %v292, %v1168
      %v1170 = vpop.f32.mrb[0].mxu0
      %1171 = vmatprep.mubr.bf16.mxu0 0
      %1172 = vmatmul.mubr.bf16.gmra.mrb[0].mxu0 %v728
      %v1173 = vpop.f32.mrb[0].mxu0
      %v1174 = vadd.f32 %v292, %v1173
      %v1175 = vpop.f32.mrb[0].mxu0
      %v1176 = vpop.f32.mrb[0].mxu0
      %v1177 = vadd.f32 %v292, %v1176
      %v1178 = vpop.f32.mrb[0].mxu0
      %1179 = vmatprep.mubr.bf16.mxu0 0
      %1180 = vmatmul.mubr.bf16.gmra.mrb[0].mxu0 %v731
      %v1181 = vpop.f32.mrb[0].mxu0
      %v1182 = vadd.f32 %v292, %v1181
      %v1183 = vpop.f32.mrb[0].mxu0
      %v1184 = vpop.f32.mrb[0].mxu0
      %v1185 = vadd.f32 %v292, %v1184
      %v1186 = vpop.f32.mrb[0].mxu0
      %1187 = vmatprep.mubr.bf16.mxu0 0
      %1188 = vmatmul.mubr.bf16.gmra.mrb[0].mxu0 %v734
      %v1189 = vpop.f32.mrb[0].mxu0
      %v1190 = vadd.f32 %v292, %v1189
      %v1191 = vpop.f32.mrb[0].mxu0
      %v1192 = vpop.f32.mrb[0].mxu0
      %v1193 = vadd.f32 %v292, %v1192
      %v1194 = vpop.f32.mrb[0].mxu0
      %1195 = vmatprep.mubr.bf16.mxu0 0
      %1196 = vmatmul.mubr.bf16.gmra.mrb[0].mxu0 %v737
      %v1197 = vpop.f32.mrb[0].mxu0
      %v1198 = vadd.f32 %v292, %v1197
      %v1199 = vpop.f32.mrb[0].mxu0
      %v1200 = vpop.f32.mrb[0].mxu0
      %v1201 = vadd.f32 %v292, %v1200
      %v1202 = vpop.f32.mrb[0].mxu0
      %1203 = vdwg.mxu0
      %1204 = vst.msk [vmem:[%s172] sm:$0xff] %vm576, %v774
      %1205 = vst.msk [vmem:[%s172 + $0x8] sm:$0xff] %vm576, %v777
      %1206 = vst.msk [vmem:[%s172 + $0x10] sm:$0xff] %vm576, %v782
      %1207 = vst.msk [vmem:[%s172 + $0x18] sm:$0xff] %vm576, %v785
      %1208 = vst.msk [vmem:[%s172 + $0x20] sm:$0xff] %vm576, %v790
      %1209 = vst.msk [vmem:[%s172 + $0x28] sm:$0xff] %vm576, %v793
      %1210 = vst.msk [vmem:[%s172 + $0x30] sm:$0xff] %vm576, %v798
      %1211 = vst.msk [vmem:[%s172 + $0x38] sm:$0xff] %vm576, %v801
      %1212 = vst.msk [vmem:[%s172 + $0x40] sm:$0xff] %vm576, %v806
      %1213 = vst.msk [vmem:[%s172 + $0x48] sm:$0xff] %vm576, %v809
      %1214 = vst.msk [vmem:[%s172 + $0x50] sm:$0xff] %vm576, %v814
      %1215 = vst.msk [vmem:[%s172 + $0x58] sm:$0xff] %vm576, %v817
      %1216 = vst.msk [vmem:[%s172 + $0x60] sm:$0xff] %vm576, %v822
      %1217 = vst.msk [vmem:[%s172 + $0x68] sm:$0xff] %vm576, %v825
      %1218 = vst.msk [vmem:[%s172 + $0x70] sm:$0xff] %vm576, %v830
      %1219 = vst.msk [vmem:[%s172 + $0x78] sm:$0xff] %vm576, %v833
      %1220 = vst.msk [vmem:[%s172 + $0x80] sm:$0xff] %vm576, %v838
      %1221 = vst.msk [vmem:[%s172 + $0x88] sm:$0xff] %vm576, %v841
      %1222 = vst.msk [vmem:[%s172 + $0x90] sm:$0xff] %vm576, %v846
      %1223 = vst.msk [vmem:[%s172 + $0x98] sm:$0xff] %vm576, %v849
      %1224 = vst.msk [vmem:[%s172 + $0xa0] sm:$0xff] %vm576, %v854
      %1225 = vst.msk [vmem:[%s172 + $0xa8] sm:$0xff] %vm576, %v857
      %1226 = vst.msk [vmem:[%s172 + $0xb0] sm:$0xff] %vm576, %v862
      %1227 = vst.msk [vmem:[%s172 + $0xb8] sm:$0xff] %vm576, %v865
      %1228 = vst.msk [vmem:[%s172 + $0xc0] sm:$0xff] %vm576, %v870
      %1229 = vst.msk [vmem:[%s172 + $0xc8] sm:$0xff] %vm576, %v873
      %1230 = vst.msk [vmem:[%s172 + $0xd0] sm:$0xff] %vm576, %v878
      %1231 = vst.msk [vmem:[%s172 + $0xd8] sm:$0xff] %vm576, %v881
      %1232 = vst.msk [vmem:[%s172 + $0xe0] sm:$0xff] %vm576, %v886
      %1233 = vst.msk [vmem:[%s172 + $0xe8] sm:$0xff] %vm576, %v889
      %1234 = vst.msk [vmem:[%s172 + $0xf0] sm:$0xff] %vm576, %v894
      %1235 = vst.msk [vmem:[%s172 + $0xf8] sm:$0xff] %vm576, %v897
      %1236 = vst.msk [vmem:[%s172 + $0x100] sm:$0xff] %vm576, %v902
      %1237 = vst.msk [vmem:[%s172 + $0x108] sm:$0xff] %vm576, %v905
      %1238 = vst.msk [vmem:[%s172 + $0x110] sm:$0xff] %vm576, %v910
      %1239 = vst.msk [vmem:[%s172 + $0x118] sm:$0xff] %vm576, %v913
      %1240 = vst.msk [vmem:[%s172 + $0x120] sm:$0xff] %vm576, %v918
      %1241 = vst.msk [vmem:[%s172 + $0x128] sm:$0xff] %vm576, %v921
      %1242 = vst.msk [vmem:[%s172 + $0x130] sm:$0xff] %vm576, %v926
      %1243 = vst.msk [vmem:[%s172 + $0x138] sm:$0xff] %vm576, %v929
      %1244 = vst.msk [vmem:[%s172 + $0x140] sm:$0xff] %vm576, %v934
      %1245 = vst.msk [vmem:[%s172 + $0x148] sm:$0xff] %vm576, %v937
      %1246 = vst.msk [vmem:[%s172 + $0x150] sm:$0xff] %vm576, %v942
      %1247 = vst.msk [vmem:[%s172 + $0x158] sm:$0xff] %vm576, %v945
      %1248 = vst.msk [vmem:[%s172 + $0x160] sm:$0xff] %vm576, %v950
      %1249 = vst.msk [vmem:[%s172 + $0x168] sm:$0xff] %vm576, %v953
      %1250 = vst.msk [vmem:[%s172 + $0x170] sm:$0xff] %vm576, %v958
      %1251 = vst.msk [vmem:[%s172 + $0x178] sm:$0xff] %vm576, %v961
      %1252 = vst.msk [vmem:[%s172 + $0x180] sm:$0xff] %vm576, %v966
      %1253 = vst.msk [vmem:[%s172 + $0x188] sm:$0xff] %vm576, %v969
      %1254 = vst.msk [vmem:[%s172 + $0x190] sm:$0xff] %vm576, %v974
      %1255 = vst.msk [vmem:[%s172 + $0x198] sm:$0xff] %vm576, %v977
      %1256 = vst.msk [vmem:[%s172 + $0x1a0] sm:$0xff] %vm576, %v982
      %1257 = vst.msk [vmem:[%s172 + $0x1a8] sm:$0xff] %vm576, %v985
      %1258 = vst.msk [vmem:[%s172 + $0x1b0] sm:$0xff] %vm576, %v990
      %1259 = vst.msk [vmem:[%s172 + $0x1b8] sm:$0xff] %vm576, %v993
      %1260 = vst.msk [vmem:[%s172 + $0x1c0] sm:$0xff] %vm576, %v998
      %1261 = vst.msk [vmem:[%s172 + $0x1c8] sm:$0xff] %vm576, %v1001
      %1262 = vst.msk [vmem:[%s172 + $0x1d0] sm:$0xff] %vm576, %v1006
      %1263 = vst.msk [vmem:[%s172 + $0x1d8] sm:$0xff] %vm576, %v1009
      %1264 = vst.msk [vmem:[%s172 + $0x1e0] sm:$0xff] %vm576, %v1014
      %1265 = vst.msk [vmem:[%s172 + $0x1e8] sm:$0xff] %vm576, %v1017
      %1266 = vst.msk [vmem:[%s172 + $0x1f0] sm:$0xff] %vm576, %v1022
      %1267 = vst.msk [vmem:[%s172 + $0x1f8] sm:$0xff] %vm576, %v1025
      %1268 = vst.msk [vmem:[%s172 + $0x200] sm:$0xff] %vm576, %v1030
      %1269 = vst.msk [vmem:[%s172 + $0x208] sm:$0xff] %vm576, %v1033
      %1270 = vst.msk [vmem:[%s172 + $0x210] sm:$0xff] %vm576, %v1038
      %1271 = vst.msk [vmem:[%s172 + $0x218] sm:$0xff] %vm576, %v1041
      %1272 = vst.msk [vmem:[%s172 + $0x220] sm:$0xff] %vm576, %v1046
      %1273 = vst.msk [vmem:[%s172 + $0x228] sm:$0xff] %vm576, %v1049
      %1274 = vst.msk [vmem:[%s172 + $0x230] sm:$0xff] %vm576, %v1054
      %1275 = vst.msk [vmem:[%s172 + $0x238] sm:$0xff] %vm576, %v1057
      %1276 = vst.msk [vmem:[%s172 + $0x240] sm:$0xff] %vm576, %v1062
      %1277 = vst.msk [vmem:[%s172 + $0x248] sm:$0xff] %vm576, %v1065
      %1278 = vst.msk [vmem:[%s172 + $0x250] sm:$0xff] %vm576, %v1070
      %1279 = vst.msk [vmem:[%s172 + $0x258] sm:$0xff] %vm576, %v1073
      %1280 = vst.msk [vmem:[%s172 + $0x260] sm:$0xff] %vm576, %v1078
      %1281 = vst.msk [vmem:[%s172 + $0x268] sm:$0xff] %vm576, %v1081
      %1282 = vst.msk [vmem:[%s172 + $0x270] sm:$0xff] %vm576, %v1086
      %1283 = vst.msk [vmem:[%s172 + $0x278] sm:$0xff] %vm576, %v1089
      %1284 = vst.msk [vmem:[%s172 + $0x280] sm:$0xff] %vm576, %v1094
      %1285 = vst.msk [vmem:[%s172 + $0x288] sm:$0xff] %vm576, %v1097
      %1286 = vst.msk [vmem:[%s172 + $0x290] sm:$0xff] %vm576, %v1102
      %1287 = vst.msk [vmem:[%s172 + $0x298] sm:$0xff] %vm576, %v1105
      %1288 = vst.msk [vmem:[%s172 + $0x2a0] sm:$0xff] %vm576, %v1110
      %1289 = vst.msk [vmem:[%s172 + $0x2a8] sm:$0xff] %vm576, %v1113
      %1290 = vst.msk [vmem:[%s172 + $0x2b0] sm:$0xff] %vm576, %v1118
      %1291 = vst.msk [vmem:[%s172 + $0x2b8] sm:$0xff] %vm576, %v1121
      %1292 = vst.msk [vmem:[%s172 + $0x2c0] sm:$0xff] %vm576, %v1126
      %1293 = vst.msk [vmem:[%s172 + $0x2c8] sm:$0xff] %vm576, %v1129
      %1294 = vst.msk [vmem:[%s172 + $0x2d0] sm:$0xff] %vm576, %v1134
      %1295 = vst.msk [vmem:[%s172 + $0x2d8] sm:$0xff] %vm576, %v1137
      %1296 = vst.msk [vmem:[%s172 + $0x2e0] sm:$0xff] %vm576, %v1142
      %1297 = vst.msk [vmem:[%s172 + $0x2e8] sm:$0xff] %vm576, %v1145
      %1298 = vst.msk [vmem:[%s172 + $0x2f0] sm:$0xff] %vm576, %v1150
      %1299 = vst.msk [vmem:[%s172 + $0x2f8] sm:$0xff] %vm576, %v1153
      %1300 = vst.msk [vmem:[%s172 + $0x300] sm:$0xff] %vm576, %v1158
      %1301 = vst.msk [vmem:[%s172 + $0x308] sm:$0xff] %vm576, %v1161
      %1302 = vst.msk [vmem:[%s172 + $0x310] sm:$0xff] %vm576, %v1166
      %1303 = vst.msk [vmem:[%s172 + $0x318] sm:$0xff] %vm576, %v1169
      %1304 = vst.msk [vmem:[%s172 + $0x320] sm:$0xff] %vm576, %v1174
      %1305 = vst.msk [vmem:[%s172 + $0x328] sm:$0xff] %vm576, %v1177
      %1306 = vst.msk [vmem:[%s172 + $0x330] sm:$0xff] %vm576, %v1182
      %1307 = vst.msk [vmem:[%s172 + $0x338] sm:$0xff] %vm576, %v1185
      %1308 = vst.msk [vmem:[%s172 + $0x340] sm:$0xff] %vm576, %v1190
      %1309 = vst.msk [vmem:[%s172 + $0x348] sm:$0xff] %vm576, %v1193
      %1310 = vst.msk [vmem:[%s172 + $0x350] sm:$0xff] %vm576, %v1198
      %1311 = vst.msk [vmem:[%s172 + $0x358] sm:$0xff] %vm576, %v1201
      %s1312 = smul.u32 108, %s14
      %p1313 = scmp.lt.s32.totalorder %s1312, 431
      %s1314 = scalar_select %p1313, %s1312, 431
      %s1315 = smul.addr %s1314, 8
      %s1316 = scalar_lea.vmem %s3, %s1315
      // Predicated region
      $region33: #{forward.12} parent=31 // pred_check
        %p1317 = pneg %p100
      $region34: #{forward.12} parent=31 // pred_check_branch
        %1319 = sbr.rel (%p1317) target = $region36
      $region35: #{forward.12} parent=31 // pred_region
        %s1320 = smul.u32 108, %s14
      $region36: #{forward.12} parent=31 // pred_fallthru
        _
    $region32: #{forward.12} parent=5 // pred_fallthru
      _
    %p1321 = scmp.le.s32.totalorder 2, %s9
    // Predicated region
    $region37: #{forward.12} parent=5 // pred_check
      %p1322 = pneg %p1321
    $region38: #{forward.12} parent=5 // pred_check_branch
      %1324 = sbr.rel (%p1322) target = $region40
    $region39: #{forward.12} parent=5 // pred_region
      %s1325 = ssub.s32 %s9, 2
      // Predicated region
      $region41: #{forward.12} parent=39 // pred_check
        %p1326 = pneg %p106
      $region42: #{forward.12} parent=39 // pred_check_branch
        %1328 = sbr.rel (%p1326) target = $region44
      $region43: #{forward.12} parent=39 // pred_region
        %s1329 = smul.u32 108, %s15
        %p1330 = scmp.lt.s32.totalorder %s1329, 431
        %s1331 = scalar_select %p1330, %s1329, 431
        %s1332 = smul.addr %s1331, 8
        %s1333 = scalar_lea.vmem %s3, %s1332
      $region44: #{forward.12} parent=39 // pred_fallthru
        _
    $region40: #{forward.12} parent=5 // pred_fallthru
      _
  $region6: #{forward.12} parent=0 // loop_footer
    %s13 = sadd.s32 1, %s9
  $region7: #{forward.12} parent=0 // loop_footer_branch
    %8 = sbr.rel target = $region3
  $region8: #{forward.12} parent=0 // loop_exit
    _

// kernel: forward.16
$region0: #{forward.16}
  #allocation0 [shape = 'u32[]', space=smem, size = 0x4, offset = 0x4, fixed_abs, tag = 'smem constant byte address 0x4 - core index']
  #allocation1 [shape = 'u32[144,128]{1,0:T(1,128)}', space=vmem, size = 0x12000, scoped, tag = 'internal scratch']
  %s0 = inlined_call_operand.vmem [shape: f32[1152,32], index: 0, kind: input, shape index: {}]
  %s1 = inlined_call_operand.vmem [shape: f32[1152,32], index: 1, kind: input, shape index: {}]
  %s2 = inlined_call_operand.vmem [shape: f32[1152,32], index: 2, kind: input, shape index: {}]
  %s3 = inlined_call_operand.vmem [shape: f32[1152,32], index: 3, kind: output, shape index: {0}]
  %s4 = inlined_call_operand.vmem [shape: f32[1152,32], index: 4, kind: output, shape index: {1}]
  %5 = xla_tuple %s3, %s4
  %s6 = sld [smem:[#allocation0]]
  $region30: #{forward.16} parent=0
    _
  %s8 = ssub.s32 1, %s6
  %s9 = scalar_select 0, %s8, %s6
  // Predicated region
  $region2: #{forward.16} parent=0 // pred_check
    _
  $region3: #{forward.16} parent=0 // pred_check_branch
    %11 = sbr.rel (0) target = $region5
  $region4: #{forward.16} parent=0 // pred_region
    _
  $region5: #{forward.16} parent=0 // pred_fallthru
    _
  // Predicated region
  $region6: #{forward.16} parent=0 // pred_check
    _
  $region7: #{forward.16} parent=0 // pred_check_branch
    %13 = sbr.rel (0) target = $region9
  $region8: #{forward.16} parent=0 // pred_region
    _
  $region9: #{forward.16} parent=0 // pred_fallthru
    _
  // Predicated region
  $region10: #{forward.16} parent=0 // pred_check
    _
  $region11: #{forward.16} parent=0 // pred_check_branch
    %15 = sbr.rel (0) target = $region13
  $region12: #{forward.16} parent=0 // pred_region
    _
  $region13: #{forward.16} parent=0 // pred_fallthru
    _
  %v16 = vld [vmem:[%s2] sm:$0xff]
  %v17 = vld [vmem:[%s2 + $0x8] sm:$0xff]
  %v18 = vld [vmem:[%s2 + $0x10] sm:$0xff]
  %v19 = vld [vmem:[%s2 + $0x18] sm:$0xff]
  %v20 = vld [vmem:[%s2 + $0x20] sm:$0xff]
  %v21 = vld [vmem:[%s2 + $0x28] sm:$0xff]
  %v22 = vld [vmem:[%s2 + $0x30] sm:$0xff]
  %v23 = vld [vmem:[%s2 + $0x38] sm:$0xff]
  %v24 = vld [vmem:[%s2 + $0x40] sm:$0xff]
  %v25 = vld [vmem:[%s2 + $0x48] sm:$0xff]
  %v26 = vld [vmem:[%s2 + $0x50] sm:$0xff]
  %v27 = vld [vmem:[%s2 + $0x58] sm:$0xff]
  %v28 = vld [vmem:[%s2 + $0x60] sm:$0xff]
  %v29 = vld [vmem:[%s2 + $0x68] sm:$0xff]
  %v30 = vld [vmem:[%s2 + $0x70] sm:$0xff]
  %v31 = vld [vmem:[%s2 + $0x78] sm:$0xff]
  %v32 = vld [vmem:[%s2 + $0x80] sm:$0xff]
  %v33 = vld [vmem:[%s2 + $0x88] sm:$0xff]
  %v34 = vld [vmem:[%s2 + $0x90] sm:$0xff]
  %v35 = vld [vmem:[%s2 + $0x98] sm:$0xff]
  %v36 = vld [vmem:[%s2 + $0xa0] sm:$0xff]
  %v37 = vld [vmem:[%s2 + $0xa8] sm:$0xff]
  %v38 = vld [vmem:[%s2 + $0xb0] sm:$0xff]
  %v39 = vld [vmem:[%s2 + $0xb8] sm:$0xff]
  %v40 = vld [vmem:[%s2 + $0xc0] sm:$0xff]
  %v41 = vld [vmem:[%s2 + $0xc8] sm:$0xff]
  %v42 = vld [vmem:[%s2 + $0xd0] sm:$0xff]
  %v43 = vld [vmem:[%s2 + $0xd8] sm:$0xff]
  %v44 = vld [vmem:[%s2 + $0xe0] sm:$0xff]
  %v45 = vld [vmem:[%s2 + $0xe8] sm:$0xff]
  %v46 = vld [vmem:[%s2 + $0xf0] sm:$0xff]
  %v47 = vld [vmem:[%s2 + $0xf8] sm:$0xff]
  %v48 = vld [vmem:[%s2 + $0x100] sm:$0xff]
  %v49 = vld [vmem:[%s2 + $0x108] sm:$0xff]
  %v50 = vld [vmem:[%s2 + $0x110] sm:$0xff]
  %v51 = vld [vmem:[%s2 + $0x118] sm:$0xff]
  %v52 = vld [vmem:[%s2 + $0x120] sm:$0xff]
  %v53 = vld [vmem:[%s2 + $0x128] sm:$0xff]
  %v54 = vld [vmem:[%s2 + $0x130] sm:$0xff]
  %v55 = vld [vmem:[%s2 + $0x138] sm:$0xff]
  %v56 = vld [vmem:[%s2 + $0x140] sm:$0xff]
  %v57 = vld [vmem:[%s2 + $0x148] sm:$0xff]
  %v58 = vld [vmem:[%s2 + $0x150] sm:$0xff]
  %v59 = vld [vmem:[%s2 + $0x158] sm:$0xff]
  %v60 = vld [vmem:[%s2 + $0x160] sm:$0xff]
  %v61 = vld [vmem:[%s2 + $0x168] sm:$0xff]
  %v62 = vld [vmem:[%s2 + $0x170] sm:$0xff]
  %v63 = vld [vmem:[%s2 + $0x178] sm:$0xff]
  %v64 = vld [vmem:[%s2 + $0x180] sm:$0xff]
  %v65 = vld [vmem:[%s2 + $0x188] sm:$0xff]
  %v66 = vld [vmem:[%s2 + $0x190] sm:$0xff]
  %v67 = vld [vmem:[%s2 + $0x198] sm:$0xff]
  %v68 = vld [vmem:[%s2 + $0x1a0] sm:$0xff]
  %v69 = vld [vmem:[%s2 + $0x1a8] sm:$0xff]
  %v70 = vld [vmem:[%s2 + $0x1b0] sm:$0xff]
  %v71 = vld [vmem:[%s2 + $0x1b8] sm:$0xff]
  %v72 = vld [vmem:[%s2 + $0x1c0] sm:$0xff]
  %v73 = vld [vmem:[%s2 + $0x1c8] sm:$0xff]
  %v74 = vld [vmem:[%s2 + $0x1d0] sm:$0xff]
  %v75 = vld [vmem:[%s2 + $0x1d8] sm:$0xff]
  %v76 = vld [vmem:[%s2 + $0x1e0] sm:$0xff]
  %v77 = vld [vmem:[%s2 + $0x1e8] sm:$0xff]
  %v78 = vld [vmem:[%s2 + $0x1f0] sm:$0xff]
  %v79 = vld [vmem:[%s2 + $0x1f8] sm:$0xff]
  %v80 = vld [vmem:[%s2 + $0x200] sm:$0xff]
  %v81 = vld [vmem:[%s2 + $0x208] sm:$0xff]
  %v82 = vld [vmem:[%s2 + $0x210] sm:$0xff]
  %v83 = vld [vmem:[%s2 + $0x218] sm:$0xff]
  %v84 = vld [vmem:[%s2 + $0x220] sm:$0xff]
  %v85 = vld [vmem:[%s2 + $0x228] sm:$0xff]
  %v86 = vld [vmem:[%s2 + $0x230] sm:$0xff]
  %v87 = vld [vmem:[%s2 + $0x238] sm:$0xff]
  %v88 = vld [vmem:[%s2 + $0x240] sm:$0xff]
  %v89 = vld [vmem:[%s2 + $0x248] sm:$0xff]
  %v90 = vld [vmem:[%s2 + $0x250] sm:$0xff]
  %v91 = vld [vmem:[%s2 + $0x258] sm:$0xff]
  %v92 = vld [vmem:[%s2 + $0x260] sm:$0xff]
  %v93 = vld [vmem:[%s2 + $0x268] sm:$0xff]
  %v94 = vld [vmem:[%s2 + $0x270] sm:$0xff]
  %v95 = vld [vmem:[%s2 + $0x278] sm:$0xff]
  %v96 = vld [vmem:[%s2 + $0x280] sm:$0xff]
  %v97 = vld [vmem:[%s2 + $0x288] sm:$0xff]
  %v98 = vld [vmem:[%s2 + $0x290] sm:$0xff]
  %v99 = vld [vmem:[%s2 + $0x298] sm:$0xff]
  %v100 = vld [vmem:[%s2 + $0x2a0] sm:$0xff]
  %v101 = vld [vmem:[%s2 + $0x2a8] sm:$0xff]
  %v102 = vld [vmem:[%s2 + $0x2b0] sm:$0xff]
  %v103 = vld [vmem:[%s2 + $0x2b8] sm:$0xff]
  %v104 = vld [vmem:[%s2 + $0x2c0] sm:$0xff]
  %v105 = vld [vmem:[%s2 + $0x2c8] sm:$0xff]
  %v106 = vld [vmem:[%s2 + $0x2d0] sm:$0xff]
  %v107 = vld [vmem:[%s2 + $0x2d8] sm:$0xff]
  %v108 = vld [vmem:[%s2 + $0x2e0] sm:$0xff]
  %v109 = vld [vmem:[%s2 + $0x2e8] sm:$0xff]
  %v110 = vld [vmem:[%s2 + $0x2f0] sm:$0xff]
  %v111 = vld [vmem:[%s2 + $0x2f8] sm:$0xff]
  %v112 = vld [vmem:[%s2 + $0x300] sm:$0xff]
  %v113 = vld [vmem:[%s2 + $0x308] sm:$0xff]
  %v114 = vld [vmem:[%s2 + $0x310] sm:$0xff]
  %v115 = vld [vmem:[%s2 + $0x318] sm:$0xff]
  %v116 = vld [vmem:[%s2 + $0x320] sm:$0xff]
  %v117 = vld [vmem:[%s2 + $0x328] sm:$0xff]
  %v118 = vld [vmem:[%s2 + $0x330] sm:$0xff]
  %v119 = vld [vmem:[%s2 + $0x338] sm:$0xff]
  %v120 = vld [vmem:[%s2 + $0x340] sm:$0xff]
  %v121 = vld [vmem:[%s2 + $0x348] sm:$0xff]
  %v122 = vld [vmem:[%s2 + $0x350] sm:$0xff]
  %v123 = vld [vmem:[%s2 + $0x358] sm:$0xff]
  %v124 = vld [vmem:[%s2 + $0x360] sm:$0xff]
  %v125 = vld [vmem:[%s2 + $0x368] sm:$0xff]
  %v126 = vld [vmem:[%s2 + $0x370] sm:$0xff]
  %v127 = vld [vmem:[%s2 + $0x378] sm:$0xff]
  %v128 = vld [vmem:[%s2 + $0x380] sm:$0xff]
  %v129 = vld [vmem:[%s2 + $0x388] sm:$0xff]
  %v130 = vld [vmem:[%s2 + $0x390] sm:$0xff]
  %v131 = vld [vmem:[%s2 + $0x398] sm:$0xff]
  %v132 = vld [vmem:[%s2 + $0x3a0] sm:$0xff]
  %v133 = vld [vmem:[%s2 + $0x3a8] sm:$0xff]
  %v134 = vld [vmem:[%s2 + $0x3b0] sm:$0xff]
  %v135 = vld [vmem:[%s2 + $0x3b8] sm:$0xff]
  %v136 = vld [vmem:[%s2 + $0x3c0] sm:$0xff]
  %v137 = vld [vmem:[%s2 + $0x3c8] sm:$0xff]
  %v138 = vld [vmem:[%s2 + $0x3d0] sm:$0xff]
  %v139 = vld [vmem:[%s2 + $0x3d8] sm:$0xff]
  %v140 = vld [vmem:[%s2 + $0x3e0] sm:$0xff]
  %v141 = vld [vmem:[%s2 + $0x3e8] sm:$0xff]
  %v142 = vld [vmem:[%s2 + $0x3f0] sm:$0xff]
  %v143 = vld [vmem:[%s2 + $0x3f8] sm:$0xff]
  %v144 = vld [vmem:[%s2 + $0x400] sm:$0xff]
  %v145 = vld [vmem:[%s2 + $0x408] sm:$0xff]
  %v146 = vld [vmem:[%s2 + $0x410] sm:$0xff]
  %v147 = vld [vmem:[%s2 + $0x418] sm:$0xff]
  %v148 = vld [vmem:[%s2 + $0x420] sm:$0xff]
  %v149 = vld [vmem:[%s2 + $0x428] sm:$0xff]
  %v150 = vld [vmem:[%s2 + $0x430] sm:$0xff]
  %v151 = vld [vmem:[%s2 + $0x438] sm:$0xff]
  %v152 = vld [vmem:[%s2 + $0x440] sm:$0xff]
  %v153 = vld [vmem:[%s2 + $0x448] sm:$0xff]
  %v154 = vld [vmem:[%s2 + $0x450] sm:$0xff]
  %v155 = vld [vmem:[%s2 + $0x458] sm:$0xff]
  %v156 = vld [vmem:[%s2 + $0x460] sm:$0xff]
  %v157 = vld [vmem:[%s2 + $0x468] sm:$0xff]
  %v158 = vld [vmem:[%s2 + $0x470] sm:$0xff]
  %v159 = vld [vmem:[%s2 + $0x478] sm:$0xff]
  %v160 = vmul.f32 %v16, 0.96
  %v161 = vmul.f32 %v17, 0.96
  %v162 = vmul.f32 %v18, 0.96
  %v163 = vmul.f32 %v19, 0.96
  %v164 = vmul.f32 %v20, 0.96
  %v165 = vmul.f32 %v21, 0.96
  %v166 = vmul.f32 %v22, 0.96
  %v167 = vmul.f32 %v23, 0.96
  %v168 = vmul.f32 %v24, 0.96
  %v169 = vmul.f32 %v25, 0.96
  %v170 = vmul.f32 %v26, 0.96
  %v171 = vmul.f32 %v27, 0.96
  %v172 = vmul.f32 %v28, 0.96
  %v173 = vmul.f32 %v29, 0.96
  %v174 = vmul.f32 %v30, 0.96
  %v175 = vmul.f32 %v31, 0.96
  %v176 = vmul.f32 %v32, 0.96
  %v177 = vmul.f32 %v33, 0.96
  %v178 = vmul.f32 %v34, 0.96
  %v179 = vmul.f32 %v35, 0.96
  %v180 = vmul.f32 %v36, 0.96
  %v181 = vmul.f32 %v37, 0.96
  %v182 = vmul.f32 %v38, 0.96
  %v183 = vmul.f32 %v39, 0.96
  %v184 = vmul.f32 %v40, 0.96
  %v185 = vmul.f32 %v41, 0.96
  %v186 = vmul.f32 %v42, 0.96
  %v187 = vmul.f32 %v43, 0.96
  %v188 = vmul.f32 %v44, 0.96
  %v189 = vmul.f32 %v45, 0.96
  %v190 = vmul.f32 %v46, 0.96
  %v191 = vmul.f32 %v47, 0.96
  %v192 = vmul.f32 %v48, 0.96
  %v193 = vmul.f32 %v49, 0.96
  %v194 = vmul.f32 %v50, 0.96
  %v195 = vmul.f32 %v51, 0.96
  %v196 = vmul.f32 %v52, 0.96
  %v197 = vmul.f32 %v53, 0.96
  %v198 = vmul.f32 %v54, 0.96
  %v199 = vmul.f32 %v55, 0.96
  %v200 = vmul.f32 %v56, 0.96
  %v201 = vmul.f32 %v57, 0.96
  %v202 = vmul.f32 %v58, 0.96
  %v203 = vmul.f32 %v59, 0.96
  %v204 = vmul.f32 %v60, 0.96
  %v205 = vmul.f32 %v61, 0.96
  %v206 = vmul.f32 %v62, 0.96
  %v207 = vmul.f32 %v63, 0.96
  %v208 = vmul.f32 %v64, 0.96
  %v209 = vmul.f32 %v65, 0.96
  %v210 = vmul.f32 %v66, 0.96
  %v211 = vmul.f32 %v67, 0.96
  %v212 = vmul.f32 %v68, 0.96
  %v213 = vmul.f32 %v69, 0.96
  %v214 = vmul.f32 %v70, 0.96
  %v215 = vmul.f32 %v71, 0.96
  %v216 = vmul.f32 %v72, 0.96
  %v217 = vmul.f32 %v73, 0.96
  %v218 = vmul.f32 %v74, 0.96
  %v219 = vmul.f32 %v75, 0.96
  %v220 = vmul.f32 %v76, 0.96
  %v221 = vmul.f32 %v77, 0.96
  %v222 = vmul.f32 %v78, 0.96
  %v223 = vmul.f32 %v79, 0.96
  %v224 = vmul.f32 %v80, 0.96
  %v225 = vmul.f32 %v81, 0.96
  %v226 = vmul.f32 %v82, 0.96
  %v227 = vmul.f32 %v83, 0.96
  %v228 = vmul.f32 %v84, 0.96
  %v229 = vmul.f32 %v85, 0.96
  %v230 = vmul.f32 %v86, 0.96
  %v231 = vmul.f32 %v87, 0.96
  %v232 = vmul.f32 %v88, 0.96
  %v233 = vmul.f32 %v89, 0.96
  %v234 = vmul.f32 %v90, 0.96
  %v235 = vmul.f32 %v91, 0.96
  %v236 = vmul.f32 %v92, 0.96
  %v237 = vmul.f32 %v93, 0.96
  %v238 = vmul.f32 %v94, 0.96
  %v239 = vmul.f32 %v95, 0.96
  %v240 = vmul.f32 %v96, 0.96
  %v241 = vmul.f32 %v97, 0.96
  %v242 = vmul.f32 %v98, 0.96
  %v243 = vmul.f32 %v99, 0.96
  %v244 = vmul.f32 %v100, 0.96
  %v245 = vmul.f32 %v101, 0.96
  %v246 = vmul.f32 %v102, 0.96
  %v247 = vmul.f32 %v103, 0.96
  %v248 = vmul.f32 %v104, 0.96
  %v249 = vmul.f32 %v105, 0.96
  %v250 = vmul.f32 %v106, 0.96
  %v251 = vmul.f32 %v107, 0.96
  %v252 = vmul.f32 %v108, 0.96
  %v253 = vmul.f32 %v109, 0.96
  %v254 = vmul.f32 %v110, 0.96
  %v255 = vmul.f32 %v111, 0.96
  %v256 = vmul.f32 %v112, 0.96
  %v257 = vmul.f32 %v113, 0.96
  %v258 = vmul.f32 %v114, 0.96
  %v259 = vmul.f32 %v115, 0.96
  %v260 = vmul.f32 %v116, 0.96
  %v261 = vmul.f32 %v117, 0.96
  %v262 = vmul.f32 %v118, 0.96
  %v263 = vmul.f32 %v119, 0.96
  %v264 = vmul.f32 %v120, 0.96
  %v265 = vmul.f32 %v121, 0.96
  %v266 = vmul.f32 %v122, 0.96
  %v267 = vmul.f32 %v123, 0.96
  %v268 = vmul.f32 %v124, 0.96
  %v269 = vmul.f32 %v125, 0.96
  %v270 = vmul.f32 %v126, 0.96
  %v271 = vmul.f32 %v127, 0.96
  %v272 = vmul.f32 %v128, 0.96
  %v273 = vmul.f32 %v129, 0.96
  %v274 = vmul.f32 %v130, 0.96
  %v275 = vmul.f32 %v131, 0.96
  %v276 = vmul.f32 %v132, 0.96
  %v277 = vmul.f32 %v133, 0.96
  %v278 = vmul.f32 %v134, 0.96
  %v279 = vmul.f32 %v135, 0.96
  %v280 = vmul.f32 %v136, 0.96
  %v281 = vmul.f32 %v137, 0.96
  %v282 = vmul.f32 %v138, 0.96
  %v283 = vmul.f32 %v139, 0.96
  %v284 = vmul.f32 %v140, 0.96
  %v285 = vmul.f32 %v141, 0.96
  %v286 = vmul.f32 %v142, 0.96
  %v287 = vmul.f32 %v143, 0.96
  %v288 = vmul.f32 %v144, 0.96
  %v289 = vmul.f32 %v145, 0.96
  %v290 = vmul.f32 %v146, 0.96
  %v291 = vmul.f32 %v147, 0.96
  %v292 = vmul.f32 %v148, 0.96
  %v293 = vmul.f32 %v149, 0.96
  %v294 = vmul.f32 %v150, 0.96
  %v295 = vmul.f32 %v151, 0.96
  %v296 = vmul.f32 %v152, 0.96
  %v297 = vmul.f32 %v153, 0.96
  %v298 = vmul.f32 %v154, 0.96
  %v299 = vmul.f32 %v155, 0.96
  %v300 = vmul.f32 %v156, 0.96
  %v301 = vmul.f32 %v157, 0.96
  %v302 = vmul.f32 %v158, 0.96
  %v303 = vmul.f32 %v159, 0.96
  %v304 = vld [vmem:[%s1] sm:$0xff]
  %v305 = vld [vmem:[%s1 + $0x8] sm:$0xff]
  %v306 = vld [vmem:[%s1 + $0x10] sm:$0xff]
  %v307 = vld [vmem:[%s1 + $0x18] sm:$0xff]
  %v308 = vld [vmem:[%s1 + $0x20] sm:$0xff]
  %v309 = vld [vmem:[%s1 + $0x28] sm:$0xff]
  %v310 = vld [vmem:[%s1 + $0x30] sm:$0xff]
  %v311 = vld [vmem:[%s1 + $0x38] sm:$0xff]
  %v312 = vld [vmem:[%s1 + $0x40] sm:$0xff]
  %v313 = vld [vmem:[%s1 + $0x48] sm:$0xff]
  %v314 = vld [vmem:[%s1 + $0x50] sm:$0xff]
  %v315 = vld [vmem:[%s1 + $0x58] sm:$0xff]
  %v316 = vld [vmem:[%s1 + $0x60] sm:$0xff]
  %v317 = vld [vmem:[%s1 + $0x68] sm:$0xff]
  %v318 = vld [vmem:[%s1 + $0x70] sm:$0xff]
  %v319 = vld [vmem:[%s1 + $0x78] sm:$0xff]
  %v320 = vld [vmem:[%s1 + $0x80] sm:$0xff]
  %v321 = vld [vmem:[%s1 + $0x88] sm:$0xff]
  %v322 = vld [vmem:[%s1 + $0x90] sm:$0xff]
  %v323 = vld [vmem:[%s1 + $0x98] sm:$0xff]
  %v324 = vld [vmem:[%s1 + $0xa0] sm:$0xff]
  %v325 = vld [vmem:[%s1 + $0xa8] sm:$0xff]
  %v326 = vld [vmem:[%s1 + $0xb0] sm:$0xff]
  %v327 = vld [vmem:[%s1 + $0xb8] sm:$0xff]
  %v328 = vld [vmem:[%s1 + $0xc0] sm:$0xff]
  %v329 = vld [vmem:[%s1 + $0xc8] sm:$0xff]
  %v330 = vld [vmem:[%s1 + $0xd0] sm:$0xff]
  %v331 = vld [vmem:[%s1 + $0xd8] sm:$0xff]
  %v332 = vld [vmem:[%s1 + $0xe0] sm:$0xff]
  %v333 = vld [vmem:[%s1 + $0xe8] sm:$0xff]
  %v334 = vld [vmem:[%s1 + $0xf0] sm:$0xff]
  %v335 = vld [vmem:[%s1 + $0xf8] sm:$0xff]
  %v336 = vld [vmem:[%s1 + $0x100] sm:$0xff]
  %v337 = vld [vmem:[%s1 + $0x108] sm:$0xff]
  %v338 = vld [vmem:[%s1 + $0x110] sm:$0xff]
  %v339 = vld [vmem:[%s1 + $0x118] sm:$0xff]
  %v340 = vld [vmem:[%s1 + $0x120] sm:$0xff]
  %v341 = vld [vmem:[%s1 + $0x128] sm:$0xff]
  %v342 = vld [vmem:[%s1 + $0x130] sm:$0xff]
  %v343 = vld [vmem:[%s1 + $0x138] sm:$0xff]
  %v344 = vld [vmem:[%s1 + $0x140] sm:$0xff]
  %v345 = vld [vmem:[%s1 + $0x148] sm:$0xff]
  %v346 = vld [vmem:[%s1 + $0x150] sm:$0xff]
  %v347 = vld [vmem:[%s1 + $0x158] sm:$0xff]
  %v348 = vld [vmem:[%s1 + $0x160] sm:$0xff]
  %v349 = vld [vmem:[%s1 + $0x168] sm:$0xff]
  %v350 = vld [vmem:[%s1 + $0x170] sm:$0xff]
  %v351 = vld [vmem:[%s1 + $0x178] sm:$0xff]
  %v352 = vld [vmem:[%s1 + $0x180] sm:$0xff]
  %v353 = vld [vmem:[%s1 + $0x188] sm:$0xff]
  %v354 = vld [vmem:[%s1 + $0x190] sm:$0xff]
  %v355 = vld [vmem:[%s1 + $0x198] sm:$0xff]
  %v356 = vld [vmem:[%s1 + $0x1a0] sm:$0xff]
  %v357 = vld [vmem:[%s1 + $0x1a8] sm:$0xff]
  %v358 = vld [vmem:[%s1 + $0x1b0] sm:$0xff]
  %v359 = vld [vmem:[%s1 + $0x1b8] sm:$0xff]
  %v360 = vld [vmem:[%s1 + $0x1c0] sm:$0xff]
  %v361 = vld [vmem:[%s1 + $0x1c8] sm:$0xff]
  %v362 = vld [vmem:[%s1 + $0x1d0] sm:$0xff]
  %v363 = vld [vmem:[%s1 + $0x1d8] sm:$0xff]
  %v364 = vld [vmem:[%s1 + $0x1e0] sm:$0xff]
  %v365 = vld [vmem:[%s1 + $0x1e8] sm:$0xff]
  %v366 = vld [vmem:[%s1 + $0x1f0] sm:$0xff]
  %v367 = vld [vmem:[%s1 + $0x1f8] sm:$0xff]
  %v368 = vld [vmem:[%s1 + $0x200] sm:$0xff]
  %v369 = vld [vmem:[%s1 + $0x208] sm:$0xff]
  %v370 = vld [vmem:[%s1 + $0x210] sm:$0xff]
  %v371 = vld [vmem:[%s1 + $0x218] sm:$0xff]
  %v372 = vld [vmem:[%s1 + $0x220] sm:$0xff]
  %v373 = vld [vmem:[%s1 + $0x228] sm:$0xff]
  %v374 = vld [vmem:[%s1 + $0x230] sm:$0xff]
  %v375 = vld [vmem:[%s1 + $0x238] sm:$0xff]
  %v376 = vld [vmem:[%s1 + $0x240] sm:$0xff]
  %v377 = vld [vmem:[%s1 + $0x248] sm:$0xff]
  %v378 = vld [vmem:[%s1 + $0x250] sm:$0xff]
  %v379 = vld [vmem:[%s1 + $0x258] sm:$0xff]
  %v380 = vld [vmem:[%s1 + $0x260] sm:$0xff]
  %v381 = vld [vmem:[%s1 + $0x268] sm:$0xff]
  %v382 = vld [vmem:[%s1 + $0x270] sm:$0xff]
  %v383 = vld [vmem:[%s1 + $0x278] sm:$0xff]
  %v384 = vld [vmem:[%s1 + $0x280] sm:$0xff]
  %v385 = vld [vmem:[%s1 + $0x288] sm:$0xff]
  %v386 = vld [vmem:[%s1 + $0x290] sm:$0xff]
  %v387 = vld [vmem:[%s1 + $0x298] sm:$0xff]
  %v388 = vld [vmem:[%s1 + $0x2a0] sm:$0xff]
  %v389 = vld [vmem:[%s1 + $0x2a8] sm:$0xff]
  %v390 = vld [vmem:[%s1 + $0x2b0] sm:$0xff]
  %v391 = vld [vmem:[%s1 + $0x2b8] sm:$0xff]
  %v392 = vld [vmem:[%s1 + $0x2c0] sm:$0xff]
  %v393 = vld [vmem:[%s1 + $0x2c8] sm:$0xff]
  %v394 = vld [vmem:[%s1 + $0x2d0] sm:$0xff]
  %v395 = vld [vmem:[%s1 + $0x2d8] sm:$0xff]
  %v396 = vld [vmem:[%s1 + $0x2e0] sm:$0xff]
  %v397 = vld [vmem:[%s1 + $0x2e8] sm:$0xff]
  %v398 = vld [vmem:[%s1 + $0x2f0] sm:$0xff]
  %v399 = vld [vmem:[%s1 + $0x2f8] sm:$0xff]
  %v400 = vld [vmem:[%s1 + $0x300] sm:$0xff]
  %v401 = vld [vmem:[%s1 + $0x308] sm:$0xff]
  %v402 = vld [vmem:[%s1 + $0x310] sm:$0xff]
  %v403 = vld [vmem:[%s1 + $0x318] sm:$0xff]
  %v404 = vld [vmem:[%s1 + $0x320] sm:$0xff]
  %v405 = vld [vmem:[%s1 + $0x328] sm:$0xff]
  %v406 = vld [vmem:[%s1 + $0x330] sm:$0xff]
  %v407 = vld [vmem:[%s1 + $0x338] sm:$0xff]
  %v408 = vld [vmem:[%s1 + $0x340] sm:$0xff]
  %v409 = vld [vmem:[%s1 + $0x348] sm:$0xff]
  %v410 = vld [vmem:[%s1 + $0x350] sm:$0xff]
  %v411 = vld [vmem:[%s1 + $0x358] sm:$0xff]
  %v412 = vld [vmem:[%s1 + $0x360] sm:$0xff]
  %v413 = vld [vmem:[%s1 + $0x368] sm:$0xff]
  %v414 = vld [vmem:[%s1 + $0x370] sm:$0xff]
  %v415 = vld [vmem:[%s1 + $0x378] sm:$0xff]
  %v416 = vld [vmem:[%s1 + $0x380] sm:$0xff]
  %v417 = vld [vmem:[%s1 + $0x388] sm:$0xff]
  %v418 = vld [vmem:[%s1 + $0x390] sm:$0xff]
  %v419 = vld [vmem:[%s1 + $0x398] sm:$0xff]
  %v420 = vld [vmem:[%s1 + $0x3a0] sm:$0xff]
  %v421 = vld [vmem:[%s1 + $0x3a8] sm:$0xff]
  %v422 = vld [vmem:[%s1 + $0x3b0] sm:$0xff]
  %v423 = vld [vmem:[%s1 + $0x3b8] sm:$0xff]
  %v424 = vld [vmem:[%s1 + $0x3c0] sm:$0xff]
  %v425 = vld [vmem:[%s1 + $0x3c8] sm:$0xff]
  %v426 = vld [vmem:[%s1 + $0x3d0] sm:$0xff]
  %v427 = vld [vmem:[%s1 + $0x3d8] sm:$0xff]
  %v428 = vld [vmem:[%s1 + $0x3e0] sm:$0xff]
  %v429 = vld [vmem:[%s1 + $0x3e8] sm:$0xff]
  %v430 = vld [vmem:[%s1 + $0x3f0] sm:$0xff]
  %v431 = vld [vmem:[%s1 + $0x3f8] sm:$0xff]
  %v432 = vld [vmem:[%s1 + $0x400] sm:$0xff]
  %v433 = vld [vmem:[%s1 + $0x408] sm:$0xff]
  %v434 = vld [vmem:[%s1 + $0x410] sm:$0xff]
  %v435 = vld [vmem:[%s1 + $0x418] sm:$0xff]
  %v436 = vld [vmem:[%s1 + $0x420] sm:$0xff]
  %v437 = vld [vmem:[%s1 + $0x428] sm:$0xff]
  %v438 = vld [vmem:[%s1 + $0x430] sm:$0xff]
  %v439 = vld [vmem:[%s1 + $0x438] sm:$0xff]
  %v440 = vld [vmem:[%s1 + $0x440] sm:$0xff]
  %v441 = vld [vmem:[%s1 + $0x448] sm:$0xff]
  %v442 = vld [vmem:[%s1 + $0x450] sm:$0xff]
  %v443 = vld [vmem:[%s1 + $0x458] sm:$0xff]
  %v444 = vld [vmem:[%s1 + $0x460] sm:$0xff]
  %v445 = vld [vmem:[%s1 + $0x468] sm:$0xff]
  %v446 = vld [vmem:[%s1 + $0x470] sm:$0xff]
  %v447 = vld [vmem:[%s1 + $0x478] sm:$0xff]
  %v448 = vmul.f32 %v304, 0.04
  %v449 = vmul.f32 %v305, 0.04
  %v450 = vmul.f32 %v306, 0.04
  %v451 = vmul.f32 %v307, 0.04
  %v452 = vmul.f32 %v308, 0.04
  %v453 = vmul.f32 %v309, 0.04
  %v454 = vmul.f32 %v310, 0.04
  %v455 = vmul.f32 %v311, 0.04
  %v456 = vmul.f32 %v312, 0.04
  %v457 = vmul.f32 %v313, 0.04
  %v458 = vmul.f32 %v314, 0.04
  %v459 = vmul.f32 %v315, 0.04
  %v460 = vmul.f32 %v316, 0.04
  %v461 = vmul.f32 %v317, 0.04
  %v462 = vmul.f32 %v318, 0.04
  %v463 = vmul.f32 %v319, 0.04
  %v464 = vmul.f32 %v320, 0.04
  %v465 = vmul.f32 %v321, 0.04
  %v466 = vmul.f32 %v322, 0.04
  %v467 = vmul.f32 %v323, 0.04
  %v468 = vmul.f32 %v324, 0.04
  %v469 = vmul.f32 %v325, 0.04
  %v470 = vmul.f32 %v326, 0.04
  %v471 = vmul.f32 %v327, 0.04
  %v472 = vmul.f32 %v328, 0.04
  %v473 = vmul.f32 %v329, 0.04
  %v474 = vmul.f32 %v330, 0.04
  %v475 = vmul.f32 %v331, 0.04
  %v476 = vmul.f32 %v332, 0.04
  %v477 = vmul.f32 %v333, 0.04
  %v478 = vmul.f32 %v334, 0.04
  %v479 = vmul.f32 %v335, 0.04
  %v480 = vmul.f32 %v336, 0.04
  %v481 = vmul.f32 %v337, 0.04
  %v482 = vmul.f32 %v338, 0.04
  %v483 = vmul.f32 %v339, 0.04
  %v484 = vmul.f32 %v340, 0.04
  %v485 = vmul.f32 %v341, 0.04
  %v486 = vmul.f32 %v342, 0.04
  %v487 = vmul.f32 %v343, 0.04
  %v488 = vmul.f32 %v344, 0.04
  %v489 = vmul.f32 %v345, 0.04
  %v490 = vmul.f32 %v346, 0.04
  %v491 = vmul.f32 %v347, 0.04
  %v492 = vmul.f32 %v348, 0.04
  %v493 = vmul.f32 %v349, 0.04
  %v494 = vmul.f32 %v350, 0.04
  %v495 = vmul.f32 %v351, 0.04
  %v496 = vmul.f32 %v352, 0.04
  %v497 = vmul.f32 %v353, 0.04
  %v498 = vmul.f32 %v354, 0.04
  %v499 = vmul.f32 %v355, 0.04
  %v500 = vmul.f32 %v356, 0.04
  %v501 = vmul.f32 %v357, 0.04
  %v502 = vmul.f32 %v358, 0.04
  %v503 = vmul.f32 %v359, 0.04
  %v504 = vmul.f32 %v360, 0.04
  %v505 = vmul.f32 %v361, 0.04
  %v506 = vmul.f32 %v362, 0.04
  %v507 = vmul.f32 %v363, 0.04
  %v508 = vmul.f32 %v364, 0.04
  %v509 = vmul.f32 %v365, 0.04
  %v510 = vmul.f32 %v366, 0.04
  %v511 = vmul.f32 %v367, 0.04
  %v512 = vmul.f32 %v368, 0.04
  %v513 = vmul.f32 %v369, 0.04
  %v514 = vmul.f32 %v370, 0.04
  %v515 = vmul.f32 %v371, 0.04
  %v516 = vmul.f32 %v372, 0.04
  %v517 = vmul.f32 %v373, 0.04
  %v518 = vmul.f32 %v374, 0.04
  %v519 = vmul.f32 %v375, 0.04
  %v520 = vmul.f32 %v376, 0.04
  %v521 = vmul.f32 %v377, 0.04
  %v522 = vmul.f32 %v378, 0.04
  %v523 = vmul.f32 %v379, 0.04
  %v524 = vmul.f32 %v380, 0.04
  %v525 = vmul.f32 %v381, 0.04
  %v526 = vmul.f32 %v382, 0.04
  %v527 = vmul.f32 %v383, 0.04
  %v528 = vmul.f32 %v384, 0.04
  %v529 = vmul.f32 %v385, 0.04
  %v530 = vmul.f32 %v386, 0.04
  %v531 = vmul.f32 %v387, 0.04
  %v532 = vmul.f32 %v388, 0.04
  %v533 = vmul.f32 %v389, 0.04
  %v534 = vmul.f32 %v390, 0.04
  %v535 = vmul.f32 %v391, 0.04
  %v536 = vmul.f32 %v392, 0.04
  %v537 = vmul.f32 %v393, 0.04
  %v538 = vmul.f32 %v394, 0.04
  %v539 = vmul.f32 %v395, 0.04
  %v540 = vmul.f32 %v396, 0.04
  %v541 = vmul.f32 %v397, 0.04
  %v542 = vmul.f32 %v398, 0.04
  %v543 = vmul.f32 %v399, 0.04
  %v544 = vmul.f32 %v400, 0.04
  %v545 = vmul.f32 %v401, 0.04
  %v546 = vmul.f32 %v402, 0.04
  %v547 = vmul.f32 %v403, 0.04
  %v548 = vmul.f32 %v404, 0.04
  %v549 = vmul.f32 %v405, 0.04
  %v550 = vmul.f32 %v406, 0.04
  %v551 = vmul.f32 %v407, 0.04
  %v552 = vmul.f32 %v408, 0.04
  %v553 = vmul.f32 %v409, 0.04
  %v554 = vmul.f32 %v410, 0.04
  %v555 = vmul.f32 %v411, 0.04
  %v556 = vmul.f32 %v412, 0.04
  %v557 = vmul.f32 %v413, 0.04
  %v558 = vmul.f32 %v414, 0.04
  %v559 = vmul.f32 %v415, 0.04
  %v560 = vmul.f32 %v416, 0.04
  %v561 = vmul.f32 %v417, 0.04
  %v562 = vmul.f32 %v418, 0.04
  %v563 = vmul.f32 %v419, 0.04
  %v564 = vmul.f32 %v420, 0.04
  %v565 = vmul.f32 %v421, 0.04
  %v566 = vmul.f32 %v422, 0.04
  %v567 = vmul.f32 %v423, 0.04
  %v568 = vmul.f32 %v424, 0.04
  %v569 = vmul.f32 %v425, 0.04
  %v570 = vmul.f32 %v426, 0.04
  %v571 = vmul.f32 %v427, 0.04
  %v572 = vmul.f32 %v428, 0.04
  %v573 = vmul.f32 %v429, 0.04
  %v574 = vmul.f32 %v430, 0.04
  %v575 = vmul.f32 %v431, 0.04
  %v576 = vmul.f32 %v432, 0.04
  %v577 = vmul.f32 %v433, 0.04
  %v578 = vmul.f32 %v434, 0.04
  %v579 = vmul.f32 %v435, 0.04
  %v580 = vmul.f32 %v436, 0.04
  %v581 = vmul.f32 %v437, 0.04
  %v582 = vmul.f32 %v438, 0.04
  %v583 = vmul.f32 %v439, 0.04
  %v584 = vmul.f32 %v440, 0.04
  %v585 = vmul.f32 %v441, 0.04
  %v586 = vmul.f32 %v442, 0.04
  %v587 = vmul.f32 %v443, 0.04
  %v588 = vmul.f32 %v444, 0.04
  %v589 = vmul.f32 %v445, 0.04
  %v590 = vmul.f32 %v446, 0.04
  %v591 = vmul.f32 %v447, 0.04
  %v592 = vadd.f32 %v160, %v448
  %v593 = vadd.f32 %v161, %v449
  %v594 = vadd.f32 %v162, %v450
  %v595 = vadd.f32 %v163, %v451
  %v596 = vadd.f32 %v164, %v452
  %v597 = vadd.f32 %v165, %v453
  %v598 = vadd.f32 %v166, %v454
  %v599 = vadd.f32 %v167, %v455
  %v600 = vadd.f32 %v168, %v456
  %v601 = vadd.f32 %v169, %v457
  %v602 = vadd.f32 %v170, %v458
  %v603 = vadd.f32 %v171, %v459
  %v604 = vadd.f32 %v172, %v460
  %v605 = vadd.f32 %v173, %v461
  %v606 = vadd.f32 %v174, %v462
  %v607 = vadd.f32 %v175, %v463
  %v608 = vadd.f32 %v176, %v464
  %v609 = vadd.f32 %v177, %v465
  %v610 = vadd.f32 %v178, %v466
  %v611 = vadd.f32 %v179, %v467
  %v612 = vadd.f32 %v180, %v468
  %v613 = vadd.f32 %v181, %v469
  %v614 = vadd.f32 %v182, %v470
  %v615 = vadd.f32 %v183, %v471
  %v616 = vadd.f32 %v184, %v472
  %v617 = vadd.f32 %v185, %v473
  %v618 = vadd.f32 %v186, %v474
  %v619 = vadd.f32 %v187, %v475
  %v620 = vadd.f32 %v188, %v476
  %v621 = vadd.f32 %v189, %v477
  %v622 = vadd.f32 %v190, %v478
  %v623 = vadd.f32 %v191, %v479
  %v624 = vadd.f32 %v192, %v480
  %v625 = vadd.f32 %v193, %v481
  %v626 = vadd.f32 %v194, %v482
  %v627 = vadd.f32 %v195, %v483
  %v628 = vadd.f32 %v196, %v484
  %v629 = vadd.f32 %v197, %v485
  %v630 = vadd.f32 %v198, %v486
  %v631 = vadd.f32 %v199, %v487
  %v632 = vadd.f32 %v200, %v488
  %v633 = vadd.f32 %v201, %v489
  %v634 = vadd.f32 %v202, %v490
  %v635 = vadd.f32 %v203, %v491
  %v636 = vadd.f32 %v204, %v492
  %v637 = vadd.f32 %v205, %v493
  %v638 = vadd.f32 %v206, %v494
  %v639 = vadd.f32 %v207, %v495
  %v640 = vadd.f32 %v208, %v496
  %v641 = vadd.f32 %v209, %v497
  %v642 = vadd.f32 %v210, %v498
  %v643 = vadd.f32 %v211, %v499
  %v644 = vadd.f32 %v212, %v500
  %v645 = vadd.f32 %v213, %v501
  %v646 = vadd.f32 %v214, %v502
  %v647 = vadd.f32 %v215, %v503
  %v648 = vadd.f32 %v216, %v504
  %v649 = vadd.f32 %v217, %v505
  %v650 = vadd.f32 %v218, %v506
  %v651 = vadd.f32 %v219, %v507
  %v652 = vadd.f32 %v220, %v508
  %v653 = vadd.f32 %v221, %v509
  %v654 = vadd.f32 %v222, %v510
  %v655 = vadd.f32 %v223, %v511
  %v656 = vadd.f32 %v224, %v512
  %v657 = vadd.f32 %v225, %v513
  %v658 = vadd.f32 %v226, %v514
  %v659 = vadd.f32 %v227, %v515
  %v660 = vadd.f32 %v228, %v516
  %v661 = vadd.f32 %v229, %v517
  %v662 = vadd.f32 %v230, %v518
  %v663 = vadd.f32 %v231, %v519
  %v664 = vadd.f32 %v232, %v520
  %v665 = vadd.f32 %v233, %v521
  %v666 = vadd.f32 %v234, %v522
  %v667 = vadd.f32 %v235, %v523
  %v668 = vadd.f32 %v236, %v524
  %v669 = vadd.f32 %v237, %v525
  %v670 = vadd.f32 %v238, %v526
  %v671 = vadd.f32 %v239, %v527
  %v672 = vadd.f32 %v240, %v528
  %v673 = vadd.f32 %v241, %v529
  %v674 = vadd.f32 %v242, %v530
  %v675 = vadd.f32 %v243, %v531
  %v676 = vadd.f32 %v244, %v532
  %v677 = vadd.f32 %v245, %v533
  %v678 = vadd.f32 %v246, %v534
  %v679 = vadd.f32 %v247, %v535
  %v680 = vadd.f32 %v248, %v536
  %v681 = vadd.f32 %v249, %v537
  %v682 = vadd.f32 %v250, %v538
  %v683 = vadd.f32 %v251, %v539
  %v684 = vadd.f32 %v252, %v540
  %v685 = vadd.f32 %v253, %v541
  %v686 = vadd.f32 %v254, %v542
  %v687 = vadd.f32 %v255, %v543
  %v688 = vadd.f32 %v256, %v544
  %v689 = vadd.f32 %v257, %v545
  %v690 = vadd.f32 %v258, %v546
  %v691 = vadd.f32 %v259, %v547
  %v692 = vadd.f32 %v260, %v548
  %v693 = vadd.f32 %v261, %v549
  %v694 = vadd.f32 %v262, %v550
  %v695 = vadd.f32 %v263, %v551
  %v696 = vadd.f32 %v264, %v552
  %v697 = vadd.f32 %v265, %v553
  %v698 = vadd.f32 %v266, %v554
  %v699 = vadd.f32 %v267, %v555
  %v700 = vadd.f32 %v268, %v556
  %v701 = vadd.f32 %v269, %v557
  %v702 = vadd.f32 %v270, %v558
  %v703 = vadd.f32 %v271, %v559
  %v704 = vadd.f32 %v272, %v560
  %v705 = vadd.f32 %v273, %v561
  %v706 = vadd.f32 %v274, %v562
  %v707 = vadd.f32 %v275, %v563
  %v708 = vadd.f32 %v276, %v564
  %v709 = vadd.f32 %v277, %v565
  %v710 = vadd.f32 %v278, %v566
  %v711 = vadd.f32 %v279, %v567
  %v712 = vadd.f32 %v280, %v568
  %v713 = vadd.f32 %v281, %v569
  %v714 = vadd.f32 %v282, %v570
  %v715 = vadd.f32 %v283, %v571
  %v716 = vadd.f32 %v284, %v572
  %v717 = vadd.f32 %v285, %v573
  %v718 = vadd.f32 %v286, %v574
  %v719 = vadd.f32 %v287, %v575
  %v720 = vadd.f32 %v288, %v576
  %v721 = vadd.f32 %v289, %v577
  %v722 = vadd.f32 %v290, %v578
  %v723 = vadd.f32 %v291, %v579
  %v724 = vadd.f32 %v292, %v580
  %v725 = vadd.f32 %v293, %v581
  %v726 = vadd.f32 %v294, %v582
  %v727 = vadd.f32 %v295, %v583
  %v728 = vadd.f32 %v296, %v584
  %v729 = vadd.f32 %v297, %v585
  %v730 = vadd.f32 %v298, %v586
  %v731 = vadd.f32 %v299, %v587
  %v732 = vadd.f32 %v300, %v588
  %v733 = vadd.f32 %v301, %v589
  %v734 = vadd.f32 %v302, %v590
  %v735 = vadd.f32 %v303, %v591
  %vm736 = vcmask 261120
  %737 = vst.msk [vmem:[%s4] sm:$0xff] %vm736, %v592
  %738 = vst.msk [vmem:[%s4 + $0x8] sm:$0xff] %vm736, %v593
  %739 = vst.msk [vmem:[%s4 + $0x10] sm:$0xff] %vm736, %v594
  %740 = vst.msk [vmem:[%s4 + $0x18] sm:$0xff] %vm736, %v595
  %741 = vst.msk [vmem:[%s4 + $0x20] sm:$0xff] %vm736, %v596
  %742 = vst.msk [vmem:[%s4 + $0x28] sm:$0xff] %vm736, %v597
  %743 = vst.msk [vmem:[%s4 + $0x30] sm:$0xff] %vm736, %v598
  %744 = vst.msk [vmem:[%s4 + $0x38] sm:$0xff] %vm736, %v599
  %745 = vst.msk [vmem:[%s4 + $0x40] sm:$0xff] %vm736, %v600
  %746 = vst.msk [vmem:[%s4 + $0x48] sm:$0xff] %vm736, %v601
  %747 = vst.msk [vmem:[%s4 + $0x50] sm:$0xff] %vm736, %v602
  %748 = vst.msk [vmem:[%s4 + $0x58] sm:$0xff] %vm736, %v603
  %749 = vst.msk [vmem:[%s4 + $0x60] sm:$0xff] %vm736, %v604
  %750 = vst.msk [vmem:[%s4 + $0x68] sm:$0xff] %vm736, %v605
  %751 = vst.msk [vmem:[%s4 + $0x70] sm:$0xff] %vm736, %v606
  %752 = vst.msk [vmem:[%s4 + $0x78] sm:$0xff] %vm736, %v607
  %753 = vst.msk [vmem:[%s4 + $0x80] sm:$0xff] %vm736, %v608
  %754 = vst.msk [vmem:[%s4 + $0x88] sm:$0xff] %vm736, %v609
  %755 = vst.msk [vmem:[%s4 + $0x90] sm:$0xff] %vm736, %v610
  %756 = vst.msk [vmem:[%s4 + $0x98] sm:$0xff] %vm736, %v611
  %757 = vst.msk [vmem:[%s4 + $0xa0] sm:$0xff] %vm736, %v612
  %758 = vst.msk [vmem:[%s4 + $0xa8] sm:$0xff] %vm736, %v613
  %759 = vst.msk [vmem:[%s4 + $0xb0] sm:$0xff] %vm736, %v614
  %760 = vst.msk [vmem:[%s4 + $0xb8] sm:$0xff] %vm736, %v615
  %761 = vst.msk [vmem:[%s4 + $0xc0] sm:$0xff] %vm736, %v616
  %762 = vst.msk [vmem:[%s4 + $0xc8] sm:$0xff] %vm736, %v617
  %763 = vst.msk [vmem:[%s4 + $0xd0] sm:$0xff] %vm736, %v618
  %764 = vst.msk [vmem:[%s4 + $0xd8] sm:$0xff] %vm736, %v619
  %765 = vst.msk [vmem:[%s4 + $0xe0] sm:$0xff] %vm736, %v620
  %766 = vst.msk [vmem:[%s4 + $0xe8] sm:$0xff] %vm736, %v621
  %767 = vst.msk [vmem:[%s4 + $0xf0] sm:$0xff] %vm736, %v622
  %768 = vst.msk [vmem:[%s4 + $0xf8] sm:$0xff] %vm736, %v623
  %769 = vst.msk [vmem:[%s4 + $0x100] sm:$0xff] %vm736, %v624
  %770 = vst.msk [vmem:[%s4 + $0x108] sm:$0xff] %vm736, %v625
  %771 = vst.msk [vmem:[%s4 + $0x110] sm:$0xff] %vm736, %v626
  %772 = vst.msk [vmem:[%s4 + $0x118] sm:$0xff] %vm736, %v627
  %773 = vst.msk [vmem:[%s4 + $0x120] sm:$0xff] %vm736, %v628
  %774 = vst.msk [vmem:[%s4 + $0x128] sm:$0xff] %vm736, %v629
  %775 = vst.msk [vmem:[%s4 + $0x130] sm:$0xff] %vm736, %v630
  %776 = vst.msk [vmem:[%s4 + $0x138] sm:$0xff] %vm736, %v631
  %777 = vst.msk [vmem:[%s4 + $0x140] sm:$0xff] %vm736, %v632
  %778 = vst.msk [vmem:[%s4 + $0x148] sm:$0xff] %vm736, %v633
  %779 = vst.msk [vmem:[%s4 + $0x150] sm:$0xff] %vm736, %v634
  %780 = vst.msk [vmem:[%s4 + $0x158] sm:$0xff] %vm736, %v635
  %781 = vst.msk [vmem:[%s4 + $0x160] sm:$0xff] %vm736, %v636
  %782 = vst.msk [vmem:[%s4 + $0x168] sm:$0xff] %vm736, %v637
  %783 = vst.msk [vmem:[%s4 + $0x170] sm:$0xff] %vm736, %v638
  %784 = vst.msk [vmem:[%s4 + $0x178] sm:$0xff] %vm736, %v639
  %785 = vst.msk [vmem:[%s4 + $0x180] sm:$0xff] %vm736, %v640
  %786 = vst.msk [vmem:[%s4 + $0x188] sm:$0xff] %vm736, %v641
  %787 = vst.msk [vmem:[%s4 + $0x190] sm:$0xff] %vm736, %v642
  %788 = vst.msk [vmem:[%s4 + $0x198] sm:$0xff] %vm736, %v643
  %789 = vst.msk [vmem:[%s4 + $0x1a0] sm:$0xff] %vm736, %v644
  %790 = vst.msk [vmem:[%s4 + $0x1a8] sm:$0xff] %vm736, %v645
  %791 = vst.msk [vmem:[%s4 + $0x1b0] sm:$0xff] %vm736, %v646
  %792 = vst.msk [vmem:[%s4 + $0x1b8] sm:$0xff] %vm736, %v647
  %793 = vst.msk [vmem:[%s4 + $0x1c0] sm:$0xff] %vm736, %v648
  %794 = vst.msk [vmem:[%s4 + $0x1c8] sm:$0xff] %vm736, %v649
  %795 = vst.msk [vmem:[%s4 + $0x1d0] sm:$0xff] %vm736, %v650
  %796 = vst.msk [vmem:[%s4 + $0x1d8] sm:$0xff] %vm736, %v651
  %797 = vst.msk [vmem:[%s4 + $0x1e0] sm:$0xff] %vm736, %v652
  %798 = vst.msk [vmem:[%s4 + $0x1e8] sm:$0xff] %vm736, %v653
  %799 = vst.msk [vmem:[%s4 + $0x1f0] sm:$0xff] %vm736, %v654
  %800 = vst.msk [vmem:[%s4 + $0x1f8] sm:$0xff] %vm736, %v655
  %801 = vst.msk [vmem:[%s4 + $0x200] sm:$0xff] %vm736, %v656
  %802 = vst.msk [vmem:[%s4 + $0x208] sm:$0xff] %vm736, %v657
  %803 = vst.msk [vmem:[%s4 + $0x210] sm:$0xff] %vm736, %v658
  %804 = vst.msk [vmem:[%s4 + $0x218] sm:$0xff] %vm736, %v659
  %805 = vst.msk [vmem:[%s4 + $0x220] sm:$0xff] %vm736, %v660
  %806 = vst.msk [vmem:[%s4 + $0x228] sm:$0xff] %vm736, %v661
  %807 = vst.msk [vmem:[%s4 + $0x230] sm:$0xff] %vm736, %v662
  %808 = vst.msk [vmem:[%s4 + $0x238] sm:$0xff] %vm736, %v663
  %809 = vst.msk [vmem:[%s4 + $0x240] sm:$0xff] %vm736, %v664
  %810 = vst.msk [vmem:[%s4 + $0x248] sm:$0xff] %vm736, %v665
  %811 = vst.msk [vmem:[%s4 + $0x250] sm:$0xff] %vm736, %v666
  %812 = vst.msk [vmem:[%s4 + $0x258] sm:$0xff] %vm736, %v667
  %813 = vst.msk [vmem:[%s4 + $0x260] sm:$0xff] %vm736, %v668
  %814 = vst.msk [vmem:[%s4 + $0x268] sm:$0xff] %vm736, %v669
  %815 = vst.msk [vmem:[%s4 + $0x270] sm:$0xff] %vm736, %v670
  %816 = vst.msk [vmem:[%s4 + $0x278] sm:$0xff] %vm736, %v671
  %817 = vst.msk [vmem:[%s4 + $0x280] sm:$0xff] %vm736, %v672
  %818 = vst.msk [vmem:[%s4 + $0x288] sm:$0xff] %vm736, %v673
  %819 = vst.msk [vmem:[%s4 + $0x290] sm:$0xff] %vm736, %v674
  %820 = vst.msk [vmem:[%s4 + $0x298] sm:$0xff] %vm736, %v675
  %821 = vst.msk [vmem:[%s4 + $0x2a0] sm:$0xff] %vm736, %v676
  %822 = vst.msk [vmem:[%s4 + $0x2a8] sm:$0xff] %vm736, %v677
  %823 = vst.msk [vmem:[%s4 + $0x2b0] sm:$0xff] %vm736, %v678
  %824 = vst.msk [vmem:[%s4 + $0x2b8] sm:$0xff] %vm736, %v679
  %825 = vst.msk [vmem:[%s4 + $0x2c0] sm:$0xff] %vm736, %v680
  %826 = vst.msk [vmem:[%s4 + $0x2c8] sm:$0xff] %vm736, %v681
  %827 = vst.msk [vmem:[%s4 + $0x2d0] sm:$0xff] %vm736, %v682
  %828 = vst.msk [vmem:[%s4 + $0x2d8] sm:$0xff] %vm736, %v683
  %829 = vst.msk [vmem:[%s4 + $0x2e0] sm:$0xff] %vm736, %v684
  %830 = vst.msk [vmem:[%s4 + $0x2e8] sm:$0xff] %vm736, %v685
  %831 = vst.msk [vmem:[%s4 + $0x2f0] sm:$0xff] %vm736, %v686
  %832 = vst.msk [vmem:[%s4 + $0x2f8] sm:$0xff] %vm736, %v687
  %833 = vst.msk [vmem:[%s4 + $0x300] sm:$0xff] %vm736, %v688
  %834 = vst.msk [vmem:[%s4 + $0x308] sm:$0xff] %vm736, %v689
  %835 = vst.msk [vmem:[%s4 + $0x310] sm:$0xff] %vm736, %v690
  %836 = vst.msk [vmem:[%s4 + $0x318] sm:$0xff] %vm736, %v691
  %837 = vst.msk [vmem:[%s4 + $0x320] sm:$0xff] %vm736, %v692
  %838 = vst.msk [vmem:[%s4 + $0x328] sm:$0xff] %vm736, %v693
  %839 = vst.msk [vmem:[%s4 + $0x330] sm:$0xff] %vm736, %v694
  %840 = vst.msk [vmem:[%s4 + $0x338] sm:$0xff] %vm736, %v695
  %841 = vst.msk [vmem:[%s4 + $0x340] sm:$0xff] %vm736, %v696
  %842 = vst.msk [vmem:[%s4 + $0x348] sm:$0xff] %vm736, %v697
  %843 = vst.msk [vmem:[%s4 + $0x350] sm:$0xff] %vm736, %v698
  %844 = vst.msk [vmem:[%s4 + $0x358] sm:$0xff] %vm736, %v699
  %845 = vst.msk [vmem:[%s4 + $0x360] sm:$0xff] %vm736, %v700
  %846 = vst.msk [vmem:[%s4 + $0x368] sm:$0xff] %vm736, %v701
  %847 = vst.msk [vmem:[%s4 + $0x370] sm:$0xff] %vm736, %v702
  %848 = vst.msk [vmem:[%s4 + $0x378] sm:$0xff] %vm736, %v703
  %849 = vst.msk [vmem:[%s4 + $0x380] sm:$0xff] %vm736, %v704
  %850 = vst.msk [vmem:[%s4 + $0x388] sm:$0xff] %vm736, %v705
  %851 = vst.msk [vmem:[%s4 + $0x390] sm:$0xff] %vm736, %v706
  %852 = vst.msk [vmem:[%s4 + $0x398] sm:$0xff] %vm736, %v707
  %853 = vst.msk [vmem:[%s4 + $0x3a0] sm:$0xff] %vm736, %v708
  %854 = vst.msk [vmem:[%s4 + $0x3a8] sm:$0xff] %vm736, %v709
  %855 = vst.msk [vmem:[%s4 + $0x3b0] sm:$0xff] %vm736, %v710
  %856 = vst.msk [vmem:[%s4 + $0x3b8] sm:$0xff] %vm736, %v711
  %857 = vst.msk [vmem:[%s4 + $0x3c0] sm:$0xff] %vm736, %v712
  %858 = vst.msk [vmem:[%s4 + $0x3c8] sm:$0xff] %vm736, %v713
  %859 = vst.msk [vmem:[%s4 + $0x3d0] sm:$0xff] %vm736, %v714
  %860 = vst.msk [vmem:[%s4 + $0x3d8] sm:$0xff] %vm736, %v715
  %861 = vst.msk [vmem:[%s4 + $0x3e0] sm:$0xff] %vm736, %v716
  %862 = vst.msk [vmem:[%s4 + $0x3e8] sm:$0xff] %vm736, %v717
  %863 = vst.msk [vmem:[%s4 + $0x3f0] sm:$0xff] %vm736, %v718
  %864 = vst.msk [vmem:[%s4 + $0x3f8] sm:$0xff] %vm736, %v719
  %865 = vst.msk [vmem:[%s4 + $0x400] sm:$0xff] %vm736, %v720
  %866 = vst.msk [vmem:[%s4 + $0x408] sm:$0xff] %vm736, %v721
  %867 = vst.msk [vmem:[%s4 + $0x410] sm:$0xff] %vm736, %v722
  %868 = vst.msk [vmem:[%s4 + $0x418] sm:$0xff] %vm736, %v723
  %869 = vst.msk [vmem:[%s4 + $0x420] sm:$0xff] %vm736, %v724
  %870 = vst.msk [vmem:[%s4 + $0x428] sm:$0xff] %vm736, %v725
  %871 = vst.msk [vmem:[%s4 + $0x430] sm:$0xff] %vm736, %v726
  %872 = vst.msk [vmem:[%s4 + $0x438] sm:$0xff] %vm736, %v727
  %873 = vst.msk [vmem:[%s4 + $0x440] sm:$0xff] %vm736, %v728
  %874 = vst.msk [vmem:[%s4 + $0x448] sm:$0xff] %vm736, %v729
  %875 = vst.msk [vmem:[%s4 + $0x450] sm:$0xff] %vm736, %v730
  %876 = vst.msk [vmem:[%s4 + $0x458] sm:$0xff] %vm736, %v731
  %877 = vst.msk [vmem:[%s4 + $0x460] sm:$0xff] %vm736, %v732
  %878 = vst.msk [vmem:[%s4 + $0x468] sm:$0xff] %vm736, %v733
  %879 = vst.msk [vmem:[%s4 + $0x470] sm:$0xff] %vm736, %v734
  %880 = vst.msk [vmem:[%s4 + $0x478] sm:$0xff] %vm736, %v735
  %v881 = vld [vmem:[%s0] sm:$0xff]
  %v882 = vld [vmem:[%s0 + $0x8] sm:$0xff]
  %v883 = vld [vmem:[%s0 + $0x10] sm:$0xff]
  %v884 = vld [vmem:[%s0 + $0x18] sm:$0xff]
  %v885 = vld [vmem:[%s0 + $0x20] sm:$0xff]
  %v886 = vld [vmem:[%s0 + $0x28] sm:$0xff]
  %v887 = vld [vmem:[%s0 + $0x30] sm:$0xff]
  %v888 = vld [vmem:[%s0 + $0x38] sm:$0xff]
  %v889 = vld [vmem:[%s0 + $0x40] sm:$0xff]
  %v890 = vld [vmem:[%s0 + $0x48] sm:$0xff]
  %v891 = vld [vmem:[%s0 + $0x50] sm:$0xff]
  %v892 = vld [vmem:[%s0 + $0x58] sm:$0xff]
  %v893 = vld [vmem:[%s0 + $0x60] sm:$0xff]
  %v894 = vld [vmem:[%s0 + $0x68] sm:$0xff]
  %v895 = vld [vmem:[%s0 + $0x70] sm:$0xff]
  %v896 = vld [vmem:[%s0 + $0x78] sm:$0xff]
  %v897 = vld [vmem:[%s0 + $0x80] sm:$0xff]
  %v898 = vld [vmem:[%s0 + $0x88] sm:$0xff]
  %v899 = vld [vmem:[%s0 + $0x90] sm:$0xff]
  %v900 = vld [vmem:[%s0 + $0x98] sm:$0xff]
  %v901 = vld [vmem:[%s0 + $0xa0] sm:$0xff]
  %v902 = vld [vmem:[%s0 + $0xa8] sm:$0xff]
  %v903 = vld [vmem:[%s0 + $0xb0] sm:$0xff]
  %v904 = vld [vmem:[%s0 + $0xb8] sm:$0xff]
  %v905 = vld [vmem:[%s0 + $0xc0] sm:$0xff]
  %v906 = vld [vmem:[%s0 + $0xc8] sm:$0xff]
  %v907 = vld [vmem:[%s0 + $0xd0] sm:$0xff]
  %v908 = vld [vmem:[%s0 + $0xd8] sm:$0xff]
  %v909 = vld [vmem:[%s0 + $0xe0] sm:$0xff]
  %v910 = vld [vmem:[%s0 + $0xe8] sm:$0xff]
  %v911 = vld [vmem:[%s0 + $0xf0] sm:$0xff]
  %v912 = vld [vmem:[%s0 + $0xf8] sm:$0xff]
  %v913 = vld [vmem:[%s0 + $0x100] sm:$0xff]
  %v914 = vld [vmem:[%s0 + $0x108] sm:$0xff]
  %v915 = vld [vmem:[%s0 + $0x110] sm:$0xff]
  %v916 = vld [vmem:[%s0 + $0x118] sm:$0xff]
  %v917 = vld [vmem:[%s0 + $0x120] sm:$0xff]
  %v918 = vld [vmem:[%s0 + $0x128] sm:$0xff]
  %v919 = vld [vmem:[%s0 + $0x130] sm:$0xff]
  %v920 = vld [vmem:[%s0 + $0x138] sm:$0xff]
  %v921 = vld [vmem:[%s0 + $0x140] sm:$0xff]
  %v922 = vld [vmem:[%s0 + $0x148] sm:$0xff]
  %v923 = vld [vmem:[%s0 + $0x150] sm:$0xff]
  %v924 = vld [vmem:[%s0 + $0x158] sm:$0xff]
  %v925 = vld [vmem:[%s0 + $0x160] sm:$0xff]
  %v926 = vld [vmem:[%s0 + $0x168] sm:$0xff]
  %v927 = vld [vmem:[%s0 + $0x170] sm:$0xff]
  %v928 = vld [vmem:[%s0 + $0x178] sm:$0xff]
  %v929 = vld [vmem:[%s0 + $0x180] sm:$0xff]
  %v930 = vld [vmem:[%s0 + $0x188] sm:$0xff]
  %v931 = vld [vmem:[%s0 + $0x190] sm:$0xff]
  %v932 = vld [vmem:[%s0 + $0x198] sm:$0xff]
  %v933 = vld [vmem:[%s0 + $0x1a0] sm:$0xff]
  %v934 = vld [vmem:[%s0 + $0x1a8] sm:$0xff]
  %v935 = vld [vmem:[%s0 + $0x1b0] sm:$0xff]
  %v936 = vld [vmem:[%s0 + $0x1b8] sm:$0xff]
  %v937 = vld [vmem:[%s0 + $0x1c0] sm:$0xff]
  %v938 = vld [vmem:[%s0 + $0x1c8] sm:$0xff]
  %v939 = vld [vmem:[%s0 + $0x1d0] sm:$0xff]
  %v940 = vld [vmem:[%s0 + $0x1d8] sm:$0xff]
  %v941 = vld [vmem:[%s0 + $0x1e0] sm:$0xff]
  %v942 = vld [vmem:[%s0 + $0x1e8] sm:$0xff]
  %v943 = vld [vmem:[%s0 + $0x1f0] sm:$0xff]
  %v944 = vld [vmem:[%s0 + $0x1f8] sm:$0xff]
  %v945 = vld [vmem:[%s0 + $0x200] sm:$0xff]
  %v946 = vld [vmem:[%s0 + $0x208] sm:$0xff]
  %v947 = vld [vmem:[%s0 + $0x210] sm:$0xff]
  %v948 = vld [vmem:[%s0 + $0x218] sm:$0xff]
  %v949 = vld [vmem:[%s0 + $0x220] sm:$0xff]
  %v950 = vld [vmem:[%s0 + $0x228] sm:$0xff]
  %v951 = vld [vmem:[%s0 + $0x230] sm:$0xff]
  %v952 = vld [vmem:[%s0 + $0x238] sm:$0xff]
  %v953 = vld [vmem:[%s0 + $0x240] sm:$0xff]
  %v954 = vld [vmem:[%s0 + $0x248] sm:$0xff]
  %v955 = vld [vmem:[%s0 + $0x250] sm:$0xff]
  %v956 = vld [vmem:[%s0 + $0x258] sm:$0xff]
  %v957 = vld [vmem:[%s0 + $0x260] sm:$0xff]
  %v958 = vld [vmem:[%s0 + $0x268] sm:$0xff]
  %v959 = vld [vmem:[%s0 + $0x270] sm:$0xff]
  %v960 = vld [vmem:[%s0 + $0x278] sm:$0xff]
  %v961 = vld [vmem:[%s0 + $0x280] sm:$0xff]
  %v962 = vld [vmem:[%s0 + $0x288] sm:$0xff]
  %v963 = vld [vmem:[%s0 + $0x290] sm:$0xff]
  %v964 = vld [vmem:[%s0 + $0x298] sm:$0xff]
  %v965 = vld [vmem:[%s0 + $0x2a0] sm:$0xff]
  %v966 = vld [vmem:[%s0 + $0x2a8] sm:$0xff]
  %v967 = vld [vmem:[%s0 + $0x2b0] sm:$0xff]
  %v968 = vld [vmem:[%s0 + $0x2b8] sm:$0xff]
  %v969 = vld [vmem:[%s0 + $0x2c0] sm:$0xff]
  %v970 = vld [vmem:[%s0 + $0x2c8] sm:$0xff]
  %v971 = vld [vmem:[%s0 + $0x2d0] sm:$0xff]
  %v972 = vld [vmem:[%s0 + $0x2d8] sm:$0xff]
  %v973 = vld [vmem:[%s0 + $0x2e0] sm:$0xff]
  %v974 = vld [vmem:[%s0 + $0x2e8] sm:$0xff]
  %v975 = vld [vmem:[%s0 + $0x2f0] sm:$0xff]
  %v976 = vld [vmem:[%s0 + $0x2f8] sm:$0xff]
  %v977 = vld [vmem:[%s0 + $0x300] sm:$0xff]
  %v978 = vld [vmem:[%s0 + $0x308] sm:$0xff]
  %v979 = vld [vmem:[%s0 + $0x310] sm:$0xff]
  %v980 = vld [vmem:[%s0 + $0x318] sm:$0xff]
  %v981 = vld [vmem:[%s0 + $0x320] sm:$0xff]
  %v982 = vld [vmem:[%s0 + $0x328] sm:$0xff]
  %v983 = vld [vmem:[%s0 + $0x330] sm:$0xff]
  %v984 = vld [vmem:[%s0 + $0x338] sm:$0xff]
  %v985 = vld [vmem:[%s0 + $0x340] sm:$0xff]
  %v986 = vld [vmem:[%s0 + $0x348] sm:$0xff]
  %v987 = vld [vmem:[%s0 + $0x350] sm:$0xff]
  %v988 = vld [vmem:[%s0 + $0x358] sm:$0xff]
  %v989 = vld [vmem:[%s0 + $0x360] sm:$0xff]
  %v990 = vld [vmem:[%s0 + $0x368] sm:$0xff]
  %v991 = vld [vmem:[%s0 + $0x370] sm:$0xff]
  %v992 = vld [vmem:[%s0 + $0x378] sm:$0xff]
  %v993 = vld [vmem:[%s0 + $0x380] sm:$0xff]
  %v994 = vld [vmem:[%s0 + $0x388] sm:$0xff]
  %v995 = vld [vmem:[%s0 + $0x390] sm:$0xff]
  %v996 = vld [vmem:[%s0 + $0x398] sm:$0xff]
  %v997 = vld [vmem:[%s0 + $0x3a0] sm:$0xff]
  %v998 = vld [vmem:[%s0 + $0x3a8] sm:$0xff]
  %v999 = vld [vmem:[%s0 + $0x3b0] sm:$0xff]
  %v1000 = vld [vmem:[%s0 + $0x3b8] sm:$0xff]
  %v1001 = vld [vmem:[%s0 + $0x3c0] sm:$0xff]
  %v1002 = vld [vmem:[%s0 + $0x3c8] sm:$0xff]
  %v1003 = vld [vmem:[%s0 + $0x3d0] sm:$0xff]
  %v1004 = vld [vmem:[%s0 + $0x3d8] sm:$0xff]
  %v1005 = vld [vmem:[%s0 + $0x3e0] sm:$0xff]
  %v1006 = vld [vmem:[%s0 + $0x3e8] sm:$0xff]
  %v1007 = vld [vmem:[%s0 + $0x3f0] sm:$0xff]
  %v1008 = vld [vmem:[%s0 + $0x3f8] sm:$0xff]
  %v1009 = vld [vmem:[%s0 + $0x400] sm:$0xff]
  %v1010 = vld [vmem:[%s0 + $0x408] sm:$0xff]
  %v1011 = vld [vmem:[%s0 + $0x410] sm:$0xff]
  %v1012 = vld [vmem:[%s0 + $0x418] sm:$0xff]
  %v1013 = vld [vmem:[%s0 + $0x420] sm:$0xff]
  %v1014 = vld [vmem:[%s0 + $0x428] sm:$0xff]
  %v1015 = vld [vmem:[%s0 + $0x430] sm:$0xff]
  %v1016 = vld [vmem:[%s0 + $0x438] sm:$0xff]
  %v1017 = vld [vmem:[%s0 + $0x440] sm:$0xff]
  %v1018 = vld [vmem:[%s0 + $0x448] sm:$0xff]
  %v1019 = vld [vmem:[%s0 + $0x450] sm:$0xff]
  %v1020 = vld [vmem:[%s0 + $0x458] sm:$0xff]
  %v1021 = vld [vmem:[%s0 + $0x460] sm:$0xff]
  %v1022 = vld [vmem:[%s0 + $0x468] sm:$0xff]
  %v1023 = vld [vmem:[%s0 + $0x470] sm:$0xff]
  %v1024 = vld [vmem:[%s0 + $0x478] sm:$0xff]
  %v1025 = vmul.f32 %v592, 0.7
  %v1026 = vmul.f32 %v593, 0.7
  %v1027 = vmul.f32 %v594, 0.7
  %v1028 = vmul.f32 %v595, 0.7
  %v1029 = vmul.f32 %v596, 0.7
  %v1030 = vmul.f32 %v597, 0.7
  %v1031 = vmul.f32 %v598, 0.7
  %v1032 = vmul.f32 %v599, 0.7
  %v1033 = vmul.f32 %v600, 0.7
  %v1034 = vmul.f32 %v601, 0.7
  %v1035 = vmul.f32 %v602, 0.7
  %v1036 = vmul.f32 %v603, 0.7
  %v1037 = vmul.f32 %v604, 0.7
  %v1038 = vmul.f32 %v605, 0.7
  %v1039 = vmul.f32 %v606, 0.7
  %v1040 = vmul.f32 %v607, 0.7
  %v1041 = vmul.f32 %v608, 0.7
  %v1042 = vmul.f32 %v609, 0.7
  %v1043 = vmul.f32 %v610, 0.7
  %v1044 = vmul.f32 %v611, 0.7
  %v1045 = vmul.f32 %v612, 0.7
  %v1046 = vmul.f32 %v613, 0.7
  %v1047 = vmul.f32 %v614, 0.7
  %v1048 = vmul.f32 %v615, 0.7
  %v1049 = vmul.f32 %v616, 0.7
  %v1050 = vmul.f32 %v617, 0.7
  %v1051 = vmul.f32 %v618, 0.7
  %v1052 = vmul.f32 %v619, 0.7
  %v1053 = vmul.f32 %v620, 0.7
  %v1054 = vmul.f32 %v621, 0.7
  %v1055 = vmul.f32 %v622, 0.7
  %v1056 = vmul.f32 %v623, 0.7
  %v1057 = vmul.f32 %v624, 0.7
  %v1058 = vmul.f32 %v625, 0.7
  %v1059 = vmul.f32 %v626, 0.7
  %v1060 = vmul.f32 %v627, 0.7
  %v1061 = vmul.f32 %v628, 0.7
  %v1062 = vmul.f32 %v629, 0.7
  %v1063 = vmul.f32 %v630, 0.7
  %v1064 = vmul.f32 %v631, 0.7
  %v1065 = vmul.f32 %v632, 0.7
  %v1066 = vmul.f32 %v633, 0.7
  %v1067 = vmul.f32 %v634, 0.7
  %v1068 = vmul.f32 %v635, 0.7
  %v1069 = vmul.f32 %v636, 0.7
  %v1070 = vmul.f32 %v637, 0.7
  %v1071 = vmul.f32 %v638, 0.7
  %v1072 = vmul.f32 %v639, 0.7
  %v1073 = vmul.f32 %v640, 0.7
  %v1074 = vmul.f32 %v641, 0.7
  %v1075 = vmul.f32 %v642, 0.7
  %v1076 = vmul.f32 %v643, 0.7
  %v1077 = vmul.f32 %v644, 0.7
  %v1078 = vmul.f32 %v645, 0.7
  %v1079 = vmul.f32 %v646, 0.7
  %v1080 = vmul.f32 %v647, 0.7
  %v1081 = vmul.f32 %v648, 0.7
  %v1082 = vmul.f32 %v649, 0.7
  %v1083 = vmul.f32 %v650, 0.7
  %v1084 = vmul.f32 %v651, 0.7
  %v1085 = vmul.f32 %v652, 0.7
  %v1086 = vmul.f32 %v653, 0.7
  %v1087 = vmul.f32 %v654, 0.7
  %v1088 = vmul.f32 %v655, 0.7
  %v1089 = vmul.f32 %v656, 0.7
  %v1090 = vmul.f32 %v657, 0.7
  %v1091 = vmul.f32 %v658, 0.7
  %v1092 = vmul.f32 %v659, 0.7
  %v1093 = vmul.f32 %v660, 0.7
  %v1094 = vmul.f32 %v661, 0.7
  %v1095 = vmul.f32 %v662, 0.7
  %v1096 = vmul.f32 %v663, 0.7
  %v1097 = vmul.f32 %v664, 0.7
  %v1098 = vmul.f32 %v665, 0.7
  %v1099 = vmul.f32 %v666, 0.7
  %v1100 = vmul.f32 %v667, 0.7
  %v1101 = vmul.f32 %v668, 0.7
  %v1102 = vmul.f32 %v669, 0.7
  %v1103 = vmul.f32 %v670, 0.7
  %v1104 = vmul.f32 %v671, 0.7
  %v1105 = vmul.f32 %v672, 0.7
  %v1106 = vmul.f32 %v673, 0.7
  %v1107 = vmul.f32 %v674, 0.7
  %v1108 = vmul.f32 %v675, 0.7
  %v1109 = vmul.f32 %v676, 0.7
  %v1110 = vmul.f32 %v677, 0.7
  %v1111 = vmul.f32 %v678, 0.7
  %v1112 = vmul.f32 %v679, 0.7
  %v1113 = vmul.f32 %v680, 0.7
  %v1114 = vmul.f32 %v681, 0.7
  %v1115 = vmul.f32 %v682, 0.7
  %v1116 = vmul.f32 %v683, 0.7
  %v1117 = vmul.f32 %v684, 0.7
  %v1118 = vmul.f32 %v685, 0.7
  %v1119 = vmul.f32 %v686, 0.7
  %v1120 = vmul.f32 %v687, 0.7
  %v1121 = vmul.f32 %v688, 0.7
  %v1122 = vmul.f32 %v689, 0.7
  %v1123 = vmul.f32 %v690, 0.7
  %v1124 = vmul.f32 %v691, 0.7
  %v1125 = vmul.f32 %v692, 0.7
  %v1126 = vmul.f32 %v693, 0.7
  %v1127 = vmul.f32 %v694, 0.7
  %v1128 = vmul.f32 %v695, 0.7
  %v1129 = vmul.f32 %v696, 0.7
  %v1130 = vmul.f32 %v697, 0.7
  %v1131 = vmul.f32 %v698, 0.7
  %v1132 = vmul.f32 %v699, 0.7
  %v1133 = vmul.f32 %v700, 0.7
  %v1134 = vmul.f32 %v701, 0.7
  %v1135 = vmul.f32 %v702, 0.7
  %v1136 = vmul.f32 %v703, 0.7
  %v1137 = vmul.f32 %v704, 0.7
  %v1138 = vmul.f32 %v705, 0.7
  %v1139 = vmul.f32 %v706, 0.7
  %v1140 = vmul.f32 %v707, 0.7
  %v1141 = vmul.f32 %v708, 0.7
  %v1142 = vmul.f32 %v709, 0.7
  %v1143 = vmul.f32 %v710, 0.7
  %v1144 = vmul.f32 %v711, 0.7
  %v1145 = vmul.f32 %v712, 0.7
  %v1146 = vmul.f32 %v713, 0.7
  %v1147 = vmul.f32 %v714, 0.7
  %v1148 = vmul.f32 %v715, 0.7
  %v1149 = vmul.f32 %v716, 0.7
  %v1150 = vmul.f32 %v717, 0.7
  %v1151 = vmul.f32 %v718, 0.7
  %v1152 = vmul.f32 %v719, 0.7
  %v1153 = vmul.f32 %v720, 0.7
  %v1154 = vmul.f32 %v721, 0.7
  %v1155 = vmul.f32 %v722, 0.7
  %v1156 = vmul.f32 %v723, 0.7
  %v1157 = vmul.f32 %v724, 0.7
  %v1158 = vmul.f32 %v725, 0.7
  %v1159 = vmul.f32 %v726, 0.7
  %v1160 = vmul.f32 %v727, 0.7
  %v1161 = vmul.f32 %v728, 0.7
  %v1162 = vmul.f32 %v729, 0.7
  %v1163 = vmul.f32 %v730, 0.7
  %v1164 = vmul.f32 %v731, 0.7
  %v1165 = vmul.f32 %v732, 0.7
  %v1166 = vmul.f32 %v733, 0.7
  %v1167 = vmul.f32 %v734, 0.7
  %v1168 = vmul.f32 %v735, 0.7
  %v1169 = vsub.f32 %v881, %v1025
  %v1170 = vsub.f32 %v882, %v1026
  %v1171 = vsub.f32 %v883, %v1027
  %v1172 = vsub.f32 %v884, %v1028
  %v1173 = vsub.f32 %v885, %v1029
  %v1174 = vsub.f32 %v886, %v1030
  %v1175 = vsub.f32 %v887, %v1031
  %v1176 = vsub.f32 %v888, %v1032
  %v1177 = vsub.f32 %v889, %v1033
  %v1178 = vsub.f32 %v890, %v1034
  %v1179 = vsub.f32 %v891, %v1035
  %v1180 = vsub.f32 %v892, %v1036
  %v1181 = vsub.f32 %v893, %v1037
  %v1182 = vsub.f32 %v894, %v1038
  %v1183 = vsub.f32 %v895, %v1039
  %v1184 = vsub.f32 %v896, %v1040
  %v1185 = vsub.f32 %v897, %v1041
  %v1186 = vsub.f32 %v898, %v1042
  %v1187 = vsub.f32 %v899, %v1043
  %v1188 = vsub.f32 %v900, %v1044
  %v1189 = vsub.f32 %v901, %v1045
  %v1190 = vsub.f32 %v902, %v1046
  %v1191 = vsub.f32 %v903, %v1047
  %v1192 = vsub.f32 %v904, %v1048
  %v1193 = vsub.f32 %v905, %v1049
  %v1194 = vsub.f32 %v906, %v1050
  %v1195 = vsub.f32 %v907, %v1051
  %v1196 = vsub.f32 %v908, %v1052
  %v1197 = vsub.f32 %v909, %v1053
  %v1198 = vsub.f32 %v910, %v1054
  %v1199 = vsub.f32 %v911, %v1055
  %v1200 = vsub.f32 %v912, %v1056
  %v1201 = vsub.f32 %v913, %v1057
  %v1202 = vsub.f32 %v914, %v1058
  %v1203 = vsub.f32 %v915, %v1059
  %v1204 = vsub.f32 %v916, %v1060
  %v1205 = vsub.f32 %v917, %v1061
  %v1206 = vsub.f32 %v918, %v1062
  %v1207 = vsub.f32 %v919, %v1063
  %v1208 = vsub.f32 %v920, %v1064
  %v1209 = vsub.f32 %v921, %v1065
  %v1210 = vsub.f32 %v922, %v1066
  %v1211 = vsub.f32 %v923, %v1067
  %v1212 = vsub.f32 %v924, %v1068
  %v1213 = vsub.f32 %v925, %v1069
  %v1214 = vsub.f32 %v926, %v1070
  %v1215 = vsub.f32 %v927, %v1071
  %v1216 = vsub.f32 %v928, %v1072
  %v1217 = vsub.f32 %v929, %v1073
  %v1218 = vsub.f32 %v930, %v1074
  %v1219 = vsub.f32 %v931, %v1075
  %v1220 = vsub.f32 %v932, %v1076
  %v1221 = vsub.f32 %v933, %v1077
  %v1222 = vsub.f32 %v934, %v1078
  %v1223 = vsub.f32 %v935, %v1079
  %v1224 = vsub.f32 %v936, %v1080
  %v1225 = vsub.f32 %v937, %v1081
  %v1226 = vsub.f32 %v938, %v1082
  %v1227 = vsub.f32 %v939, %v1083
  %v1228 = vsub.f32 %v940, %v1084
  %v1229 = vsub.f32 %v941, %v1085
  %v1230 = vsub.f32 %v942, %v1086
  %v1231 = vsub.f32 %v943, %v1087
  %v1232 = vsub.f32 %v944, %v1088
  %v1233 = vsub.f32 %v945, %v1089
  %v1234 = vsub.f32 %v946, %v1090
  %v1235 = vsub.f32 %v947, %v1091
  %v1236 = vsub.f32 %v948, %v1092
  %v1237 = vsub.f32 %v949, %v1093
  %v1238 = vsub.f32 %v950, %v1094
  %v1239 = vsub.f32 %v951, %v1095
  %v1240 = vsub.f32 %v952, %v1096
  %v1241 = vsub.f32 %v953, %v1097
  %v1242 = vsub.f32 %v954, %v1098
  %v1243 = vsub.f32 %v955, %v1099
  %v1244 = vsub.f32 %v956, %v1100
  %v1245 = vsub.f32 %v957, %v1101
  %v1246 = vsub.f32 %v958, %v1102
  %v1247 = vsub.f32 %v959, %v1103
  %v1248 = vsub.f32 %v960, %v1104
  %v1249 = vsub.f32 %v961, %v1105
  %v1250 = vsub.f32 %v962, %v1106
  %v1251 = vsub.f32 %v963, %v1107
  %v1252 = vsub.f32 %v964, %v1108
  %v1253 = vsub.f32 %v965, %v1109
  %v1254 = vsub.f32 %v966, %v1110
  %v1255 = vsub.f32 %v967, %v1111
  %v1256 = vsub.f32 %v968, %v1112
  %v1257 = vsub.f32 %v969, %v1113
  %v1258 = vsub.f32 %v970, %v1114
  %v1259 = vsub.f32 %v971, %v1115
  %v1260 = vsub.f32 %v972, %v1116
  %v1261 = vsub.f32 %v973, %v1117
  %v1262 = vsub.f32 %v974, %v1118
  %v1263 = vsub.f32 %v975, %v1119
  %v1264 = vsub.f32 %v976, %v1120
  %v1265 = vsub.f32 %v977, %v1121
  %v1266 = vsub.f32 %v978, %v1122
  %v1267 = vsub.f32 %v979, %v1123
  %v1268 = vsub.f32 %v980, %v1124
  %v1269 = vsub.f32 %v981, %v1125
  %v1270 = vsub.f32 %v982, %v1126
  %v1271 = vsub.f32 %v983, %v1127
  %v1272 = vsub.f32 %v984, %v1128
  %v1273 = vsub.f32 %v985, %v1129
  %v1274 = vsub.f32 %v986, %v1130
  %v1275 = vsub.f32 %v987, %v1131
  %v1276 = vsub.f32 %v988, %v1132
  %v1277 = vsub.f32 %v989, %v1133
  %v1278 = vsub.f32 %v990, %v1134
  %v1279 = vsub.f32 %v991, %v1135
  %v1280 = vsub.f32 %v992, %v1136
  %v1281 = vsub.f32 %v993, %v1137
  %v1282 = vsub.f32 %v994, %v1138
  %v1283 = vsub.f32 %v995, %v1139
  %v1284 = vsub.f32 %v996, %v1140
  %v1285 = vsub.f32 %v997, %v1141
  %v1286 = vsub.f32 %v998, %v1142
  %v1287 = vsub.f32 %v999, %v1143
  %v1288 = vsub.f32 %v1000, %v1144
  %v1289 = vsub.f32 %v1001, %v1145
  %v1290 = vsub.f32 %v1002, %v1146
  %v1291 = vsub.f32 %v1003, %v1147
  %v1292 = vsub.f32 %v1004, %v1148
  %v1293 = vsub.f32 %v1005, %v1149
  %v1294 = vsub.f32 %v1006, %v1150
  %v1295 = vsub.f32 %v1007, %v1151
  %v1296 = vsub.f32 %v1008, %v1152
  %v1297 = vsub.f32 %v1009, %v1153
  %v1298 = vsub.f32 %v1010, %v1154
  %v1299 = vsub.f32 %v1011, %v1155
  %v1300 = vsub.f32 %v1012, %v1156
  %v1301 = vsub.f32 %v1013, %v1157
  %v1302 = vsub.f32 %v1014, %v1158
  %v1303 = vsub.f32 %v1015, %v1159
  %v1304 = vsub.f32 %v1016, %v1160
  %v1305 = vsub.f32 %v1017, %v1161
  %v1306 = vsub.f32 %v1018, %v1162
  %v1307 = vsub.f32 %v1019, %v1163
  %v1308 = vsub.f32 %v1020, %v1164
  %v1309 = vsub.f32 %v1021, %v1165
  %v1310 = vsub.f32 %v1022, %v1166
  %v1311 = vsub.f32 %v1023, %v1167
  %v1312 = vsub.f32 %v1024, %v1168
  %v1313 = vmax.f32 %v1169, 0.0
  %v1314 = vmax.f32 %v1170, 0.0
  %v1315 = vmax.f32 %v1171, 0.0
  %v1316 = vmax.f32 %v1172, 0.0
  %v1317 = vmax.f32 %v1173, 0.0
  %v1318 = vmax.f32 %v1174, 0.0
  %v1319 = vmax.f32 %v1175, 0.0
  %v1320 = vmax.f32 %v1176, 0.0
  %v1321 = vmax.f32 %v1177, 0.0
  %v1322 = vmax.f32 %v1178, 0.0
  %v1323 = vmax.f32 %v1179, 0.0
  %v1324 = vmax.f32 %v1180, 0.0
  %v1325 = vmax.f32 %v1181, 0.0
  %v1326 = vmax.f32 %v1182, 0.0
  %v1327 = vmax.f32 %v1183, 0.0
  %v1328 = vmax.f32 %v1184, 0.0
  %v1329 = vmax.f32 %v1185, 0.0
  %v1330 = vmax.f32 %v1186, 0.0
  %v1331 = vmax.f32 %v1187, 0.0
  %v1332 = vmax.f32 %v1188, 0.0
  %v1333 = vmax.f32 %v1189, 0.0
  %v1334 = vmax.f32 %v1190, 0.0
  %v1335 = vmax.f32 %v1191, 0.0
  %v1336 = vmax.f32 %v1192, 0.0
  %v1337 = vmax.f32 %v1193, 0.0
  %v1338 = vmax.f32 %v1194, 0.0
  %v1339 = vmax.f32 %v1195, 0.0
  %v1340 = vmax.f32 %v1196, 0.0
  %v1341 = vmax.f32 %v1197, 0.0
  %v1342 = vmax.f32 %v1198, 0.0
  %v1343 = vmax.f32 %v1199, 0.0
  %v1344 = vmax.f32 %v1200, 0.0
  %v1345 = vmax.f32 %v1201, 0.0
  %v1346 = vmax.f32 %v1202, 0.0
  %v1347 = vmax.f32 %v1203, 0.0
  %v1348 = vmax.f32 %v1204, 0.0
  %v1349 = vmax.f32 %v1205, 0.0
  %v1350 = vmax.f32 %v1206, 0.0
  %v1351 = vmax.f32 %v1207, 0.0
  %v1352 = vmax.f32 %v1208, 0.0
  %v1353 = vmax.f32 %v1209, 0.0
  %v1354 = vmax.f32 %v1210, 0.0
  %v1355 = vmax.f32 %v1211, 0.0
  %v1356 = vmax.f32 %v1212, 0.0
  %v1357 = vmax.f32 %v1213, 0.0
  %v1358 = vmax.f32 %v1214, 0.0
  %v1359 = vmax.f32 %v1215, 0.0
  %v1360 = vmax.f32 %v1216, 0.0
  %v1361 = vmax.f32 %v1217, 0.0
  %v1362 = vmax.f32 %v1218, 0.0
  %v1363 = vmax.f32 %v1219, 0.0
  %v1364 = vmax.f32 %v1220, 0.0
  %v1365 = vmax.f32 %v1221, 0.0
  %v1366 = vmax.f32 %v1222, 0.0
  %v1367 = vmax.f32 %v1223, 0.0
  %v1368 = vmax.f32 %v1224, 0.0
  %v1369 = vmax.f32 %v1225, 0.0
  %v1370 = vmax.f32 %v1226, 0.0
  %v1371 = vmax.f32 %v1227, 0.0
  %v1372 = vmax.f32 %v1228, 0.0
  %v1373 = vmax.f32 %v1229, 0.0
  %v1374 = vmax.f32 %v1230, 0.0
  %v1375 = vmax.f32 %v1231, 0.0
  %v1376 = vmax.f32 %v1232, 0.0
  %v1377 = vmax.f32 %v1233, 0.0
  %v1378 = vmax.f32 %v1234, 0.0
  %v1379 = vmax.f32 %v1235, 0.0
  %v1380 = vmax.f32 %v1236, 0.0
  %v1381 = vmax.f32 %v1237, 0.0
  %v1382 = vmax.f32 %v1238, 0.0
  %v1383 = vmax.f32 %v1239, 0.0
  %v1384 = vmax.f32 %v1240, 0.0
  %v1385 = vmax.f32 %v1241, 0.0
  %v1386 = vmax.f32 %v1242, 0.0
  %v1387 = vmax.f32 %v1243, 0.0
  %v1388 = vmax.f32 %v1244, 0.0
  %v1389 = vmax.f32 %v1245, 0.0
  %v1390 = vmax.f32 %v1246, 0.0
  %v1391 = vmax.f32 %v1247, 0.0
  %v1392 = vmax.f32 %v1248, 0.0
  %v1393 = vmax.f32 %v1249, 0.0
  %v1394 = vmax.f32 %v1250, 0.0
  %v1395 = vmax.f32 %v1251, 0.0
  %v1396 = vmax.f32 %v1252, 0.0
  %v1397 = vmax.f32 %v1253, 0.0
  %v1398 = vmax.f32 %v1254, 0.0
  %v1399 = vmax.f32 %v1255, 0.0
  %v1400 = vmax.f32 %v1256, 0.0
  %v1401 = vmax.f32 %v1257, 0.0
  %v1402 = vmax.f32 %v1258, 0.0
  %v1403 = vmax.f32 %v1259, 0.0
  %v1404 = vmax.f32 %v1260, 0.0
  %v1405 = vmax.f32 %v1261, 0.0
  %v1406 = vmax.f32 %v1262, 0.0
  %v1407 = vmax.f32 %v1263, 0.0
  %v1408 = vmax.f32 %v1264, 0.0
  %v1409 = vmax.f32 %v1265, 0.0
  %v1410 = vmax.f32 %v1266, 0.0
  %v1411 = vmax.f32 %v1267, 0.0
  %v1412 = vmax.f32 %v1268, 0.0
  %v1413 = vmax.f32 %v1269, 0.0
  %v1414 = vmax.f32 %v1270, 0.0
  %v1415 = vmax.f32 %v1271, 0.0
  %v1416 = vmax.f32 %v1272, 0.0
  %v1417 = vmax.f32 %v1273, 0.0
  %v1418 = vmax.f32 %v1274, 0.0
  %v1419 = vmax.f32 %v1275, 0.0
  %v1420 = vmax.f32 %v1276, 0.0
  %v1421 = vmax.f32 %v1277, 0.0
  %v1422 = vmax.f32 %v1278, 0.0
  %v1423 = vmax.f32 %v1279, 0.0
  %v1424 = vmax.f32 %v1280, 0.0
  %v1425 = vmax.f32 %v1281, 0.0
  %v1426 = vmax.f32 %v1282, 0.0
  %v1427 = vmax.f32 %v1283, 0.0
  %v1428 = vmax.f32 %v1284, 0.0
  %v1429 = vmax.f32 %v1285, 0.0
  %v1430 = vmax.f32 %v1286, 0.0
  %v1431 = vmax.f32 %v1287, 0.0
  %v1432 = vmax.f32 %v1288, 0.0
  %v1433 = vmax.f32 %v1289, 0.0
  %v1434 = vmax.f32 %v1290, 0.0
  %v1435 = vmax.f32 %v1291, 0.0
  %v1436 = vmax.f32 %v1292, 0.0
  %v1437 = vmax.f32 %v1293, 0.0
  %v1438 = vmax.f32 %v1294, 0.0
  %v1439 = vmax.f32 %v1295, 0.0
  %v1440 = vmax.f32 %v1296, 0.0
  %v1441 = vmax.f32 %v1297, 0.0
  %v1442 = vmax.f32 %v1298, 0.0
  %v1443 = vmax.f32 %v1299, 0.0
  %v1444 = vmax.f32 %v1300, 0.0
  %v1445 = vmax.f32 %v1301, 0.0
  %v1446 = vmax.f32 %v1302, 0.0
  %v1447 = vmax.f32 %v1303, 0.0
  %v1448 = vmax.f32 %v1304, 0.0
  %v1449 = vmax.f32 %v1305, 0.0
  %v1450 = vmax.f32 %v1306, 0.0
  %v1451 = vmax.f32 %v1307, 0.0
  %v1452 = vmax.f32 %v1308, 0.0
  %v1453 = vmax.f32 %v1309, 0.0
  %v1454 = vmax.f32 %v1310, 0.0
  %v1455 = vmax.f32 %v1311, 0.0
  %v1456 = vmax.f32 %v1312, 0.0
  %1457 = vst.msk [vmem:[%s3] sm:$0xff] %vm736, %v1313
  %1458 = vst.msk [vmem:[%s3 + $0x8] sm:$0xff] %vm736, %v1314
  %1459 = vst.msk [vmem:[%s3 + $0x10] sm:$0xff] %vm736, %v1315
  %1460 = vst.msk [vmem:[%s3 + $0x18] sm:$0xff] %vm736, %v1316
  %1461 = vst.msk [vmem:[%s3 + $0x20] sm:$0xff] %vm736, %v1317
  %1462 = vst.msk [vmem:[%s3 + $0x28] sm:$0xff] %vm736, %v1318
  %1463 = vst.msk [vmem:[%s3 + $0x30] sm:$0xff] %vm736, %v1319
  %1464 = vst.msk [vmem:[%s3 + $0x38] sm:$0xff] %vm736, %v1320
  %1465 = vst.msk [vmem:[%s3 + $0x40] sm:$0xff] %vm736, %v1321
  %1466 = vst.msk [vmem:[%s3 + $0x48] sm:$0xff] %vm736, %v1322
  %1467 = vst.msk [vmem:[%s3 + $0x50] sm:$0xff] %vm736, %v1323
  %1468 = vst.msk [vmem:[%s3 + $0x58] sm:$0xff] %vm736, %v1324
  %1469 = vst.msk [vmem:[%s3 + $0x60] sm:$0xff] %vm736, %v1325
  %1470 = vst.msk [vmem:[%s3 + $0x68] sm:$0xff] %vm736, %v1326
  %1471 = vst.msk [vmem:[%s3 + $0x70] sm:$0xff] %vm736, %v1327
  %1472 = vst.msk [vmem:[%s3 + $0x78] sm:$0xff] %vm736, %v1328
  %1473 = vst.msk [vmem:[%s3 + $0x80] sm:$0xff] %vm736, %v1329
  %1474 = vst.msk [vmem:[%s3 + $0x88] sm:$0xff] %vm736, %v1330
  %1475 = vst.msk [vmem:[%s3 + $0x90] sm:$0xff] %vm736, %v1331
  %1476 = vst.msk [vmem:[%s3 + $0x98] sm:$0xff] %vm736, %v1332
  %1477 = vst.msk [vmem:[%s3 + $0xa0] sm:$0xff] %vm736, %v1333
  %1478 = vst.msk [vmem:[%s3 + $0xa8] sm:$0xff] %vm736, %v1334
  %1479 = vst.msk [vmem:[%s3 + $0xb0] sm:$0xff] %vm736, %v1335
  %1480 = vst.msk [vmem:[%s3 + $0xb8] sm:$0xff] %vm736, %v1336
  %1481 = vst.msk [vmem:[%s3 + $0xc0] sm:$0xff] %vm736, %v1337
  %1482 = vst.msk [vmem:[%s3 + $0xc8] sm:$0xff] %vm736, %v1338
  %1483 = vst.msk [vmem:[%s3 + $0xd0] sm:$0xff] %vm736, %v1339
  %1484 = vst.msk [vmem:[%s3 + $0xd8] sm:$0xff] %vm736, %v1340
  %1485 = vst.msk [vmem:[%s3 + $0xe0] sm:$0xff] %vm736, %v1341
  %1486 = vst.msk [vmem:[%s3 + $0xe8] sm:$0xff] %vm736, %v1342
  %1487 = vst.msk [vmem:[%s3 + $0xf0] sm:$0xff] %vm736, %v1343
  %1488 = vst.msk [vmem:[%s3 + $0xf8] sm:$0xff] %vm736, %v1344
  %1489 = vst.msk [vmem:[%s3 + $0x100] sm:$0xff] %vm736, %v1345
  %1490 = vst.msk [vmem:[%s3 + $0x108] sm:$0xff] %vm736, %v1346
  %1491 = vst.msk [vmem:[%s3 + $0x110] sm:$0xff] %vm736, %v1347
  %1492 = vst.msk [vmem:[%s3 + $0x118] sm:$0xff] %vm736, %v1348
  %1493 = vst.msk [vmem:[%s3 + $0x120] sm:$0xff] %vm736, %v1349
  %1494 = vst.msk [vmem:[%s3 + $0x128] sm:$0xff] %vm736, %v1350
  %1495 = vst.msk [vmem:[%s3 + $0x130] sm:$0xff] %vm736, %v1351
  %1496 = vst.msk [vmem:[%s3 + $0x138] sm:$0xff] %vm736, %v1352
  %1497 = vst.msk [vmem:[%s3 + $0x140] sm:$0xff] %vm736, %v1353
  %1498 = vst.msk [vmem:[%s3 + $0x148] sm:$0xff] %vm736, %v1354
  %1499 = vst.msk [vmem:[%s3 + $0x150] sm:$0xff] %vm736, %v1355
  %1500 = vst.msk [vmem:[%s3 + $0x158] sm:$0xff] %vm736, %v1356
  %1501 = vst.msk [vmem:[%s3 + $0x160] sm:$0xff] %vm736, %v1357
  %1502 = vst.msk [vmem:[%s3 + $0x168] sm:$0xff] %vm736, %v1358
  %1503 = vst.msk [vmem:[%s3 + $0x170] sm:$0xff] %vm736, %v1359
  %1504 = vst.msk [vmem:[%s3 + $0x178] sm:$0xff] %vm736, %v1360
  %1505 = vst.msk [vmem:[%s3 + $0x180] sm:$0xff] %vm736, %v1361
  %1506 = vst.msk [vmem:[%s3 + $0x188] sm:$0xff] %vm736, %v1362
  %1507 = vst.msk [vmem:[%s3 + $0x190] sm:$0xff] %vm736, %v1363
  %1508 = vst.msk [vmem:[%s3 + $0x198] sm:$0xff] %vm736, %v1364
  %1509 = vst.msk [vmem:[%s3 + $0x1a0] sm:$0xff] %vm736, %v1365
  %1510 = vst.msk [vmem:[%s3 + $0x1a8] sm:$0xff] %vm736, %v1366
  %1511 = vst.msk [vmem:[%s3 + $0x1b0] sm:$0xff] %vm736, %v1367
  %1512 = vst.msk [vmem:[%s3 + $0x1b8] sm:$0xff] %vm736, %v1368
  %1513 = vst.msk [vmem:[%s3 + $0x1c0] sm:$0xff] %vm736, %v1369
  %1514 = vst.msk [vmem:[%s3 + $0x1c8] sm:$0xff] %vm736, %v1370
  %1515 = vst.msk [vmem:[%s3 + $0x1d0] sm:$0xff] %vm736, %v1371
  %1516 = vst.msk [vmem:[%s3 + $0x1d8] sm:$0xff] %vm736, %v1372
  %1517 = vst.msk [vmem:[%s3 + $0x1e0] sm:$0xff] %vm736, %v1373
  %1518 = vst.msk [vmem:[%s3 + $0x1e8] sm:$0xff] %vm736, %v1374
  %1519 = vst.msk [vmem:[%s3 + $0x1f0] sm:$0xff] %vm736, %v1375
  %1520 = vst.msk [vmem:[%s3 + $0x1f8] sm:$0xff] %vm736, %v1376
  %1521 = vst.msk [vmem:[%s3 + $0x200] sm:$0xff] %vm736, %v1377
  %1522 = vst.msk [vmem:[%s3 + $0x208] sm:$0xff] %vm736, %v1378
  %1523 = vst.msk [vmem:[%s3 + $0x210] sm:$0xff] %vm736, %v1379
  %1524 = vst.msk [vmem:[%s3 + $0x218] sm:$0xff] %vm736, %v1380
  %1525 = vst.msk [vmem:[%s3 + $0x220] sm:$0xff] %vm736, %v1381
  %1526 = vst.msk [vmem:[%s3 + $0x228] sm:$0xff] %vm736, %v1382
  %1527 = vst.msk [vmem:[%s3 + $0x230] sm:$0xff] %vm736, %v1383
  %1528 = vst.msk [vmem:[%s3 + $0x238] sm:$0xff] %vm736, %v1384
  %1529 = vst.msk [vmem:[%s3 + $0x240] sm:$0xff] %vm736, %v1385
  %1530 = vst.msk [vmem:[%s3 + $0x248] sm:$0xff] %vm736, %v1386
  %1531 = vst.msk [vmem:[%s3 + $0x250] sm:$0xff] %vm736, %v1387
  %1532 = vst.msk [vmem:[%s3 + $0x258] sm:$0xff] %vm736, %v1388
  %1533 = vst.msk [vmem:[%s3 + $0x260] sm:$0xff] %vm736, %v1389
  %1534 = vst.msk [vmem:[%s3 + $0x268] sm:$0xff] %vm736, %v1390
  %1535 = vst.msk [vmem:[%s3 + $0x270] sm:$0xff] %vm736, %v1391
  %1536 = vst.msk [vmem:[%s3 + $0x278] sm:$0xff] %vm736, %v1392
  %1537 = vst.msk [vmem:[%s3 + $0x280] sm:$0xff] %vm736, %v1393
  %1538 = vst.msk [vmem:[%s3 + $0x288] sm:$0xff] %vm736, %v1394
  %1539 = vst.msk [vmem:[%s3 + $0x290] sm:$0xff] %vm736, %v1395
  %1540 = vst.msk [vmem:[%s3 + $0x298] sm:$0xff] %vm736, %v1396
  %1541 = vst.msk [vmem:[%s3 + $0x2a0] sm:$0xff] %vm736, %v1397
  %1542 = vst.msk [vmem:[%s3 + $0x2a8] sm:$0xff] %vm736, %v1398
  %1543 = vst.msk [vmem:[%s3 + $0x2b0] sm:$0xff] %vm736, %v1399
  %1544 = vst.msk [vmem:[%s3 + $0x2b8] sm:$0xff] %vm736, %v1400
  %1545 = vst.msk [vmem:[%s3 + $0x2c0] sm:$0xff] %vm736, %v1401
  %1546 = vst.msk [vmem:[%s3 + $0x2c8] sm:$0xff] %vm736, %v1402
  %1547 = vst.msk [vmem:[%s3 + $0x2d0] sm:$0xff] %vm736, %v1403
  %1548 = vst.msk [vmem:[%s3 + $0x2d8] sm:$0xff] %vm736, %v1404
  %1549 = vst.msk [vmem:[%s3 + $0x2e0] sm:$0xff] %vm736, %v1405
  %1550 = vst.msk [vmem:[%s3 + $0x2e8] sm:$0xff] %vm736, %v1406
  %1551 = vst.msk [vmem:[%s3 + $0x2f0] sm:$0xff] %vm736, %v1407
  %1552 = vst.msk [vmem:[%s3 + $0x2f8] sm:$0xff] %vm736, %v1408
  %1553 = vst.msk [vmem:[%s3 + $0x300] sm:$0xff] %vm736, %v1409
  %1554 = vst.msk [vmem:[%s3 + $0x308] sm:$0xff] %vm736, %v1410
  %1555 = vst.msk [vmem:[%s3 + $0x310] sm:$0xff] %vm736, %v1411
  %1556 = vst.msk [vmem:[%s3 + $0x318] sm:$0xff] %vm736, %v1412
  %1557 = vst.msk [vmem:[%s3 + $0x320] sm:$0xff] %vm736, %v1413
  %1558 = vst.msk [vmem:[%s3 + $0x328] sm:$0xff] %vm736, %v1414
  %1559 = vst.msk [vmem:[%s3 + $0x330] sm:$0xff] %vm736, %v1415
  %1560 = vst.msk [vmem:[%s3 + $0x338] sm:$0xff] %vm736, %v1416
  %1561 = vst.msk [vmem:[%s3 + $0x340] sm:$0xff] %vm736, %v1417
  %1562 = vst.msk [vmem:[%s3 + $0x348] sm:$0xff] %vm736, %v1418
  %1563 = vst.msk [vmem:[%s3 + $0x350] sm:$0xff] %vm736, %v1419
  %1564 = vst.msk [vmem:[%s3 + $0x358] sm:$0xff] %vm736, %v1420
  %1565 = vst.msk [vmem:[%s3 + $0x360] sm:$0xff] %vm736, %v1421
  %1566 = vst.msk [vmem:[%s3 + $0x368] sm:$0xff] %vm736, %v1422
  %1567 = vst.msk [vmem:[%s3 + $0x370] sm:$0xff] %vm736, %v1423
  %1568 = vst.msk [vmem:[%s3 + $0x378] sm:$0xff] %vm736, %v1424
  %1569 = vst.msk [vmem:[%s3 + $0x380] sm:$0xff] %vm736, %v1425
  %1570 = vst.msk [vmem:[%s3 + $0x388] sm:$0xff] %vm736, %v1426
  %1571 = vst.msk [vmem:[%s3 + $0x390] sm:$0xff] %vm736, %v1427
  %1572 = vst.msk [vmem:[%s3 + $0x398] sm:$0xff] %vm736, %v1428
  %1573 = vst.msk [vmem:[%s3 + $0x3a0] sm:$0xff] %vm736, %v1429
  %1574 = vst.msk [vmem:[%s3 + $0x3a8] sm:$0xff] %vm736, %v1430
  %1575 = vst.msk [vmem:[%s3 + $0x3b0] sm:$0xff] %vm736, %v1431
  %1576 = vst.msk [vmem:[%s3 + $0x3b8] sm:$0xff] %vm736, %v1432
  %1577 = vst.msk [vmem:[%s3 + $0x3c0] sm:$0xff] %vm736, %v1433
  %1578 = vst.msk [vmem:[%s3 + $0x3c8] sm:$0xff] %vm736, %v1434
  %1579 = vst.msk [vmem:[%s3 + $0x3d0] sm:$0xff] %vm736, %v1435
  %1580 = vst.msk [vmem:[%s3 + $0x3d8] sm:$0xff] %vm736, %v1436
  %1581 = vst.msk [vmem:[%s3 + $0x3e0] sm:$0xff] %vm736, %v1437
  %1582 = vst.msk [vmem:[%s3 + $0x3e8] sm:$0xff] %vm736, %v1438
  %1583 = vst.msk [vmem:[%s3 + $0x3f0] sm:$0xff] %vm736, %v1439
  %1584 = vst.msk [vmem:[%s3 + $0x3f8] sm:$0xff] %vm736, %v1440
  %1585 = vst.msk [vmem:[%s3 + $0x400] sm:$0xff] %vm736, %v1441
  %1586 = vst.msk [vmem:[%s3 + $0x408] sm:$0xff] %vm736, %v1442
  %1587 = vst.msk [vmem:[%s3 + $0x410] sm:$0xff] %vm736, %v1443
  %1588 = vst.msk [vmem:[%s3 + $0x418] sm:$0xff] %vm736, %v1444
  %1589 = vst.msk [vmem:[%s3 + $0x420] sm:$0xff] %vm736, %v1445
  %1590 = vst.msk [vmem:[%s3 + $0x428] sm:$0xff] %vm736, %v1446
  %1591 = vst.msk [vmem:[%s3 + $0x430] sm:$0xff] %vm736, %v1447
  %1592 = vst.msk [vmem:[%s3 + $0x438] sm:$0xff] %vm736, %v1448
  %1593 = vst.msk [vmem:[%s3 + $0x440] sm:$0xff] %vm736, %v1449
  %1594 = vst.msk [vmem:[%s3 + $0x448] sm:$0xff] %vm736, %v1450
  %1595 = vst.msk [vmem:[%s3 + $0x450] sm:$0xff] %vm736, %v1451
  %1596 = vst.msk [vmem:[%s3 + $0x458] sm:$0xff] %vm736, %v1452
  %1597 = vst.msk [vmem:[%s3 + $0x460] sm:$0xff] %vm736, %v1453
  %1598 = vst.msk [vmem:[%s3 + $0x468] sm:$0xff] %vm736, %v1454
  %1599 = vst.msk [vmem:[%s3 + $0x470] sm:$0xff] %vm736, %v1455
  %1600 = vst.msk [vmem:[%s3 + $0x478] sm:$0xff] %vm736, %v1456
  // Predicated region
  $region14: #{forward.16} parent=0 // pred_check
    _
  $region15: #{forward.16} parent=0 // pred_check_branch
    %1602 = sbr.rel (0) target = $region17
  $region16: #{forward.16} parent=0 // pred_region
    _
  $region17: #{forward.16} parent=0 // pred_fallthru
    _
  // Predicated region
  $region18: #{forward.16} parent=0 // pred_check
    _
  $region19: #{forward.16} parent=0 // pred_check_branch
    %1604 = sbr.rel (0) target = $region21
  $region20: #{forward.16} parent=0 // pred_region
    _
  $region21: #{forward.16} parent=0 // pred_fallthru
    _
  // Predicated region
  $region22: #{forward.16} parent=0 // pred_check
    _
  $region23: #{forward.16} parent=0 // pred_check_branch
    %1606 = sbr.rel (0) target = $region25
  $region24: #{forward.16} parent=0 // pred_region
    _
  $region25: #{forward.16} parent=0 // pred_fallthru
    _
  // Predicated region
  $region26: #{forward.16} parent=0 // pred_check
    _
  $region27: #{forward.16} parent=0 // pred_check_branch
    %1608 = sbr.rel (0) target = $region29
  $region28: #{forward.16} parent=0 // pred_region
    _
  $region29: #{forward.16} parent=0 // pred_fallthru
    _

// kernel: forward.13
$region0: #{forward.13}
  #allocation0 [shape = 'u32[]', space=smem, size = 0x4, offset = 0x4, fixed_abs, tag = 'smem constant byte address 0x4 - core index']
  #allocation1 [shape = 'u32[144,128]{1,0:T(1,128)}', space=vmem, size = 0x12000, scoped, tag = 'internal scratch']
  %s0 = inlined_call_operand.vmem [shape: bf16[128,800], index: 0, kind: input, shape index: {}]
  %s1 = inlined_call_operand.vmem [shape: bf16[800,32], index: 1, kind: input, shape index: {}]
  %s2 = inlined_call_operand.vmem [shape: f32[1,32], index: 2, kind: input, shape index: {}]
  %s3 = inlined_call_operand.vmem [shape: f32[128,32], index: 3, kind: output, shape index: {}]
  %s4 = sld [smem:[#allocation0]]
  $region22: #{forward.13} parent=0
    _
  %s6 = ssub.s32 1, %s4
  %s7 = scalar_select 0, %s6, %s4
  // Predicated region
  $region2: #{forward.13} parent=0 // pred_check
    _
  $region3: #{forward.13} parent=0 // pred_check_branch
    %9 = sbr.rel (0) target = $region5
  $region4: #{forward.13} parent=0 // pred_region
    _
  $region5: #{forward.13} parent=0 // pred_fallthru
    _
  // Predicated region
  $region6: #{forward.13} parent=0 // pred_check
    _
  $region7: #{forward.13} parent=0 // pred_check_branch
    %11 = sbr.rel (0) target = $region9
  $region8: #{forward.13} parent=0 // pred_region
    _
  $region9: #{forward.13} parent=0 // pred_fallthru
    _
  // Predicated region
  $region10: #{forward.13} parent=0 // pred_check
    _
  $region11: #{forward.13} parent=0 // pred_check_branch
    %13 = sbr.rel (0) target = $region13
  $region12: #{forward.13} parent=0 // pred_region
    _
  $region13: #{forward.13} parent=0 // pred_fallthru
    _
  %v15 = vld [vmem:[%s0] sm:$0xff]
  %v16 = vld [vmem:[%s0 + $0x8] sm:$0xff]
  %v17 = vld [vmem:[%s0 + $0x10] sm:$0xff]
  %v18 = vld [vmem:[%s0 + $0x18] sm:$0xf]
  %v19 = vld [vmem:[%s0 + $0x1c] sm:$0xff]
  %v20 = vld [vmem:[%s0 + $0x24] sm:$0xff]
  %v21 = vld [vmem:[%s0 + $0x2c] sm:$0xff]
  %v22 = vld [vmem:[%s0 + $0x34] sm:$0xf]
  %v23 = vld [vmem:[%s0 + $0x38] sm:$0xff]
  %v24 = vld [vmem:[%s0 + $0x40] sm:$0xff]
  %v25 = vld [vmem:[%s0 + $0x48] sm:$0xff]
  %v26 = vld [vmem:[%s0 + $0x50] sm:$0xf]
  %v27 = vld [vmem:[%s0 + $0x54] sm:$0xff]
  %v28 = vld [vmem:[%s0 + $0x5c] sm:$0xff]
  %v29 = vld [vmem:[%s0 + $0x64] sm:$0xff]
  %v30 = vld [vmem:[%s0 + $0x6c] sm:$0xf]
  %v31 = vld [vmem:[%s0 + $0x70] sm:$0xff]
  %v32 = vld [vmem:[%s0 + $0x78] sm:$0xff]
  %v33 = vld [vmem:[%s0 + $0x80] sm:$0xff]
  %v34 = vld [vmem:[%s0 + $0x88] sm:$0xf]
  %v35 = vld [vmem:[%s0 + $0x8c] sm:$0xff]
  %v36 = vld [vmem:[%s0 + $0x94] sm:$0xff]
  %v37 = vld [vmem:[%s0 + $0x9c] sm:$0xff]
  %v38 = vld [vmem:[%s0 + $0xa4] sm:$0xf]
  %v39 = vld [vmem:[%s0 + $0xa8] sm:$0xff]
  %v40 = vld [vmem:[%s0 + $0xb0] sm:$0xff]
  %v41 = vld [vmem:[%s0 + $0xb8] sm:$0xff]
  %v42 = vld [vmem:[%s0 + $0xc0] sm:$0xf]
  %v43 = vld [vmem:[%s0 + $0xc4] sm:$0xff]
  %v44 = vld [vmem:[%s0 + $0xcc] sm:$0xff]
  %v45 = vld [vmem:[%s0 + $0xd4] sm:$0xff]
  %v46 = vld [vmem:[%s0 + $0xdc] sm:$0xf]
  %v47 = vld [vmem:[%s0 + $0xe0] sm:$0xff]
  %v48 = vld [vmem:[%s0 + $0xe8] sm:$0xff]
  %v49 = vld [vmem:[%s0 + $0xf0] sm:$0xff]
  %v50 = vld [vmem:[%s0 + $0xf8] sm:$0xf]
  %v51 = vld [vmem:[%s0 + $0xfc] sm:$0xff]
  %v52 = vld [vmem:[%s0 + $0x104] sm:$0xff]
  %v53 = vld [vmem:[%s0 + $0x10c] sm:$0xff]
  %v54 = vld [vmem:[%s0 + $0x114] sm:$0xf]
  %v55 = vld [vmem:[%s0 + $0x118] sm:$0xff]
  %v56 = vld [vmem:[%s0 + $0x120] sm:$0xff]
  %v57 = vld [vmem:[%s0 + $0x128] sm:$0xff]
  %v58 = vld [vmem:[%s0 + $0x130] sm:$0xf]
  %v59 = vld [vmem:[%s0 + $0x134] sm:$0xff]
  %v60 = vld [vmem:[%s0 + $0x13c] sm:$0xff]
  %v61 = vld [vmem:[%s0 + $0x144] sm:$0xff]
  %v62 = vld [vmem:[%s0 + $0x14c] sm:$0xf]
  %v63 = vld [vmem:[%s0 + $0x150] sm:$0xff]
  %v64 = vld [vmem:[%s0 + $0x158] sm:$0xff]
  %v65 = vld [vmem:[%s0 + $0x160] sm:$0xff]
  %v66 = vld [vmem:[%s0 + $0x168] sm:$0xf]
  %v67 = vld [vmem:[%s0 + $0x16c] sm:$0xff]
  %v68 = vld [vmem:[%s0 + $0x174] sm:$0xff]
  %v69 = vld [vmem:[%s0 + $0x17c] sm:$0xff]
  %v70 = vld [vmem:[%s0 + $0x184] sm:$0xf]
  %v71 = vld [vmem:[%s0 + $0x188] sm:$0xff]
  %v72 = vld [vmem:[%s0 + $0x190] sm:$0xff]
  %v73 = vld [vmem:[%s0 + $0x198] sm:$0xff]
  %v74 = vld [vmem:[%s0 + $0x1a0] sm:$0xf]
  %v75 = vld [vmem:[%s0 + $0x1a4] sm:$0xff]
  %v76 = vld [vmem:[%s0 + $0x1ac] sm:$0xff]
  %v77 = vld [vmem:[%s0 + $0x1b4] sm:$0xff]
  %v78 = vld [vmem:[%s0 + $0x1bc] sm:$0xf]
  %v79 = vld [vmem:[%s1] sm:$0xf]
  %v80 = vld [vmem:[%s1 + $0x4] sm:$0xf]
  %v81 = vld [vmem:[%s1 + $0x8] sm:$0xf]
  %v82 = vld [vmem:[%s1 + $0xc] sm:$0xf]
  %v83 = vld [vmem:[%s1 + $0x10] sm:$0xf]
  %v84 = vld [vmem:[%s1 + $0x14] sm:$0xf]
  %v85 = vld [vmem:[%s1 + $0x18] sm:$0xf]
  %v86 = vld [vmem:[%s1 + $0x1c] sm:$0xf]
  %v87 = vld [vmem:[%s1 + $0x20] sm:$0xf]
  %v88 = vld [vmem:[%s1 + $0x24] sm:$0xf]
  %v89 = vld [vmem:[%s1 + $0x28] sm:$0xf]
  %v90 = vld [vmem:[%s1 + $0x2c] sm:$0xf]
  %v91 = vld [vmem:[%s1 + $0x30] sm:$0xf]
  %v92 = vld [vmem:[%s1 + $0x34] sm:$0xf]
  %v93 = vld [vmem:[%s1 + $0x38] sm:$0xf]
  %v94 = vld [vmem:[%s1 + $0x3c] sm:$0xf]
  %v95 = vld [vmem:[%s1 + $0x40] sm:$0xf]
  %v96 = vld [vmem:[%s1 + $0x44] sm:$0xf]
  %v97 = vld [vmem:[%s1 + $0x48] sm:$0xf]
  %v98 = vld [vmem:[%s1 + $0x4c] sm:$0xf]
  %v99 = vld [vmem:[%s1 + $0x50] sm:$0xf]
  %v100 = vld [vmem:[%s1 + $0x54] sm:$0xf]
  %v101 = vld [vmem:[%s1 + $0x58] sm:$0xf]
  %v102 = vld [vmem:[%s1 + $0x5c] sm:$0xf]
  %v103 = vld [vmem:[%s1 + $0x60] sm:$0xf]
  %v104 = vld [vmem:[%s1 + $0x64] sm:$0xf]
  %v105 = vld [vmem:[%s1 + $0x68] sm:$0xf]
  %v106 = vld [vmem:[%s1 + $0x6c] sm:$0xf]
  %v107 = vld [vmem:[%s1 + $0x70] sm:$0xf]
  %v108 = vld [vmem:[%s1 + $0x74] sm:$0xf]
  %v109 = vld [vmem:[%s1 + $0x78] sm:$0xf]
  %v110 = vld [vmem:[%s1 + $0x7c] sm:$0xf]
  %v111 = vld [vmem:[%s1 + $0x80] sm:$0xf]
  %v112 = vld [vmem:[%s1 + $0x84] sm:$0xf]
  %v113 = vld [vmem:[%s1 + $0x88] sm:$0xf]
  %v114 = vld [vmem:[%s1 + $0x8c] sm:$0xf]
  %v115 = vld [vmem:[%s1 + $0x90] sm:$0xf]
  %v116 = vld [vmem:[%s1 + $0x94] sm:$0xf]
  %v117 = vld [vmem:[%s1 + $0x98] sm:$0xf]
  %v118 = vld [vmem:[%s1 + $0x9c] sm:$0xf]
  %v119 = vld [vmem:[%s1 + $0xa0] sm:$0xf]
  %v120 = vld [vmem:[%s1 + $0xa4] sm:$0xf]
  %v121 = vld [vmem:[%s1 + $0xa8] sm:$0xf]
  %v122 = vld [vmem:[%s1 + $0xac] sm:$0xf]
  %v123 = vld [vmem:[%s1 + $0xb0] sm:$0xf]
  %v124 = vld [vmem:[%s1 + $0xb4] sm:$0xf]
  %v125 = vld [vmem:[%s1 + $0xb8] sm:$0xf]
  %v126 = vld [vmem:[%s1 + $0xbc] sm:$0xf]
  %v127 = vld [vmem:[%s1 + $0xc0] sm:$0xf]
  %v128 = vld [vmem:[%s1 + $0xc4] sm:$0xf]
  %v129 = vld [vmem:[%s1 + $0xc8] sm:$0xf]
  %v130 = vld [vmem:[%s1 + $0xcc] sm:$0xf]
  %v131 = vld [vmem:[%s1 + $0xd0] sm:$0xf]
  %v132 = vld [vmem:[%s1 + $0xd4] sm:$0xf]
  %v133 = vld [vmem:[%s1 + $0xd8] sm:$0xf]
  %v134 = vld [vmem:[%s1 + $0xdc] sm:$0xf]
  %v135 = vld [vmem:[%s1 + $0xe0] sm:$0xf]
  %v136 = vld [vmem:[%s1 + $0xe4] sm:$0xf]
  %v137 = vld [vmem:[%s1 + $0xe8] sm:$0xf]
  %v138 = vld [vmem:[%s1 + $0xec] sm:$0xf]
  %v139 = vld [vmem:[%s1 + $0xf0] sm:$0xf]
  %v140 = vld [vmem:[%s1 + $0xf4] sm:$0xf]
  %v141 = vld [vmem:[%s1 + $0xf8] sm:$0xf]
  %v142 = vld [vmem:[%s1 + $0xfc] sm:$0xf]
  %v143 = vld [vmem:[%s1 + $0x100] sm:$0xf]
  %v144 = vld [vmem:[%s1 + $0x104] sm:$0xf]
  %v145 = vld [vmem:[%s1 + $0x108] sm:$0xf]
  %v146 = vld [vmem:[%s1 + $0x10c] sm:$0xf]
  %v147 = vld [vmem:[%s1 + $0x110] sm:$0xf]
  %v148 = vld [vmem:[%s1 + $0x114] sm:$0xf]
  %v149 = vld [vmem:[%s1 + $0x118] sm:$0xf]
  %v150 = vld [vmem:[%s1 + $0x11c] sm:$0xf]
  %v151 = vld [vmem:[%s1 + $0x120] sm:$0xf]
  %v152 = vld [vmem:[%s1 + $0x124] sm:$0xf]
  %v153 = vld [vmem:[%s1 + $0x128] sm:$0xf]
  %v154 = vld [vmem:[%s1 + $0x12c] sm:$0xf]
  %v155 = vld [vmem:[%s1 + $0x130] sm:$0xf]
  %v156 = vld [vmem:[%s1 + $0x134] sm:$0xf]
  %v157 = vld [vmem:[%s1 + $0x138] sm:$0xf]
  %v158 = vld [vmem:[%s1 + $0x13c] sm:$0xf]
  %v159 = vld [vmem:[%s1 + $0x140] sm:$0xf]
  %v160 = vld [vmem:[%s1 + $0x144] sm:$0xf]
  %v161 = vld [vmem:[%s1 + $0x148] sm:$0xf]
  %v162 = vld [vmem:[%s1 + $0x14c] sm:$0xf]
  %v163 = vld [vmem:[%s1 + $0x150] sm:$0xf]
  %v164 = vld [vmem:[%s1 + $0x154] sm:$0xf]
  %v165 = vld [vmem:[%s1 + $0x158] sm:$0xf]
  %v166 = vld [vmem:[%s1 + $0x15c] sm:$0xf]
  %v167 = vld [vmem:[%s1 + $0x160] sm:$0xf]
  %v168 = vld [vmem:[%s1 + $0x164] sm:$0xf]
  %v169 = vld [vmem:[%s1 + $0x168] sm:$0xf]
  %v170 = vld [vmem:[%s1 + $0x16c] sm:$0xf]
  %v171 = vld [vmem:[%s1 + $0x170] sm:$0xf]
  %v172 = vld [vmem:[%s1 + $0x174] sm:$0xf]
  %v173 = vld [vmem:[%s1 + $0x178] sm:$0xf]
  %v174 = vld [vmem:[%s1 + $0x17c] sm:$0xf]
  %v175 = vld [vmem:[%s1 + $0x180] sm:$0xf]
  %v176 = vld [vmem:[%s1 + $0x184] sm:$0xf]
  %v177 = vld [vmem:[%s1 + $0x188] sm:$0xf]
  %v178 = vld [vmem:[%s1 + $0x18c] sm:$0xf]
  %v179 = vld [vmem:[%s2] sm:$0x1]
  %v181 = vlaneseq
  %v182 = vshrl.u32 %v181, 7
  %v183 = vsub.s32 0, %v182
  %v184 = vrot.slane %v179, %v183
  %v250 = vunpack.c.l.b16 %v15
  %v251 = vunpack.c.h.b16 %v15
  %v252 = vunpack.c.l.b16 %v16
  %v253 = vunpack.c.h.b16 %v16
  %v254 = vunpack.c.l.b16 %v17
  %v255 = vunpack.c.h.b16 %v17
  %v256 = vunpack.c.l.b16 %v18
  %v257 = vunpack.c.l.b16 %v19
  %v258 = vunpack.c.h.b16 %v19
  %v259 = vunpack.c.l.b16 %v20
  %v260 = vunpack.c.h.b16 %v20
  %v261 = vunpack.c.l.b16 %v21
  %v262 = vunpack.c.h.b16 %v21
  %v263 = vunpack.c.l.b16 %v22
  %v264 = vunpack.c.l.b16 %v23
  %v265 = vunpack.c.h.b16 %v23
  %v266 = vunpack.c.l.b16 %v24
  %v267 = vunpack.c.h.b16 %v24
  %v268 = vunpack.c.l.b16 %v25
  %v269 = vunpack.c.h.b16 %v25
  %v270 = vunpack.c.l.b16 %v26
  %v271 = vunpack.c.l.b16 %v27
  %v272 = vunpack.c.h.b16 %v27
  %v273 = vunpack.c.l.b16 %v28
  %v274 = vunpack.c.h.b16 %v28
  %v275 = vunpack.c.l.b16 %v29
  %v276 = vunpack.c.h.b16 %v29
  %v277 = vunpack.c.l.b16 %v30
  %v278 = vunpack.c.l.b16 %v31
  %v279 = vunpack.c.h.b16 %v31
  %v280 = vunpack.c.l.b16 %v32
  %v281 = vunpack.c.h.b16 %v32
  %v282 = vunpack.c.l.b16 %v33
  %v283 = vunpack.c.h.b16 %v33
  %v284 = vunpack.c.l.b16 %v34
  %v285 = vunpack.c.l.b16 %v35
  %v286 = vunpack.c.h.b16 %v35
  %v287 = vunpack.c.l.b16 %v36
  %v288 = vunpack.c.h.b16 %v36
  %v289 = vunpack.c.l.b16 %v37
  %v290 = vunpack.c.h.b16 %v37
  %v291 = vunpack.c.l.b16 %v38
  %v292 = vunpack.c.l.b16 %v39
  %v293 = vunpack.c.h.b16 %v39
  %v294 = vunpack.c.l.b16 %v40
  %v295 = vunpack.c.h.b16 %v40
  %v296 = vunpack.c.l.b16 %v41
  %v297 = vunpack.c.h.b16 %v41
  %v298 = vunpack.c.l.b16 %v42
  %v299 = vunpack.c.l.b16 %v43
  %v300 = vunpack.c.h.b16 %v43
  %v301 = vunpack.c.l.b16 %v44
  %v302 = vunpack.c.h.b16 %v44
  %v303 = vunpack.c.l.b16 %v45
  %v304 = vunpack.c.h.b16 %v45
  %v305 = vunpack.c.l.b16 %v46
  %v306 = vunpack.c.l.b16 %v47
  %v307 = vunpack.c.h.b16 %v47
  %v308 = vunpack.c.l.b16 %v48
  %v309 = vunpack.c.h.b16 %v48
  %v310 = vunpack.c.l.b16 %v49
  %v311 = vunpack.c.h.b16 %v49
  %v312 = vunpack.c.l.b16 %v50
  %v313 = vunpack.c.l.b16 %v51
  %v314 = vunpack.c.h.b16 %v51
  %v315 = vunpack.c.l.b16 %v52
  %v316 = vunpack.c.h.b16 %v52
  %v317 = vunpack.c.l.b16 %v53
  %v318 = vunpack.c.h.b16 %v53
  %v319 = vunpack.c.l.b16 %v54
  %v320 = vunpack.c.l.b16 %v55
  %v321 = vunpack.c.h.b16 %v55
  %v322 = vunpack.c.l.b16 %v56
  %v323 = vunpack.c.h.b16 %v56
  %v324 = vunpack.c.l.b16 %v57
  %v325 = vunpack.c.h.b16 %v57
  %v326 = vunpack.c.l.b16 %v58
  %v327 = vunpack.c.l.b16 %v59
  %v328 = vunpack.c.h.b16 %v59
  %v329 = vunpack.c.l.b16 %v60
  %v330 = vunpack.c.h.b16 %v60
  %v331 = vunpack.c.l.b16 %v61
  %v332 = vunpack.c.h.b16 %v61
  %v333 = vunpack.c.l.b16 %v62
  %v334 = vunpack.c.l.b16 %v63
  %v335 = vunpack.c.h.b16 %v63
  %v336 = vunpack.c.l.b16 %v64
  %v337 = vunpack.c.h.b16 %v64
  %v338 = vunpack.c.l.b16 %v65
  %v339 = vunpack.c.h.b16 %v65
  %v340 = vunpack.c.l.b16 %v66
  %v341 = vunpack.c.l.b16 %v67
  %v342 = vunpack.c.h.b16 %v67
  %v343 = vunpack.c.l.b16 %v68
  %v344 = vunpack.c.h.b16 %v68
  %v345 = vunpack.c.l.b16 %v69
  %v346 = vunpack.c.h.b16 %v69
  %v347 = vunpack.c.l.b16 %v70
  %v348 = vunpack.c.l.b16 %v71
  %v349 = vunpack.c.h.b16 %v71
  %v350 = vunpack.c.l.b16 %v72
  %v351 = vunpack.c.h.b16 %v72
  %v352 = vunpack.c.l.b16 %v73
  %v353 = vunpack.c.h.b16 %v73
  %v354 = vunpack.c.l.b16 %v74
  %v355 = vunpack.c.l.b16 %v75
  %v356 = vunpack.c.h.b16 %v75
  %v357 = vunpack.c.l.b16 %v76
  %v358 = vunpack.c.h.b16 %v76
  %v359 = vunpack.c.l.b16 %v77
  %v360 = vunpack.c.h.b16 %v77
  %v361 = vunpack.c.l.b16 %v78
  %v362 = vpack.c.b16 %v257, %v250
  %v363 = vpack.c.b16 %v258, %v251
  %v364 = vpack.c.b16 %v259, %v252
  %v365 = vpack.c.b16 %v260, %v253
  %v366 = vpack.c.b16 %v261, %v254
  %v367 = vpack.c.b16 %v262, %v255
  %v368 = vpack.c.b16 %v263, %v256
  %v369 = vpack.c.b16 %v271, %v264
  %v370 = vpack.c.b16 %v272, %v265
  %v371 = vpack.c.b16 %v273, %v266
  %v372 = vpack.c.b16 %v274, %v267
  %v373 = vpack.c.b16 %v275, %v268
  %v374 = vpack.c.b16 %v276, %v269
  %v375 = vpack.c.b16 %v277, %v270
  %v376 = vpack.c.b16 %v285, %v278
  %v377 = vpack.c.b16 %v286, %v279
  %v378 = vpack.c.b16 %v287, %v280
  %v379 = vpack.c.b16 %v288, %v281
  %v380 = vpack.c.b16 %v289, %v282
  %v381 = vpack.c.b16 %v290, %v283
  %v382 = vpack.c.b16 %v291, %v284
  %v383 = vpack.c.b16 %v299, %v292
  %v384 = vpack.c.b16 %v300, %v293
  %v385 = vpack.c.b16 %v301, %v294
  %v386 = vpack.c.b16 %v302, %v295
  %v387 = vpack.c.b16 %v303, %v296
  %v388 = vpack.c.b16 %v304, %v297
  %v389 = vpack.c.b16 %v305, %v298
  %v390 = vpack.c.b16 %v313, %v306
  %v391 = vpack.c.b16 %v314, %v307
  %v392 = vpack.c.b16 %v315, %v308
  %v393 = vpack.c.b16 %v316, %v309
  %v394 = vpack.c.b16 %v317, %v310
  %v395 = vpack.c.b16 %v318, %v311
  %v396 = vpack.c.b16 %v319, %v312
  %v397 = vpack.c.b16 %v327, %v320
  %v398 = vpack.c.b16 %v328, %v321
  %v399 = vpack.c.b16 %v329, %v322
  %v400 = vpack.c.b16 %v330, %v323
  %v401 = vpack.c.b16 %v331, %v324
  %v402 = vpack.c.b16 %v332, %v325
  %v403 = vpack.c.b16 %v333, %v326
  %v404 = vpack.c.b16 %v341, %v334
  %v405 = vpack.c.b16 %v342, %v335
  %v406 = vpack.c.b16 %v343, %v336
  %v407 = vpack.c.b16 %v344, %v337
  %v408 = vpack.c.b16 %v345, %v338
  %v409 = vpack.c.b16 %v346, %v339
  %v410 = vpack.c.b16 %v347, %v340
  %v411 = vpack.c.b16 %v355, %v348
  %v412 = vpack.c.b16 %v356, %v349
  %v413 = vpack.c.b16 %v357, %v350
  %v414 = vpack.c.b16 %v358, %v351
  %v415 = vpack.c.b16 %v359, %v352
  %v416 = vpack.c.b16 %v360, %v353
  %v417 = vpack.c.b16 %v361, %v354
  %v566 = vunpack.c.l.b16 %v79
  %v567 = vunpack.c.l.b16 %v80
  %v568 = vunpack.c.l.b16 %v81
  %v569 = vunpack.c.l.b16 %v82
  %v570 = vunpack.c.l.b16 %v83
  %v571 = vunpack.c.l.b16 %v84
  %v572 = vunpack.c.l.b16 %v85
  %v573 = vunpack.c.l.b16 %v86
  %v574 = vunpack.c.l.b16 %v87
  %v575 = vunpack.c.l.b16 %v88
  %v576 = vunpack.c.l.b16 %v89
  %v577 = vunpack.c.l.b16 %v90
  %v578 = vunpack.c.l.b16 %v91
  %v579 = vunpack.c.l.b16 %v92
  %v580 = vunpack.c.l.b16 %v93
  %v581 = vunpack.c.l.b16 %v94
  %v582 = vunpack.c.l.b16 %v95
  %v583 = vunpack.c.l.b16 %v96
  %v584 = vunpack.c.l.b16 %v97
  %v585 = vunpack.c.l.b16 %v98
  %v586 = vunpack.c.l.b16 %v99
  %v587 = vunpack.c.l.b16 %v100
  %v588 = vunpack.c.l.b16 %v101
  %v589 = vunpack.c.l.b16 %v102
  %v590 = vunpack.c.l.b16 %v103
  %v591 = vunpack.c.l.b16 %v104
  %v592 = vunpack.c.l.b16 %v105
  %v593 = vunpack.c.l.b16 %v106
  %v594 = vunpack.c.l.b16 %v107
  %v595 = vunpack.c.l.b16 %v108
  %v596 = vunpack.c.l.b16 %v109
  %v597 = vunpack.c.l.b16 %v110
  %v598 = vunpack.c.l.b16 %v111
  %v599 = vunpack.c.l.b16 %v112
  %v600 = vunpack.c.l.b16 %v113
  %v601 = vunpack.c.l.b16 %v114
  %v602 = vunpack.c.l.b16 %v115
  %v603 = vunpack.c.l.b16 %v116
  %v604 = vunpack.c.l.b16 %v117
  %v605 = vunpack.c.l.b16 %v118
  %v606 = vunpack.c.l.b16 %v119
  %v607 = vunpack.c.l.b16 %v120
  %v608 = vunpack.c.l.b16 %v121
  %v609 = vunpack.c.l.b16 %v122
  %v610 = vunpack.c.l.b16 %v123
  %v611 = vunpack.c.l.b16 %v124
  %v612 = vunpack.c.l.b16 %v125
  %v613 = vunpack.c.l.b16 %v126
  %v614 = vunpack.c.l.b16 %v127
  %v615 = vunpack.c.l.b16 %v128
  %v616 = vunpack.c.l.b16 %v129
  %v617 = vunpack.c.l.b16 %v130
  %v618 = vunpack.c.l.b16 %v131
  %v619 = vunpack.c.l.b16 %v132
  %v620 = vunpack.c.l.b16 %v133
  %v621 = vunpack.c.l.b16 %v134
  %v622 = vunpack.c.l.b16 %v135
  %v623 = vunpack.c.l.b16 %v136
  %v624 = vunpack.c.l.b16 %v137
  %v625 = vunpack.c.l.b16 %v138
  %v626 = vunpack.c.l.b16 %v139
  %v627 = vunpack.c.l.b16 %v140
  %v628 = vunpack.c.l.b16 %v141
  %v629 = vunpack.c.l.b16 %v142
  %v630 = vunpack.c.l.b16 %v143
  %v631 = vunpack.c.l.b16 %v144
  %v632 = vunpack.c.l.b16 %v145
  %v633 = vunpack.c.l.b16 %v146
  %v634 = vunpack.c.l.b16 %v147
  %v635 = vunpack.c.l.b16 %v148
  %v636 = vunpack.c.l.b16 %v149
  %v637 = vunpack.c.l.b16 %v150
  %v638 = vunpack.c.l.b16 %v151
  %v639 = vunpack.c.l.b16 %v152
  %v640 = vunpack.c.l.b16 %v153
  %v641 = vunpack.c.l.b16 %v154
  %v642 = vunpack.c.l.b16 %v155
  %v643 = vunpack.c.l.b16 %v156
  %v644 = vunpack.c.l.b16 %v157
  %v645 = vunpack.c.l.b16 %v158
  %v646 = vunpack.c.l.b16 %v159
  %v647 = vunpack.c.l.b16 %v160
  %v648 = vunpack.c.l.b16 %v161
  %v649 = vunpack.c.l.b16 %v162
  %v650 = vunpack.c.l.b16 %v163
  %v651 = vunpack.c.l.b16 %v164
  %v652 = vunpack.c.l.b16 %v165
  %v653 = vunpack.c.l.b16 %v166
  %v654 = vunpack.c.l.b16 %v167
  %v655 = vunpack.c.l.b16 %v168
  %v656 = vunpack.c.l.b16 %v169
  %v657 = vunpack.c.l.b16 %v170
  %v658 = vunpack.c.l.b16 %v171
  %v659 = vunpack.c.l.b16 %v172
  %v660 = vunpack.c.l.b16 %v173
  %v661 = vunpack.c.l.b16 %v174
  %v662 = vunpack.c.l.b16 %v175
  %v663 = vunpack.c.l.b16 %v176
  %v664 = vunpack.c.l.b16 %v177
  %v665 = vunpack.c.l.b16 %v178
  %v666 = vpack.c.b16 %v567, %v566
  %v667 = vpack.c.b16 %v569, %v568
  %v668 = vpack.c.b16 %v571, %v570
  %v669 = vpack.c.b16 %v573, %v572
  %v670 = vpack.c.b16 %v575, %v574
  %v671 = vpack.c.b16 %v577, %v576
  %v672 = vpack.c.b16 %v579, %v578
  %v673 = vpack.c.b16 %v581, %v580
  %v674 = vpack.c.b16 %v583, %v582
  %v675 = vpack.c.b16 %v585, %v584
  %v676 = vpack.c.b16 %v587, %v586
  %v677 = vpack.c.b16 %v589, %v588
  %v678 = vpack.c.b16 %v591, %v590
  %v679 = vpack.c.b16 %v593, %v592
  %v680 = vpack.c.b16 %v595, %v594
  %v681 = vpack.c.b16 %v597, %v596
  %v682 = vpack.c.b16 %v599, %v598
  %v683 = vpack.c.b16 %v601, %v600
  %v684 = vpack.c.b16 %v603, %v602
  %v685 = vpack.c.b16 %v605, %v604
  %v686 = vpack.c.b16 %v607, %v606
  %v687 = vpack.c.b16 %v609, %v608
  %v688 = vpack.c.b16 %v611, %v610
  %v689 = vpack.c.b16 %v613, %v612
  %v690 = vpack.c.b16 %v615, %v614
  %v691 = vpack.c.b16 %v617, %v616
  %v692 = vpack.c.b16 %v619, %v618
  %v693 = vpack.c.b16 %v621, %v620
  %v694 = vpack.c.b16 %v623, %v622
  %v695 = vpack.c.b16 %v625, %v624
  %v696 = vpack.c.b16 %v627, %v626
  %v697 = vpack.c.b16 %v629, %v628
  %v698 = vpack.c.b16 %v631, %v630
  %v699 = vpack.c.b16 %v633, %v632
  %v700 = vpack.c.b16 %v635, %v634
  %v701 = vpack.c.b16 %v637, %v636
  %v702 = vpack.c.b16 %v639, %v638
  %v703 = vpack.c.b16 %v641, %v640
  %v704 = vpack.c.b16 %v643, %v642
  %v705 = vpack.c.b16 %v645, %v644
  %v706 = vpack.c.b16 %v647, %v646
  %v707 = vpack.c.b16 %v649, %v648
  %v708 = vpack.c.b16 %v651, %v650
  %v709 = vpack.c.b16 %v653, %v652
  %v710 = vpack.c.b16 %v655, %v654
  %v711 = vpack.c.b16 %v657, %v656
  %v712 = vpack.c.b16 %v659, %v658
  %v713 = vpack.c.b16 %v661, %v660
  %v714 = vpack.c.b16 %v663, %v662
  %v715 = vpack.c.b16 %v665, %v664
  %vm766 = vcmask 261120
  %v768 = vsel %vm766, %v368, 0
  %v771 = vsel %vm766, %v375, 0
  %v774 = vsel %vm766, %v382, 0
  %v777 = vsel %vm766, %v389, 0
  %v780 = vsel %vm766, %v396, 0
  %v783 = vsel %vm766, %v403, 0
  %v786 = vsel %vm766, %v410, 0
  %v789 = vsel %vm766, %v417, 0
  %791 = vmatprep.subr.bf16.mxu0 0
  %792 = vmatpush1.bf16.msra.mxu0 %v666
  %793 = vmatprep.subr.bf16.mxu0 0
  %794 = vmatpush1.bf16.msra.mxu0 %v667
  %795 = vmatprep.subr.bf16.mxu0 0
  %796 = vmatpush1.bf16.msra.mxu0 %v668
  %797 = vmatprep.subr.bf16.mxu0 0
  %798 = vmatpush1.bf16.msra.mxu0 %v669
  %799 = vmatprep.subr.bf16.mxu0 0
  %800 = vmatpush1.bf16.msra.mxu0 %v670
  %801 = vmatprep.subr.bf16.mxu0 0
  %802 = vmatpush1.bf16.msra.mxu0 %v671
  %803 = vmatprep.subr.bf16.mxu0 0
  %804 = vmatpush1.bf16.msra.mxu0 %v672
  %805 = vmatprep.subr.bf16.mxu0 0
  %806 = vmatpush1.bf16.msra.mxu0 %v673
  %807 = vmatprep.subr.bf16.mxu0 0
  %808 = vmatpush1.bf16.msra.mxu0 %v674
  %809 = vmatprep.subr.bf16.mxu0 0
  %810 = vmatpush1.bf16.msra.mxu0 %v675
  %811 = vmatprep.subr.bf16.mxu0 0
  %812 = vmatpush1.bf16.msra.mxu0 %v676
  %813 = vmatprep.subr.bf16.mxu0 0
  %814 = vmatpush1.bf16.msra.mxu0 %v677
  %815 = vmatprep.subr.bf16.mxu0 0
  %816 = vmatpush1.bf16.msra.mxu0 %v678
  %817 = vmatprep.subr.bf16.mxu0 0
  %818 = vmatpush1.bf16.msra.mxu0 %v679
  %819 = vmatprep.subr.bf16.mxu0 0
  %820 = vmatpush1.bf16.msra.mxu0 %v680
  %821 = vmatprep.subr.bf16.mxu0 0
  %822 = vmatpush1.bf16.msra.mxu0 %v681
  %823 = vmatprep.mubr.bf16.mxu0 %v363
  %824 = vmatmul.mubr.bf16.gmra.mrb[0].mxu0 %v362
  %v825 = vpop.f32.mrb[0].mxu0
  %v826 = vadd.f32 %v184, %v825
  %v827 = vpop.f32.mrb[0].mxu0
  %v828 = vpop.f32.mrb[0].mxu0
  %v829 = vadd.f32 %v184, %v828
  %v830 = vpop.f32.mrb[0].mxu0
  %831 = vmatprep.mubr.bf16.mxu0 %v370
  %832 = vmatmul.mubr.bf16.gmra.mrb[0].mxu0 %v369
  %v833 = vpop.f32.mrb[0].mxu0
  %v834 = vadd.f32 %v184, %v833
  %v835 = vpop.f32.mrb[0].mxu0
  %v836 = vpop.f32.mrb[0].mxu0
  %v837 = vadd.f32 %v184, %v836
  %v838 = vpop.f32.mrb[0].mxu0
  %839 = vmatprep.mubr.bf16.mxu0 %v377
  %840 = vmatmul.mubr.bf16.gmra.mrb[0].mxu0 %v376
  %v841 = vpop.f32.mrb[0].mxu0
  %v842 = vadd.f32 %v184, %v841
  %v843 = vpop.f32.mrb[0].mxu0
  %v844 = vpop.f32.mrb[0].mxu0
  %v845 = vadd.f32 %v184, %v844
  %v846 = vpop.f32.mrb[0].mxu0
  %847 = vmatprep.mubr.bf16.mxu0 %v384
  %848 = vmatmul.mubr.bf16.gmra.mrb[0].mxu0 %v383
  %v849 = vpop.f32.mrb[0].mxu0
  %v850 = vadd.f32 %v184, %v849
  %v851 = vpop.f32.mrb[0].mxu0
  %v852 = vpop.f32.mrb[0].mxu0
  %v853 = vadd.f32 %v184, %v852
  %v854 = vpop.f32.mrb[0].mxu0
  %855 = vmatprep.mubr.bf16.mxu0 %v391
  %856 = vmatmul.mubr.bf16.gmra.mrb[0].mxu0 %v390
  %v857 = vpop.f32.mrb[0].mxu0
  %v858 = vadd.f32 %v184, %v857
  %v859 = vpop.f32.mrb[0].mxu0
  %v860 = vpop.f32.mrb[0].mxu0
  %v861 = vadd.f32 %v184, %v860
  %v862 = vpop.f32.mrb[0].mxu0
  %863 = vmatprep.mubr.bf16.mxu0 %v398
  %864 = vmatmul.mubr.bf16.gmra.mrb[0].mxu0 %v397
  %v865 = vpop.f32.mrb[0].mxu0
  %v866 = vadd.f32 %v184, %v865
  %v867 = vpop.f32.mrb[0].mxu0
  %v868 = vpop.f32.mrb[0].mxu0
  %v869 = vadd.f32 %v184, %v868
  %v870 = vpop.f32.mrb[0].mxu0
  %871 = vmatprep.mubr.bf16.mxu0 %v405
  %872 = vmatmul.mubr.bf16.gmra.mrb[0].mxu0 %v404
  %v873 = vpop.f32.mrb[0].mxu0
  %v874 = vadd.f32 %v184, %v873
  %v875 = vpop.f32.mrb[0].mxu0
  %v876 = vpop.f32.mrb[0].mxu0
  %v877 = vadd.f32 %v184, %v876
  %v878 = vpop.f32.mrb[0].mxu0
  %879 = vmatprep.mubr.bf16.mxu0 %v412
  %880 = vmatmul.mubr.bf16.gmra.mrb[0].mxu0 %v411
  %v881 = vpop.f32.mrb[0].mxu0
  %v882 = vadd.f32 %v184, %v881
  %v883 = vpop.f32.mrb[0].mxu0
  %v884 = vpop.f32.mrb[0].mxu0
  %v885 = vadd.f32 %v184, %v884
  %v886 = vpop.f32.mrb[0].mxu0
  %887 = vdwg.mxu0
  %888 = vmatprep.subr.bf16.mxu0 0
  %889 = vmatpush1.bf16.msra.mxu0 %v682
  %890 = vmatprep.subr.bf16.mxu0 0
  %891 = vmatpush1.bf16.msra.mxu0 %v683
  %892 = vmatprep.subr.bf16.mxu0 0
  %893 = vmatpush1.bf16.msra.mxu0 %v684
  %894 = vmatprep.subr.bf16.mxu0 0
  %895 = vmatpush1.bf16.msra.mxu0 %v685
  %896 = vmatprep.subr.bf16.mxu0 0
  %897 = vmatpush1.bf16.msra.mxu0 %v686
  %898 = vmatprep.subr.bf16.mxu0 0
  %899 = vmatpush1.bf16.msra.mxu0 %v687
  %900 = vmatprep.subr.bf16.mxu0 0
  %901 = vmatpush1.bf16.msra.mxu0 %v688
  %902 = vmatprep.subr.bf16.mxu0 0
  %903 = vmatpush1.bf16.msra.mxu0 %v689
  %904 = vmatprep.subr.bf16.mxu0 0
  %905 = vmatpush1.bf16.msra.mxu0 %v690
  %906 = vmatprep.subr.bf16.mxu0 0
  %907 = vmatpush1.bf16.msra.mxu0 %v691
  %908 = vmatprep.subr.bf16.mxu0 0
  %909 = vmatpush1.bf16.msra.mxu0 %v692
  %910 = vmatprep.subr.bf16.mxu0 0
  %911 = vmatpush1.bf16.msra.mxu0 %v693
  %912 = vmatprep.subr.bf16.mxu0 0
  %913 = vmatpush1.bf16.msra.mxu0 %v694
  %914 = vmatprep.subr.bf16.mxu0 0
  %915 = vmatpush1.bf16.msra.mxu0 %v695
  %916 = vmatprep.subr.bf16.mxu0 0
  %917 = vmatpush1.bf16.msra.mxu0 %v696
  %918 = vmatprep.subr.bf16.mxu0 0
  %919 = vmatpush1.bf16.msra.mxu0 %v697
  %920 = vmatprep.mubr.bf16.mxu0 %v365
  %921 = vmatmul.mubr.bf16.gmra.mrb[0].mxu0 %v364
  %v922 = vpop.f32.mrb[0].mxu0
  %v923 = vadd.f32 %v826, %v922
  %v924 = vpop.f32.mrb[0].mxu0
  %v925 = vpop.f32.mrb[0].mxu0
  %v926 = vadd.f32 %v829, %v925
  %v927 = vpop.f32.mrb[0].mxu0
  %928 = vmatprep.mubr.bf16.mxu0 %v372
  %929 = vmatmul.mubr.bf16.gmra.mrb[0].mxu0 %v371
  %v930 = vpop.f32.mrb[0].mxu0
  %v931 = vadd.f32 %v834, %v930
  %v932 = vpop.f32.mrb[0].mxu0
  %v933 = vpop.f32.mrb[0].mxu0
  %v934 = vadd.f32 %v837, %v933
  %v935 = vpop.f32.mrb[0].mxu0
  %936 = vmatprep.mubr.bf16.mxu0 %v379
  %937 = vmatmul.mubr.bf16.gmra.mrb[0].mxu0 %v378
  %v938 = vpop.f32.mrb[0].mxu0
  %v939 = vadd.f32 %v842, %v938
  %v940 = vpop.f32.mrb[0].mxu0
  %v941 = vpop.f32.mrb[0].mxu0
  %v942 = vadd.f32 %v845, %v941
  %v943 = vpop.f32.mrb[0].mxu0
  %944 = vmatprep.mubr.bf16.mxu0 %v386
  %945 = vmatmul.mubr.bf16.gmra.mrb[0].mxu0 %v385
  %v946 = vpop.f32.mrb[0].mxu0
  %v947 = vadd.f32 %v850, %v946
  %v948 = vpop.f32.mrb[0].mxu0
  %v949 = vpop.f32.mrb[0].mxu0
  %v950 = vadd.f32 %v853, %v949
  %v951 = vpop.f32.mrb[0].mxu0
  %952 = vmatprep.mubr.bf16.mxu0 %v393
  %953 = vmatmul.mubr.bf16.gmra.mrb[0].mxu0 %v392
  %v954 = vpop.f32.mrb[0].mxu0
  %v955 = vadd.f32 %v858, %v954
  %v956 = vpop.f32.mrb[0].mxu0
  %v957 = vpop.f32.mrb[0].mxu0
  %v958 = vadd.f32 %v861, %v957
  %v959 = vpop.f32.mrb[0].mxu0
  %960 = vmatprep.mubr.bf16.mxu0 %v400
  %961 = vmatmul.mubr.bf16.gmra.mrb[0].mxu0 %v399
  %v962 = vpop.f32.mrb[0].mxu0
  %v963 = vadd.f32 %v866, %v962
  %v964 = vpop.f32.mrb[0].mxu0
  %v965 = vpop.f32.mrb[0].mxu0
  %v966 = vadd.f32 %v869, %v965
  %v967 = vpop.f32.mrb[0].mxu0
  %968 = vmatprep.mubr.bf16.mxu0 %v407
  %969 = vmatmul.mubr.bf16.gmra.mrb[0].mxu0 %v406
  %v970 = vpop.f32.mrb[0].mxu0
  %v971 = vadd.f32 %v874, %v970
  %v972 = vpop.f32.mrb[0].mxu0
  %v973 = vpop.f32.mrb[0].mxu0
  %v974 = vadd.f32 %v877, %v973
  %v975 = vpop.f32.mrb[0].mxu0
  %976 = vmatprep.mubr.bf16.mxu0 %v414
  %977 = vmatmul.mubr.bf16.gmra.mrb[0].mxu0 %v413
  %v978 = vpop.f32.mrb[0].mxu0
  %v979 = vadd.f32 %v882, %v978
  %v980 = vpop.f32.mrb[0].mxu0
  %v981 = vpop.f32.mrb[0].mxu0
  %v982 = vadd.f32 %v885, %v981
  %v983 = vpop.f32.mrb[0].mxu0
  %984 = vdwg.mxu0
  %985 = vmatprep.subr.bf16.mxu0 0
  %986 = vmatpush1.bf16.msra.mxu0 %v698
  %987 = vmatprep.subr.bf16.mxu0 0
  %988 = vmatpush1.bf16.msra.mxu0 %v699
  %989 = vmatprep.subr.bf16.mxu0 0
  %990 = vmatpush1.bf16.msra.mxu0 %v700
  %991 = vmatprep.subr.bf16.mxu0 0
  %992 = vmatpush1.bf16.msra.mxu0 %v701
  %993 = vmatprep.subr.bf16.mxu0 0
  %994 = vmatpush1.bf16.msra.mxu0 %v702
  %995 = vmatprep.subr.bf16.mxu0 0
  %996 = vmatpush1.bf16.msra.mxu0 %v703
  %997 = vmatprep.subr.bf16.mxu0 0
  %998 = vmatpush1.bf16.msra.mxu0 %v704
  %999 = vmatprep.subr.bf16.mxu0 0
  %1000 = vmatpush1.bf16.msra.mxu0 %v705
  %1001 = vmatprep.subr.bf16.mxu0 0
  %1002 = vmatpush1.bf16.msra.mxu0 %v706
  %1003 = vmatprep.subr.bf16.mxu0 0
  %1004 = vmatpush1.bf16.msra.mxu0 %v707
  %1005 = vmatprep.subr.bf16.mxu0 0
  %1006 = vmatpush1.bf16.msra.mxu0 %v708
  %1007 = vmatprep.subr.bf16.mxu0 0
  %1008 = vmatpush1.bf16.msra.mxu0 %v709
  %1009 = vmatprep.subr.bf16.mxu0 0
  %1010 = vmatpush1.bf16.msra.mxu0 %v710
  %1011 = vmatprep.subr.bf16.mxu0 0
  %1012 = vmatpush1.bf16.msra.mxu0 %v711
  %1013 = vmatprep.subr.bf16.mxu0 0
  %1014 = vmatpush1.bf16.msra.mxu0 %v712
  %1015 = vmatprep.subr.bf16.mxu0 0
  %1016 = vmatpush1.bf16.msra.mxu0 %v713
  %1017 = vmatprep.mubr.bf16.mxu0 %v367
  %1018 = vmatmul.mubr.bf16.gmra.mrb[0].mxu0 %v366
  %v1019 = vpop.f32.mrb[0].mxu0
  %v1020 = vadd.f32 %v923, %v1019
  %v1021 = vpop.f32.mrb[0].mxu0
  %v1022 = vpop.f32.mrb[0].mxu0
  %v1023 = vadd.f32 %v926, %v1022
  %v1024 = vpop.f32.mrb[0].mxu0
  %1025 = vmatprep.mubr.bf16.mxu0 %v374
  %1026 = vmatmul.mubr.bf16.gmra.mrb[0].mxu0 %v373
  %v1027 = vpop.f32.mrb[0].mxu0
  %v1028 = vadd.f32 %v931, %v1027
  %v1029 = vpop.f32.mrb[0].mxu0
  %v1030 = vpop.f32.mrb[0].mxu0
  %v1031 = vadd.f32 %v934, %v1030
  %v1032 = vpop.f32.mrb[0].mxu0
  %1033 = vmatprep.mubr.bf16.mxu0 %v381
  %1034 = vmatmul.mubr.bf16.gmra.mrb[0].mxu0 %v380
  %v1035 = vpop.f32.mrb[0].mxu0
  %v1036 = vadd.f32 %v939, %v1035
  %v1037 = vpop.f32.mrb[0].mxu0
  %v1038 = vpop.f32.mrb[0].mxu0
  %v1039 = vadd.f32 %v942, %v1038
  %v1040 = vpop.f32.mrb[0].mxu0
  %1041 = vmatprep.mubr.bf16.mxu0 %v388
  %1042 = vmatmul.mubr.bf16.gmra.mrb[0].mxu0 %v387
  %v1043 = vpop.f32.mrb[0].mxu0
  %v1044 = vadd.f32 %v947, %v1043
  %v1045 = vpop.f32.mrb[0].mxu0
  %v1046 = vpop.f32.mrb[0].mxu0
  %v1047 = vadd.f32 %v950, %v1046
  %v1048 = vpop.f32.mrb[0].mxu0
  %1049 = vmatprep.mubr.bf16.mxu0 %v395
  %1050 = vmatmul.mubr.bf16.gmra.mrb[0].mxu0 %v394
  %v1051 = vpop.f32.mrb[0].mxu0
  %v1052 = vadd.f32 %v955, %v1051
  %v1053 = vpop.f32.mrb[0].mxu0
  %v1054 = vpop.f32.mrb[0].mxu0
  %v1055 = vadd.f32 %v958, %v1054
  %v1056 = vpop.f32.mrb[0].mxu0
  %1057 = vmatprep.mubr.bf16.mxu0 %v402
  %1058 = vmatmul.mubr.bf16.gmra.mrb[0].mxu0 %v401
  %v1059 = vpop.f32.mrb[0].mxu0
  %v1060 = vadd.f32 %v963, %v1059
  %v1061 = vpop.f32.mrb[0].mxu0
  %v1062 = vpop.f32.mrb[0].mxu0
  %v1063 = vadd.f32 %v966, %v1062
  %v1064 = vpop.f32.mrb[0].mxu0
  %1065 = vmatprep.mubr.bf16.mxu0 %v409
  %1066 = vmatmul.mubr.bf16.gmra.mrb[0].mxu0 %v408
  %v1067 = vpop.f32.mrb[0].mxu0
  %v1068 = vadd.f32 %v971, %v1067
  %v1069 = vpop.f32.mrb[0].mxu0
  %v1070 = vpop.f32.mrb[0].mxu0
  %v1071 = vadd.f32 %v974, %v1070
  %v1072 = vpop.f32.mrb[0].mxu0
  %1073 = vmatprep.mubr.bf16.mxu0 %v416
  %1074 = vmatmul.mubr.bf16.gmra.mrb[0].mxu0 %v415
  %v1075 = vpop.f32.mrb[0].mxu0
  %v1076 = vadd.f32 %v979, %v1075
  %v1077 = vpop.f32.mrb[0].mxu0
  %v1078 = vpop.f32.mrb[0].mxu0
  %v1079 = vadd.f32 %v982, %v1078
  %v1080 = vpop.f32.mrb[0].mxu0
  %1081 = vdwg.mxu0
  %1082 = vmatprep.subr.bf16.mxu0 0
  %1083 = vmatpush1.bf16.msra.mxu0 %v714
  %1084 = vmatprep.subr.bf16.mxu0 0
  %1085 = vmatpush1.bf16.msra.mxu0 %v715
  %1086 = vmatprep.subr.bf16.mxu0 0
  %1087 = vmatpush1.bf16.msra.mxu0 0
  %1088 = vmatprep.subr.bf16.mxu0 0
  %1089 = vmatpush1.bf16.msra.mxu0 0
  %1090 = vmatprep.subr.bf16.mxu0 0
  %1091 = vmatpush1.bf16.msra.mxu0 0
  %1092 = vmatprep.subr.bf16.mxu0 0
  %1093 = vmatpush1.bf16.msra.mxu0 0
  %1094 = vmatprep.subr.bf16.mxu0 0
  %1095 = vmatpush1.bf16.msra.mxu0 0
  %1096 = vmatprep.subr.bf16.mxu0 0
  %1097 = vmatpush1.bf16.msra.mxu0 0
  %1098 = vmatprep.subr.bf16.mxu0 0
  %1099 = vmatpush1.bf16.msra.mxu0 0
  %1100 = vmatprep.subr.bf16.mxu0 0
  %1101 = vmatpush1.bf16.msra.mxu0 0
  %1102 = vmatprep.subr.bf16.mxu0 0
  %1103 = vmatpush1.bf16.msra.mxu0 0
  %1104 = vmatprep.subr.bf16.mxu0 0
  %1105 = vmatpush1.bf16.msra.mxu0 0
  %1106 = vmatprep.subr.bf16.mxu0 0
  %1107 = vmatpush1.bf16.msra.mxu0 0
  %1108 = vmatprep.subr.bf16.mxu0 0
  %1109 = vmatpush1.bf16.msra.mxu0 0
  %1110 = vmatprep.subr.bf16.mxu0 0
  %1111 = vmatpush1.bf16.msra.mxu0 0
  %1112 = vmatprep.subr.bf16.mxu0 0
  %1113 = vmatpush1.bf16.msra.mxu0 0
  %1114 = vmatprep.mubr.bf16.mxu0 0
  %1115 = vmatmul.mubr.bf16.gmra.mrb[0].mxu0 %v768
  %v1116 = vpop.f32.mrb[0].mxu0
  %v1117 = vadd.f32 %v1020, %v1116
  %v1118 = vpop.f32.mrb[0].mxu0
  %v1119 = vpop.f32.mrb[0].mxu0
  %v1120 = vadd.f32 %v1023, %v1119
  %v1121 = vpop.f32.mrb[0].mxu0
  %1122 = vmatprep.mubr.bf16.mxu0 0
  %1123 = vmatmul.mubr.bf16.gmra.mrb[0].mxu0 %v771
  %v1124 = vpop.f32.mrb[0].mxu0
  %v1125 = vadd.f32 %v1028, %v1124
  %v1126 = vpop.f32.mrb[0].mxu0
  %v1127 = vpop.f32.mrb[0].mxu0
  %v1128 = vadd.f32 %v1031, %v1127
  %v1129 = vpop.f32.mrb[0].mxu0
  %1130 = vmatprep.mubr.bf16.mxu0 0
  %1131 = vmatmul.mubr.bf16.gmra.mrb[0].mxu0 %v774
  %v1132 = vpop.f32.mrb[0].mxu0
  %v1133 = vadd.f32 %v1036, %v1132
  %v1134 = vpop.f32.mrb[0].mxu0
  %v1135 = vpop.f32.mrb[0].mxu0
  %v1136 = vadd.f32 %v1039, %v1135
  %v1137 = vpop.f32.mrb[0].mxu0
  %1138 = vmatprep.mubr.bf16.mxu0 0
  %1139 = vmatmul.mubr.bf16.gmra.mrb[0].mxu0 %v777
  %v1140 = vpop.f32.mrb[0].mxu0
  %v1141 = vadd.f32 %v1044, %v1140
  %v1142 = vpop.f32.mrb[0].mxu0
  %v1143 = vpop.f32.mrb[0].mxu0
  %v1144 = vadd.f32 %v1047, %v1143
  %v1145 = vpop.f32.mrb[0].mxu0
  %1146 = vmatprep.mubr.bf16.mxu0 0
  %1147 = vmatmul.mubr.bf16.gmra.mrb[0].mxu0 %v780
  %v1148 = vpop.f32.mrb[0].mxu0
  %v1149 = vadd.f32 %v1052, %v1148
  %v1150 = vpop.f32.mrb[0].mxu0
  %v1151 = vpop.f32.mrb[0].mxu0
  %v1152 = vadd.f32 %v1055, %v1151
  %v1153 = vpop.f32.mrb[0].mxu0
  %1154 = vmatprep.mubr.bf16.mxu0 0
  %1155 = vmatmul.mubr.bf16.gmra.mrb[0].mxu0 %v783
  %v1156 = vpop.f32.mrb[0].mxu0
  %v1157 = vadd.f32 %v1060, %v1156
  %v1158 = vpop.f32.mrb[0].mxu0
  %v1159 = vpop.f32.mrb[0].mxu0
  %v1160 = vadd.f32 %v1063, %v1159
  %v1161 = vpop.f32.mrb[0].mxu0
  %1162 = vmatprep.mubr.bf16.mxu0 0
  %1163 = vmatmul.mubr.bf16.gmra.mrb[0].mxu0 %v786
  %v1164 = vpop.f32.mrb[0].mxu0
  %v1165 = vadd.f32 %v1068, %v1164
  %v1166 = vpop.f32.mrb[0].mxu0
  %v1167 = vpop.f32.mrb[0].mxu0
  %v1168 = vadd.f32 %v1071, %v1167
  %v1169 = vpop.f32.mrb[0].mxu0
  %1170 = vmatprep.mubr.bf16.mxu0 0
  %1171 = vmatmul.mubr.bf16.gmra.mrb[0].mxu0 %v789
  %v1172 = vpop.f32.mrb[0].mxu0
  %v1173 = vadd.f32 %v1076, %v1172
  %v1174 = vpop.f32.mrb[0].mxu0
  %v1175 = vpop.f32.mrb[0].mxu0
  %v1176 = vadd.f32 %v1079, %v1175
  %v1177 = vpop.f32.mrb[0].mxu0
  %1178 = vdwg.mxu0
  %1179 = vst.msk [vmem:[%s3] sm:$0xff] %vm766, %v1117
  %1180 = vst.msk [vmem:[%s3 + $0x8] sm:$0xff] %vm766, %v1120
  %1181 = vst.msk [vmem:[%s3 + $0x10] sm:$0xff] %vm766, %v1125
  %1182 = vst.msk [vmem:[%s3 + $0x18] sm:$0xff] %vm766, %v1128
  %1183 = vst.msk [vmem:[%s3 + $0x20] sm:$0xff] %vm766, %v1133
  %1184 = vst.msk [vmem:[%s3 + $0x28] sm:$0xff] %vm766, %v1136
  %1185 = vst.msk [vmem:[%s3 + $0x30] sm:$0xff] %vm766, %v1141
  %1186 = vst.msk [vmem:[%s3 + $0x38] sm:$0xff] %vm766, %v1144
  %1187 = vst.msk [vmem:[%s3 + $0x40] sm:$0xff] %vm766, %v1149
  %1188 = vst.msk [vmem:[%s3 + $0x48] sm:$0xff] %vm766, %v1152
  %1189 = vst.msk [vmem:[%s3 + $0x50] sm:$0xff] %vm766, %v1157
  %1190 = vst.msk [vmem:[%s3 + $0x58] sm:$0xff] %vm766, %v1160
  %1191 = vst.msk [vmem:[%s3 + $0x60] sm:$0xff] %vm766, %v1165
  %1192 = vst.msk [vmem:[%s3 + $0x68] sm:$0xff] %vm766, %v1168
  %1193 = vst.msk [vmem:[%s3 + $0x70] sm:$0xff] %vm766, %v1173
  %1194 = vst.msk [vmem:[%s3 + $0x78] sm:$0xff] %vm766, %v1176
  // Predicated region
  $region14: #{forward.13} parent=0 // pred_check
    _
  $region15: #{forward.13} parent=0 // pred_check_branch
    %1196 = sbr.rel (0) target = $region17
  $region16: #{forward.13} parent=0 // pred_region
    _
  $region17: #{forward.13} parent=0 // pred_fallthru
    _
  // Predicated region
  $region18: #{forward.13} parent=0 // pred_check
    _
  $region19: #{forward.13} parent=0 // pred_check_branch
    %1198 = sbr.rel (0) target = $region21
  $region20: #{forward.13} parent=0 // pred_region
    _
  $region21: #{forward.13} parent=0 // pred_fallthru
    _

// kernel: forward.17
$region0: #{forward.17}
  #allocation0 [shape = 'u32[]', space=smem, size = 0x4, offset = 0x4, fixed_abs, tag = 'smem constant byte address 0x4 - core index']
  #allocation1 [shape = 'u32[144,128]{1,0:T(1,128)}', space=vmem, size = 0x12000, scoped, tag = 'internal scratch']
  %s0 = inlined_call_operand.vmem [shape: bf16[128,800], index: 0, kind: input, shape index: {}]
  %s1 = inlined_call_operand.vmem [shape: bf16[800,32], index: 1, kind: input, shape index: {}]
  %s2 = inlined_call_operand.vmem [shape: f32[1,32], index: 2, kind: input, shape index: {}]
  %s3 = inlined_call_operand.vmem [shape: f32[128,32], index: 3, kind: input, shape index: {}]
  %s4 = inlined_call_operand.vmem [shape: f32[128,32], index: 4, kind: input, shape index: {}]
  %s5 = inlined_call_operand.vmem [shape: f32[128,32], index: 5, kind: output, shape index: {0}]
  %s6 = inlined_call_operand.vmem [shape: f32[128,32], index: 6, kind: output, shape index: {1}]
  %7 = xla_tuple %s5, %s6
  %s8 = sld [smem:[#allocation0]]
  $region38: #{forward.17} parent=0
    _
  %s10 = ssub.s32 1, %s8
  %s11 = scalar_select 0, %s10, %s8
  // Predicated region
  $region2: #{forward.17} parent=0 // pred_check
    _
  $region3: #{forward.17} parent=0 // pred_check_branch
    %13 = sbr.rel (0) target = $region5
  $region4: #{forward.17} parent=0 // pred_region
    _
  $region5: #{forward.17} parent=0 // pred_fallthru
    _
  // Predicated region
  $region6: #{forward.17} parent=0 // pred_check
    _
  $region7: #{forward.17} parent=0 // pred_check_branch
    %15 = sbr.rel (0) target = $region9
  $region8: #{forward.17} parent=0 // pred_region
    _
  $region9: #{forward.17} parent=0 // pred_fallthru
    _
  // Predicated region
  $region10: #{forward.17} parent=0 // pred_check
    _
  $region11: #{forward.17} parent=0 // pred_check_branch
    %17 = sbr.rel (0) target = $region13
  $region12: #{forward.17} parent=0 // pred_region
    _
  $region13: #{forward.17} parent=0 // pred_fallthru
    _
  // Predicated region
  $region14: #{forward.17} parent=0 // pred_check
    _
  $region15: #{forward.17} parent=0 // pred_check_branch
    %19 = sbr.rel (0) target = $region17
  $region16: #{forward.17} parent=0 // pred_region
    _
  $region17: #{forward.17} parent=0 // pred_fallthru
    _
  // Predicated region
  $region18: #{forward.17} parent=0 // pred_check
    _
  $region19: #{forward.17} parent=0 // pred_check_branch
    %21 = sbr.rel (0) target = $region21
  $region20: #{forward.17} parent=0 // pred_region
    _
  $region21: #{forward.17} parent=0 // pred_fallthru
    _
  %v23 = vld [vmem:[%s0] sm:$0xff]
  %v24 = vld [vmem:[%s0 + $0x8] sm:$0xff]
  %v25 = vld [vmem:[%s0 + $0x10] sm:$0xff]
  %v26 = vld [vmem:[%s0 + $0x18] sm:$0xf]
  %v27 = vld [vmem:[%s0 + $0x1c] sm:$0xff]
  %v28 = vld [vmem:[%s0 + $0x24] sm:$0xff]
  %v29 = vld [vmem:[%s0 + $0x2c] sm:$0xff]
  %v30 = vld [vmem:[%s0 + $0x34] sm:$0xf]
  %v31 = vld [vmem:[%s0 + $0x38] sm:$0xff]
  %v32 = vld [vmem:[%s0 + $0x40] sm:$0xff]
  %v33 = vld [vmem:[%s0 + $0x48] sm:$0xff]
  %v34 = vld [vmem:[%s0 + $0x50] sm:$0xf]
  %v35 = vld [vmem:[%s0 + $0x54] sm:$0xff]
  %v36 = vld [vmem:[%s0 + $0x5c] sm:$0xff]
  %v37 = vld [vmem:[%s0 + $0x64] sm:$0xff]
  %v38 = vld [vmem:[%s0 + $0x6c] sm:$0xf]
  %v39 = vld [vmem:[%s0 + $0x70] sm:$0xff]
  %v40 = vld [vmem:[%s0 + $0x78] sm:$0xff]
  %v41 = vld [vmem:[%s0 + $0x80] sm:$0xff]
  %v42 = vld [vmem:[%s0 + $0x88] sm:$0xf]
  %v43 = vld [vmem:[%s0 + $0x8c] sm:$0xff]
  %v44 = vld [vmem:[%s0 + $0x94] sm:$0xff]
  %v45 = vld [vmem:[%s0 + $0x9c] sm:$0xff]
  %v46 = vld [vmem:[%s0 + $0xa4] sm:$0xf]
  %v47 = vld [vmem:[%s0 + $0xa8] sm:$0xff]
  %v48 = vld [vmem:[%s0 + $0xb0] sm:$0xff]
  %v49 = vld [vmem:[%s0 + $0xb8] sm:$0xff]
  %v50 = vld [vmem:[%s0 + $0xc0] sm:$0xf]
  %v51 = vld [vmem:[%s0 + $0xc4] sm:$0xff]
  %v52 = vld [vmem:[%s0 + $0xcc] sm:$0xff]
  %v53 = vld [vmem:[%s0 + $0xd4] sm:$0xff]
  %v54 = vld [vmem:[%s0 + $0xdc] sm:$0xf]
  %v55 = vld [vmem:[%s0 + $0xe0] sm:$0xff]
  %v56 = vld [vmem:[%s0 + $0xe8] sm:$0xff]
  %v57 = vld [vmem:[%s0 + $0xf0] sm:$0xff]
  %v58 = vld [vmem:[%s0 + $0xf8] sm:$0xf]
  %v59 = vld [vmem:[%s0 + $0xfc] sm:$0xff]
  %v60 = vld [vmem:[%s0 + $0x104] sm:$0xff]
  %v61 = vld [vmem:[%s0 + $0x10c] sm:$0xff]
  %v62 = vld [vmem:[%s0 + $0x114] sm:$0xf]
  %v63 = vld [vmem:[%s0 + $0x118] sm:$0xff]
  %v64 = vld [vmem:[%s0 + $0x120] sm:$0xff]
  %v65 = vld [vmem:[%s0 + $0x128] sm:$0xff]
  %v66 = vld [vmem:[%s0 + $0x130] sm:$0xf]
  %v67 = vld [vmem:[%s0 + $0x134] sm:$0xff]
  %v68 = vld [vmem:[%s0 + $0x13c] sm:$0xff]
  %v69 = vld [vmem:[%s0 + $0x144] sm:$0xff]
  %v70 = vld [vmem:[%s0 + $0x14c] sm:$0xf]
  %v71 = vld [vmem:[%s0 + $0x150] sm:$0xff]
  %v72 = vld [vmem:[%s0 + $0x158] sm:$0xff]
  %v73 = vld [vmem:[%s0 + $0x160] sm:$0xff]
  %v74 = vld [vmem:[%s0 + $0x168] sm:$0xf]
  %v75 = vld [vmem:[%s0 + $0x16c] sm:$0xff]
  %v76 = vld [vmem:[%s0 + $0x174] sm:$0xff]
  %v77 = vld [vmem:[%s0 + $0x17c] sm:$0xff]
  %v78 = vld [vmem:[%s0 + $0x184] sm:$0xf]
  %v79 = vld [vmem:[%s0 + $0x188] sm:$0xff]
  %v80 = vld [vmem:[%s0 + $0x190] sm:$0xff]
  %v81 = vld [vmem:[%s0 + $0x198] sm:$0xff]
  %v82 = vld [vmem:[%s0 + $0x1a0] sm:$0xf]
  %v83 = vld [vmem:[%s0 + $0x1a4] sm:$0xff]
  %v84 = vld [vmem:[%s0 + $0x1ac] sm:$0xff]
  %v85 = vld [vmem:[%s0 + $0x1b4] sm:$0xff]
  %v86 = vld [vmem:[%s0 + $0x1bc] sm:$0xf]
  %v87 = vld [vmem:[%s1] sm:$0xf]
  %v88 = vld [vmem:[%s1 + $0x4] sm:$0xf]
  %v89 = vld [vmem:[%s1 + $0x8] sm:$0xf]
  %v90 = vld [vmem:[%s1 + $0xc] sm:$0xf]
  %v91 = vld [vmem:[%s1 + $0x10] sm:$0xf]
  %v92 = vld [vmem:[%s1 + $0x14] sm:$0xf]
  %v93 = vld [vmem:[%s1 + $0x18] sm:$0xf]
  %v94 = vld [vmem:[%s1 + $0x1c] sm:$0xf]
  %v95 = vld [vmem:[%s1 + $0x20] sm:$0xf]
  %v96 = vld [vmem:[%s1 + $0x24] sm:$0xf]
  %v97 = vld [vmem:[%s1 + $0x28] sm:$0xf]
  %v98 = vld [vmem:[%s1 + $0x2c] sm:$0xf]
  %v99 = vld [vmem:[%s1 + $0x30] sm:$0xf]
  %v100 = vld [vmem:[%s1 + $0x34] sm:$0xf]
  %v101 = vld [vmem:[%s1 + $0x38] sm:$0xf]
  %v102 = vld [vmem:[%s1 + $0x3c] sm:$0xf]
  %v103 = vld [vmem:[%s1 + $0x40] sm:$0xf]
  %v104 = vld [vmem:[%s1 + $0x44] sm:$0xf]
  %v105 = vld [vmem:[%s1 + $0x48] sm:$0xf]
  %v106 = vld [vmem:[%s1 + $0x4c] sm:$0xf]
  %v107 = vld [vmem:[%s1 + $0x50] sm:$0xf]
  %v108 = vld [vmem:[%s1 + $0x54] sm:$0xf]
  %v109 = vld [vmem:[%s1 + $0x58] sm:$0xf]
  %v110 = vld [vmem:[%s1 + $0x5c] sm:$0xf]
  %v111 = vld [vmem:[%s1 + $0x60] sm:$0xf]
  %v112 = vld [vmem:[%s1 + $0x64] sm:$0xf]
  %v113 = vld [vmem:[%s1 + $0x68] sm:$0xf]
  %v114 = vld [vmem:[%s1 + $0x6c] sm:$0xf]
  %v115 = vld [vmem:[%s1 + $0x70] sm:$0xf]
  %v116 = vld [vmem:[%s1 + $0x74] sm:$0xf]
  %v117 = vld [vmem:[%s1 + $0x78] sm:$0xf]
  %v118 = vld [vmem:[%s1 + $0x7c] sm:$0xf]
  %v119 = vld [vmem:[%s1 + $0x80] sm:$0xf]
  %v120 = vld [vmem:[%s1 + $0x84] sm:$0xf]
  %v121 = vld [vmem:[%s1 + $0x88] sm:$0xf]
  %v122 = vld [vmem:[%s1 + $0x8c] sm:$0xf]
  %v123 = vld [vmem:[%s1 + $0x90] sm:$0xf]
  %v124 = vld [vmem:[%s1 + $0x94] sm:$0xf]
  %v125 = vld [vmem:[%s1 + $0x98] sm:$0xf]
  %v126 = vld [vmem:[%s1 + $0x9c] sm:$0xf]
  %v127 = vld [vmem:[%s1 + $0xa0] sm:$0xf]
  %v128 = vld [vmem:[%s1 + $0xa4] sm:$0xf]
  %v129 = vld [vmem:[%s1 + $0xa8] sm:$0xf]
  %v130 = vld [vmem:[%s1 + $0xac] sm:$0xf]
  %v131 = vld [vmem:[%s1 + $0xb0] sm:$0xf]
  %v132 = vld [vmem:[%s1 + $0xb4] sm:$0xf]
  %v133 = vld [vmem:[%s1 + $0xb8] sm:$0xf]
  %v134 = vld [vmem:[%s1 + $0xbc] sm:$0xf]
  %v135 = vld [vmem:[%s1 + $0xc0] sm:$0xf]
  %v136 = vld [vmem:[%s1 + $0xc4] sm:$0xf]
  %v137 = vld [vmem:[%s1 + $0xc8] sm:$0xf]
  %v138 = vld [vmem:[%s1 + $0xcc] sm:$0xf]
  %v139 = vld [vmem:[%s1 + $0xd0] sm:$0xf]
  %v140 = vld [vmem:[%s1 + $0xd4] sm:$0xf]
  %v141 = vld [vmem:[%s1 + $0xd8] sm:$0xf]
  %v142 = vld [vmem:[%s1 + $0xdc] sm:$0xf]
  %v143 = vld [vmem:[%s1 + $0xe0] sm:$0xf]
  %v144 = vld [vmem:[%s1 + $0xe4] sm:$0xf]
  %v145 = vld [vmem:[%s1 + $0xe8] sm:$0xf]
  %v146 = vld [vmem:[%s1 + $0xec] sm:$0xf]
  %v147 = vld [vmem:[%s1 + $0xf0] sm:$0xf]
  %v148 = vld [vmem:[%s1 + $0xf4] sm:$0xf]
  %v149 = vld [vmem:[%s1 + $0xf8] sm:$0xf]
  %v150 = vld [vmem:[%s1 + $0xfc] sm:$0xf]
  %v151 = vld [vmem:[%s1 + $0x100] sm:$0xf]
  %v152 = vld [vmem:[%s1 + $0x104] sm:$0xf]
  %v153 = vld [vmem:[%s1 + $0x108] sm:$0xf]
  %v154 = vld [vmem:[%s1 + $0x10c] sm:$0xf]
  %v155 = vld [vmem:[%s1 + $0x110] sm:$0xf]
  %v156 = vld [vmem:[%s1 + $0x114] sm:$0xf]
  %v157 = vld [vmem:[%s1 + $0x118] sm:$0xf]
  %v158 = vld [vmem:[%s1 + $0x11c] sm:$0xf]
  %v159 = vld [vmem:[%s1 + $0x120] sm:$0xf]
  %v160 = vld [vmem:[%s1 + $0x124] sm:$0xf]
  %v161 = vld [vmem:[%s1 + $0x128] sm:$0xf]
  %v162 = vld [vmem:[%s1 + $0x12c] sm:$0xf]
  %v163 = vld [vmem:[%s1 + $0x130] sm:$0xf]
  %v164 = vld [vmem:[%s1 + $0x134] sm:$0xf]
  %v165 = vld [vmem:[%s1 + $0x138] sm:$0xf]
  %v166 = vld [vmem:[%s1 + $0x13c] sm:$0xf]
  %v167 = vld [vmem:[%s1 + $0x140] sm:$0xf]
  %v168 = vld [vmem:[%s1 + $0x144] sm:$0xf]
  %v169 = vld [vmem:[%s1 + $0x148] sm:$0xf]
  %v170 = vld [vmem:[%s1 + $0x14c] sm:$0xf]
  %v171 = vld [vmem:[%s1 + $0x150] sm:$0xf]
  %v172 = vld [vmem:[%s1 + $0x154] sm:$0xf]
  %v173 = vld [vmem:[%s1 + $0x158] sm:$0xf]
  %v174 = vld [vmem:[%s1 + $0x15c] sm:$0xf]
  %v175 = vld [vmem:[%s1 + $0x160] sm:$0xf]
  %v176 = vld [vmem:[%s1 + $0x164] sm:$0xf]
  %v177 = vld [vmem:[%s1 + $0x168] sm:$0xf]
  %v178 = vld [vmem:[%s1 + $0x16c] sm:$0xf]
  %v179 = vld [vmem:[%s1 + $0x170] sm:$0xf]
  %v180 = vld [vmem:[%s1 + $0x174] sm:$0xf]
  %v181 = vld [vmem:[%s1 + $0x178] sm:$0xf]
  %v182 = vld [vmem:[%s1 + $0x17c] sm:$0xf]
  %v183 = vld [vmem:[%s1 + $0x180] sm:$0xf]
  %v184 = vld [vmem:[%s1 + $0x184] sm:$0xf]
  %v185 = vld [vmem:[%s1 + $0x188] sm:$0xf]
  %v186 = vld [vmem:[%s1 + $0x18c] sm:$0xf]
  %v187 = vld [vmem:[%s2] sm:$0x1]
  %v189 = vlaneseq
  %v190 = vshrl.u32 %v189, 7
  %v191 = vsub.s32 0, %v190
  %v192 = vrot.slane %v187, %v191
  %v258 = vunpack.c.l.b16 %v23
  %v259 = vunpack.c.h.b16 %v23
  %v260 = vunpack.c.l.b16 %v24
  %v261 = vunpack.c.h.b16 %v24
  %v262 = vunpack.c.l.b16 %v25
  %v263 = vunpack.c.h.b16 %v25
  %v264 = vunpack.c.l.b16 %v26
  %v265 = vunpack.c.l.b16 %v27
  %v266 = vunpack.c.h.b16 %v27
  %v267 = vunpack.c.l.b16 %v28
  %v268 = vunpack.c.h.b16 %v28
  %v269 = vunpack.c.l.b16 %v29
  %v270 = vunpack.c.h.b16 %v29
  %v271 = vunpack.c.l.b16 %v30
  %v272 = vunpack.c.l.b16 %v31
  %v273 = vunpack.c.h.b16 %v31
  %v274 = vunpack.c.l.b16 %v32
  %v275 = vunpack.c.h.b16 %v32
  %v276 = vunpack.c.l.b16 %v33
  %v277 = vunpack.c.h.b16 %v33
  %v278 = vunpack.c.l.b16 %v34
  %v279 = vunpack.c.l.b16 %v35
  %v280 = vunpack.c.h.b16 %v35
  %v281 = vunpack.c.l.b16 %v36
  %v282 = vunpack.c.h.b16 %v36
  %v283 = vunpack.c.l.b16 %v37
  %v284 = vunpack.c.h.b16 %v37
  %v285 = vunpack.c.l.b16 %v38
  %v286 = vunpack.c.l.b16 %v39
  %v287 = vunpack.c.h.b16 %v39
  %v288 = vunpack.c.l.b16 %v40
  %v289 = vunpack.c.h.b16 %v40
  %v290 = vunpack.c.l.b16 %v41
  %v291 = vunpack.c.h.b16 %v41
  %v292 = vunpack.c.l.b16 %v42
  %v293 = vunpack.c.l.b16 %v43
  %v294 = vunpack.c.h.b16 %v43
  %v295 = vunpack.c.l.b16 %v44
  %v296 = vunpack.c.h.b16 %v44
  %v297 = vunpack.c.l.b16 %v45
  %v298 = vunpack.c.h.b16 %v45
  %v299 = vunpack.c.l.b16 %v46
  %v300 = vunpack.c.l.b16 %v47
  %v301 = vunpack.c.h.b16 %v47
  %v302 = vunpack.c.l.b16 %v48
  %v303 = vunpack.c.h.b16 %v48
  %v304 = vunpack.c.l.b16 %v49
  %v305 = vunpack.c.h.b16 %v49
  %v306 = vunpack.c.l.b16 %v50
  %v307 = vunpack.c.l.b16 %v51
  %v308 = vunpack.c.h.b16 %v51
  %v309 = vunpack.c.l.b16 %v52
  %v310 = vunpack.c.h.b16 %v52
  %v311 = vunpack.c.l.b16 %v53
  %v312 = vunpack.c.h.b16 %v53
  %v313 = vunpack.c.l.b16 %v54
  %v314 = vunpack.c.l.b16 %v55
  %v315 = vunpack.c.h.b16 %v55
  %v316 = vunpack.c.l.b16 %v56
  %v317 = vunpack.c.h.b16 %v56
  %v318 = vunpack.c.l.b16 %v57
  %v319 = vunpack.c.h.b16 %v57
  %v320 = vunpack.c.l.b16 %v58
  %v321 = vunpack.c.l.b16 %v59
  %v322 = vunpack.c.h.b16 %v59
  %v323 = vunpack.c.l.b16 %v60
  %v324 = vunpack.c.h.b16 %v60
  %v325 = vunpack.c.l.b16 %v61
  %v326 = vunpack.c.h.b16 %v61
  %v327 = vunpack.c.l.b16 %v62
  %v328 = vunpack.c.l.b16 %v63
  %v329 = vunpack.c.h.b16 %v63
  %v330 = vunpack.c.l.b16 %v64
  %v331 = vunpack.c.h.b16 %v64
  %v332 = vunpack.c.l.b16 %v65
  %v333 = vunpack.c.h.b16 %v65
  %v334 = vunpack.c.l.b16 %v66
  %v335 = vunpack.c.l.b16 %v67
  %v336 = vunpack.c.h.b16 %v67
  %v337 = vunpack.c.l.b16 %v68
  %v338 = vunpack.c.h.b16 %v68
  %v339 = vunpack.c.l.b16 %v69
  %v340 = vunpack.c.h.b16 %v69
  %v341 = vunpack.c.l.b16 %v70
  %v342 = vunpack.c.l.b16 %v71
  %v343 = vunpack.c.h.b16 %v71
  %v344 = vunpack.c.l.b16 %v72
  %v345 = vunpack.c.h.b16 %v72
  %v346 = vunpack.c.l.b16 %v73
  %v347 = vunpack.c.h.b16 %v73
  %v348 = vunpack.c.l.b16 %v74
  %v349 = vunpack.c.l.b16 %v75
  %v350 = vunpack.c.h.b16 %v75
  %v351 = vunpack.c.l.b16 %v76
  %v352 = vunpack.c.h.b16 %v76
  %v353 = vunpack.c.l.b16 %v77
  %v354 = vunpack.c.h.b16 %v77
  %v355 = vunpack.c.l.b16 %v78
  %v356 = vunpack.c.l.b16 %v79
  %v357 = vunpack.c.h.b16 %v79
  %v358 = vunpack.c.l.b16 %v80
  %v359 = vunpack.c.h.b16 %v80
  %v360 = vunpack.c.l.b16 %v81
  %v361 = vunpack.c.h.b16 %v81
  %v362 = vunpack.c.l.b16 %v82
  %v363 = vunpack.c.l.b16 %v83
  %v364 = vunpack.c.h.b16 %v83
  %v365 = vunpack.c.l.b16 %v84
  %v366 = vunpack.c.h.b16 %v84
  %v367 = vunpack.c.l.b16 %v85
  %v368 = vunpack.c.h.b16 %v85
  %v369 = vunpack.c.l.b16 %v86
  %v370 = vpack.c.b16 %v265, %v258
  %v371 = vpack.c.b16 %v266, %v259
  %v372 = vpack.c.b16 %v267, %v260
  %v373 = vpack.c.b16 %v268, %v261
  %v374 = vpack.c.b16 %v269, %v262
  %v375 = vpack.c.b16 %v270, %v263
  %v376 = vpack.c.b16 %v271, %v264
  %v377 = vpack.c.b16 %v279, %v272
  %v378 = vpack.c.b16 %v280, %v273
  %v379 = vpack.c.b16 %v281, %v274
  %v380 = vpack.c.b16 %v282, %v275
  %v381 = vpack.c.b16 %v283, %v276
  %v382 = vpack.c.b16 %v284, %v277
  %v383 = vpack.c.b16 %v285, %v278
  %v384 = vpack.c.b16 %v293, %v286
  %v385 = vpack.c.b16 %v294, %v287
  %v386 = vpack.c.b16 %v295, %v288
  %v387 = vpack.c.b16 %v296, %v289
  %v388 = vpack.c.b16 %v297, %v290
  %v389 = vpack.c.b16 %v298, %v291
  %v390 = vpack.c.b16 %v299, %v292
  %v391 = vpack.c.b16 %v307, %v300
  %v392 = vpack.c.b16 %v308, %v301
  %v393 = vpack.c.b16 %v309, %v302
  %v394 = vpack.c.b16 %v310, %v303
  %v395 = vpack.c.b16 %v311, %v304
  %v396 = vpack.c.b16 %v312, %v305
  %v397 = vpack.c.b16 %v313, %v306
  %v398 = vpack.c.b16 %v321, %v314
  %v399 = vpack.c.b16 %v322, %v315
  %v400 = vpack.c.b16 %v323, %v316
  %v401 = vpack.c.b16 %v324, %v317
  %v402 = vpack.c.b16 %v325, %v318
  %v403 = vpack.c.b16 %v326, %v319
  %v404 = vpack.c.b16 %v327, %v320
  %v405 = vpack.c.b16 %v335, %v328
  %v406 = vpack.c.b16 %v336, %v329
  %v407 = vpack.c.b16 %v337, %v330
  %v408 = vpack.c.b16 %v338, %v331
  %v409 = vpack.c.b16 %v339, %v332
  %v410 = vpack.c.b16 %v340, %v333
  %v411 = vpack.c.b16 %v341, %v334
  %v412 = vpack.c.b16 %v349, %v342
  %v413 = vpack.c.b16 %v350, %v343
  %v414 = vpack.c.b16 %v351, %v344
  %v415 = vpack.c.b16 %v352, %v345
  %v416 = vpack.c.b16 %v353, %v346
  %v417 = vpack.c.b16 %v354, %v347
  %v418 = vpack.c.b16 %v355, %v348
  %v419 = vpack.c.b16 %v363, %v356
  %v420 = vpack.c.b16 %v364, %v357
  %v421 = vpack.c.b16 %v365, %v358
  %v422 = vpack.c.b16 %v366, %v359
  %v423 = vpack.c.b16 %v367, %v360
  %v424 = vpack.c.b16 %v368, %v361
  %v425 = vpack.c.b16 %v369, %v362
  %v574 = vunpack.c.l.b16 %v87
  %v575 = vunpack.c.l.b16 %v88
  %v576 = vunpack.c.l.b16 %v89
  %v577 = vunpack.c.l.b16 %v90
  %v578 = vunpack.c.l.b16 %v91
  %v579 = vunpack.c.l.b16 %v92
  %v580 = vunpack.c.l.b16 %v93
  %v581 = vunpack.c.l.b16 %v94
  %v582 = vunpack.c.l.b16 %v95
  %v583 = vunpack.c.l.b16 %v96
  %v584 = vunpack.c.l.b16 %v97
  %v585 = vunpack.c.l.b16 %v98
  %v586 = vunpack.c.l.b16 %v99
  %v587 = vunpack.c.l.b16 %v100
  %v588 = vunpack.c.l.b16 %v101
  %v589 = vunpack.c.l.b16 %v102
  %v590 = vunpack.c.l.b16 %v103
  %v591 = vunpack.c.l.b16 %v104
  %v592 = vunpack.c.l.b16 %v105
  %v593 = vunpack.c.l.b16 %v106
  %v594 = vunpack.c.l.b16 %v107
  %v595 = vunpack.c.l.b16 %v108
  %v596 = vunpack.c.l.b16 %v109
  %v597 = vunpack.c.l.b16 %v110
  %v598 = vunpack.c.l.b16 %v111
  %v599 = vunpack.c.l.b16 %v112
  %v600 = vunpack.c.l.b16 %v113
  %v601 = vunpack.c.l.b16 %v114
  %v602 = vunpack.c.l.b16 %v115
  %v603 = vunpack.c.l.b16 %v116
  %v604 = vunpack.c.l.b16 %v117
  %v605 = vunpack.c.l.b16 %v118
  %v606 = vunpack.c.l.b16 %v119
  %v607 = vunpack.c.l.b16 %v120
  %v608 = vunpack.c.l.b16 %v121
  %v609 = vunpack.c.l.b16 %v122
  %v610 = vunpack.c.l.b16 %v123
  %v611 = vunpack.c.l.b16 %v124
  %v612 = vunpack.c.l.b16 %v125
  %v613 = vunpack.c.l.b16 %v126
  %v614 = vunpack.c.l.b16 %v127
  %v615 = vunpack.c.l.b16 %v128
  %v616 = vunpack.c.l.b16 %v129
  %v617 = vunpack.c.l.b16 %v130
  %v618 = vunpack.c.l.b16 %v131
  %v619 = vunpack.c.l.b16 %v132
  %v620 = vunpack.c.l.b16 %v133
  %v621 = vunpack.c.l.b16 %v134
  %v622 = vunpack.c.l.b16 %v135
  %v623 = vunpack.c.l.b16 %v136
  %v624 = vunpack.c.l.b16 %v137
  %v625 = vunpack.c.l.b16 %v138
  %v626 = vunpack.c.l.b16 %v139
  %v627 = vunpack.c.l.b16 %v140
  %v628 = vunpack.c.l.b16 %v141
  %v629 = vunpack.c.l.b16 %v142
  %v630 = vunpack.c.l.b16 %v143
  %v631 = vunpack.c.l.b16 %v144
  %v632 = vunpack.c.l.b16 %v145
  %v633 = vunpack.c.l.b16 %v146
  %v634 = vunpack.c.l.b16 %v147
  %v635 = vunpack.c.l.b16 %v148
  %v636 = vunpack.c.l.b16 %v149
  %v637 = vunpack.c.l.b16 %v150
  %v638 = vunpack.c.l.b16 %v151
  %v639 = vunpack.c.l.b16 %v152
  %v640 = vunpack.c.l.b16 %v153
  %v641 = vunpack.c.l.b16 %v154
  %v642 = vunpack.c.l.b16 %v155
  %v643 = vunpack.c.l.b16 %v156
  %v644 = vunpack.c.l.b16 %v157
  %v645 = vunpack.c.l.b16 %v158
  %v646 = vunpack.c.l.b16 %v159
  %v647 = vunpack.c.l.b16 %v160
  %v648 = vunpack.c.l.b16 %v161
  %v649 = vunpack.c.l.b16 %v162
  %v650 = vunpack.c.l.b16 %v163
  %v651 = vunpack.c.l.b16 %v164
  %v652 = vunpack.c.l.b16 %v165
  %v653 = vunpack.c.l.b16 %v166
  %v654 = vunpack.c.l.b16 %v167
  %v655 = vunpack.c.l.b16 %v168
  %v656 = vunpack.c.l.b16 %v169
  %v657 = vunpack.c.l.b16 %v170
  %v658 = vunpack.c.l.b16 %v171
  %v659 = vunpack.c.l.b16 %v172
  %v660 = vunpack.c.l.b16 %v173
  %v661 = vunpack.c.l.b16 %v174
  %v662 = vunpack.c.l.b16 %v175
  %v663 = vunpack.c.l.b16 %v176
  %v664 = vunpack.c.l.b16 %v177
  %v665 = vunpack.c.l.b16 %v178
  %v666 = vunpack.c.l.b16 %v179
  %v667 = vunpack.c.l.b16 %v180
  %v668 = vunpack.c.l.b16 %v181
  %v669 = vunpack.c.l.b16 %v182
  %v670 = vunpack.c.l.b16 %v183
  %v671 = vunpack.c.l.b16 %v184
  %v672 = vunpack.c.l.b16 %v185
  %v673 = vunpack.c.l.b16 %v186
  %v674 = vpack.c.b16 %v575, %v574
  %v675 = vpack.c.b16 %v577, %v576
  %v676 = vpack.c.b16 %v579, %v578
  %v677 = vpack.c.b16 %v581, %v580
  %v678 = vpack.c.b16 %v583, %v582
  %v679 = vpack.c.b16 %v585, %v584
  %v680 = vpack.c.b16 %v587, %v586
  %v681 = vpack.c.b16 %v589, %v588
  %v682 = vpack.c.b16 %v591, %v590
  %v683 = vpack.c.b16 %v593, %v592
  %v684 = vpack.c.b16 %v595, %v594
  %v685 = vpack.c.b16 %v597, %v596
  %v686 = vpack.c.b16 %v599, %v598
  %v687 = vpack.c.b16 %v601, %v600
  %v688 = vpack.c.b16 %v603, %v602
  %v689 = vpack.c.b16 %v605, %v604
  %v690 = vpack.c.b16 %v607, %v606
  %v691 = vpack.c.b16 %v609, %v608
  %v692 = vpack.c.b16 %v611, %v610
  %v693 = vpack.c.b16 %v613, %v612
  %v694 = vpack.c.b16 %v615, %v614
  %v695 = vpack.c.b16 %v617, %v616
  %v696 = vpack.c.b16 %v619, %v618
  %v697 = vpack.c.b16 %v621, %v620
  %v698 = vpack.c.b16 %v623, %v622
  %v699 = vpack.c.b16 %v625, %v624
  %v700 = vpack.c.b16 %v627, %v626
  %v701 = vpack.c.b16 %v629, %v628
  %v702 = vpack.c.b16 %v631, %v630
  %v703 = vpack.c.b16 %v633, %v632
  %v704 = vpack.c.b16 %v635, %v634
  %v705 = vpack.c.b16 %v637, %v636
  %v706 = vpack.c.b16 %v639, %v638
  %v707 = vpack.c.b16 %v641, %v640
  %v708 = vpack.c.b16 %v643, %v642
  %v709 = vpack.c.b16 %v645, %v644
  %v710 = vpack.c.b16 %v647, %v646
  %v711 = vpack.c.b16 %v649, %v648
  %v712 = vpack.c.b16 %v651, %v650
  %v713 = vpack.c.b16 %v653, %v652
  %v714 = vpack.c.b16 %v655, %v654
  %v715 = vpack.c.b16 %v657, %v656
  %v716 = vpack.c.b16 %v659, %v658
  %v717 = vpack.c.b16 %v661, %v660
  %v718 = vpack.c.b16 %v663, %v662
  %v719 = vpack.c.b16 %v665, %v664
  %v720 = vpack.c.b16 %v667, %v666
  %v721 = vpack.c.b16 %v669, %v668
  %v722 = vpack.c.b16 %v671, %v670
  %v723 = vpack.c.b16 %v673, %v672
  %vm774 = vcmask 261120
  %v776 = vsel %vm774, %v376, 0
  %v779 = vsel %vm774, %v383, 0
  %v782 = vsel %vm774, %v390, 0
  %v785 = vsel %vm774, %v397, 0
  %v788 = vsel %vm774, %v404, 0
  %v791 = vsel %vm774, %v411, 0
  %v794 = vsel %vm774, %v418, 0
  %v797 = vsel %vm774, %v425, 0
  %799 = vmatprep.subr.bf16.mxu0 0
  %800 = vmatpush1.bf16.msra.mxu0 %v674
  %801 = vmatprep.subr.bf16.mxu0 0
  %802 = vmatpush1.bf16.msra.mxu0 %v675
  %803 = vmatprep.subr.bf16.mxu0 0
  %804 = vmatpush1.bf16.msra.mxu0 %v676
  %805 = vmatprep.subr.bf16.mxu0 0
  %806 = vmatpush1.bf16.msra.mxu0 %v677
  %807 = vmatprep.subr.bf16.mxu0 0
  %808 = vmatpush1.bf16.msra.mxu0 %v678
  %809 = vmatprep.subr.bf16.mxu0 0
  %810 = vmatpush1.bf16.msra.mxu0 %v679
  %811 = vmatprep.subr.bf16.mxu0 0
  %812 = vmatpush1.bf16.msra.mxu0 %v680
  %813 = vmatprep.subr.bf16.mxu0 0
  %814 = vmatpush1.bf16.msra.mxu0 %v681
  %815 = vmatprep.subr.bf16.mxu0 0
  %816 = vmatpush1.bf16.msra.mxu0 %v682
  %817 = vmatprep.subr.bf16.mxu0 0
  %818 = vmatpush1.bf16.msra.mxu0 %v683
  %819 = vmatprep.subr.bf16.mxu0 0
  %820 = vmatpush1.bf16.msra.mxu0 %v684
  %821 = vmatprep.subr.bf16.mxu0 0
  %822 = vmatpush1.bf16.msra.mxu0 %v685
  %823 = vmatprep.subr.bf16.mxu0 0
  %824 = vmatpush1.bf16.msra.mxu0 %v686
  %825 = vmatprep.subr.bf16.mxu0 0
  %826 = vmatpush1.bf16.msra.mxu0 %v687
  %827 = vmatprep.subr.bf16.mxu0 0
  %828 = vmatpush1.bf16.msra.mxu0 %v688
  %829 = vmatprep.subr.bf16.mxu0 0
  %830 = vmatpush1.bf16.msra.mxu0 %v689
  %831 = vmatprep.mubr.bf16.mxu0 %v371
  %832 = vmatmul.mubr.bf16.gmra.mrb[0].mxu0 %v370
  %v833 = vpop.f32.mrb[0].mxu0
  %v834 = vadd.f32 %v192, %v833
  %v835 = vpop.f32.mrb[0].mxu0
  %v836 = vpop.f32.mrb[0].mxu0
  %v837 = vadd.f32 %v192, %v836
  %v838 = vpop.f32.mrb[0].mxu0
  %839 = vmatprep.mubr.bf16.mxu0 %v378
  %840 = vmatmul.mubr.bf16.gmra.mrb[0].mxu0 %v377
  %v841 = vpop.f32.mrb[0].mxu0
  %v842 = vadd.f32 %v192, %v841
  %v843 = vpop.f32.mrb[0].mxu0
  %v844 = vpop.f32.mrb[0].mxu0
  %v845 = vadd.f32 %v192, %v844
  %v846 = vpop.f32.mrb[0].mxu0
  %847 = vmatprep.mubr.bf16.mxu0 %v385
  %848 = vmatmul.mubr.bf16.gmra.mrb[0].mxu0 %v384
  %v849 = vpop.f32.mrb[0].mxu0
  %v850 = vadd.f32 %v192, %v849
  %v851 = vpop.f32.mrb[0].mxu0
  %v852 = vpop.f32.mrb[0].mxu0
  %v853 = vadd.f32 %v192, %v852
  %v854 = vpop.f32.mrb[0].mxu0
  %855 = vmatprep.mubr.bf16.mxu0 %v392
  %856 = vmatmul.mubr.bf16.gmra.mrb[0].mxu0 %v391
  %v857 = vpop.f32.mrb[0].mxu0
  %v858 = vadd.f32 %v192, %v857
  %v859 = vpop.f32.mrb[0].mxu0
  %v860 = vpop.f32.mrb[0].mxu0
  %v861 = vadd.f32 %v192, %v860
  %v862 = vpop.f32.mrb[0].mxu0
  %863 = vmatprep.mubr.bf16.mxu0 %v399
  %864 = vmatmul.mubr.bf16.gmra.mrb[0].mxu0 %v398
  %v865 = vpop.f32.mrb[0].mxu0
  %v866 = vadd.f32 %v192, %v865
  %v867 = vpop.f32.mrb[0].mxu0
  %v868 = vpop.f32.mrb[0].mxu0
  %v869 = vadd.f32 %v192, %v868
  %v870 = vpop.f32.mrb[0].mxu0
  %871 = vmatprep.mubr.bf16.mxu0 %v406
  %872 = vmatmul.mubr.bf16.gmra.mrb[0].mxu0 %v405
  %v873 = vpop.f32.mrb[0].mxu0
  %v874 = vadd.f32 %v192, %v873
  %v875 = vpop.f32.mrb[0].mxu0
  %v876 = vpop.f32.mrb[0].mxu0
  %v877 = vadd.f32 %v192, %v876
  %v878 = vpop.f32.mrb[0].mxu0
  %879 = vmatprep.mubr.bf16.mxu0 %v413
  %880 = vmatmul.mubr.bf16.gmra.mrb[0].mxu0 %v412
  %v881 = vpop.f32.mrb[0].mxu0
  %v882 = vadd.f32 %v192, %v881
  %v883 = vpop.f32.mrb[0].mxu0
  %v884 = vpop.f32.mrb[0].mxu0
  %v885 = vadd.f32 %v192, %v884
  %v886 = vpop.f32.mrb[0].mxu0
  %887 = vmatprep.mubr.bf16.mxu0 %v420
  %888 = vmatmul.mubr.bf16.gmra.mrb[0].mxu0 %v419
  %v889 = vpop.f32.mrb[0].mxu0
  %v890 = vadd.f32 %v192, %v889
  %v891 = vpop.f32.mrb[0].mxu0
  %v892 = vpop.f32.mrb[0].mxu0
  %v893 = vadd.f32 %v192, %v892
  %v894 = vpop.f32.mrb[0].mxu0
  %895 = vdwg.mxu0
  %896 = vmatprep.subr.bf16.mxu0 0
  %897 = vmatpush1.bf16.msra.mxu0 %v690
  %898 = vmatprep.subr.bf16.mxu0 0
  %899 = vmatpush1.bf16.msra.mxu0 %v691
  %900 = vmatprep.subr.bf16.mxu0 0
  %901 = vmatpush1.bf16.msra.mxu0 %v692
  %902 = vmatprep.subr.bf16.mxu0 0
  %903 = vmatpush1.bf16.msra.mxu0 %v693
  %904 = vmatprep.subr.bf16.mxu0 0
  %905 = vmatpush1.bf16.msra.mxu0 %v694
  %906 = vmatprep.subr.bf16.mxu0 0
  %907 = vmatpush1.bf16.msra.mxu0 %v695
  %908 = vmatprep.subr.bf16.mxu0 0
  %909 = vmatpush1.bf16.msra.mxu0 %v696
  %910 = vmatprep.subr.bf16.mxu0 0
  %911 = vmatpush1.bf16.msra.mxu0 %v697
  %912 = vmatprep.subr.bf16.mxu0 0
  %913 = vmatpush1.bf16.msra.mxu0 %v698
  %914 = vmatprep.subr.bf16.mxu0 0
  %915 = vmatpush1.bf16.msra.mxu0 %v699
  %916 = vmatprep.subr.bf16.mxu0 0
  %917 = vmatpush1.bf16.msra.mxu0 %v700
  %918 = vmatprep.subr.bf16.mxu0 0
  %919 = vmatpush1.bf16.msra.mxu0 %v701
  %920 = vmatprep.subr.bf16.mxu0 0
  %921 = vmatpush1.bf16.msra.mxu0 %v702
  %922 = vmatprep.subr.bf16.mxu0 0
  %923 = vmatpush1.bf16.msra.mxu0 %v703
  %924 = vmatprep.subr.bf16.mxu0 0
  %925 = vmatpush1.bf16.msra.mxu0 %v704
  %926 = vmatprep.subr.bf16.mxu0 0
  %927 = vmatpush1.bf16.msra.mxu0 %v705
  %928 = vmatprep.mubr.bf16.mxu0 %v373
  %929 = vmatmul.mubr.bf16.gmra.mrb[0].mxu0 %v372
  %v930 = vpop.f32.mrb[0].mxu0
  %v931 = vadd.f32 %v834, %v930
  %v932 = vpop.f32.mrb[0].mxu0
  %v933 = vpop.f32.mrb[0].mxu0
  %v934 = vadd.f32 %v837, %v933
  %v935 = vpop.f32.mrb[0].mxu0
  %936 = vmatprep.mubr.bf16.mxu0 %v380
  %937 = vmatmul.mubr.bf16.gmra.mrb[0].mxu0 %v379
  %v938 = vpop.f32.mrb[0].mxu0
  %v939 = vadd.f32 %v842, %v938
  %v940 = vpop.f32.mrb[0].mxu0
  %v941 = vpop.f32.mrb[0].mxu0
  %v942 = vadd.f32 %v845, %v941
  %v943 = vpop.f32.mrb[0].mxu0
  %944 = vmatprep.mubr.bf16.mxu0 %v387
  %945 = vmatmul.mubr.bf16.gmra.mrb[0].mxu0 %v386
  %v946 = vpop.f32.mrb[0].mxu0
  %v947 = vadd.f32 %v850, %v946
  %v948 = vpop.f32.mrb[0].mxu0
  %v949 = vpop.f32.mrb[0].mxu0
  %v950 = vadd.f32 %v853, %v949
  %v951 = vpop.f32.mrb[0].mxu0
  %952 = vmatprep.mubr.bf16.mxu0 %v394
  %953 = vmatmul.mubr.bf16.gmra.mrb[0].mxu0 %v393
  %v954 = vpop.f32.mrb[0].mxu0
  %v955 = vadd.f32 %v858, %v954
  %v956 = vpop.f32.mrb[0].mxu0
  %v957 = vpop.f32.mrb[0].mxu0
  %v958 = vadd.f32 %v861, %v957
  %v959 = vpop.f32.mrb[0].mxu0
  %960 = vmatprep.mubr.bf16.mxu0 %v401
  %961 = vmatmul.mubr.bf16.gmra.mrb[0].mxu0 %v400
  %v962 = vpop.f32.mrb[0].mxu0
  %v963 = vadd.f32 %v866, %v962
  %v964 = vpop.f32.mrb[0].mxu0
  %v965 = vpop.f32.mrb[0].mxu0
  %v966 = vadd.f32 %v869, %v965
  %v967 = vpop.f32.mrb[0].mxu0
  %968 = vmatprep.mubr.bf16.mxu0 %v408
  %969 = vmatmul.mubr.bf16.gmra.mrb[0].mxu0 %v407
  %v970 = vpop.f32.mrb[0].mxu0
  %v971 = vadd.f32 %v874, %v970
  %v972 = vpop.f32.mrb[0].mxu0
  %v973 = vpop.f32.mrb[0].mxu0
  %v974 = vadd.f32 %v877, %v973
  %v975 = vpop.f32.mrb[0].mxu0
  %976 = vmatprep.mubr.bf16.mxu0 %v415
  %977 = vmatmul.mubr.bf16.gmra.mrb[0].mxu0 %v414
  %v978 = vpop.f32.mrb[0].mxu0
  %v979 = vadd.f32 %v882, %v978
  %v980 = vpop.f32.mrb[0].mxu0
  %v981 = vpop.f32.mrb[0].mxu0
  %v982 = vadd.f32 %v885, %v981
  %v983 = vpop.f32.mrb[0].mxu0
  %984 = vmatprep.mubr.bf16.mxu0 %v422
  %985 = vmatmul.mubr.bf16.gmra.mrb[0].mxu0 %v421
  %v986 = vpop.f32.mrb[0].mxu0
  %v987 = vadd.f32 %v890, %v986
  %v988 = vpop.f32.mrb[0].mxu0
  %v989 = vpop.f32.mrb[0].mxu0
  %v990 = vadd.f32 %v893, %v989
  %v991 = vpop.f32.mrb[0].mxu0
  %992 = vdwg.mxu0
  %993 = vmatprep.subr.bf16.mxu0 0
  %994 = vmatpush1.bf16.msra.mxu0 %v706
  %995 = vmatprep.subr.bf16.mxu0 0
  %996 = vmatpush1.bf16.msra.mxu0 %v707
  %997 = vmatprep.subr.bf16.mxu0 0
  %998 = vmatpush1.bf16.msra.mxu0 %v708
  %999 = vmatprep.subr.bf16.mxu0 0
  %1000 = vmatpush1.bf16.msra.mxu0 %v709
  %1001 = vmatprep.subr.bf16.mxu0 0
  %1002 = vmatpush1.bf16.msra.mxu0 %v710
  %1003 = vmatprep.subr.bf16.mxu0 0
  %1004 = vmatpush1.bf16.msra.mxu0 %v711
  %1005 = vmatprep.subr.bf16.mxu0 0
  %1006 = vmatpush1.bf16.msra.mxu0 %v712
  %1007 = vmatprep.subr.bf16.mxu0 0
  %1008 = vmatpush1.bf16.msra.mxu0 %v713
  %1009 = vmatprep.subr.bf16.mxu0 0
  %1010 = vmatpush1.bf16.msra.mxu0 %v714
  %1011 = vmatprep.subr.bf16.mxu0 0
  %1012 = vmatpush1.bf16.msra.mxu0 %v715
  %1013 = vmatprep.subr.bf16.mxu0 0
  %1014 = vmatpush1.bf16.msra.mxu0 %v716
  %1015 = vmatprep.subr.bf16.mxu0 0
  %1016 = vmatpush1.bf16.msra.mxu0 %v717
  %1017 = vmatprep.subr.bf16.mxu0 0
  %1018 = vmatpush1.bf16.msra.mxu0 %v718
  %1019 = vmatprep.subr.bf16.mxu0 0
  %1020 = vmatpush1.bf16.msra.mxu0 %v719
  %1021 = vmatprep.subr.bf16.mxu0 0
  %1022 = vmatpush1.bf16.msra.mxu0 %v720
  %1023 = vmatprep.subr.bf16.mxu0 0
  %1024 = vmatpush1.bf16.msra.mxu0 %v721
  %1025 = vmatprep.mubr.bf16.mxu0 %v375
  %1026 = vmatmul.mubr.bf16.gmra.mrb[0].mxu0 %v374
  %v1027 = vpop.f32.mrb[0].mxu0
  %v1028 = vadd.f32 %v931, %v1027
  %v1029 = vpop.f32.mrb[0].mxu0
  %v1030 = vpop.f32.mrb[0].mxu0
  %v1031 = vadd.f32 %v934, %v1030
  %v1032 = vpop.f32.mrb[0].mxu0
  %1033 = vmatprep.mubr.bf16.mxu0 %v382
  %1034 = vmatmul.mubr.bf16.gmra.mrb[0].mxu0 %v381
  %v1035 = vpop.f32.mrb[0].mxu0
  %v1036 = vadd.f32 %v939, %v1035
  %v1037 = vpop.f32.mrb[0].mxu0
  %v1038 = vpop.f32.mrb[0].mxu0
  %v1039 = vadd.f32 %v942, %v1038
  %v1040 = vpop.f32.mrb[0].mxu0
  %1041 = vmatprep.mubr.bf16.mxu0 %v389
  %1042 = vmatmul.mubr.bf16.gmra.mrb[0].mxu0 %v388
  %v1043 = vpop.f32.mrb[0].mxu0
  %v1044 = vadd.f32 %v947, %v1043
  %v1045 = vpop.f32.mrb[0].mxu0
  %v1046 = vpop.f32.mrb[0].mxu0
  %v1047 = vadd.f32 %v950, %v1046
  %v1048 = vpop.f32.mrb[0].mxu0
  %1049 = vmatprep.mubr.bf16.mxu0 %v396
  %1050 = vmatmul.mubr.bf16.gmra.mrb[0].mxu0 %v395
  %v1051 = vpop.f32.mrb[0].mxu0
  %v1052 = vadd.f32 %v955, %v1051
  %v1053 = vpop.f32.mrb[0].mxu0
  %v1054 = vpop.f32.mrb[0].mxu0
  %v1055 = vadd.f32 %v958, %v1054
  %v1056 = vpop.f32.mrb[0].mxu0
  %1057 = vmatprep.mubr.bf16.mxu0 %v403
  %1058 = vmatmul.mubr.bf16.gmra.mrb[0].mxu0 %v402
  %v1059 = vpop.f32.mrb[0].mxu0
  %v1060 = vadd.f32 %v963, %v1059
  %v1061 = vpop.f32.mrb[0].mxu0
  %v1062 = vpop.f32.mrb[0].mxu0
  %v1063 = vadd.f32 %v966, %v1062
  %v1064 = vpop.f32.mrb[0].mxu0
  %1065 = vmatprep.mubr.bf16.mxu0 %v410
  %1066 = vmatmul.mubr.bf16.gmra.mrb[0].mxu0 %v409
  %v1067 = vpop.f32.mrb[0].mxu0
  %v1068 = vadd.f32 %v971, %v1067
  %v1069 = vpop.f32.mrb[0].mxu0
  %v1070 = vpop.f32.mrb[0].mxu0
  %v1071 = vadd.f32 %v974, %v1070
  %v1072 = vpop.f32.mrb[0].mxu0
  %1073 = vmatprep.mubr.bf16.mxu0 %v417
  %1074 = vmatmul.mubr.bf16.gmra.mrb[0].mxu0 %v416
  %v1075 = vpop.f32.mrb[0].mxu0
  %v1076 = vadd.f32 %v979, %v1075
  %v1077 = vpop.f32.mrb[0].mxu0
  %v1078 = vpop.f32.mrb[0].mxu0
  %v1079 = vadd.f32 %v982, %v1078
  %v1080 = vpop.f32.mrb[0].mxu0
  %1081 = vmatprep.mubr.bf16.mxu0 %v424
  %1082 = vmatmul.mubr.bf16.gmra.mrb[0].mxu0 %v423
  %v1083 = vpop.f32.mrb[0].mxu0
  %v1084 = vadd.f32 %v987, %v1083
  %v1085 = vpop.f32.mrb[0].mxu0
  %v1086 = vpop.f32.mrb[0].mxu0
  %v1087 = vadd.f32 %v990, %v1086
  %v1088 = vpop.f32.mrb[0].mxu0
  %1089 = vdwg.mxu0
  %1090 = vmatprep.subr.bf16.mxu0 0
  %1091 = vmatpush1.bf16.msra.mxu0 %v722
  %1092 = vmatprep.subr.bf16.mxu0 0
  %1093 = vmatpush1.bf16.msra.mxu0 %v723
  %1094 = vmatprep.subr.bf16.mxu0 0
  %1095 = vmatpush1.bf16.msra.mxu0 0
  %1096 = vmatprep.subr.bf16.mxu0 0
  %1097 = vmatpush1.bf16.msra.mxu0 0
  %1098 = vmatprep.subr.bf16.mxu0 0
  %1099 = vmatpush1.bf16.msra.mxu0 0
  %1100 = vmatprep.subr.bf16.mxu0 0
  %1101 = vmatpush1.bf16.msra.mxu0 0
  %1102 = vmatprep.subr.bf16.mxu0 0
  %1103 = vmatpush1.bf16.msra.mxu0 0
  %1104 = vmatprep.subr.bf16.mxu0 0
  %1105 = vmatpush1.bf16.msra.mxu0 0
  %1106 = vmatprep.subr.bf16.mxu0 0
  %1107 = vmatpush1.bf16.msra.mxu0 0
  %1108 = vmatprep.subr.bf16.mxu0 0
  %1109 = vmatpush1.bf16.msra.mxu0 0
  %1110 = vmatprep.subr.bf16.mxu0 0
  %1111 = vmatpush1.bf16.msra.mxu0 0
  %1112 = vmatprep.subr.bf16.mxu0 0
  %1113 = vmatpush1.bf16.msra.mxu0 0
  %1114 = vmatprep.subr.bf16.mxu0 0
  %1115 = vmatpush1.bf16.msra.mxu0 0
  %1116 = vmatprep.subr.bf16.mxu0 0
  %1117 = vmatpush1.bf16.msra.mxu0 0
  %1118 = vmatprep.subr.bf16.mxu0 0
  %1119 = vmatpush1.bf16.msra.mxu0 0
  %1120 = vmatprep.subr.bf16.mxu0 0
  %1121 = vmatpush1.bf16.msra.mxu0 0
  %1122 = vmatprep.mubr.bf16.mxu0 0
  %1123 = vmatmul.mubr.bf16.gmra.mrb[0].mxu0 %v776
  %v1124 = vpop.f32.mrb[0].mxu0
  %v1125 = vadd.f32 %v1028, %v1124
  %v1126 = vpop.f32.mrb[0].mxu0
  %v1127 = vpop.f32.mrb[0].mxu0
  %v1128 = vadd.f32 %v1031, %v1127
  %v1129 = vpop.f32.mrb[0].mxu0
  %1130 = vmatprep.mubr.bf16.mxu0 0
  %1131 = vmatmul.mubr.bf16.gmra.mrb[0].mxu0 %v779
  %v1132 = vpop.f32.mrb[0].mxu0
  %v1133 = vadd.f32 %v1036, %v1132
  %v1134 = vpop.f32.mrb[0].mxu0
  %v1135 = vpop.f32.mrb[0].mxu0
  %v1136 = vadd.f32 %v1039, %v1135
  %v1137 = vpop.f32.mrb[0].mxu0
  %1138 = vmatprep.mubr.bf16.mxu0 0
  %1139 = vmatmul.mubr.bf16.gmra.mrb[0].mxu0 %v782
  %v1140 = vpop.f32.mrb[0].mxu0
  %v1141 = vadd.f32 %v1044, %v1140
  %v1142 = vpop.f32.mrb[0].mxu0
  %v1143 = vpop.f32.mrb[0].mxu0
  %v1144 = vadd.f32 %v1047, %v1143
  %v1145 = vpop.f32.mrb[0].mxu0
  %1146 = vmatprep.mubr.bf16.mxu0 0
  %1147 = vmatmul.mubr.bf16.gmra.mrb[0].mxu0 %v785
  %v1148 = vpop.f32.mrb[0].mxu0
  %v1149 = vadd.f32 %v1052, %v1148
  %v1150 = vpop.f32.mrb[0].mxu0
  %v1151 = vpop.f32.mrb[0].mxu0
  %v1152 = vadd.f32 %v1055, %v1151
  %v1153 = vpop.f32.mrb[0].mxu0
  %1154 = vmatprep.mubr.bf16.mxu0 0
  %1155 = vmatmul.mubr.bf16.gmra.mrb[0].mxu0 %v788
  %v1156 = vpop.f32.mrb[0].mxu0
  %v1157 = vadd.f32 %v1060, %v1156
  %v1158 = vpop.f32.mrb[0].mxu0
  %v1159 = vpop.f32.mrb[0].mxu0
  %v1160 = vadd.f32 %v1063, %v1159
  %v1161 = vpop.f32.mrb[0].mxu0
  %1162 = vmatprep.mubr.bf16.mxu0 0
  %1163 = vmatmul.mubr.bf16.gmra.mrb[0].mxu0 %v791
  %v1164 = vpop.f32.mrb[0].mxu0
  %v1165 = vadd.f32 %v1068, %v1164
  %v1166 = vpop.f32.mrb[0].mxu0
  %v1167 = vpop.f32.mrb[0].mxu0
  %v1168 = vadd.f32 %v1071, %v1167
  %v1169 = vpop.f32.mrb[0].mxu0
  %1170 = vmatprep.mubr.bf16.mxu0 0
  %1171 = vmatmul.mubr.bf16.gmra.mrb[0].mxu0 %v794
  %v1172 = vpop.f32.mrb[0].mxu0
  %v1173 = vadd.f32 %v1076, %v1172
  %v1174 = vpop.f32.mrb[0].mxu0
  %v1175 = vpop.f32.mrb[0].mxu0
  %v1176 = vadd.f32 %v1079, %v1175
  %v1177 = vpop.f32.mrb[0].mxu0
  %1178 = vmatprep.mubr.bf16.mxu0 0
  %1179 = vmatmul.mubr.bf16.gmra.mrb[0].mxu0 %v797
  %v1180 = vpop.f32.mrb[0].mxu0
  %v1181 = vadd.f32 %v1084, %v1180
  %v1182 = vpop.f32.mrb[0].mxu0
  %v1183 = vpop.f32.mrb[0].mxu0
  %v1184 = vadd.f32 %v1087, %v1183
  %v1185 = vpop.f32.mrb[0].mxu0
  %1186 = vdwg.mxu0
  %v1187 = vld [vmem:[%s4] sm:$0xff]
  %v1188 = vld [vmem:[%s4 + $0x8] sm:$0xff]
  %v1189 = vld [vmem:[%s4 + $0x10] sm:$0xff]
  %v1190 = vld [vmem:[%s4 + $0x18] sm:$0xff]
  %v1191 = vld [vmem:[%s4 + $0x20] sm:$0xff]
  %v1192 = vld [vmem:[%s4 + $0x28] sm:$0xff]
  %v1193 = vld [vmem:[%s4 + $0x30] sm:$0xff]
  %v1194 = vld [vmem:[%s4 + $0x38] sm:$0xff]
  %v1195 = vld [vmem:[%s4 + $0x40] sm:$0xff]
  %v1196 = vld [vmem:[%s4 + $0x48] sm:$0xff]
  %v1197 = vld [vmem:[%s4 + $0x50] sm:$0xff]
  %v1198 = vld [vmem:[%s4 + $0x58] sm:$0xff]
  %v1199 = vld [vmem:[%s4 + $0x60] sm:$0xff]
  %v1200 = vld [vmem:[%s4 + $0x68] sm:$0xff]
  %v1201 = vld [vmem:[%s4 + $0x70] sm:$0xff]
  %v1202 = vld [vmem:[%s4 + $0x78] sm:$0xff]
  %v1203 = vmul.f32 %v1187, 0.96
  %v1204 = vmul.f32 %v1188, 0.96
  %v1205 = vmul.f32 %v1189, 0.96
  %v1206 = vmul.f32 %v1190, 0.96
  %v1207 = vmul.f32 %v1191, 0.96
  %v1208 = vmul.f32 %v1192, 0.96
  %v1209 = vmul.f32 %v1193, 0.96
  %v1210 = vmul.f32 %v1194, 0.96
  %v1211 = vmul.f32 %v1195, 0.96
  %v1212 = vmul.f32 %v1196, 0.96
  %v1213 = vmul.f32 %v1197, 0.96
  %v1214 = vmul.f32 %v1198, 0.96
  %v1215 = vmul.f32 %v1199, 0.96
  %v1216 = vmul.f32 %v1200, 0.96
  %v1217 = vmul.f32 %v1201, 0.96
  %v1218 = vmul.f32 %v1202, 0.96
  %v1219 = vld [vmem:[%s3] sm:$0xff]
  %v1220 = vld [vmem:[%s3 + $0x8] sm:$0xff]
  %v1221 = vld [vmem:[%s3 + $0x10] sm:$0xff]
  %v1222 = vld [vmem:[%s3 + $0x18] sm:$0xff]
  %v1223 = vld [vmem:[%s3 + $0x20] sm:$0xff]
  %v1224 = vld [vmem:[%s3 + $0x28] sm:$0xff]
  %v1225 = vld [vmem:[%s3 + $0x30] sm:$0xff]
  %v1226 = vld [vmem:[%s3 + $0x38] sm:$0xff]
  %v1227 = vld [vmem:[%s3 + $0x40] sm:$0xff]
  %v1228 = vld [vmem:[%s3 + $0x48] sm:$0xff]
  %v1229 = vld [vmem:[%s3 + $0x50] sm:$0xff]
  %v1230 = vld [vmem:[%s3 + $0x58] sm:$0xff]
  %v1231 = vld [vmem:[%s3 + $0x60] sm:$0xff]
  %v1232 = vld [vmem:[%s3 + $0x68] sm:$0xff]
  %v1233 = vld [vmem:[%s3 + $0x70] sm:$0xff]
  %v1234 = vld [vmem:[%s3 + $0x78] sm:$0xff]
  %v1235 = vmul.f32 %v1219, 0.04
  %v1236 = vmul.f32 %v1220, 0.04
  %v1237 = vmul.f32 %v1221, 0.04
  %v1238 = vmul.f32 %v1222, 0.04
  %v1239 = vmul.f32 %v1223, 0.04
  %v1240 = vmul.f32 %v1224, 0.04
  %v1241 = vmul.f32 %v1225, 0.04
  %v1242 = vmul.f32 %v1226, 0.04
  %v1243 = vmul.f32 %v1227, 0.04
  %v1244 = vmul.f32 %v1228, 0.04
  %v1245 = vmul.f32 %v1229, 0.04
  %v1246 = vmul.f32 %v1230, 0.04
  %v1247 = vmul.f32 %v1231, 0.04
  %v1248 = vmul.f32 %v1232, 0.04
  %v1249 = vmul.f32 %v1233, 0.04
  %v1250 = vmul.f32 %v1234, 0.04
  %v1251 = vadd.f32 %v1203, %v1235
  %v1252 = vadd.f32 %v1204, %v1236
  %v1253 = vadd.f32 %v1205, %v1237
  %v1254 = vadd.f32 %v1206, %v1238
  %v1255 = vadd.f32 %v1207, %v1239
  %v1256 = vadd.f32 %v1208, %v1240
  %v1257 = vadd.f32 %v1209, %v1241
  %v1258 = vadd.f32 %v1210, %v1242
  %v1259 = vadd.f32 %v1211, %v1243
  %v1260 = vadd.f32 %v1212, %v1244
  %v1261 = vadd.f32 %v1213, %v1245
  %v1262 = vadd.f32 %v1214, %v1246
  %v1263 = vadd.f32 %v1215, %v1247
  %v1264 = vadd.f32 %v1216, %v1248
  %v1265 = vadd.f32 %v1217, %v1249
  %v1266 = vadd.f32 %v1218, %v1250
  %1267 = vst.msk [vmem:[%s6] sm:$0xff] %vm774, %v1251
  %1268 = vst.msk [vmem:[%s6 + $0x8] sm:$0xff] %vm774, %v1252
  %1269 = vst.msk [vmem:[%s6 + $0x10] sm:$0xff] %vm774, %v1253
  %1270 = vst.msk [vmem:[%s6 + $0x18] sm:$0xff] %vm774, %v1254
  %1271 = vst.msk [vmem:[%s6 + $0x20] sm:$0xff] %vm774, %v1255
  %1272 = vst.msk [vmem:[%s6 + $0x28] sm:$0xff] %vm774, %v1256
  %1273 = vst.msk [vmem:[%s6 + $0x30] sm:$0xff] %vm774, %v1257
  %1274 = vst.msk [vmem:[%s6 + $0x38] sm:$0xff] %vm774, %v1258
  %1275 = vst.msk [vmem:[%s6 + $0x40] sm:$0xff] %vm774, %v1259
  %1276 = vst.msk [vmem:[%s6 + $0x48] sm:$0xff] %vm774, %v1260
  %1277 = vst.msk [vmem:[%s6 + $0x50] sm:$0xff] %vm774, %v1261
  %1278 = vst.msk [vmem:[%s6 + $0x58] sm:$0xff] %vm774, %v1262
  %1279 = vst.msk [vmem:[%s6 + $0x60] sm:$0xff] %vm774, %v1263
  %1280 = vst.msk [vmem:[%s6 + $0x68] sm:$0xff] %vm774, %v1264
  %1281 = vst.msk [vmem:[%s6 + $0x70] sm:$0xff] %vm774, %v1265
  %1282 = vst.msk [vmem:[%s6 + $0x78] sm:$0xff] %vm774, %v1266
  %v1283 = vmul.f32 %v1251, 0.7
  %v1284 = vmul.f32 %v1252, 0.7
  %v1285 = vmul.f32 %v1253, 0.7
  %v1286 = vmul.f32 %v1254, 0.7
  %v1287 = vmul.f32 %v1255, 0.7
  %v1288 = vmul.f32 %v1256, 0.7
  %v1289 = vmul.f32 %v1257, 0.7
  %v1290 = vmul.f32 %v1258, 0.7
  %v1291 = vmul.f32 %v1259, 0.7
  %v1292 = vmul.f32 %v1260, 0.7
  %v1293 = vmul.f32 %v1261, 0.7
  %v1294 = vmul.f32 %v1262, 0.7
  %v1295 = vmul.f32 %v1263, 0.7
  %v1296 = vmul.f32 %v1264, 0.7
  %v1297 = vmul.f32 %v1265, 0.7
  %v1298 = vmul.f32 %v1266, 0.7
  %v1299 = vsub.f32 %v1125, %v1283
  %v1300 = vsub.f32 %v1128, %v1284
  %v1301 = vsub.f32 %v1133, %v1285
  %v1302 = vsub.f32 %v1136, %v1286
  %v1303 = vsub.f32 %v1141, %v1287
  %v1304 = vsub.f32 %v1144, %v1288
  %v1305 = vsub.f32 %v1149, %v1289
  %v1306 = vsub.f32 %v1152, %v1290
  %v1307 = vsub.f32 %v1157, %v1291
  %v1308 = vsub.f32 %v1160, %v1292
  %v1309 = vsub.f32 %v1165, %v1293
  %v1310 = vsub.f32 %v1168, %v1294
  %v1311 = vsub.f32 %v1173, %v1295
  %v1312 = vsub.f32 %v1176, %v1296
  %v1313 = vsub.f32 %v1181, %v1297
  %v1314 = vsub.f32 %v1184, %v1298
  %v1315 = vmax.f32 %v1299, 0.0
  %v1316 = vmax.f32 %v1300, 0.0
  %v1317 = vmax.f32 %v1301, 0.0
  %v1318 = vmax.f32 %v1302, 0.0
  %v1319 = vmax.f32 %v1303, 0.0
  %v1320 = vmax.f32 %v1304, 0.0
  %v1321 = vmax.f32 %v1305, 0.0
  %v1322 = vmax.f32 %v1306, 0.0
  %v1323 = vmax.f32 %v1307, 0.0
  %v1324 = vmax.f32 %v1308, 0.0
  %v1325 = vmax.f32 %v1309, 0.0
  %v1326 = vmax.f32 %v1310, 0.0
  %v1327 = vmax.f32 %v1311, 0.0
  %v1328 = vmax.f32 %v1312, 0.0
  %v1329 = vmax.f32 %v1313, 0.0
  %v1330 = vmax.f32 %v1314, 0.0
  %1331 = vst.msk [vmem:[%s5] sm:$0xff] %vm774, %v1315
  %1332 = vst.msk [vmem:[%s5 + $0x8] sm:$0xff] %vm774, %v1316
  %1333 = vst.msk [vmem:[%s5 + $0x10] sm:$0xff] %vm774, %v1317
  %1334 = vst.msk [vmem:[%s5 + $0x18] sm:$0xff] %vm774, %v1318
  %1335 = vst.msk [vmem:[%s5 + $0x20] sm:$0xff] %vm774, %v1319
  %1336 = vst.msk [vmem:[%s5 + $0x28] sm:$0xff] %vm774, %v1320
  %1337 = vst.msk [vmem:[%s5 + $0x30] sm:$0xff] %vm774, %v1321
  %1338 = vst.msk [vmem:[%s5 + $0x38] sm:$0xff] %vm774, %v1322
  %1339 = vst.msk [vmem:[%s5 + $0x40] sm:$0xff] %vm774, %v1323
  %1340 = vst.msk [vmem:[%s5 + $0x48] sm:$0xff] %vm774, %v1324
  %1341 = vst.msk [vmem:[%s5 + $0x50] sm:$0xff] %vm774, %v1325
  %1342 = vst.msk [vmem:[%s5 + $0x58] sm:$0xff] %vm774, %v1326
  %1343 = vst.msk [vmem:[%s5 + $0x60] sm:$0xff] %vm774, %v1327
  %1344 = vst.msk [vmem:[%s5 + $0x68] sm:$0xff] %vm774, %v1328
  %1345 = vst.msk [vmem:[%s5 + $0x70] sm:$0xff] %vm774, %v1329
  %1346 = vst.msk [vmem:[%s5 + $0x78] sm:$0xff] %vm774, %v1330
  // Predicated region
  $region22: #{forward.17} parent=0 // pred_check
    _
  $region23: #{forward.17} parent=0 // pred_check_branch
    %1348 = sbr.rel (0) target = $region25
  $region24: #{forward.17} parent=0 // pred_region
    _
  $region25: #{forward.17} parent=0 // pred_fallthru
    _
  // Predicated region
  $region26: #{forward.17} parent=0 // pred_check
    _
  $region27: #{forward.17} parent=0 // pred_check_branch
    %1350 = sbr.rel (0) target = $region29
  $region28: #{forward.17} parent=0 // pred_region
    _
  $region29: #{forward.17} parent=0 // pred_fallthru
    _
  // Predicated region
  $region30: #{forward.17} parent=0 // pred_check
    _
  $region31: #{forward.17} parent=0 // pred_check_branch
    %1352 = sbr.rel (0) target = $region33
  $region32: #{forward.17} parent=0 // pred_region
    _
  $region33: #{forward.17} parent=0 // pred_fallthru
    _
  // Predicated region
  $region34: #{forward.17} parent=0 // pred_check
    _
  $region35: #{forward.17} parent=0 // pred_check_branch
    %1354 = sbr.rel (0) target = $region37
  $region36: #{forward.17} parent=0 // pred_region
    _
  $region37: #{forward.17} parent=0 // pred_fallthru
    _

// kernel: forward.14
$region0: #{forward.14}
  #allocation0 [shape = 'u32[]', space=smem, size = 0x4, offset = 0x4, fixed_abs, tag = 'smem constant byte address 0x4 - core index']
  #allocation1 [shape = 'u32[144,128]{1,0:T(1,128)}', space=vmem, size = 0x12000, scoped, tag = 'internal scratch']
  %s0 = inlined_call_operand.vmem [shape: bf16[8,288], index: 0, kind: input, shape index: {}]
  %s1 = inlined_call_operand.vmem [shape: bf16[288,32], index: 1, kind: input, shape index: {}]
  %s2 = inlined_call_operand.vmem [shape: f32[1,32], index: 2, kind: input, shape index: {}]
  %s3 = inlined_call_operand.vmem [shape: f32[8,32], index: 3, kind: output, shape index: {}]
  %s4 = sld [smem:[#allocation0]]
  $region22: #{forward.14} parent=0
    _
  %s6 = ssub.s32 1, %s4
  %s7 = scalar_select 0, %s6, %s4
  // Predicated region
  $region2: #{forward.14} parent=0 // pred_check
    _
  $region3: #{forward.14} parent=0 // pred_check_branch
    %9 = sbr.rel (0) target = $region5
  $region4: #{forward.14} parent=0 // pred_region
    _
  $region5: #{forward.14} parent=0 // pred_fallthru
    _
  // Predicated region
  $region6: #{forward.14} parent=0 // pred_check
    _
  $region7: #{forward.14} parent=0 // pred_check_branch
    %11 = sbr.rel (0) target = $region9
  $region8: #{forward.14} parent=0 // pred_region
    _
  $region9: #{forward.14} parent=0 // pred_fallthru
    _
  // Predicated region
  $region10: #{forward.14} parent=0 // pred_check
    _
  $region11: #{forward.14} parent=0 // pred_check_branch
    %13 = sbr.rel (0) target = $region13
  $region12: #{forward.14} parent=0 // pred_region
    _
  $region13: #{forward.14} parent=0 // pred_fallthru
    _
  %v15 = vld [vmem:[%s0] sm:$0xff]
  %v16 = vld [vmem:[%s0 + $0x8] sm:$0xf]
  %v17 = vld [vmem:[%s1] sm:$0xf]
  %v18 = vld [vmem:[%s1 + $0x4] sm:$0xf]
  %v19 = vld [vmem:[%s1 + $0x8] sm:$0xf]
  %v20 = vld [vmem:[%s1 + $0xc] sm:$0xf]
  %v21 = vld [vmem:[%s1 + $0x10] sm:$0xf]
  %v22 = vld [vmem:[%s1 + $0x14] sm:$0xf]
  %v23 = vld [vmem:[%s1 + $0x18] sm:$0xf]
  %v24 = vld [vmem:[%s1 + $0x1c] sm:$0xf]
  %v25 = vld [vmem:[%s1 + $0x20] sm:$0xf]
  %v26 = vld [vmem:[%s1 + $0x24] sm:$0xf]
  %v27 = vld [vmem:[%s1 + $0x28] sm:$0xf]
  %v28 = vld [vmem:[%s1 + $0x2c] sm:$0xf]
  %v29 = vld [vmem:[%s1 + $0x30] sm:$0xf]
  %v30 = vld [vmem:[%s1 + $0x34] sm:$0xf]
  %v31 = vld [vmem:[%s1 + $0x38] sm:$0xf]
  %v32 = vld [vmem:[%s1 + $0x3c] sm:$0xf]
  %v33 = vld [vmem:[%s1 + $0x40] sm:$0xf]
  %v34 = vld [vmem:[%s1 + $0x44] sm:$0xf]
  %v35 = vld [vmem:[%s1 + $0x48] sm:$0xf]
  %v36 = vld [vmem:[%s1 + $0x4c] sm:$0xf]
  %v37 = vld [vmem:[%s1 + $0x50] sm:$0xf]
  %v38 = vld [vmem:[%s1 + $0x54] sm:$0xf]
  %v39 = vld [vmem:[%s1 + $0x58] sm:$0xf]
  %v40 = vld [vmem:[%s1 + $0x5c] sm:$0xf]
  %v41 = vld [vmem:[%s1 + $0x60] sm:$0xf]
  %v42 = vld [vmem:[%s1 + $0x64] sm:$0xf]
  %v43 = vld [vmem:[%s1 + $0x68] sm:$0xf]
  %v44 = vld [vmem:[%s1 + $0x6c] sm:$0xf]
  %v45 = vld [vmem:[%s1 + $0x70] sm:$0xf]
  %v46 = vld [vmem:[%s1 + $0x74] sm:$0xf]
  %v47 = vld [vmem:[%s1 + $0x78] sm:$0xf]
  %v48 = vld [vmem:[%s1 + $0x7c] sm:$0xf]
  %v49 = vld [vmem:[%s1 + $0x80] sm:$0xf]
  %v50 = vld [vmem:[%s1 + $0x84] sm:$0xf]
  %v51 = vld [vmem:[%s1 + $0x88] sm:$0xf]
  %v52 = vld [vmem:[%s1 + $0x8c] sm:$0xf]
  %v53 = vld [vmem:[%s2] sm:$0x1]
  %v55 = vlaneseq
  %v56 = vshrl.u32 %v55, 7
  %v57 = vsub.s32 0, %v56
  %v58 = vrot.slane %v53, %v57
  %v62 = vunpack.c.l.b16 %v15
  %v63 = vunpack.c.h.b16 %v15
  %v64 = vunpack.c.l.b16 %v16
  %v65 = vpack.c.b16 %v62, %v62
  %v66 = vpack.c.b16 %v63, %v63
  %v67 = vpack.c.b16 %v64, %v64
  %v106 = vunpack.c.l.b16 %v17
  %v107 = vunpack.c.l.b16 %v18
  %v108 = vunpack.c.l.b16 %v19
  %v109 = vunpack.c.l.b16 %v20
  %v110 = vunpack.c.l.b16 %v21
  %v111 = vunpack.c.l.b16 %v22
  %v112 = vunpack.c.l.b16 %v23
  %v113 = vunpack.c.l.b16 %v24
  %v114 = vunpack.c.l.b16 %v25
  %v115 = vunpack.c.l.b16 %v26
  %v116 = vunpack.c.l.b16 %v27
  %v117 = vunpack.c.l.b16 %v28
  %v118 = vunpack.c.l.b16 %v29
  %v119 = vunpack.c.l.b16 %v30
  %v120 = vunpack.c.l.b16 %v31
  %v121 = vunpack.c.l.b16 %v32
  %v122 = vunpack.c.l.b16 %v33
  %v123 = vunpack.c.l.b16 %v34
  %v124 = vunpack.c.l.b16 %v35
  %v125 = vunpack.c.l.b16 %v36
  %v126 = vunpack.c.l.b16 %v37
  %v127 = vunpack.c.l.b16 %v38
  %v128 = vunpack.c.l.b16 %v39
  %v129 = vunpack.c.l.b16 %v40
  %v130 = vunpack.c.l.b16 %v41
  %v131 = vunpack.c.l.b16 %v42
  %v132 = vunpack.c.l.b16 %v43
  %v133 = vunpack.c.l.b16 %v44
  %v134 = vunpack.c.l.b16 %v45
  %v135 = vunpack.c.l.b16 %v46
  %v136 = vunpack.c.l.b16 %v47
  %v137 = vunpack.c.l.b16 %v48
  %v138 = vunpack.c.l.b16 %v49
  %v139 = vunpack.c.l.b16 %v50
  %v140 = vunpack.c.l.b16 %v51
  %v141 = vunpack.c.l.b16 %v52
  %v142 = vpack.c.b16 %v107, %v106
  %v143 = vpack.c.b16 %v109, %v108
  %v144 = vpack.c.b16 %v111, %v110
  %v145 = vpack.c.b16 %v113, %v112
  %v146 = vpack.c.b16 %v115, %v114
  %v147 = vpack.c.b16 %v117, %v116
  %v148 = vpack.c.b16 %v119, %v118
  %v149 = vpack.c.b16 %v121, %v120
  %v150 = vpack.c.b16 %v123, %v122
  %v151 = vpack.c.b16 %v125, %v124
  %v152 = vpack.c.b16 %v127, %v126
  %v153 = vpack.c.b16 %v129, %v128
  %v154 = vpack.c.b16 %v131, %v130
  %v155 = vpack.c.b16 %v133, %v132
  %v156 = vpack.c.b16 %v135, %v134
  %v157 = vpack.c.b16 %v137, %v136
  %v158 = vpack.c.b16 %v139, %v138
  %v159 = vpack.c.b16 %v141, %v140
  %vm178 = vcmask 261120
  %v180 = vsel %vm178, %v67, 0
  %182 = vmatprep.subr.bf16.mxu0 0
  %183 = vmatpush1.bf16.msra.mxu0 %v142
  %184 = vmatprep.subr.bf16.mxu0 0
  %185 = vmatpush1.bf16.msra.mxu0 %v143
  %186 = vmatprep.subr.bf16.mxu0 0
  %187 = vmatpush1.bf16.msra.mxu0 %v144
  %188 = vmatprep.subr.bf16.mxu0 0
  %189 = vmatpush1.bf16.msra.mxu0 %v145
  %190 = vmatprep.subr.bf16.mxu0 0
  %191 = vmatpush1.bf16.msra.mxu0 %v146
  %192 = vmatprep.subr.bf16.mxu0 0
  %193 = vmatpush1.bf16.msra.mxu0 %v147
  %194 = vmatprep.subr.bf16.mxu0 0
  %195 = vmatpush1.bf16.msra.mxu0 %v148
  %196 = vmatprep.subr.bf16.mxu0 0
  %197 = vmatpush1.bf16.msra.mxu0 %v149
  %198 = vmatprep.subr.bf16.mxu0 0
  %199 = vmatpush1.bf16.msra.mxu0 %v150
  %200 = vmatprep.subr.bf16.mxu0 0
  %201 = vmatpush1.bf16.msra.mxu0 %v151
  %202 = vmatprep.subr.bf16.mxu0 0
  %203 = vmatpush1.bf16.msra.mxu0 %v152
  %204 = vmatprep.subr.bf16.mxu0 0
  %205 = vmatpush1.bf16.msra.mxu0 %v153
  %206 = vmatprep.subr.bf16.mxu0 0
  %207 = vmatpush1.bf16.msra.mxu0 %v154
  %208 = vmatprep.subr.bf16.mxu0 0
  %209 = vmatpush1.bf16.msra.mxu0 %v155
  %210 = vmatprep.subr.bf16.mxu0 0
  %211 = vmatpush1.bf16.msra.mxu0 %v156
  %212 = vmatprep.subr.bf16.mxu0 0
  %213 = vmatpush1.bf16.msra.mxu0 %v157
  %214 = vmatprep.mubr.bf16.mxu0 %v66
  %215 = vmatmul.mubr.bf16.gmra.mrb[0].mxu0 %v65
  %v216 = vpop.f32.mrb[0].mxu0
  %v217 = vadd.f32 %v58, %v216
  %v218 = vpop.f32.mrb[0].mxu0
  %v219 = vpop.f32.mrb[0].mxu0
  %v220 = vpop.f32.mrb[0].mxu0
  %221 = vdwg.mxu0
  %222 = vmatprep.subr.bf16.mxu0 0
  %223 = vmatpush1.bf16.msra.mxu0 %v158
  %224 = vmatprep.subr.bf16.mxu0 0
  %225 = vmatpush1.bf16.msra.mxu0 %v159
  %226 = vmatprep.subr.bf16.mxu0 0
  %227 = vmatpush1.bf16.msra.mxu0 0
  %228 = vmatprep.subr.bf16.mxu0 0
  %229 = vmatpush1.bf16.msra.mxu0 0
  %230 = vmatprep.subr.bf16.mxu0 0
  %231 = vmatpush1.bf16.msra.mxu0 0
  %232 = vmatprep.subr.bf16.mxu0 0
  %233 = vmatpush1.bf16.msra.mxu0 0
  %234 = vmatprep.subr.bf16.mxu0 0
  %235 = vmatpush1.bf16.msra.mxu0 0
  %236 = vmatprep.subr.bf16.mxu0 0
  %237 = vmatpush1.bf16.msra.mxu0 0
  %238 = vmatprep.subr.bf16.mxu0 0
  %239 = vmatpush1.bf16.msra.mxu0 0
  %240 = vmatprep.subr.bf16.mxu0 0
  %241 = vmatpush1.bf16.msra.mxu0 0
  %242 = vmatprep.subr.bf16.mxu0 0
  %243 = vmatpush1.bf16.msra.mxu0 0
  %244 = vmatprep.subr.bf16.mxu0 0
  %245 = vmatpush1.bf16.msra.mxu0 0
  %246 = vmatprep.subr.bf16.mxu0 0
  %247 = vmatpush1.bf16.msra.mxu0 0
  %248 = vmatprep.subr.bf16.mxu0 0
  %249 = vmatpush1.bf16.msra.mxu0 0
  %250 = vmatprep.subr.bf16.mxu0 0
  %251 = vmatpush1.bf16.msra.mxu0 0
  %252 = vmatprep.subr.bf16.mxu0 0
  %253 = vmatpush1.bf16.msra.mxu0 0
  %254 = vmatprep.mubr.bf16.mxu0 0
  %255 = vmatmul.mubr.bf16.gmra.mrb[0].mxu0 %v180
  %v256 = vpop.f32.mrb[0].mxu0
  %v257 = vadd.f32 %v217, %v256
  %v258 = vpop.f32.mrb[0].mxu0
  %v259 = vpop.f32.mrb[0].mxu0
  %v260 = vpop.f32.mrb[0].mxu0
  %261 = vdwg.mxu0
  %v262 = vmax.f32 %v257, 0.0
  %263 = vst.msk [vmem:[%s3] sm:$0xff] %vm178, %v262
  // Predicated region
  $region14: #{forward.14} parent=0 // pred_check
    _
  $region15: #{forward.14} parent=0 // pred_check_branch
    %265 = sbr.rel (0) target = $region17
  $region16: #{forward.14} parent=0 // pred_region
    _
  $region17: #{forward.14} parent=0 // pred_fallthru
    _
  // Predicated region
  $region18: #{forward.14} parent=0 // pred_check
    _
  $region19: #{forward.14} parent=0 // pred_check_branch
    %267 = sbr.rel (0) target = $region21
  $region20: #{forward.14} parent=0 // pred_region
    _
  $region21: #{forward.14} parent=0 // pred_fallthru
    _

// kernel: forward.18
$region0: #{forward.18}
  #allocation0 [shape = 'u32[]', space=smem, size = 0x4, offset = 0x4, fixed_abs, tag = 'smem constant byte address 0x4 - core index']
  #allocation1 [shape = 'u32[144,128]{1,0:T(1,128)}', space=vmem, size = 0x12000, scoped, tag = 'internal scratch']
  %s0 = inlined_call_operand.vmem [shape: bf16[8,288], index: 0, kind: input, shape index: {}]
  %s1 = inlined_call_operand.vmem [shape: bf16[288,32], index: 1, kind: input, shape index: {}]
  %s2 = inlined_call_operand.vmem [shape: f32[1,32], index: 2, kind: input, shape index: {}]
  %s3 = inlined_call_operand.vmem [shape: f32[8,32], index: 3, kind: input, shape index: {}]
  %s4 = inlined_call_operand.vmem [shape: f32[8,32], index: 4, kind: input, shape index: {}]
  %s5 = inlined_call_operand.vmem [shape: f32[8,32], index: 5, kind: output, shape index: {0}]
  %s6 = inlined_call_operand.vmem [shape: f32[8,32], index: 6, kind: output, shape index: {1}]
  %7 = xla_tuple %s5, %s6
  %s8 = sld [smem:[#allocation0]]
  $region38: #{forward.18} parent=0
    _
  %s10 = ssub.s32 1, %s8
  %s11 = scalar_select 0, %s10, %s8
  // Predicated region
  $region2: #{forward.18} parent=0 // pred_check
    _
  $region3: #{forward.18} parent=0 // pred_check_branch
    %13 = sbr.rel (0) target = $region5
  $region4: #{forward.18} parent=0 // pred_region
    _
  $region5: #{forward.18} parent=0 // pred_fallthru
    _
  // Predicated region
  $region6: #{forward.18} parent=0 // pred_check
    _
  $region7: #{forward.18} parent=0 // pred_check_branch
    %15 = sbr.rel (0) target = $region9
  $region8: #{forward.18} parent=0 // pred_region
    _
  $region9: #{forward.18} parent=0 // pred_fallthru
    _
  // Predicated region
  $region10: #{forward.18} parent=0 // pred_check
    _
  $region11: #{forward.18} parent=0 // pred_check_branch
    %17 = sbr.rel (0) target = $region13
  $region12: #{forward.18} parent=0 // pred_region
    _
  $region13: #{forward.18} parent=0 // pred_fallthru
    _
  // Predicated region
  $region14: #{forward.18} parent=0 // pred_check
    _
  $region15: #{forward.18} parent=0 // pred_check_branch
    %19 = sbr.rel (0) target = $region17
  $region16: #{forward.18} parent=0 // pred_region
    _
  $region17: #{forward.18} parent=0 // pred_fallthru
    _
  // Predicated region
  $region18: #{forward.18} parent=0 // pred_check
    _
  $region19: #{forward.18} parent=0 // pred_check_branch
    %21 = sbr.rel (0) target = $region21
  $region20: #{forward.18} parent=0 // pred_region
    _
  $region21: #{forward.18} parent=0 // pred_fallthru
    _
  %v23 = vld [vmem:[%s0] sm:$0xff]
  %v24 = vld [vmem:[%s0 + $0x8] sm:$0xf]
  %v25 = vld [vmem:[%s1] sm:$0xf]
  %v26 = vld [vmem:[%s1 + $0x4] sm:$0xf]
  %v27 = vld [vmem:[%s1 + $0x8] sm:$0xf]
  %v28 = vld [vmem:[%s1 + $0xc] sm:$0xf]
  %v29 = vld [vmem:[%s1 + $0x10] sm:$0xf]
  %v30 = vld [vmem:[%s1 + $0x14] sm:$0xf]
  %v31 = vld [vmem:[%s1 + $0x18] sm:$0xf]
  %v32 = vld [vmem:[%s1 + $0x1c] sm:$0xf]
  %v33 = vld [vmem:[%s1 + $0x20] sm:$0xf]
  %v34 = vld [vmem:[%s1 + $0x24] sm:$0xf]
  %v35 = vld [vmem:[%s1 + $0x28] sm:$0xf]
  %v36 = vld [vmem:[%s1 + $0x2c] sm:$0xf]
  %v37 = vld [vmem:[%s1 + $0x30] sm:$0xf]
  %v38 = vld [vmem:[%s1 + $0x34] sm:$0xf]
  %v39 = vld [vmem:[%s1 + $0x38] sm:$0xf]
  %v40 = vld [vmem:[%s1 + $0x3c] sm:$0xf]
  %v41 = vld [vmem:[%s1 + $0x40] sm:$0xf]
  %v42 = vld [vmem:[%s1 + $0x44] sm:$0xf]
  %v43 = vld [vmem:[%s1 + $0x48] sm:$0xf]
  %v44 = vld [vmem:[%s1 + $0x4c] sm:$0xf]
  %v45 = vld [vmem:[%s1 + $0x50] sm:$0xf]
  %v46 = vld [vmem:[%s1 + $0x54] sm:$0xf]
  %v47 = vld [vmem:[%s1 + $0x58] sm:$0xf]
  %v48 = vld [vmem:[%s1 + $0x5c] sm:$0xf]
  %v49 = vld [vmem:[%s1 + $0x60] sm:$0xf]
  %v50 = vld [vmem:[%s1 + $0x64] sm:$0xf]
  %v51 = vld [vmem:[%s1 + $0x68] sm:$0xf]
  %v52 = vld [vmem:[%s1 + $0x6c] sm:$0xf]
  %v53 = vld [vmem:[%s1 + $0x70] sm:$0xf]
  %v54 = vld [vmem:[%s1 + $0x74] sm:$0xf]
  %v55 = vld [vmem:[%s1 + $0x78] sm:$0xf]
  %v56 = vld [vmem:[%s1 + $0x7c] sm:$0xf]
  %v57 = vld [vmem:[%s1 + $0x80] sm:$0xf]
  %v58 = vld [vmem:[%s1 + $0x84] sm:$0xf]
  %v59 = vld [vmem:[%s1 + $0x88] sm:$0xf]
  %v60 = vld [vmem:[%s1 + $0x8c] sm:$0xf]
  %v61 = vld [vmem:[%s2] sm:$0x1]
  %v63 = vlaneseq
  %v64 = vshrl.u32 %v63, 7
  %v65 = vsub.s32 0, %v64
  %v66 = vrot.slane %v61, %v65
  %v70 = vunpack.c.l.b16 %v23
  %v71 = vunpack.c.h.b16 %v23
  %v72 = vunpack.c.l.b16 %v24
  %v73 = vpack.c.b16 %v70, %v70
  %v74 = vpack.c.b16 %v71, %v71
  %v75 = vpack.c.b16 %v72, %v72
  %v114 = vunpack.c.l.b16 %v25
  %v115 = vunpack.c.l.b16 %v26
  %v116 = vunpack.c.l.b16 %v27
  %v117 = vunpack.c.l.b16 %v28
  %v118 = vunpack.c.l.b16 %v29
  %v119 = vunpack.c.l.b16 %v30
  %v120 = vunpack.c.l.b16 %v31
  %v121 = vunpack.c.l.b16 %v32
  %v122 = vunpack.c.l.b16 %v33
  %v123 = vunpack.c.l.b16 %v34
  %v124 = vunpack.c.l.b16 %v35
  %v125 = vunpack.c.l.b16 %v36
  %v126 = vunpack.c.l.b16 %v37
  %v127 = vunpack.c.l.b16 %v38
  %v128 = vunpack.c.l.b16 %v39
  %v129 = vunpack.c.l.b16 %v40
  %v130 = vunpack.c.l.b16 %v41
  %v131 = vunpack.c.l.b16 %v42
  %v132 = vunpack.c.l.b16 %v43
  %v133 = vunpack.c.l.b16 %v44
  %v134 = vunpack.c.l.b16 %v45
  %v135 = vunpack.c.l.b16 %v46
  %v136 = vunpack.c.l.b16 %v47
  %v137 = vunpack.c.l.b16 %v48
  %v138 = vunpack.c.l.b16 %v49
  %v139 = vunpack.c.l.b16 %v50
  %v140 = vunpack.c.l.b16 %v51
  %v141 = vunpack.c.l.b16 %v52
  %v142 = vunpack.c.l.b16 %v53
  %v143 = vunpack.c.l.b16 %v54
  %v144 = vunpack.c.l.b16 %v55
  %v145 = vunpack.c.l.b16 %v56
  %v146 = vunpack.c.l.b16 %v57
  %v147 = vunpack.c.l.b16 %v58
  %v148 = vunpack.c.l.b16 %v59
  %v149 = vunpack.c.l.b16 %v60
  %v150 = vpack.c.b16 %v115, %v114
  %v151 = vpack.c.b16 %v117, %v116
  %v152 = vpack.c.b16 %v119, %v118
  %v153 = vpack.c.b16 %v121, %v120
  %v154 = vpack.c.b16 %v123, %v122
  %v155 = vpack.c.b16 %v125, %v124
  %v156 = vpack.c.b16 %v127, %v126
  %v157 = vpack.c.b16 %v129, %v128
  %v158 = vpack.c.b16 %v131, %v130
  %v159 = vpack.c.b16 %v133, %v132
  %v160 = vpack.c.b16 %v135, %v134
  %v161 = vpack.c.b16 %v137, %v136
  %v162 = vpack.c.b16 %v139, %v138
  %v163 = vpack.c.b16 %v141, %v140
  %v164 = vpack.c.b16 %v143, %v142
  %v165 = vpack.c.b16 %v145, %v144
  %v166 = vpack.c.b16 %v147, %v146
  %v167 = vpack.c.b16 %v149, %v148
  %vm186 = vcmask 261120
  %v188 = vsel %vm186, %v75, 0
  %190 = vmatprep.subr.bf16.mxu0 0
  %191 = vmatpush1.bf16.msra.mxu0 %v150
  %192 = vmatprep.subr.bf16.mxu0 0
  %193 = vmatpush1.bf16.msra.mxu0 %v151
  %194 = vmatprep.subr.bf16.mxu0 0
  %195 = vmatpush1.bf16.msra.mxu0 %v152
  %196 = vmatprep.subr.bf16.mxu0 0
  %197 = vmatpush1.bf16.msra.mxu0 %v153
  %198 = vmatprep.subr.bf16.mxu0 0
  %199 = vmatpush1.bf16.msra.mxu0 %v154
  %200 = vmatprep.subr.bf16.mxu0 0
  %201 = vmatpush1.bf16.msra.mxu0 %v155
  %202 = vmatprep.subr.bf16.mxu0 0
  %203 = vmatpush1.bf16.msra.mxu0 %v156
  %204 = vmatprep.subr.bf16.mxu0 0
  %205 = vmatpush1.bf16.msra.mxu0 %v157
  %206 = vmatprep.subr.bf16.mxu0 0
  %207 = vmatpush1.bf16.msra.mxu0 %v158
  %208 = vmatprep.subr.bf16.mxu0 0
  %209 = vmatpush1.bf16.msra.mxu0 %v159
  %210 = vmatprep.subr.bf16.mxu0 0
  %211 = vmatpush1.bf16.msra.mxu0 %v160
  %212 = vmatprep.subr.bf16.mxu0 0
  %213 = vmatpush1.bf16.msra.mxu0 %v161
  %214 = vmatprep.subr.bf16.mxu0 0
  %215 = vmatpush1.bf16.msra.mxu0 %v162
  %216 = vmatprep.subr.bf16.mxu0 0
  %217 = vmatpush1.bf16.msra.mxu0 %v163
  %218 = vmatprep.subr.bf16.mxu0 0
  %219 = vmatpush1.bf16.msra.mxu0 %v164
  %220 = vmatprep.subr.bf16.mxu0 0
  %221 = vmatpush1.bf16.msra.mxu0 %v165
  %222 = vmatprep.mubr.bf16.mxu0 %v74
  %223 = vmatmul.mubr.bf16.gmra.mrb[0].mxu0 %v73
  %v224 = vpop.f32.mrb[0].mxu0
  %v225 = vadd.f32 %v66, %v224
  %v226 = vpop.f32.mrb[0].mxu0
  %v227 = vpop.f32.mrb[0].mxu0
  %v228 = vpop.f32.mrb[0].mxu0
  %229 = vdwg.mxu0
  %230 = vmatprep.subr.bf16.mxu0 0
  %231 = vmatpush1.bf16.msra.mxu0 %v166
  %232 = vmatprep.subr.bf16.mxu0 0
  %233 = vmatpush1.bf16.msra.mxu0 %v167
  %234 = vmatprep.subr.bf16.mxu0 0
  %235 = vmatpush1.bf16.msra.mxu0 0
  %236 = vmatprep.subr.bf16.mxu0 0
  %237 = vmatpush1.bf16.msra.mxu0 0
  %238 = vmatprep.subr.bf16.mxu0 0
  %239 = vmatpush1.bf16.msra.mxu0 0
  %240 = vmatprep.subr.bf16.mxu0 0
  %241 = vmatpush1.bf16.msra.mxu0 0
  %242 = vmatprep.subr.bf16.mxu0 0
  %243 = vmatpush1.bf16.msra.mxu0 0
  %244 = vmatprep.subr.bf16.mxu0 0
  %245 = vmatpush1.bf16.msra.mxu0 0
  %246 = vmatprep.subr.bf16.mxu0 0
  %247 = vmatpush1.bf16.msra.mxu0 0
  %248 = vmatprep.subr.bf16.mxu0 0
  %249 = vmatpush1.bf16.msra.mxu0 0
  %250 = vmatprep.subr.bf16.mxu0 0
  %251 = vmatpush1.bf16.msra.mxu0 0
  %252 = vmatprep.subr.bf16.mxu0 0
  %253 = vmatpush1.bf16.msra.mxu0 0
  %254 = vmatprep.subr.bf16.mxu0 0
  %255 = vmatpush1.bf16.msra.mxu0 0
  %256 = vmatprep.subr.bf16.mxu0 0
  %257 = vmatpush1.bf16.msra.mxu0 0
  %258 = vmatprep.subr.bf16.mxu0 0
  %259 = vmatpush1.bf16.msra.mxu0 0
  %260 = vmatprep.subr.bf16.mxu0 0
  %261 = vmatpush1.bf16.msra.mxu0 0
  %262 = vmatprep.mubr.bf16.mxu0 0
  %263 = vmatmul.mubr.bf16.gmra.mrb[0].mxu0 %v188
  %v264 = vpop.f32.mrb[0].mxu0
  %v265 = vadd.f32 %v225, %v264
  %v266 = vpop.f32.mrb[0].mxu0
  %v267 = vpop.f32.mrb[0].mxu0
  %v268 = vpop.f32.mrb[0].mxu0
  %269 = vdwg.mxu0
  %v270 = vld [vmem:[%s4] sm:$0xff]
  %v271 = vmul.f32 %v270, 0.96
  %v272 = vld [vmem:[%s3] sm:$0xff]
  %v273 = vmul.f32 %v272, 0.04
  %v274 = vadd.f32 %v271, %v273
  %275 = vst.msk [vmem:[%s6] sm:$0xff] %vm186, %v274
  %v276 = vmul.f32 %v274, 0.7
  %v277 = vsub.f32 %v265, %v276
  %v278 = vmax.f32 %v277, 0.0
  %279 = vst.msk [vmem:[%s5] sm:$0xff] %vm186, %v278
  // Predicated region
  $region22: #{forward.18} parent=0 // pred_check
    _
  $region23: #{forward.18} parent=0 // pred_check_branch
    %281 = sbr.rel (0) target = $region25
  $region24: #{forward.18} parent=0 // pred_region
    _
  $region25: #{forward.18} parent=0 // pred_fallthru
    _
  // Predicated region
  $region26: #{forward.18} parent=0 // pred_check
    _
  $region27: #{forward.18} parent=0 // pred_check_branch
    %283 = sbr.rel (0) target = $region29
  $region28: #{forward.18} parent=0 // pred_region
    _
  $region29: #{forward.18} parent=0 // pred_fallthru
    _
  // Predicated region
  $region30: #{forward.18} parent=0 // pred_check
    _
  $region31: #{forward.18} parent=0 // pred_check_branch
    %285 = sbr.rel (0) target = $region33
  $region32: #{forward.18} parent=0 // pred_region
    _
  $region33: #{forward.18} parent=0 // pred_fallthru
    _
  // Predicated region
  $region34: #{forward.18} parent=0 // pred_check
    _
  $region35: #{forward.18} parent=0 // pred_check_branch
    %287 = sbr.rel (0) target = $region37
  $region36: #{forward.18} parent=0 // pred_region
    _
  $region37: #{forward.18} parent=0 // pred_fallthru
    _

// kernel: forward.15
$region0: #{forward.15}
  #allocation0 [shape = 'u32[]', space=smem, size = 0x4, offset = 0x4, fixed_abs, tag = 'smem constant byte address 0x4 - core index']
  #allocation1 [shape = 'u32[144,128]{1,0:T(1,128)}', space=vmem, size = 0x12000, scoped, tag = 'internal scratch']
  %s0 = inlined_call_operand.vmem [shape: bf16[2,128], index: 0, kind: input, shape index: {}]
  %s1 = inlined_call_operand.vmem [shape: bf16[128,1024], index: 1, kind: input, shape index: {}]
  %s2 = inlined_call_operand.vmem [shape: f32[1,1024], index: 2, kind: input, shape index: {}]
  %s3 = inlined_call_operand.vmem [shape: f32[2,1024], index: 3, kind: output, shape index: {}]
  %s4 = sld [smem:[#allocation0]]
  $region22: #{forward.15} parent=0
    _
  %s6 = ssub.s32 1, %s4
  %s7 = scalar_select 0, %s6, %s4
  // Predicated region
  $region2: #{forward.15} parent=0 // pred_check
    _
  $region3: #{forward.15} parent=0 // pred_check_branch
    %9 = sbr.rel (0) target = $region5
  $region4: #{forward.15} parent=0 // pred_region
    _
  $region5: #{forward.15} parent=0 // pred_fallthru
    _
  // Predicated region
  $region6: #{forward.15} parent=0 // pred_check
    _
  $region7: #{forward.15} parent=0 // pred_check_branch
    %11 = sbr.rel (0) target = $region9
  $region8: #{forward.15} parent=0 // pred_region
    _
  $region9: #{forward.15} parent=0 // pred_fallthru
    _
  // Predicated region
  $region10: #{forward.15} parent=0 // pred_check
    _
  $region11: #{forward.15} parent=0 // pred_check_branch
    %13 = sbr.rel (0) target = $region13
  $region12: #{forward.15} parent=0 // pred_region
    _
  $region13: #{forward.15} parent=0 // pred_fallthru
    _
  %v15 = vld [vmem:[%s0] sm:$0x1]
  %v16 = vld [vmem:[%s1] sm:$0xff]
  %v17 = vld [vmem:[%s1 + $0x8] sm:$0xff]
  %v18 = vld [vmem:[%s1 + $0x10] sm:$0xff]
  %v19 = vld [vmem:[%s1 + $0x18] sm:$0xff]
  %v20 = vld [vmem:[%s1 + $0x20] sm:$0xff]
  %v21 = vld [vmem:[%s1 + $0x28] sm:$0xff]
  %v22 = vld [vmem:[%s1 + $0x30] sm:$0xff]
  %v23 = vld [vmem:[%s1 + $0x38] sm:$0xff]
  %v24 = vld [vmem:[%s1 + $0x40] sm:$0xff]
  %v25 = vld [vmem:[%s1 + $0x48] sm:$0xff]
  %v26 = vld [vmem:[%s1 + $0x50] sm:$0xff]
  %v27 = vld [vmem:[%s1 + $0x58] sm:$0xff]
  %v28 = vld [vmem:[%s1 + $0x60] sm:$0xff]
  %v29 = vld [vmem:[%s1 + $0x68] sm:$0xff]
  %v30 = vld [vmem:[%s1 + $0x70] sm:$0xff]
  %v31 = vld [vmem:[%s1 + $0x78] sm:$0xff]
  %v32 = vld [vmem:[%s1 + $0x80] sm:$0xff]
  %v33 = vld [vmem:[%s1 + $0x88] sm:$0xff]
  %v34 = vld [vmem:[%s1 + $0x90] sm:$0xff]
  %v35 = vld [vmem:[%s1 + $0x98] sm:$0xff]
  %v36 = vld [vmem:[%s1 + $0xa0] sm:$0xff]
  %v37 = vld [vmem:[%s1 + $0xa8] sm:$0xff]
  %v38 = vld [vmem:[%s1 + $0xb0] sm:$0xff]
  %v39 = vld [vmem:[%s1 + $0xb8] sm:$0xff]
  %v40 = vld [vmem:[%s1 + $0xc0] sm:$0xff]
  %v41 = vld [vmem:[%s1 + $0xc8] sm:$0xff]
  %v42 = vld [vmem:[%s1 + $0xd0] sm:$0xff]
  %v43 = vld [vmem:[%s1 + $0xd8] sm:$0xff]
  %v44 = vld [vmem:[%s1 + $0xe0] sm:$0xff]
  %v45 = vld [vmem:[%s1 + $0xe8] sm:$0xff]
  %v46 = vld [vmem:[%s1 + $0xf0] sm:$0xff]
  %v47 = vld [vmem:[%s1 + $0xf8] sm:$0xff]
  %v48 = vld [vmem:[%s1 + $0x100] sm:$0xff]
  %v49 = vld [vmem:[%s1 + $0x108] sm:$0xff]
  %v50 = vld [vmem:[%s1 + $0x110] sm:$0xff]
  %v51 = vld [vmem:[%s1 + $0x118] sm:$0xff]
  %v52 = vld [vmem:[%s1 + $0x120] sm:$0xff]
  %v53 = vld [vmem:[%s1 + $0x128] sm:$0xff]
  %v54 = vld [vmem:[%s1 + $0x130] sm:$0xff]
  %v55 = vld [vmem:[%s1 + $0x138] sm:$0xff]
  %v56 = vld [vmem:[%s1 + $0x140] sm:$0xff]
  %v57 = vld [vmem:[%s1 + $0x148] sm:$0xff]
  %v58 = vld [vmem:[%s1 + $0x150] sm:$0xff]
  %v59 = vld [vmem:[%s1 + $0x158] sm:$0xff]
  %v60 = vld [vmem:[%s1 + $0x160] sm:$0xff]
  %v61 = vld [vmem:[%s1 + $0x168] sm:$0xff]
  %v62 = vld [vmem:[%s1 + $0x170] sm:$0xff]
  %v63 = vld [vmem:[%s1 + $0x178] sm:$0xff]
  %v64 = vld [vmem:[%s1 + $0x180] sm:$0xff]
  %v65 = vld [vmem:[%s1 + $0x188] sm:$0xff]
  %v66 = vld [vmem:[%s1 + $0x190] sm:$0xff]
  %v67 = vld [vmem:[%s1 + $0x198] sm:$0xff]
  %v68 = vld [vmem:[%s1 + $0x1a0] sm:$0xff]
  %v69 = vld [vmem:[%s1 + $0x1a8] sm:$0xff]
  %v70 = vld [vmem:[%s1 + $0x1b0] sm:$0xff]
  %v71 = vld [vmem:[%s1 + $0x1b8] sm:$0xff]
  %v72 = vld [vmem:[%s1 + $0x1c0] sm:$0xff]
  %v73 = vld [vmem:[%s1 + $0x1c8] sm:$0xff]
  %v74 = vld [vmem:[%s1 + $0x1d0] sm:$0xff]
  %v75 = vld [vmem:[%s1 + $0x1d8] sm:$0xff]
  %v76 = vld [vmem:[%s1 + $0x1e0] sm:$0xff]
  %v77 = vld [vmem:[%s1 + $0x1e8] sm:$0xff]
  %v78 = vld [vmem:[%s1 + $0x1f0] sm:$0xff]
  %v79 = vld [vmem:[%s1 + $0x1f8] sm:$0xff]
  %v80 = vld [vmem:[%s2] sm:$0xff]
  %v82 = vlaneseq
  %v83 = vshrl.u32 %v82, 7
  %v84 = vsub.s32 0, %v83
  %v85 = vrot.slane %v80, %v84
  %v86 = vlaneseq
  %v87 = vshrl.u32 %v86, 7
  %v88 = vsub.s32 1, %v87
  %v89 = vrot.slane %v80, %v88
  %v90 = vlaneseq
  %v91 = vshrl.u32 %v90, 7
  %v92 = vsub.s32 2, %v91
  %v93 = vrot.slane %v80, %v92
  %v94 = vlaneseq
  %v95 = vshrl.u32 %v94, 7
  %v96 = vsub.s32 3, %v95
  %v97 = vrot.slane %v80, %v96
  %v98 = vlaneseq
  %v99 = vshrl.u32 %v98, 7
  %v100 = vsub.s32 4, %v99
  %v101 = vrot.slane %v80, %v100
  %v102 = vlaneseq
  %v103 = vshrl.u32 %v102, 7
  %v104 = vsub.s32 5, %v103
  %v105 = vrot.slane %v80, %v104
  %v106 = vlaneseq
  %v107 = vshrl.u32 %v106, 7
  %v108 = vsub.s32 6, %v107
  %v109 = vrot.slane %v80, %v108
  %v110 = vlaneseq
  %v111 = vshrl.u32 %v110, 7
  %v112 = vsub.s32 7, %v111
  %v113 = vrot.slane %v80, %v112
  %v186 = vunpack.c.l.b16 %v16
  %v187 = vunpack.c.h.b16 %v16
  %v188 = vunpack.c.l.b16 %v17
  %v189 = vunpack.c.h.b16 %v17
  %v190 = vunpack.c.l.b16 %v18
  %v191 = vunpack.c.h.b16 %v18
  %v192 = vunpack.c.l.b16 %v19
  %v193 = vunpack.c.h.b16 %v19
  %v194 = vunpack.c.l.b16 %v20
  %v195 = vunpack.c.h.b16 %v20
  %v196 = vunpack.c.l.b16 %v21
  %v197 = vunpack.c.h.b16 %v21
  %v198 = vunpack.c.l.b16 %v22
  %v199 = vunpack.c.h.b16 %v22
  %v200 = vunpack.c.l.b16 %v23
  %v201 = vunpack.c.h.b16 %v23
  %v202 = vunpack.c.l.b16 %v24
  %v203 = vunpack.c.h.b16 %v24
  %v204 = vunpack.c.l.b16 %v25
  %v205 = vunpack.c.h.b16 %v25
  %v206 = vunpack.c.l.b16 %v26
  %v207 = vunpack.c.h.b16 %v26
  %v208 = vunpack.c.l.b16 %v27
  %v209 = vunpack.c.h.b16 %v27
  %v210 = vunpack.c.l.b16 %v28
  %v211 = vunpack.c.h.b16 %v28
  %v212 = vunpack.c.l.b16 %v29
  %v213 = vunpack.c.h.b16 %v29
  %v214 = vunpack.c.l.b16 %v30
  %v215 = vunpack.c.h.b16 %v30
  %v216 = vunpack.c.l.b16 %v31
  %v217 = vunpack.c.h.b16 %v31
  %v218 = vunpack.c.l.b16 %v32
  %v219 = vunpack.c.h.b16 %v32
  %v220 = vunpack.c.l.b16 %v33
  %v221 = vunpack.c.h.b16 %v33
  %v222 = vunpack.c.l.b16 %v34
  %v223 = vunpack.c.h.b16 %v34
  %v224 = vunpack.c.l.b16 %v35
  %v225 = vunpack.c.h.b16 %v35
  %v226 = vunpack.c.l.b16 %v36
  %v227 = vunpack.c.h.b16 %v36
  %v228 = vunpack.c.l.b16 %v37
  %v229 = vunpack.c.h.b16 %v37
  %v230 = vunpack.c.l.b16 %v38
  %v231 = vunpack.c.h.b16 %v38
  %v232 = vunpack.c.l.b16 %v39
  %v233 = vunpack.c.h.b16 %v39
  %v234 = vunpack.c.l.b16 %v40
  %v235 = vunpack.c.h.b16 %v40
  %v236 = vunpack.c.l.b16 %v41
  %v237 = vunpack.c.h.b16 %v41
  %v238 = vunpack.c.l.b16 %v42
  %v239 = vunpack.c.h.b16 %v42
  %v240 = vunpack.c.l.b16 %v43
  %v241 = vunpack.c.h.b16 %v43
  %v242 = vunpack.c.l.b16 %v44
  %v243 = vunpack.c.h.b16 %v44
  %v244 = vunpack.c.l.b16 %v45
  %v245 = vunpack.c.h.b16 %v45
  %v246 = vunpack.c.l.b16 %v46
  %v247 = vunpack.c.h.b16 %v46
  %v248 = vunpack.c.l.b16 %v47
  %v249 = vunpack.c.h.b16 %v47
  %v250 = vunpack.c.l.b16 %v48
  %v251 = vunpack.c.h.b16 %v48
  %v252 = vunpack.c.l.b16 %v49
  %v253 = vunpack.c.h.b16 %v49
  %v254 = vunpack.c.l.b16 %v50
  %v255 = vunpack.c.h.b16 %v50
  %v256 = vunpack.c.l.b16 %v51
  %v257 = vunpack.c.h.b16 %v51
  %v258 = vunpack.c.l.b16 %v52
  %v259 = vunpack.c.h.b16 %v52
  %v260 = vunpack.c.l.b16 %v53
  %v261 = vunpack.c.h.b16 %v53
  %v262 = vunpack.c.l.b16 %v54
  %v263 = vunpack.c.h.b16 %v54
  %v264 = vunpack.c.l.b16 %v55
  %v265 = vunpack.c.h.b16 %v55
  %v266 = vunpack.c.l.b16 %v56
  %v267 = vunpack.c.h.b16 %v56
  %v268 = vunpack.c.l.b16 %v57
  %v269 = vunpack.c.h.b16 %v57
  %v270 = vunpack.c.l.b16 %v58
  %v271 = vunpack.c.h.b16 %v58
  %v272 = vunpack.c.l.b16 %v59
  %v273 = vunpack.c.h.b16 %v59
  %v274 = vunpack.c.l.b16 %v60
  %v275 = vunpack.c.h.b16 %v60
  %v276 = vunpack.c.l.b16 %v61
  %v277 = vunpack.c.h.b16 %v61
  %v278 = vunpack.c.l.b16 %v62
  %v279 = vunpack.c.h.b16 %v62
  %v280 = vunpack.c.l.b16 %v63
  %v281 = vunpack.c.h.b16 %v63
  %v282 = vunpack.c.l.b16 %v64
  %v283 = vunpack.c.h.b16 %v64
  %v284 = vunpack.c.l.b16 %v65
  %v285 = vunpack.c.h.b16 %v65
  %v286 = vunpack.c.l.b16 %v66
  %v287 = vunpack.c.h.b16 %v66
  %v288 = vunpack.c.l.b16 %v67
  %v289 = vunpack.c.h.b16 %v67
  %v290 = vunpack.c.l.b16 %v68
  %v291 = vunpack.c.h.b16 %v68
  %v292 = vunpack.c.l.b16 %v69
  %v293 = vunpack.c.h.b16 %v69
  %v294 = vunpack.c.l.b16 %v70
  %v295 = vunpack.c.h.b16 %v70
  %v296 = vunpack.c.l.b16 %v71
  %v297 = vunpack.c.h.b16 %v71
  %v298 = vunpack.c.l.b16 %v72
  %v299 = vunpack.c.h.b16 %v72
  %v300 = vunpack.c.l.b16 %v73
  %v301 = vunpack.c.h.b16 %v73
  %v302 = vunpack.c.l.b16 %v74
  %v303 = vunpack.c.h.b16 %v74
  %v304 = vunpack.c.l.b16 %v75
  %v305 = vunpack.c.h.b16 %v75
  %v306 = vunpack.c.l.b16 %v76
  %v307 = vunpack.c.h.b16 %v76
  %v308 = vunpack.c.l.b16 %v77
  %v309 = vunpack.c.h.b16 %v77
  %v310 = vunpack.c.l.b16 %v78
  %v311 = vunpack.c.h.b16 %v78
  %v312 = vunpack.c.l.b16 %v79
  %v313 = vunpack.c.h.b16 %v79
  %v314 = vpack.c.b16 %v194, %v186
  %v315 = vpack.c.b16 %v195, %v187
  %v316 = vpack.c.b16 %v196, %v188
  %v317 = vpack.c.b16 %v197, %v189
  %v318 = vpack.c.b16 %v198, %v190
  %v319 = vpack.c.b16 %v199, %v191
  %v320 = vpack.c.b16 %v200, %v192
  %v321 = vpack.c.b16 %v201, %v193
  %v322 = vpack.c.b16 %v210, %v202
  %v323 = vpack.c.b16 %v211, %v203
  %v324 = vpack.c.b16 %v212, %v204
  %v325 = vpack.c.b16 %v213, %v205
  %v326 = vpack.c.b16 %v214, %v206
  %v327 = vpack.c.b16 %v215, %v207
  %v328 = vpack.c.b16 %v216, %v208
  %v329 = vpack.c.b16 %v217, %v209
  %v330 = vpack.c.b16 %v226, %v218
  %v331 = vpack.c.b16 %v227, %v219
  %v332 = vpack.c.b16 %v228, %v220
  %v333 = vpack.c.b16 %v229, %v221
  %v334 = vpack.c.b16 %v230, %v222
  %v335 = vpack.c.b16 %v231, %v223
  %v336 = vpack.c.b16 %v232, %v224
  %v337 = vpack.c.b16 %v233, %v225
  %v338 = vpack.c.b16 %v242, %v234
  %v339 = vpack.c.b16 %v243, %v235
  %v340 = vpack.c.b16 %v244, %v236
  %v341 = vpack.c.b16 %v245, %v237
  %v342 = vpack.c.b16 %v246, %v238
  %v343 = vpack.c.b16 %v247, %v239
  %v344 = vpack.c.b16 %v248, %v240
  %v345 = vpack.c.b16 %v249, %v241
  %v346 = vpack.c.b16 %v258, %v250
  %v347 = vpack.c.b16 %v259, %v251
  %v348 = vpack.c.b16 %v260, %v252
  %v349 = vpack.c.b16 %v261, %v253
  %v350 = vpack.c.b16 %v262, %v254
  %v351 = vpack.c.b16 %v263, %v255
  %v352 = vpack.c.b16 %v264, %v256
  %v353 = vpack.c.b16 %v265, %v257
  %v354 = vpack.c.b16 %v274, %v266
  %v355 = vpack.c.b16 %v275, %v267
  %v356 = vpack.c.b16 %v276, %v268
  %v357 = vpack.c.b16 %v277, %v269
  %v358 = vpack.c.b16 %v278, %v270
  %v359 = vpack.c.b16 %v279, %v271
  %v360 = vpack.c.b16 %v280, %v272
  %v361 = vpack.c.b16 %v281, %v273
  %v362 = vpack.c.b16 %v290, %v282
  %v363 = vpack.c.b16 %v291, %v283
  %v364 = vpack.c.b16 %v292, %v284
  %v365 = vpack.c.b16 %v293, %v285
  %v366 = vpack.c.b16 %v294, %v286
  %v367 = vpack.c.b16 %v295, %v287
  %v368 = vpack.c.b16 %v296, %v288
  %v369 = vpack.c.b16 %v297, %v289
  %v370 = vpack.c.b16 %v306, %v298
  %v371 = vpack.c.b16 %v307, %v299
  %v372 = vpack.c.b16 %v308, %v300
  %v373 = vpack.c.b16 %v309, %v301
  %v374 = vpack.c.b16 %v310, %v302
  %v375 = vpack.c.b16 %v311, %v303
  %v376 = vpack.c.b16 %v312, %v304
  %v377 = vpack.c.b16 %v313, %v305
  %442 = vmatprep.subr.bf16.mxu0 %v315
  %443 = vmatpush1.bf16.msra.mxu0 %v314
  %444 = vmatprep.subr.bf16.mxu0 %v323
  %445 = vmatpush1.bf16.msra.mxu0 %v322
  %446 = vmatprep.subr.bf16.mxu0 %v331
  %447 = vmatpush1.bf16.msra.mxu0 %v330
  %448 = vmatprep.subr.bf16.mxu0 %v339
  %449 = vmatpush1.bf16.msra.mxu0 %v338
  %450 = vmatprep.subr.bf16.mxu0 %v347
  %451 = vmatpush1.bf16.msra.mxu0 %v346
  %452 = vmatprep.subr.bf16.mxu0 %v355
  %453 = vmatpush1.bf16.msra.mxu0 %v354
  %454 = vmatprep.subr.bf16.mxu0 %v363
  %455 = vmatpush1.bf16.msra.mxu0 %v362
  %456 = vmatprep.subr.bf16.mxu0 %v371
  %457 = vmatpush1.bf16.msra.mxu0 %v370
  %458 = vmatprep.subr.bf16.mxu0 0
  %459 = vmatpush1.bf16.msra.mxu0 0
  %460 = vmatprep.subr.bf16.mxu0 0
  %461 = vmatpush1.bf16.msra.mxu0 0
  %462 = vmatprep.subr.bf16.mxu0 0
  %463 = vmatpush1.bf16.msra.mxu0 0
  %464 = vmatprep.subr.bf16.mxu0 0
  %465 = vmatpush1.bf16.msra.mxu0 0
  %466 = vmatprep.subr.bf16.mxu0 0
  %467 = vmatpush1.bf16.msra.mxu0 0
  %468 = vmatprep.subr.bf16.mxu0 0
  %469 = vmatpush1.bf16.msra.mxu0 0
  %470 = vmatprep.subr.bf16.mxu0 0
  %471 = vmatpush1.bf16.msra.mxu0 0
  %472 = vmatprep.subr.bf16.mxu0 0
  %473 = vmatpush1.bf16.msra.mxu0 0
  %474 = vmatprep.mubr.bf16.mxu0 0
  %475 = vmatmul.mubr.bf16.gmra.mrb[0].mxu0 %v15
  %v476 = vpop.f32.mrb[0].mxu0
  %v477 = vadd.f32 %v85, %v476
  %v478 = vpop.f32.mrb[0].mxu0
  %v479 = vadd.f32 %v89, %v478
  %v480 = vpop.f32.mrb[0].mxu0
  %v481 = vpop.f32.mrb[0].mxu0
  %482 = vdwg.mxu0
  %483 = vmatprep.subr.bf16.mxu0 %v317
  %484 = vmatpush1.bf16.msra.mxu0 %v316
  %485 = vmatprep.subr.bf16.mxu0 %v325
  %486 = vmatpush1.bf16.msra.mxu0 %v324
  %487 = vmatprep.subr.bf16.mxu0 %v333
  %488 = vmatpush1.bf16.msra.mxu0 %v332
  %489 = vmatprep.subr.bf16.mxu0 %v341
  %490 = vmatpush1.bf16.msra.mxu0 %v340
  %491 = vmatprep.subr.bf16.mxu0 %v349
  %492 = vmatpush1.bf16.msra.mxu0 %v348
  %493 = vmatprep.subr.bf16.mxu0 %v357
  %494 = vmatpush1.bf16.msra.mxu0 %v356
  %495 = vmatprep.subr.bf16.mxu0 %v365
  %496 = vmatpush1.bf16.msra.mxu0 %v364
  %497 = vmatprep.subr.bf16.mxu0 %v373
  %498 = vmatpush1.bf16.msra.mxu0 %v372
  %499 = vmatprep.subr.bf16.mxu0 0
  %500 = vmatpush1.bf16.msra.mxu0 0
  %501 = vmatprep.subr.bf16.mxu0 0
  %502 = vmatpush1.bf16.msra.mxu0 0
  %503 = vmatprep.subr.bf16.mxu0 0
  %504 = vmatpush1.bf16.msra.mxu0 0
  %505 = vmatprep.subr.bf16.mxu0 0
  %506 = vmatpush1.bf16.msra.mxu0 0
  %507 = vmatprep.subr.bf16.mxu0 0
  %508 = vmatpush1.bf16.msra.mxu0 0
  %509 = vmatprep.subr.bf16.mxu0 0
  %510 = vmatpush1.bf16.msra.mxu0 0
  %511 = vmatprep.subr.bf16.mxu0 0
  %512 = vmatpush1.bf16.msra.mxu0 0
  %513 = vmatprep.subr.bf16.mxu0 0
  %514 = vmatpush1.bf16.msra.mxu0 0
  %515 = vmatprep.mubr.bf16.mxu0 0
  %516 = vmatmul.mubr.bf16.gmra.mrb[0].mxu0 %v15
  %v517 = vpop.f32.mrb[0].mxu0
  %v518 = vadd.f32 %v93, %v517
  %v519 = vpop.f32.mrb[0].mxu0
  %v520 = vadd.f32 %v97, %v519
  %v521 = vpop.f32.mrb[0].mxu0
  %v522 = vpop.f32.mrb[0].mxu0
  %523 = vdwg.mxu0
  %524 = vmatprep.subr.bf16.mxu0 %v319
  %525 = vmatpush1.bf16.msra.mxu0 %v318
  %526 = vmatprep.subr.bf16.mxu0 %v327
  %527 = vmatpush1.bf16.msra.mxu0 %v326
  %528 = vmatprep.subr.bf16.mxu0 %v335
  %529 = vmatpush1.bf16.msra.mxu0 %v334
  %530 = vmatprep.subr.bf16.mxu0 %v343
  %531 = vmatpush1.bf16.msra.mxu0 %v342
  %532 = vmatprep.subr.bf16.mxu0 %v351
  %533 = vmatpush1.bf16.msra.mxu0 %v350
  %534 = vmatprep.subr.bf16.mxu0 %v359
  %535 = vmatpush1.bf16.msra.mxu0 %v358
  %536 = vmatprep.subr.bf16.mxu0 %v367
  %537 = vmatpush1.bf16.msra.mxu0 %v366
  %538 = vmatprep.subr.bf16.mxu0 %v375
  %539 = vmatpush1.bf16.msra.mxu0 %v374
  %540 = vmatprep.subr.bf16.mxu0 0
  %541 = vmatpush1.bf16.msra.mxu0 0
  %542 = vmatprep.subr.bf16.mxu0 0
  %543 = vmatpush1.bf16.msra.mxu0 0
  %544 = vmatprep.subr.bf16.mxu0 0
  %545 = vmatpush1.bf16.msra.mxu0 0
  %546 = vmatprep.subr.bf16.mxu0 0
  %547 = vmatpush1.bf16.msra.mxu0 0
  %548 = vmatprep.subr.bf16.mxu0 0
  %549 = vmatpush1.bf16.msra.mxu0 0
  %550 = vmatprep.subr.bf16.mxu0 0
  %551 = vmatpush1.bf16.msra.mxu0 0
  %552 = vmatprep.subr.bf16.mxu0 0
  %553 = vmatpush1.bf16.msra.mxu0 0
  %554 = vmatprep.subr.bf16.mxu0 0
  %555 = vmatpush1.bf16.msra.mxu0 0
  %556 = vmatprep.mubr.bf16.mxu0 0
  %557 = vmatmul.mubr.bf16.gmra.mrb[0].mxu0 %v15
  %v558 = vpop.f32.mrb[0].mxu0
  %v559 = vadd.f32 %v101, %v558
  %v560 = vpop.f32.mrb[0].mxu0
  %v561 = vadd.f32 %v105, %v560
  %v562 = vpop.f32.mrb[0].mxu0
  %v563 = vpop.f32.mrb[0].mxu0
  %564 = vdwg.mxu0
  %565 = vmatprep.subr.bf16.mxu0 %v321
  %566 = vmatpush1.bf16.msra.mxu0 %v320
  %567 = vmatprep.subr.bf16.mxu0 %v329
  %568 = vmatpush1.bf16.msra.mxu0 %v328
  %569 = vmatprep.subr.bf16.mxu0 %v337
  %570 = vmatpush1.bf16.msra.mxu0 %v336
  %571 = vmatprep.subr.bf16.mxu0 %v345
  %572 = vmatpush1.bf16.msra.mxu0 %v344
  %573 = vmatprep.subr.bf16.mxu0 %v353
  %574 = vmatpush1.bf16.msra.mxu0 %v352
  %575 = vmatprep.subr.bf16.mxu0 %v361
  %576 = vmatpush1.bf16.msra.mxu0 %v360
  %577 = vmatprep.subr.bf16.mxu0 %v369
  %578 = vmatpush1.bf16.msra.mxu0 %v368
  %579 = vmatprep.subr.bf16.mxu0 %v377
  %580 = vmatpush1.bf16.msra.mxu0 %v376
  %581 = vmatprep.subr.bf16.mxu0 0
  %582 = vmatpush1.bf16.msra.mxu0 0
  %583 = vmatprep.subr.bf16.mxu0 0
  %584 = vmatpush1.bf16.msra.mxu0 0
  %585 = vmatprep.subr.bf16.mxu0 0
  %586 = vmatpush1.bf16.msra.mxu0 0
  %587 = vmatprep.subr.bf16.mxu0 0
  %588 = vmatpush1.bf16.msra.mxu0 0
  %589 = vmatprep.subr.bf16.mxu0 0
  %590 = vmatpush1.bf16.msra.mxu0 0
  %591 = vmatprep.subr.bf16.mxu0 0
  %592 = vmatpush1.bf16.msra.mxu0 0
  %593 = vmatprep.subr.bf16.mxu0 0
  %594 = vmatpush1.bf16.msra.mxu0 0
  %595 = vmatprep.subr.bf16.mxu0 0
  %596 = vmatpush1.bf16.msra.mxu0 0
  %597 = vmatprep.mubr.bf16.mxu0 0
  %598 = vmatmul.mubr.bf16.gmra.mrb[0].mxu0 %v15
  %v599 = vpop.f32.mrb[0].mxu0
  %v600 = vadd.f32 %v109, %v599
  %v601 = vpop.f32.mrb[0].mxu0
  %v602 = vadd.f32 %v113, %v601
  %v603 = vpop.f32.mrb[0].mxu0
  %v604 = vpop.f32.mrb[0].mxu0
  %605 = vdwg.mxu0
  %v614 = vcombine.low %v477, %v479
  %v615 = vcombine.low %v518, %v520
  %v617 = vunpack.c.l.s4 1983009808
  %v618 = vunpack.c.0.s8 %v617
  %v619 = vlaneseq
  %v620 = vshrl.u32 %v619, 7
  %v621 = vsub.s32 %v618, %v620
  %v622 = vrot.slane %v614, %v621
  %v624 = vunpack.c.l.s4 1983009808
  %v625 = vunpack.c.0.s8 %v624
  %v626 = vlaneseq
  %v627 = vshrl.u32 %v626, 7
  %v628 = vsub.s32 %v625, %v627
  %v629 = vrot.slane %v615, %v628
  %v630 = vcombine.low %v622, %v629
  %v631 = vcombine.low %v559, %v561
  %v632 = vcombine.low %v600, %v602
  %v634 = vunpack.c.l.s4 1983009808
  %v635 = vunpack.c.0.s8 %v634
  %v636 = vlaneseq
  %v637 = vshrl.u32 %v636, 7
  %v638 = vsub.s32 %v635, %v637
  %v639 = vrot.slane %v631, %v638
  %v641 = vunpack.c.l.s4 1983009808
  %v642 = vunpack.c.0.s8 %v641
  %v643 = vlaneseq
  %v644 = vshrl.u32 %v643, 7
  %v645 = vsub.s32 %v642, %v644
  %v646 = vrot.slane %v632, %v645
  %v647 = vcombine.low %v639, %v646
  %650 = vst [vmem:[%s3] sm:$0xff] %v630
  %651 = vst [vmem:[%s3 + $0x8] sm:$0xff] %v647
  // Predicated region
  $region14: #{forward.15} parent=0 // pred_check
    _
  $region15: #{forward.15} parent=0 // pred_check_branch
    %653 = sbr.rel (0) target = $region17
  $region16: #{forward.15} parent=0 // pred_region
    _
  $region17: #{forward.15} parent=0 // pred_fallthru
    _
  // Predicated region
  $region18: #{forward.15} parent=0 // pred_check
    _
  $region19: #{forward.15} parent=0 // pred_check_branch
    %655 = sbr.rel (0) target = $region21
  $region20: #{forward.15} parent=0 // pred_region
    _
  $region21: #{forward.15} parent=0 // pred_fallthru
    _

// kernel: forward.19
$region0: #{forward.19}
  #allocation0 [shape = 'u32[]', space=smem, size = 0x4, offset = 0x4, fixed_abs, tag = 'smem constant byte address 0x4 - core index']
  #allocation1 [shape = 'u32[144,128]{1,0:T(1,128)}', space=vmem, size = 0x12000, scoped, tag = 'internal scratch']
  %s0 = inlined_call_operand.vmem [shape: bf16[2,128], index: 0, kind: input, shape index: {}]
  %s1 = inlined_call_operand.vmem [shape: bf16[128,1024], index: 1, kind: input, shape index: {}]
  %s2 = inlined_call_operand.vmem [shape: f32[1,1024], index: 2, kind: input, shape index: {}]
  %s3 = inlined_call_operand.vmem [shape: f32[2,1024], index: 3, kind: input, shape index: {}]
  %s4 = inlined_call_operand.vmem [shape: f32[2,1024], index: 4, kind: input, shape index: {}]
  %s5 = inlined_call_operand.vmem [shape: f32[2,1024], index: 5, kind: output, shape index: {0}]
  %s6 = inlined_call_operand.vmem [shape: f32[2,1024], index: 6, kind: output, shape index: {1}]
  %7 = xla_tuple %s5, %s6
  %s8 = sld [smem:[#allocation0]]
  $region38: #{forward.19} parent=0
    _
  %s10 = ssub.s32 1, %s8
  %s11 = scalar_select 0, %s10, %s8
  // Predicated region
  $region2: #{forward.19} parent=0 // pred_check
    _
  $region3: #{forward.19} parent=0 // pred_check_branch
    %13 = sbr.rel (0) target = $region5
  $region4: #{forward.19} parent=0 // pred_region
    _
  $region5: #{forward.19} parent=0 // pred_fallthru
    _
  // Predicated region
  $region6: #{forward.19} parent=0 // pred_check
    _
  $region7: #{forward.19} parent=0 // pred_check_branch
    %15 = sbr.rel (0) target = $region9
  $region8: #{forward.19} parent=0 // pred_region
    _
  $region9: #{forward.19} parent=0 // pred_fallthru
    _
  // Predicated region
  $region10: #{forward.19} parent=0 // pred_check
    _
  $region11: #{forward.19} parent=0 // pred_check_branch
    %17 = sbr.rel (0) target = $region13
  $region12: #{forward.19} parent=0 // pred_region
    _
  $region13: #{forward.19} parent=0 // pred_fallthru
    _
  // Predicated region
  $region14: #{forward.19} parent=0 // pred_check
    _
  $region15: #{forward.19} parent=0 // pred_check_branch
    %19 = sbr.rel (0) target = $region17
  $region16: #{forward.19} parent=0 // pred_region
    _
  $region17: #{forward.19} parent=0 // pred_fallthru
    _
  // Predicated region
  $region18: #{forward.19} parent=0 // pred_check
    _
  $region19: #{forward.19} parent=0 // pred_check_branch
    %21 = sbr.rel (0) target = $region21
  $region20: #{forward.19} parent=0 // pred_region
    _
  $region21: #{forward.19} parent=0 // pred_fallthru
    _
  %v23 = vld [vmem:[%s0] sm:$0x1]
  %v24 = vld [vmem:[%s1] sm:$0xff]
  %v25 = vld [vmem:[%s1 + $0x8] sm:$0xff]
  %v26 = vld [vmem:[%s1 + $0x10] sm:$0xff]
  %v27 = vld [vmem:[%s1 + $0x18] sm:$0xff]
  %v28 = vld [vmem:[%s1 + $0x20] sm:$0xff]
  %v29 = vld [vmem:[%s1 + $0x28] sm:$0xff]
  %v30 = vld [vmem:[%s1 + $0x30] sm:$0xff]
  %v31 = vld [vmem:[%s1 + $0x38] sm:$0xff]
  %v32 = vld [vmem:[%s1 + $0x40] sm:$0xff]
  %v33 = vld [vmem:[%s1 + $0x48] sm:$0xff]
  %v34 = vld [vmem:[%s1 + $0x50] sm:$0xff]
  %v35 = vld [vmem:[%s1 + $0x58] sm:$0xff]
  %v36 = vld [vmem:[%s1 + $0x60] sm:$0xff]
  %v37 = vld [vmem:[%s1 + $0x68] sm:$0xff]
  %v38 = vld [vmem:[%s1 + $0x70] sm:$0xff]
  %v39 = vld [vmem:[%s1 + $0x78] sm:$0xff]
  %v40 = vld [vmem:[%s1 + $0x80] sm:$0xff]
  %v41 = vld [vmem:[%s1 + $0x88] sm:$0xff]
  %v42 = vld [vmem:[%s1 + $0x90] sm:$0xff]
  %v43 = vld [vmem:[%s1 + $0x98] sm:$0xff]
  %v44 = vld [vmem:[%s1 + $0xa0] sm:$0xff]
  %v45 = vld [vmem:[%s1 + $0xa8] sm:$0xff]
  %v46 = vld [vmem:[%s1 + $0xb0] sm:$0xff]
  %v47 = vld [vmem:[%s1 + $0xb8] sm:$0xff]
  %v48 = vld [vmem:[%s1 + $0xc0] sm:$0xff]
  %v49 = vld [vmem:[%s1 + $0xc8] sm:$0xff]
  %v50 = vld [vmem:[%s1 + $0xd0] sm:$0xff]
  %v51 = vld [vmem:[%s1 + $0xd8] sm:$0xff]
  %v52 = vld [vmem:[%s1 + $0xe0] sm:$0xff]
  %v53 = vld [vmem:[%s1 + $0xe8] sm:$0xff]
  %v54 = vld [vmem:[%s1 + $0xf0] sm:$0xff]
  %v55 = vld [vmem:[%s1 + $0xf8] sm:$0xff]
  %v56 = vld [vmem:[%s1 + $0x100] sm:$0xff]
  %v57 = vld [vmem:[%s1 + $0x108] sm:$0xff]
  %v58 = vld [vmem:[%s1 + $0x110] sm:$0xff]
  %v59 = vld [vmem:[%s1 + $0x118] sm:$0xff]
  %v60 = vld [vmem:[%s1 + $0x120] sm:$0xff]
  %v61 = vld [vmem:[%s1 + $0x128] sm:$0xff]
  %v62 = vld [vmem:[%s1 + $0x130] sm:$0xff]
  %v63 = vld [vmem:[%s1 + $0x138] sm:$0xff]
  %v64 = vld [vmem:[%s1 + $0x140] sm:$0xff]
  %v65 = vld [vmem:[%s1 + $0x148] sm:$0xff]
  %v66 = vld [vmem:[%s1 + $0x150] sm:$0xff]
  %v67 = vld [vmem:[%s1 + $0x158] sm:$0xff]
  %v68 = vld [vmem:[%s1 + $0x160] sm:$0xff]
  %v69 = vld [vmem:[%s1 + $0x168] sm:$0xff]
  %v70 = vld [vmem:[%s1 + $0x170] sm:$0xff]
  %v71 = vld [vmem:[%s1 + $0x178] sm:$0xff]
  %v72 = vld [vmem:[%s1 + $0x180] sm:$0xff]
  %v73 = vld [vmem:[%s1 + $0x188] sm:$0xff]
  %v74 = vld [vmem:[%s1 + $0x190] sm:$0xff]
  %v75 = vld [vmem:[%s1 + $0x198] sm:$0xff]
  %v76 = vld [vmem:[%s1 + $0x1a0] sm:$0xff]
  %v77 = vld [vmem:[%s1 + $0x1a8] sm:$0xff]
  %v78 = vld [vmem:[%s1 + $0x1b0] sm:$0xff]
  %v79 = vld [vmem:[%s1 + $0x1b8] sm:$0xff]
  %v80 = vld [vmem:[%s1 + $0x1c0] sm:$0xff]
  %v81 = vld [vmem:[%s1 + $0x1c8] sm:$0xff]
  %v82 = vld [vmem:[%s1 + $0x1d0] sm:$0xff]
  %v83 = vld [vmem:[%s1 + $0x1d8] sm:$0xff]
  %v84 = vld [vmem:[%s1 + $0x1e0] sm:$0xff]
  %v85 = vld [vmem:[%s1 + $0x1e8] sm:$0xff]
  %v86 = vld [vmem:[%s1 + $0x1f0] sm:$0xff]
  %v87 = vld [vmem:[%s1 + $0x1f8] sm:$0xff]
  %v88 = vld [vmem:[%s2] sm:$0xff]
  %v90 = vlaneseq
  %v91 = vshrl.u32 %v90, 7
  %v92 = vsub.s32 0, %v91
  %v93 = vrot.slane %v88, %v92
  %v94 = vlaneseq
  %v95 = vshrl.u32 %v94, 7
  %v96 = vsub.s32 1, %v95
  %v97 = vrot.slane %v88, %v96
  %v98 = vlaneseq
  %v99 = vshrl.u32 %v98, 7
  %v100 = vsub.s32 2, %v99
  %v101 = vrot.slane %v88, %v100
  %v102 = vlaneseq
  %v103 = vshrl.u32 %v102, 7
  %v104 = vsub.s32 3, %v103
  %v105 = vrot.slane %v88, %v104
  %v106 = vlaneseq
  %v107 = vshrl.u32 %v106, 7
  %v108 = vsub.s32 4, %v107
  %v109 = vrot.slane %v88, %v108
  %v110 = vlaneseq
  %v111 = vshrl.u32 %v110, 7
  %v112 = vsub.s32 5, %v111
  %v113 = vrot.slane %v88, %v112
  %v114 = vlaneseq
  %v115 = vshrl.u32 %v114, 7
  %v116 = vsub.s32 6, %v115
  %v117 = vrot.slane %v88, %v116
  %v118 = vlaneseq
  %v119 = vshrl.u32 %v118, 7
  %v120 = vsub.s32 7, %v119
  %v121 = vrot.slane %v88, %v120
  %v194 = vunpack.c.l.b16 %v24
  %v195 = vunpack.c.h.b16 %v24
  %v196 = vunpack.c.l.b16 %v25
  %v197 = vunpack.c.h.b16 %v25
  %v198 = vunpack.c.l.b16 %v26
  %v199 = vunpack.c.h.b16 %v26
  %v200 = vunpack.c.l.b16 %v27
  %v201 = vunpack.c.h.b16 %v27
  %v202 = vunpack.c.l.b16 %v28
  %v203 = vunpack.c.h.b16 %v28
  %v204 = vunpack.c.l.b16 %v29
  %v205 = vunpack.c.h.b16 %v29
  %v206 = vunpack.c.l.b16 %v30
  %v207 = vunpack.c.h.b16 %v30
  %v208 = vunpack.c.l.b16 %v31
  %v209 = vunpack.c.h.b16 %v31
  %v210 = vunpack.c.l.b16 %v32
  %v211 = vunpack.c.h.b16 %v32
  %v212 = vunpack.c.l.b16 %v33
  %v213 = vunpack.c.h.b16 %v33
  %v214 = vunpack.c.l.b16 %v34
  %v215 = vunpack.c.h.b16 %v34
  %v216 = vunpack.c.l.b16 %v35
  %v217 = vunpack.c.h.b16 %v35
  %v218 = vunpack.c.l.b16 %v36
  %v219 = vunpack.c.h.b16 %v36
  %v220 = vunpack.c.l.b16 %v37
  %v221 = vunpack.c.h.b16 %v37
  %v222 = vunpack.c.l.b16 %v38
  %v223 = vunpack.c.h.b16 %v38
  %v224 = vunpack.c.l.b16 %v39
  %v225 = vunpack.c.h.b16 %v39
  %v226 = vunpack.c.l.b16 %v40
  %v227 = vunpack.c.h.b16 %v40
  %v228 = vunpack.c.l.b16 %v41
  %v229 = vunpack.c.h.b16 %v41
  %v230 = vunpack.c.l.b16 %v42
  %v231 = vunpack.c.h.b16 %v42
  %v232 = vunpack.c.l.b16 %v43
  %v233 = vunpack.c.h.b16 %v43
  %v234 = vunpack.c.l.b16 %v44
  %v235 = vunpack.c.h.b16 %v44
  %v236 = vunpack.c.l.b16 %v45
  %v237 = vunpack.c.h.b16 %v45
  %v238 = vunpack.c.l.b16 %v46
  %v239 = vunpack.c.h.b16 %v46
  %v240 = vunpack.c.l.b16 %v47
  %v241 = vunpack.c.h.b16 %v47
  %v242 = vunpack.c.l.b16 %v48
  %v243 = vunpack.c.h.b16 %v48
  %v244 = vunpack.c.l.b16 %v49
  %v245 = vunpack.c.h.b16 %v49
  %v246 = vunpack.c.l.b16 %v50
  %v247 = vunpack.c.h.b16 %v50
  %v248 = vunpack.c.l.b16 %v51
  %v249 = vunpack.c.h.b16 %v51
  %v250 = vunpack.c.l.b16 %v52
  %v251 = vunpack.c.h.b16 %v52
  %v252 = vunpack.c.l.b16 %v53
  %v253 = vunpack.c.h.b16 %v53
  %v254 = vunpack.c.l.b16 %v54
  %v255 = vunpack.c.h.b16 %v54
  %v256 = vunpack.c.l.b16 %v55
  %v257 = vunpack.c.h.b16 %v55
  %v258 = vunpack.c.l.b16 %v56
  %v259 = vunpack.c.h.b16 %v56
  %v260 = vunpack.c.l.b16 %v57
  %v261 = vunpack.c.h.b16 %v57
  %v262 = vunpack.c.l.b16 %v58
  %v263 = vunpack.c.h.b16 %v58
  %v264 = vunpack.c.l.b16 %v59
  %v265 = vunpack.c.h.b16 %v59
  %v266 = vunpack.c.l.b16 %v60
  %v267 = vunpack.c.h.b16 %v60
  %v268 = vunpack.c.l.b16 %v61
  %v269 = vunpack.c.h.b16 %v61
  %v270 = vunpack.c.l.b16 %v62
  %v271 = vunpack.c.h.b16 %v62
  %v272 = vunpack.c.l.b16 %v63
  %v273 = vunpack.c.h.b16 %v63
  %v274 = vunpack.c.l.b16 %v64
  %v275 = vunpack.c.h.b16 %v64
  %v276 = vunpack.c.l.b16 %v65
  %v277 = vunpack.c.h.b16 %v65
  %v278 = vunpack.c.l.b16 %v66
  %v279 = vunpack.c.h.b16 %v66
  %v280 = vunpack.c.l.b16 %v67
  %v281 = vunpack.c.h.b16 %v67
  %v282 = vunpack.c.l.b16 %v68
  %v283 = vunpack.c.h.b16 %v68
  %v284 = vunpack.c.l.b16 %v69
  %v285 = vunpack.c.h.b16 %v69
  %v286 = vunpack.c.l.b16 %v70
  %v287 = vunpack.c.h.b16 %v70
  %v288 = vunpack.c.l.b16 %v71
  %v289 = vunpack.c.h.b16 %v71
  %v290 = vunpack.c.l.b16 %v72
  %v291 = vunpack.c.h.b16 %v72
  %v292 = vunpack.c.l.b16 %v73
  %v293 = vunpack.c.h.b16 %v73
  %v294 = vunpack.c.l.b16 %v74
  %v295 = vunpack.c.h.b16 %v74
  %v296 = vunpack.c.l.b16 %v75
  %v297 = vunpack.c.h.b16 %v75
  %v298 = vunpack.c.l.b16 %v76
  %v299 = vunpack.c.h.b16 %v76
  %v300 = vunpack.c.l.b16 %v77
  %v301 = vunpack.c.h.b16 %v77
  %v302 = vunpack.c.l.b16 %v78
  %v303 = vunpack.c.h.b16 %v78
  %v304 = vunpack.c.l.b16 %v79
  %v305 = vunpack.c.h.b16 %v79
  %v306 = vunpack.c.l.b16 %v80
  %v307 = vunpack.c.h.b16 %v80
  %v308 = vunpack.c.l.b16 %v81
  %v309 = vunpack.c.h.b16 %v81
  %v310 = vunpack.c.l.b16 %v82
  %v311 = vunpack.c.h.b16 %v82
  %v312 = vunpack.c.l.b16 %v83
  %v313 = vunpack.c.h.b16 %v83
  %v314 = vunpack.c.l.b16 %v84
  %v315 = vunpack.c.h.b16 %v84
  %v316 = vunpack.c.l.b16 %v85
  %v317 = vunpack.c.h.b16 %v85
  %v318 = vunpack.c.l.b16 %v86
  %v319 = vunpack.c.h.b16 %v86
  %v320 = vunpack.c.l.b16 %v87
  %v321 = vunpack.c.h.b16 %v87
  %v322 = vpack.c.b16 %v202, %v194
  %v323 = vpack.c.b16 %v203, %v195
  %v324 = vpack.c.b16 %v204, %v196
  %v325 = vpack.c.b16 %v205, %v197
  %v326 = vpack.c.b16 %v206, %v198
  %v327 = vpack.c.b16 %v207, %v199
  %v328 = vpack.c.b16 %v208, %v200
  %v329 = vpack.c.b16 %v209, %v201
  %v330 = vpack.c.b16 %v218, %v210
  %v331 = vpack.c.b16 %v219, %v211
  %v332 = vpack.c.b16 %v220, %v212
  %v333 = vpack.c.b16 %v221, %v213
  %v334 = vpack.c.b16 %v222, %v214
  %v335 = vpack.c.b16 %v223, %v215
  %v336 = vpack.c.b16 %v224, %v216
  %v337 = vpack.c.b16 %v225, %v217
  %v338 = vpack.c.b16 %v234, %v226
  %v339 = vpack.c.b16 %v235, %v227
  %v340 = vpack.c.b16 %v236, %v228
  %v341 = vpack.c.b16 %v237, %v229
  %v342 = vpack.c.b16 %v238, %v230
  %v343 = vpack.c.b16 %v239, %v231
  %v344 = vpack.c.b16 %v240, %v232
  %v345 = vpack.c.b16 %v241, %v233
  %v346 = vpack.c.b16 %v250, %v242
  %v347 = vpack.c.b16 %v251, %v243
  %v348 = vpack.c.b16 %v252, %v244
  %v349 = vpack.c.b16 %v253, %v245
  %v350 = vpack.c.b16 %v254, %v246
  %v351 = vpack.c.b16 %v255, %v247
  %v352 = vpack.c.b16 %v256, %v248
  %v353 = vpack.c.b16 %v257, %v249
  %v354 = vpack.c.b16 %v266, %v258
  %v355 = vpack.c.b16 %v267, %v259
  %v356 = vpack.c.b16 %v268, %v260
  %v357 = vpack.c.b16 %v269, %v261
  %v358 = vpack.c.b16 %v270, %v262
  %v359 = vpack.c.b16 %v271, %v263
  %v360 = vpack.c.b16 %v272, %v264
  %v361 = vpack.c.b16 %v273, %v265
  %v362 = vpack.c.b16 %v282, %v274
  %v363 = vpack.c.b16 %v283, %v275
  %v364 = vpack.c.b16 %v284, %v276
  %v365 = vpack.c.b16 %v285, %v277
  %v366 = vpack.c.b16 %v286, %v278
  %v367 = vpack.c.b16 %v287, %v279
  %v368 = vpack.c.b16 %v288, %v280
  %v369 = vpack.c.b16 %v289, %v281
  %v370 = vpack.c.b16 %v298, %v290
  %v371 = vpack.c.b16 %v299, %v291
  %v372 = vpack.c.b16 %v300, %v292
  %v373 = vpack.c.b16 %v301, %v293
  %v374 = vpack.c.b16 %v302, %v294
  %v375 = vpack.c.b16 %v303, %v295
  %v376 = vpack.c.b16 %v304, %v296
  %v377 = vpack.c.b16 %v305, %v297
  %v378 = vpack.c.b16 %v314, %v306
  %v379 = vpack.c.b16 %v315, %v307
  %v380 = vpack.c.b16 %v316, %v308
  %v381 = vpack.c.b16 %v317, %v309
  %v382 = vpack.c.b16 %v318, %v310
  %v383 = vpack.c.b16 %v319, %v311
  %v384 = vpack.c.b16 %v320, %v312
  %v385 = vpack.c.b16 %v321, %v313
  %450 = vmatprep.subr.bf16.mxu0 %v323
  %451 = vmatpush1.bf16.msra.mxu0 %v322
  %452 = vmatprep.subr.bf16.mxu0 %v331
  %453 = vmatpush1.bf16.msra.mxu0 %v330
  %454 = vmatprep.subr.bf16.mxu0 %v339
  %455 = vmatpush1.bf16.msra.mxu0 %v338
  %456 = vmatprep.subr.bf16.mxu0 %v347
  %457 = vmatpush1.bf16.msra.mxu0 %v346
  %458 = vmatprep.subr.bf16.mxu0 %v355
  %459 = vmatpush1.bf16.msra.mxu0 %v354
  %460 = vmatprep.subr.bf16.mxu0 %v363
  %461 = vmatpush1.bf16.msra.mxu0 %v362
  %462 = vmatprep.subr.bf16.mxu0 %v371
  %463 = vmatpush1.bf16.msra.mxu0 %v370
  %464 = vmatprep.subr.bf16.mxu0 %v379
  %465 = vmatpush1.bf16.msra.mxu0 %v378
  %466 = vmatprep.subr.bf16.mxu0 0
  %467 = vmatpush1.bf16.msra.mxu0 0
  %468 = vmatprep.subr.bf16.mxu0 0
  %469 = vmatpush1.bf16.msra.mxu0 0
  %470 = vmatprep.subr.bf16.mxu0 0
  %471 = vmatpush1.bf16.msra.mxu0 0
  %472 = vmatprep.subr.bf16.mxu0 0
  %473 = vmatpush1.bf16.msra.mxu0 0
  %474 = vmatprep.subr.bf16.mxu0 0
  %475 = vmatpush1.bf16.msra.mxu0 0
  %476 = vmatprep.subr.bf16.mxu0 0
  %477 = vmatpush1.bf16.msra.mxu0 0
  %478 = vmatprep.subr.bf16.mxu0 0
  %479 = vmatpush1.bf16.msra.mxu0 0
  %480 = vmatprep.subr.bf16.mxu0 0
  %481 = vmatpush1.bf16.msra.mxu0 0
  %482 = vmatprep.mubr.bf16.mxu0 0
  %483 = vmatmul.mubr.bf16.gmra.mrb[0].mxu0 %v23
  %v484 = vpop.f32.mrb[0].mxu0
  %v485 = vadd.f32 %v93, %v484
  %v486 = vpop.f32.mrb[0].mxu0
  %v487 = vadd.f32 %v97, %v486
  %v488 = vpop.f32.mrb[0].mxu0
  %v489 = vpop.f32.mrb[0].mxu0
  %490 = vdwg.mxu0
  %491 = vmatprep.subr.bf16.mxu0 %v325
  %492 = vmatpush1.bf16.msra.mxu0 %v324
  %493 = vmatprep.subr.bf16.mxu0 %v333
  %494 = vmatpush1.bf16.msra.mxu0 %v332
  %495 = vmatprep.subr.bf16.mxu0 %v341
  %496 = vmatpush1.bf16.msra.mxu0 %v340
  %497 = vmatprep.subr.bf16.mxu0 %v349
  %498 = vmatpush1.bf16.msra.mxu0 %v348
  %499 = vmatprep.subr.bf16.mxu0 %v357
  %500 = vmatpush1.bf16.msra.mxu0 %v356
  %501 = vmatprep.subr.bf16.mxu0 %v365
  %502 = vmatpush1.bf16.msra.mxu0 %v364
  %503 = vmatprep.subr.bf16.mxu0 %v373
  %504 = vmatpush1.bf16.msra.mxu0 %v372
  %505 = vmatprep.subr.bf16.mxu0 %v381
  %506 = vmatpush1.bf16.msra.mxu0 %v380
  %507 = vmatprep.subr.bf16.mxu0 0
  %508 = vmatpush1.bf16.msra.mxu0 0
  %509 = vmatprep.subr.bf16.mxu0 0
  %510 = vmatpush1.bf16.msra.mxu0 0
  %511 = vmatprep.subr.bf16.mxu0 0
  %512 = vmatpush1.bf16.msra.mxu0 0
  %513 = vmatprep.subr.bf16.mxu0 0
  %514 = vmatpush1.bf16.msra.mxu0 0
  %515 = vmatprep.subr.bf16.mxu0 0
  %516 = vmatpush1.bf16.msra.mxu0 0
  %517 = vmatprep.subr.bf16.mxu0 0
  %518 = vmatpush1.bf16.msra.mxu0 0
  %519 = vmatprep.subr.bf16.mxu0 0
  %520 = vmatpush1.bf16.msra.mxu0 0
  %521 = vmatprep.subr.bf16.mxu0 0
  %522 = vmatpush1.bf16.msra.mxu0 0
  %523 = vmatprep.mubr.bf16.mxu0 0
  %524 = vmatmul.mubr.bf16.gmra.mrb[0].mxu0 %v23
  %v525 = vpop.f32.mrb[0].mxu0
  %v526 = vadd.f32 %v101, %v525
  %v527 = vpop.f32.mrb[0].mxu0
  %v528 = vadd.f32 %v105, %v527
  %v529 = vpop.f32.mrb[0].mxu0
  %v530 = vpop.f32.mrb[0].mxu0
  %531 = vdwg.mxu0
  %532 = vmatprep.subr.bf16.mxu0 %v327
  %533 = vmatpush1.bf16.msra.mxu0 %v326
  %534 = vmatprep.subr.bf16.mxu0 %v335
  %535 = vmatpush1.bf16.msra.mxu0 %v334
  %536 = vmatprep.subr.bf16.mxu0 %v343
  %537 = vmatpush1.bf16.msra.mxu0 %v342
  %538 = vmatprep.subr.bf16.mxu0 %v351
  %539 = vmatpush1.bf16.msra.mxu0 %v350
  %540 = vmatprep.subr.bf16.mxu0 %v359
  %541 = vmatpush1.bf16.msra.mxu0 %v358
  %542 = vmatprep.subr.bf16.mxu0 %v367
  %543 = vmatpush1.bf16.msra.mxu0 %v366
  %544 = vmatprep.subr.bf16.mxu0 %v375
  %545 = vmatpush1.bf16.msra.mxu0 %v374
  %546 = vmatprep.subr.bf16.mxu0 %v383
  %547 = vmatpush1.bf16.msra.mxu0 %v382
  %548 = vmatprep.subr.bf16.mxu0 0
  %549 = vmatpush1.bf16.msra.mxu0 0
  %550 = vmatprep.subr.bf16.mxu0 0
  %551 = vmatpush1.bf16.msra.mxu0 0
  %552 = vmatprep.subr.bf16.mxu0 0
  %553 = vmatpush1.bf16.msra.mxu0 0
  %554 = vmatprep.subr.bf16.mxu0 0
  %555 = vmatpush1.bf16.msra.mxu0 0
  %556 = vmatprep.subr.bf16.mxu0 0
  %557 = vmatpush1.bf16.msra.mxu0 0
  %558 = vmatprep.subr.bf16.mxu0 0
  %559 = vmatpush1.bf16.msra.mxu0 0
  %560 = vmatprep.subr.bf16.mxu0 0
  %561 = vmatpush1.bf16.msra.mxu0 0
  %562 = vmatprep.subr.bf16.mxu0 0
  %563 = vmatpush1.bf16.msra.mxu0 0
  %564 = vmatprep.mubr.bf16.mxu0 0
  %565 = vmatmul.mubr.bf16.gmra.mrb[0].mxu0 %v23
  %v566 = vpop.f32.mrb[0].mxu0
  %v567 = vadd.f32 %v109, %v566
  %v568 = vpop.f32.mrb[0].mxu0
  %v569 = vadd.f32 %v113, %v568
  %v570 = vpop.f32.mrb[0].mxu0
  %v571 = vpop.f32.mrb[0].mxu0
  %572 = vdwg.mxu0
  %573 = vmatprep.subr.bf16.mxu0 %v329
  %574 = vmatpush1.bf16.msra.mxu0 %v328
  %575 = vmatprep.subr.bf16.mxu0 %v337
  %576 = vmatpush1.bf16.msra.mxu0 %v336
  %577 = vmatprep.subr.bf16.mxu0 %v345
  %578 = vmatpush1.bf16.msra.mxu0 %v344
  %579 = vmatprep.subr.bf16.mxu0 %v353
  %580 = vmatpush1.bf16.msra.mxu0 %v352
  %581 = vmatprep.subr.bf16.mxu0 %v361
  %582 = vmatpush1.bf16.msra.mxu0 %v360
  %583 = vmatprep.subr.bf16.mxu0 %v369
  %584 = vmatpush1.bf16.msra.mxu0 %v368
  %585 = vmatprep.subr.bf16.mxu0 %v377
  %586 = vmatpush1.bf16.msra.mxu0 %v376
  %587 = vmatprep.subr.bf16.mxu0 %v385
  %588 = vmatpush1.bf16.msra.mxu0 %v384
  %589 = vmatprep.subr.bf16.mxu0 0
  %590 = vmatpush1.bf16.msra.mxu0 0
  %591 = vmatprep.subr.bf16.mxu0 0
  %592 = vmatpush1.bf16.msra.mxu0 0
  %593 = vmatprep.subr.bf16.mxu0 0
  %594 = vmatpush1.bf16.msra.mxu0 0
  %595 = vmatprep.subr.bf16.mxu0 0
  %596 = vmatpush1.bf16.msra.mxu0 0
  %597 = vmatprep.subr.bf16.mxu0 0
  %598 = vmatpush1.bf16.msra.mxu0 0
  %599 = vmatprep.subr.bf16.mxu0 0
  %600 = vmatpush1.bf16.msra.mxu0 0
  %601 = vmatprep.subr.bf16.mxu0 0
  %602 = vmatpush1.bf16.msra.mxu0 0
  %603 = vmatprep.subr.bf16.mxu0 0
  %604 = vmatpush1.bf16.msra.mxu0 0
  %605 = vmatprep.mubr.bf16.mxu0 0
  %606 = vmatmul.mubr.bf16.gmra.mrb[0].mxu0 %v23
  %v607 = vpop.f32.mrb[0].mxu0
  %v608 = vadd.f32 %v117, %v607
  %v609 = vpop.f32.mrb[0].mxu0
  %v610 = vadd.f32 %v121, %v609
  %v611 = vpop.f32.mrb[0].mxu0
  %v612 = vpop.f32.mrb[0].mxu0
  %613 = vdwg.mxu0
  %v614 = vld [vmem:[%s4] sm:$0xff]
  %v615 = vld [vmem:[%s4 + $0x8] sm:$0xff]
  %v616 = vmul.f32 %v614, 0.96
  %v617 = vmul.f32 %v615, 0.96
  %v618 = vld [vmem:[%s3] sm:$0xff]
  %v619 = vld [vmem:[%s3 + $0x8] sm:$0xff]
  %v620 = vmul.f32 %v618, 0.04
  %v621 = vmul.f32 %v619, 0.04
  %v622 = vadd.f32 %v616, %v620
  %v623 = vadd.f32 %v617, %v621
  %624 = vst [vmem:[%s6] sm:$0xff] %v622
  %625 = vst [vmem:[%s6 + $0x8] sm:$0xff] %v623
  %v626 = vmul.f32 %v622, 0.7
  %v627 = vmul.f32 %v623, 0.7
  %v630 = vcombine.high %v626, %v626
  %v632 = vunpack.c.l.s4 1983009808
  %v633 = vunpack.c.0.s8 %v632
  %v634 = vlaneseq
  %v635 = vshrl.u32 %v634, 7
  %v636 = vsub.s32 %v633, %v635
  %v637 = vrot.slane %v626, %v636
  %v639 = vunpack.c.l.s4 1983009808
  %v640 = vunpack.c.0.s8 %v639
  %v641 = vlaneseq
  %v642 = vshrl.u32 %v641, 7
  %v643 = vsub.s32 %v640, %v642
  %v644 = vrot.slane %v630, %v643
  %v645 = vcombine.high %v637, %v637
  %v646 = vcombine.high %v644, %v644
  %v647 = vcombine.high %v627, %v627
  %v649 = vunpack.c.l.s4 1983009808
  %v650 = vunpack.c.0.s8 %v649
  %v651 = vlaneseq
  %v652 = vshrl.u32 %v651, 7
  %v653 = vsub.s32 %v650, %v652
  %v654 = vrot.slane %v627, %v653
  %v656 = vunpack.c.l.s4 1983009808
  %v657 = vunpack.c.0.s8 %v656
  %v658 = vlaneseq
  %v659 = vshrl.u32 %v658, 7
  %v660 = vsub.s32 %v657, %v659
  %v661 = vrot.slane %v647, %v660
  %v662 = vcombine.high %v654, %v654
  %v663 = vcombine.high %v661, %v661
  %v672 = vsub.f32 %v485, %v637
  %v673 = vsub.f32 %v487, %v645
  %v674 = vsub.f32 %v526, %v644
  %v675 = vsub.f32 %v528, %v646
  %v676 = vsub.f32 %v567, %v654
  %v677 = vsub.f32 %v569, %v662
  %v678 = vsub.f32 %v608, %v661
  %v679 = vsub.f32 %v610, %v663
  %v688 = vcombine.low %v672, %v673
  %v689 = vcombine.low %v674, %v675
  %v691 = vunpack.c.l.s4 1983009808
  %v692 = vunpack.c.0.s8 %v691
  %v693 = vlaneseq
  %v694 = vshrl.u32 %v693, 7
  %v695 = vsub.s32 %v692, %v694
  %v696 = vrot.slane %v688, %v695
  %v698 = vunpack.c.l.s4 1983009808
  %v699 = vunpack.c.0.s8 %v698
  %v700 = vlaneseq
  %v701 = vshrl.u32 %v700, 7
  %v702 = vsub.s32 %v699, %v701
  %v703 = vrot.slane %v689, %v702
  %v704 = vcombine.low %v696, %v703
  %v705 = vcombine.low %v676, %v677
  %v706 = vcombine.low %v678, %v679
  %v708 = vunpack.c.l.s4 1983009808
  %v709 = vunpack.c.0.s8 %v708
  %v710 = vlaneseq
  %v711 = vshrl.u32 %v710, 7
  %v712 = vsub.s32 %v709, %v711
  %v713 = vrot.slane %v705, %v712
  %v715 = vunpack.c.l.s4 1983009808
  %v716 = vunpack.c.0.s8 %v715
  %v717 = vlaneseq
  %v718 = vshrl.u32 %v717, 7
  %v719 = vsub.s32 %v716, %v718
  %v720 = vrot.slane %v706, %v719
  %v721 = vcombine.low %v713, %v720
  %724 = vst [vmem:[%s5] sm:$0xff] %v704
  %725 = vst [vmem:[%s5 + $0x8] sm:$0xff] %v721
  // Predicated region
  $region22: #{forward.19} parent=0 // pred_check
    _
  $region23: #{forward.19} parent=0 // pred_check_branch
    %727 = sbr.rel (0) target = $region25
  $region24: #{forward.19} parent=0 // pred_region
    _
  $region25: #{forward.19} parent=0 // pred_fallthru
    _
  // Predicated region
  $region26: #{forward.19} parent=0 // pred_check
    _
  $region27: #{forward.19} parent=0 // pred_check_branch
    %729 = sbr.rel (0) target = $region29
  $region28: #{forward.19} parent=0 // pred_region
    _
  $region29: #{forward.19} parent=0 // pred_fallthru
    _
  // Predicated region
  $region30: #{forward.19} parent=0 // pred_check
    _
  $region31: #{forward.19} parent=0 // pred_check_branch
    %731 = sbr.rel (0) target = $region33
  $region32: #{forward.19} parent=0 // pred_region
    _
  $region33: #{forward.19} parent=0 // pred_fallthru
    _
  // Predicated region
  $region34: #{forward.19} parent=0 // pred_check
    _
  $region35: #{forward.19} parent=0 // pred_check_branch
    %733 = sbr.rel (0) target = $region37
  $region36: #{forward.19} parent=0 // pred_region
    _
  $region37: #{forward.19} parent=0 // pred_fallthru
    _

// kernel: forward.22
$region0: #{forward.22}
  #allocation0 [shape = 'u32[]', space=smem, size = 0x4, offset = 0x4, fixed_abs, tag = 'smem constant byte address 0x4 - core index']
  #allocation1 [shape = 'u32[144,128]{1,0:T(1,128)}', space=vmem, size = 0x12000, scoped, tag = 'internal scratch']
  %s0 = inlined_call_operand.vmem [shape: bf16[8,288], index: 0, kind: input, shape index: {}]
  %s1 = inlined_call_operand.vmem [shape: bf16[288,32], index: 1, kind: input, shape index: {}]
  %s2 = inlined_call_operand.vmem [shape: f32[1,32], index: 2, kind: input, shape index: {}]
  %s3 = inlined_call_operand.vmem [shape: f32[8,32], index: 3, kind: input, shape index: {}]
  %s4 = inlined_call_operand.vmem [shape: f32[8,32], index: 4, kind: input, shape index: {}]
  %s5 = inlined_call_operand.vmem [shape: f32[8,32], index: 5, kind: output, shape index: {0}]
  %s6 = inlined_call_operand.hbm [shape: f32[8,32], index: 6, kind: output, shape index: {1}]
  %7 = xla_tuple %s5, %s6
  %s8 = sld [smem:[#allocation0]]
  $region38: #{forward.22} parent=0
    _
  %s10 = ssub.s32 1, %s8
  %s11 = scalar_select 0, %s10, %s8
  $region1: #{forward.22} parent=0
    #allocation2 [shape = 'u8[4096]{0}', space=vmem, size = 0x1000, scoped, tag = 'output window, operand 1, single buffered']
    #allocation3 [shape = 's32[1]{0}', space=sflag, size = 0x4, scoped, tag = 'scoped memory for forward.22']
    %12 = vsyncpa [#allocation3], 0
    // Predicated region
    $region2: #{forward.22} parent=1 // pred_check
      _
    $region3: #{forward.22} parent=1 // pred_check_branch
      %14 = sbr.rel (0) target = $region5
    $region4: #{forward.22} parent=1 // pred_region
      _
    $region5: #{forward.22} parent=1 // pred_fallthru
      _
    // Predicated region
    $region6: #{forward.22} parent=1 // pred_check
      _
    $region7: #{forward.22} parent=1 // pred_check_branch
      %16 = sbr.rel (0) target = $region9
    $region8: #{forward.22} parent=1 // pred_region
      _
    $region9: #{forward.22} parent=1 // pred_fallthru
      _
    // Predicated region
    $region10: #{forward.22} parent=1 // pred_check
      _
    $region11: #{forward.22} parent=1 // pred_check_branch
      %18 = sbr.rel (0) target = $region13
    $region12: #{forward.22} parent=1 // pred_region
      _
    $region13: #{forward.22} parent=1 // pred_fallthru
      _
    // Predicated region
    $region14: #{forward.22} parent=1 // pred_check
      _
    $region15: #{forward.22} parent=1 // pred_check_branch
      %20 = sbr.rel (0) target = $region17
    $region16: #{forward.22} parent=1 // pred_region
      _
    $region17: #{forward.22} parent=1 // pred_fallthru
      _
    // Predicated region
    $region18: #{forward.22} parent=1 // pred_check
      _
    $region19: #{forward.22} parent=1 // pred_check_branch
      %22 = sbr.rel (0) target = $region21
    $region20: #{forward.22} parent=1 // pred_region
      _
    $region21: #{forward.22} parent=1 // pred_fallthru
      _
    %v24 = vld [vmem:[%s0] sm:$0xff]
    %v25 = vld [vmem:[%s0 + $0x8] sm:$0xf]
    %v26 = vld [vmem:[%s1] sm:$0xf]
    %v27 = vld [vmem:[%s1 + $0x4] sm:$0xf]
    %v28 = vld [vmem:[%s1 + $0x8] sm:$0xf]
    %v29 = vld [vmem:[%s1 + $0xc] sm:$0xf]
    %v30 = vld [vmem:[%s1 + $0x10] sm:$0xf]
    %v31 = vld [vmem:[%s1 + $0x14] sm:$0xf]
    %v32 = vld [vmem:[%s1 + $0x18] sm:$0xf]
    %v33 = vld [vmem:[%s1 + $0x1c] sm:$0xf]
    %v34 = vld [vmem:[%s1 + $0x20] sm:$0xf]
    %v35 = vld [vmem:[%s1 + $0x24] sm:$0xf]
    %v36 = vld [vmem:[%s1 + $0x28] sm:$0xf]
    %v37 = vld [vmem:[%s1 + $0x2c] sm:$0xf]
    %v38 = vld [vmem:[%s1 + $0x30] sm:$0xf]
    %v39 = vld [vmem:[%s1 + $0x34] sm:$0xf]
    %v40 = vld [vmem:[%s1 + $0x38] sm:$0xf]
    %v41 = vld [vmem:[%s1 + $0x3c] sm:$0xf]
    %v42 = vld [vmem:[%s1 + $0x40] sm:$0xf]
    %v43 = vld [vmem:[%s1 + $0x44] sm:$0xf]
    %v44 = vld [vmem:[%s1 + $0x48] sm:$0xf]
    %v45 = vld [vmem:[%s1 + $0x4c] sm:$0xf]
    %v46 = vld [vmem:[%s1 + $0x50] sm:$0xf]
    %v47 = vld [vmem:[%s1 + $0x54] sm:$0xf]
    %v48 = vld [vmem:[%s1 + $0x58] sm:$0xf]
    %v49 = vld [vmem:[%s1 + $0x5c] sm:$0xf]
    %v50 = vld [vmem:[%s1 + $0x60] sm:$0xf]
    %v51 = vld [vmem:[%s1 + $0x64] sm:$0xf]
    %v52 = vld [vmem:[%s1 + $0x68] sm:$0xf]
    %v53 = vld [vmem:[%s1 + $0x6c] sm:$0xf]
    %v54 = vld [vmem:[%s1 + $0x70] sm:$0xf]
    %v55 = vld [vmem:[%s1 + $0x74] sm:$0xf]
    %v56 = vld [vmem:[%s1 + $0x78] sm:$0xf]
    %v57 = vld [vmem:[%s1 + $0x7c] sm:$0xf]
    %v58 = vld [vmem:[%s1 + $0x80] sm:$0xf]
    %v59 = vld [vmem:[%s1 + $0x84] sm:$0xf]
    %v60 = vld [vmem:[%s1 + $0x88] sm:$0xf]
    %v61 = vld [vmem:[%s1 + $0x8c] sm:$0xf]
    %v62 = vld [vmem:[%s2] sm:$0x1]
    %v64 = vlaneseq
    %v65 = vshrl.u32 %v64, 7
    %v66 = vsub.s32 0, %v65
    %v67 = vrot.slane %v62, %v66
    %v71 = vunpack.c.l.b16 %v24
    %v72 = vunpack.c.h.b16 %v24
    %v73 = vunpack.c.l.b16 %v25
    %v74 = vpack.c.b16 %v71, %v71
    %v75 = vpack.c.b16 %v72, %v72
    %v76 = vpack.c.b16 %v73, %v73
    %v115 = vunpack.c.l.b16 %v26
    %v116 = vunpack.c.l.b16 %v27
    %v117 = vunpack.c.l.b16 %v28
    %v118 = vunpack.c.l.b16 %v29
    %v119 = vunpack.c.l.b16 %v30
    %v120 = vunpack.c.l.b16 %v31
    %v121 = vunpack.c.l.b16 %v32
    %v122 = vunpack.c.l.b16 %v33
    %v123 = vunpack.c.l.b16 %v34
    %v124 = vunpack.c.l.b16 %v35
    %v125 = vunpack.c.l.b16 %v36
    %v126 = vunpack.c.l.b16 %v37
    %v127 = vunpack.c.l.b16 %v38
    %v128 = vunpack.c.l.b16 %v39
    %v129 = vunpack.c.l.b16 %v40
    %v130 = vunpack.c.l.b16 %v41
    %v131 = vunpack.c.l.b16 %v42
    %v132 = vunpack.c.l.b16 %v43
    %v133 = vunpack.c.l.b16 %v44
    %v134 = vunpack.c.l.b16 %v45
    %v135 = vunpack.c.l.b16 %v46
    %v136 = vunpack.c.l.b16 %v47
    %v137 = vunpack.c.l.b16 %v48
    %v138 = vunpack.c.l.b16 %v49
    %v139 = vunpack.c.l.b16 %v50
    %v140 = vunpack.c.l.b16 %v51
    %v141 = vunpack.c.l.b16 %v52
    %v142 = vunpack.c.l.b16 %v53
    %v143 = vunpack.c.l.b16 %v54
    %v144 = vunpack.c.l.b16 %v55
    %v145 = vunpack.c.l.b16 %v56
    %v146 = vunpack.c.l.b16 %v57
    %v147 = vunpack.c.l.b16 %v58
    %v148 = vunpack.c.l.b16 %v59
    %v149 = vunpack.c.l.b16 %v60
    %v150 = vunpack.c.l.b16 %v61
    %v151 = vpack.c.b16 %v116, %v115
    %v152 = vpack.c.b16 %v118, %v117
    %v153 = vpack.c.b16 %v120, %v119
    %v154 = vpack.c.b16 %v122, %v121
    %v155 = vpack.c.b16 %v124, %v123
    %v156 = vpack.c.b16 %v126, %v125
    %v157 = vpack.c.b16 %v128, %v127
    %v158 = vpack.c.b16 %v130, %v129
    %v159 = vpack.c.b16 %v132, %v131
    %v160 = vpack.c.b16 %v134, %v133
    %v161 = vpack.c.b16 %v136, %v135
    %v162 = vpack.c.b16 %v138, %v137
    %v163 = vpack.c.b16 %v140, %v139
    %v164 = vpack.c.b16 %v142, %v141
    %v165 = vpack.c.b16 %v144, %v143
    %v166 = vpack.c.b16 %v146, %v145
    %v167 = vpack.c.b16 %v148, %v147
    %v168 = vpack.c.b16 %v150, %v149
    %vm187 = vcmask 261120
    %v189 = vsel %vm187, %v76, 0
    %191 = vmatprep.subr.bf16.mxu0 0
    %192 = vmatpush1.bf16.msra.mxu0 %v151
    %193 = vmatprep.subr.bf16.mxu0 0
    %194 = vmatpush1.bf16.msra.mxu0 %v152
    %195 = vmatprep.subr.bf16.mxu0 0
    %196 = vmatpush1.bf16.msra.mxu0 %v153
    %197 = vmatprep.subr.bf16.mxu0 0
    %198 = vmatpush1.bf16.msra.mxu0 %v154
    %199 = vmatprep.subr.bf16.mxu0 0
    %200 = vmatpush1.bf16.msra.mxu0 %v155
    %201 = vmatprep.subr.bf16.mxu0 0
    %202 = vmatpush1.bf16.msra.mxu0 %v156
    %203 = vmatprep.subr.bf16.mxu0 0
    %204 = vmatpush1.bf16.msra.mxu0 %v157
    %205 = vmatprep.subr.bf16.mxu0 0
    %206 = vmatpush1.bf16.msra.mxu0 %v158
    %207 = vmatprep.subr.bf16.mxu0 0
    %208 = vmatpush1.bf16.msra.mxu0 %v159
    %209 = vmatprep.subr.bf16.mxu0 0
    %210 = vmatpush1.bf16.msra.mxu0 %v160
    %211 = vmatprep.subr.bf16.mxu0 0
    %212 = vmatpush1.bf16.msra.mxu0 %v161
    %213 = vmatprep.subr.bf16.mxu0 0
    %214 = vmatpush1.bf16.msra.mxu0 %v162
    %215 = vmatprep.subr.bf16.mxu0 0
    %216 = vmatpush1.bf16.msra.mxu0 %v163
    %217 = vmatprep.subr.bf16.mxu0 0
    %218 = vmatpush1.bf16.msra.mxu0 %v164
    %219 = vmatprep.subr.bf16.mxu0 0
    %220 = vmatpush1.bf16.msra.mxu0 %v165
    %221 = vmatprep.subr.bf16.mxu0 0
    %222 = vmatpush1.bf16.msra.mxu0 %v166
    %223 = vmatprep.mubr.bf16.mxu0 %v75
    %224 = vmatmul.mubr.bf16.gmra.mrb[0].mxu0 %v74
    %v225 = vpop.f32.mrb[0].mxu0
    %v226 = vadd.f32 %v67, %v225
    %v227 = vpop.f32.mrb[0].mxu0
    %v228 = vpop.f32.mrb[0].mxu0
    %v229 = vpop.f32.mrb[0].mxu0
    %230 = vdwg.mxu0
    %231 = vmatprep.subr.bf16.mxu0 0
    %232 = vmatpush1.bf16.msra.mxu0 %v167
    %233 = vmatprep.subr.bf16.mxu0 0
    %234 = vmatpush1.bf16.msra.mxu0 %v168
    %235 = vmatprep.subr.bf16.mxu0 0
    %236 = vmatpush1.bf16.msra.mxu0 0
    %237 = vmatprep.subr.bf16.mxu0 0
    %238 = vmatpush1.bf16.msra.mxu0 0
    %239 = vmatprep.subr.bf16.mxu0 0
    %240 = vmatpush1.bf16.msra.mxu0 0
    %241 = vmatprep.subr.bf16.mxu0 0
    %242 = vmatpush1.bf16.msra.mxu0 0
    %243 = vmatprep.subr.bf16.mxu0 0
    %244 = vmatpush1.bf16.msra.mxu0 0
    %245 = vmatprep.subr.bf16.mxu0 0
    %246 = vmatpush1.bf16.msra.mxu0 0
    %247 = vmatprep.subr.bf16.mxu0 0
    %248 = vmatpush1.bf16.msra.mxu0 0
    %249 = vmatprep.subr.bf16.mxu0 0
    %250 = vmatpush1.bf16.msra.mxu0 0
    %251 = vmatprep.subr.bf16.mxu0 0
    %252 = vmatpush1.bf16.msra.mxu0 0
    %253 = vmatprep.subr.bf16.mxu0 0
    %254 = vmatpush1.bf16.msra.mxu0 0
    %255 = vmatprep.subr.bf16.mxu0 0
    %256 = vmatpush1.bf16.msra.mxu0 0
    %257 = vmatprep.subr.bf16.mxu0 0
    %258 = vmatpush1.bf16.msra.mxu0 0
    %259 = vmatprep.subr.bf16.mxu0 0
    %260 = vmatpush1.bf16.msra.mxu0 0
    %261 = vmatprep.subr.bf16.mxu0 0
    %262 = vmatpush1.bf16.msra.mxu0 0
    %263 = vmatprep.mubr.bf16.mxu0 0
    %264 = vmatmul.mubr.bf16.gmra.mrb[0].mxu0 %v189
    %v265 = vpop.f32.mrb[0].mxu0
    %v266 = vadd.f32 %v226, %v265
    %v267 = vpop.f32.mrb[0].mxu0
    %v268 = vpop.f32.mrb[0].mxu0
    %v269 = vpop.f32.mrb[0].mxu0
    %270 = vdwg.mxu0
    %v271 = vld [vmem:[%s4] sm:$0xff]
    %v272 = vmul.f32 %v271, 0.96
    %v273 = vld [vmem:[%s3] sm:$0xff]
    %v274 = vmul.f32 %v273, 0.04
    %v275 = vadd.f32 %v272, %v274
    %276 = vst.msk [vmem:[#allocation2] sm:$0xff] %vm187, %v275
    %v277 = vmul.f32 %v275, 0.7
    %v278 = vsub.f32 %v266, %v277
    %v279 = vmax.f32 %v278, 0.0
    %280 = vst.msk [vmem:[%s5] sm:$0xff] %vm187, %v279
    // Predicated region
    $region22: #{forward.22} parent=1 // pred_check
      _
    $region23: #{forward.22} parent=1 // pred_check_branch
      %282 = sbr.rel (0) target = $region25
    $region24: #{forward.22} parent=1 // pred_region
      _
    $region25: #{forward.22} parent=1 // pred_fallthru
      _
    // Predicated region
    $region26: #{forward.22} parent=1 // pred_check
      _
    $region27: #{forward.22} parent=1 // pred_check_branch
      %284 = sbr.rel (0) target = $region29
    $region28: #{forward.22} parent=1 // pred_region
      %s286 = ssub.s32 128, 128
      %287 = vsyncadd [#allocation3], %s286
      %s289 = sshll.u32 [#allocation2], 4
      %s290 = int_to_ptr.vmem [resolvable:$true] %s289
      %292 = dma.vmem_to_hbm [thread:$0]  %s290, 128, %s6, [#allocation3]
    $region29: #{forward.22} parent=1 // pred_fallthru
      _
    // Predicated region
    $region30: #{forward.22} parent=1 // pred_check
      _
    $region31: #{forward.22} parent=1 // pred_check_branch
      %294 = sbr.rel (0) target = $region33
    $region32: #{forward.22} parent=1 // pred_region
      _
    $region33: #{forward.22} parent=1 // pred_fallthru
      _
    // Predicated region
    $region34: #{forward.22} parent=1 // pred_check
      _
    $region35: #{forward.22} parent=1 // pred_check_branch
      %296 = sbr.rel (0) target = $region37
    $region36: #{forward.22} parent=1 // pred_region
      %297 = dma.done [#allocation3], 128
    $region37: #{forward.22} parent=1 // pred_fallthru
      _
    %298 = vsyncpa [#allocation3], 1

// kernel: forward.21
$region0: #{forward.21}
  #allocation0 [shape = 'u32[]', space=smem, size = 0x4, offset = 0x4, fixed_abs, tag = 'smem constant byte address 0x4 - core index']
  #allocation1 [shape = 'u32[144,128]{1,0:T(1,128)}', space=vmem, size = 0x12000, scoped, tag = 'internal scratch']
  %s0 = inlined_call_operand.vmem [shape: bf16[128,800], index: 0, kind: input, shape index: {}]
  %s1 = inlined_call_operand.vmem [shape: bf16[800,32], index: 1, kind: input, shape index: {}]
  %s2 = inlined_call_operand.vmem [shape: f32[1,32], index: 2, kind: input, shape index: {}]
  %s3 = inlined_call_operand.vmem [shape: f32[128,32], index: 3, kind: input, shape index: {}]
  %s4 = inlined_call_operand.vmem [shape: f32[128,32], index: 4, kind: input, shape index: {}]
  %s5 = inlined_call_operand.vmem [shape: f32[128,32], index: 5, kind: output, shape index: {0}]
  %s6 = inlined_call_operand.hbm [shape: f32[128,32], index: 6, kind: output, shape index: {1}]
  %7 = xla_tuple %s5, %s6
  %s8 = sld [smem:[#allocation0]]
  $region38: #{forward.21} parent=0
    _
  %s10 = ssub.s32 1, %s8
  %s11 = scalar_select 0, %s10, %s8
  $region1: #{forward.21} parent=0
    #allocation2 [shape = 'u8[65536]{0}', space=vmem, size = 0x10000, scoped, tag = 'output window, operand 1, single buffered']
    #allocation3 [shape = 's32[1]{0}', space=sflag, size = 0x4, scoped, tag = 'scoped memory for forward.21']
    %12 = vsyncpa [#allocation3], 0
    // Predicated region
    $region2: #{forward.21} parent=1 // pred_check
      _
    $region3: #{forward.21} parent=1 // pred_check_branch
      %14 = sbr.rel (0) target = $region5
    $region4: #{forward.21} parent=1 // pred_region
      _
    $region5: #{forward.21} parent=1 // pred_fallthru
      _
    // Predicated region
    $region6: #{forward.21} parent=1 // pred_check
      _
    $region7: #{forward.21} parent=1 // pred_check_branch
      %16 = sbr.rel (0) target = $region9
    $region8: #{forward.21} parent=1 // pred_region
      _
    $region9: #{forward.21} parent=1 // pred_fallthru
      _
    // Predicated region
    $region10: #{forward.21} parent=1 // pred_check
      _
    $region11: #{forward.21} parent=1 // pred_check_branch
      %18 = sbr.rel (0) target = $region13
    $region12: #{forward.21} parent=1 // pred_region
      _
    $region13: #{forward.21} parent=1 // pred_fallthru
      _
    // Predicated region
    $region14: #{forward.21} parent=1 // pred_check
      _
    $region15: #{forward.21} parent=1 // pred_check_branch
      %20 = sbr.rel (0) target = $region17
    $region16: #{forward.21} parent=1 // pred_region
      _
    $region17: #{forward.21} parent=1 // pred_fallthru
      _
    // Predicated region
    $region18: #{forward.21} parent=1 // pred_check
      _
    $region19: #{forward.21} parent=1 // pred_check_branch
      %22 = sbr.rel (0) target = $region21
    $region20: #{forward.21} parent=1 // pred_region
      _
    $region21: #{forward.21} parent=1 // pred_fallthru
      _
    %v24 = vld [vmem:[%s0] sm:$0xff]
    %v25 = vld [vmem:[%s0 + $0x8] sm:$0xff]
    %v26 = vld [vmem:[%s0 + $0x10] sm:$0xff]
    %v27 = vld [vmem:[%s0 + $0x18] sm:$0xf]
    %v28 = vld [vmem:[%s0 + $0x1c] sm:$0xff]
    %v29 = vld [vmem:[%s0 + $0x24] sm:$0xff]
    %v30 = vld [vmem:[%s0 + $0x2c] sm:$0xff]
    %v31 = vld [vmem:[%s0 + $0x34] sm:$0xf]
    %v32 = vld [vmem:[%s0 + $0x38] sm:$0xff]
    %v33 = vld [vmem:[%s0 + $0x40] sm:$0xff]
    %v34 = vld [vmem:[%s0 + $0x48] sm:$0xff]
    %v35 = vld [vmem:[%s0 + $0x50] sm:$0xf]
    %v36 = vld [vmem:[%s0 + $0x54] sm:$0xff]
    %v37 = vld [vmem:[%s0 + $0x5c] sm:$0xff]
    %v38 = vld [vmem:[%s0 + $0x64] sm:$0xff]
    %v39 = vld [vmem:[%s0 + $0x6c] sm:$0xf]
    %v40 = vld [vmem:[%s0 + $0x70] sm:$0xff]
    %v41 = vld [vmem:[%s0 + $0x78] sm:$0xff]
    %v42 = vld [vmem:[%s0 + $0x80] sm:$0xff]
    %v43 = vld [vmem:[%s0 + $0x88] sm:$0xf]
    %v44 = vld [vmem:[%s0 + $0x8c] sm:$0xff]
    %v45 = vld [vmem:[%s0 + $0x94] sm:$0xff]
    %v46 = vld [vmem:[%s0 + $0x9c] sm:$0xff]
    %v47 = vld [vmem:[%s0 + $0xa4] sm:$0xf]
    %v48 = vld [vmem:[%s0 + $0xa8] sm:$0xff]
    %v49 = vld [vmem:[%s0 + $0xb0] sm:$0xff]
    %v50 = vld [vmem:[%s0 + $0xb8] sm:$0xff]
    %v51 = vld [vmem:[%s0 + $0xc0] sm:$0xf]
    %v52 = vld [vmem:[%s0 + $0xc4] sm:$0xff]
    %v53 = vld [vmem:[%s0 + $0xcc] sm:$0xff]
    %v54 = vld [vmem:[%s0 + $0xd4] sm:$0xff]
    %v55 = vld [vmem:[%s0 + $0xdc] sm:$0xf]
    %v56 = vld [vmem:[%s0 + $0xe0] sm:$0xff]
    %v57 = vld [vmem:[%s0 + $0xe8] sm:$0xff]
    %v58 = vld [vmem:[%s0 + $0xf0] sm:$0xff]
    %v59 = vld [vmem:[%s0 + $0xf8] sm:$0xf]
    %v60 = vld [vmem:[%s0 + $0xfc] sm:$0xff]
    %v61 = vld [vmem:[%s0 + $0x104] sm:$0xff]
    %v62 = vld [vmem:[%s0 + $0x10c] sm:$0xff]
    %v63 = vld [vmem:[%s0 + $0x114] sm:$0xf]
    %v64 = vld [vmem:[%s0 + $0x118] sm:$0xff]
    %v65 = vld [vmem:[%s0 + $0x120] sm:$0xff]
    %v66 = vld [vmem:[%s0 + $0x128] sm:$0xff]
    %v67 = vld [vmem:[%s0 + $0x130] sm:$0xf]
    %v68 = vld [vmem:[%s0 + $0x134] sm:$0xff]
    %v69 = vld [vmem:[%s0 + $0x13c] sm:$0xff]
    %v70 = vld [vmem:[%s0 + $0x144] sm:$0xff]
    %v71 = vld [vmem:[%s0 + $0x14c] sm:$0xf]
    %v72 = vld [vmem:[%s0 + $0x150] sm:$0xff]
    %v73 = vld [vmem:[%s0 + $0x158] sm:$0xff]
    %v74 = vld [vmem:[%s0 + $0x160] sm:$0xff]
    %v75 = vld [vmem:[%s0 + $0x168] sm:$0xf]
    %v76 = vld [vmem:[%s0 + $0x16c] sm:$0xff]
    %v77 = vld [vmem:[%s0 + $0x174] sm:$0xff]
    %v78 = vld [vmem:[%s0 + $0x17c] sm:$0xff]
    %v79 = vld [vmem:[%s0 + $0x184] sm:$0xf]
    %v80 = vld [vmem:[%s0 + $0x188] sm:$0xff]
    %v81 = vld [vmem:[%s0 + $0x190] sm:$0xff]
    %v82 = vld [vmem:[%s0 + $0x198] sm:$0xff]
    %v83 = vld [vmem:[%s0 + $0x1a0] sm:$0xf]
    %v84 = vld [vmem:[%s0 + $0x1a4] sm:$0xff]
    %v85 = vld [vmem:[%s0 + $0x1ac] sm:$0xff]
    %v86 = vld [vmem:[%s0 + $0x1b4] sm:$0xff]
    %v87 = vld [vmem:[%s0 + $0x1bc] sm:$0xf]
    %v88 = vld [vmem:[%s1] sm:$0xf]
    %v89 = vld [vmem:[%s1 + $0x4] sm:$0xf]
    %v90 = vld [vmem:[%s1 + $0x8] sm:$0xf]
    %v91 = vld [vmem:[%s1 + $0xc] sm:$0xf]
    %v92 = vld [vmem:[%s1 + $0x10] sm:$0xf]
    %v93 = vld [vmem:[%s1 + $0x14] sm:$0xf]
    %v94 = vld [vmem:[%s1 + $0x18] sm:$0xf]
    %v95 = vld [vmem:[%s1 + $0x1c] sm:$0xf]
    %v96 = vld [vmem:[%s1 + $0x20] sm:$0xf]
    %v97 = vld [vmem:[%s1 + $0x24] sm:$0xf]
    %v98 = vld [vmem:[%s1 + $0x28] sm:$0xf]
    %v99 = vld [vmem:[%s1 + $0x2c] sm:$0xf]
    %v100 = vld [vmem:[%s1 + $0x30] sm:$0xf]
    %v101 = vld [vmem:[%s1 + $0x34] sm:$0xf]
    %v102 = vld [vmem:[%s1 + $0x38] sm:$0xf]
    %v103 = vld [vmem:[%s1 + $0x3c] sm:$0xf]
    %v104 = vld [vmem:[%s1 + $0x40] sm:$0xf]
    %v105 = vld [vmem:[%s1 + $0x44] sm:$0xf]
    %v106 = vld [vmem:[%s1 + $0x48] sm:$0xf]
    %v107 = vld [vmem:[%s1 + $0x4c] sm:$0xf]
    %v108 = vld [vmem:[%s1 + $0x50] sm:$0xf]
    %v109 = vld [vmem:[%s1 + $0x54] sm:$0xf]
    %v110 = vld [vmem:[%s1 + $0x58] sm:$0xf]
    %v111 = vld [vmem:[%s1 + $0x5c] sm:$0xf]
    %v112 = vld [vmem:[%s1 + $0x60] sm:$0xf]
    %v113 = vld [vmem:[%s1 + $0x64] sm:$0xf]
    %v114 = vld [vmem:[%s1 + $0x68] sm:$0xf]
    %v115 = vld [vmem:[%s1 + $0x6c] sm:$0xf]
    %v116 = vld [vmem:[%s1 + $0x70] sm:$0xf]
    %v117 = vld [vmem:[%s1 + $0x74] sm:$0xf]
    %v118 = vld [vmem:[%s1 + $0x78] sm:$0xf]
    %v119 = vld [vmem:[%s1 + $0x7c] sm:$0xf]
    %v120 = vld [vmem:[%s1 + $0x80] sm:$0xf]
    %v121 = vld [vmem:[%s1 + $0x84] sm:$0xf]
    %v122 = vld [vmem:[%s1 + $0x88] sm:$0xf]
    %v123 = vld [vmem:[%s1 + $0x8c] sm:$0xf]
    %v124 = vld [vmem:[%s1 + $0x90] sm:$0xf]
    %v125 = vld [vmem:[%s1 + $0x94] sm:$0xf]
    %v126 = vld [vmem:[%s1 + $0x98] sm:$0xf]
    %v127 = vld [vmem:[%s1 + $0x9c] sm:$0xf]
    %v128 = vld [vmem:[%s1 + $0xa0] sm:$0xf]
    %v129 = vld [vmem:[%s1 + $0xa4] sm:$0xf]
    %v130 = vld [vmem:[%s1 + $0xa8] sm:$0xf]
    %v131 = vld [vmem:[%s1 + $0xac] sm:$0xf]
    %v132 = vld [vmem:[%s1 + $0xb0] sm:$0xf]
    %v133 = vld [vmem:[%s1 + $0xb4] sm:$0xf]
    %v134 = vld [vmem:[%s1 + $0xb8] sm:$0xf]
    %v135 = vld [vmem:[%s1 + $0xbc] sm:$0xf]
    %v136 = vld [vmem:[%s1 + $0xc0] sm:$0xf]
    %v137 = vld [vmem:[%s1 + $0xc4] sm:$0xf]
    %v138 = vld [vmem:[%s1 + $0xc8] sm:$0xf]
    %v139 = vld [vmem:[%s1 + $0xcc] sm:$0xf]
    %v140 = vld [vmem:[%s1 + $0xd0] sm:$0xf]
    %v141 = vld [vmem:[%s1 + $0xd4] sm:$0xf]
    %v142 = vld [vmem:[%s1 + $0xd8] sm:$0xf]
    %v143 = vld [vmem:[%s1 + $0xdc] sm:$0xf]
    %v144 = vld [vmem:[%s1 + $0xe0] sm:$0xf]
    %v145 = vld [vmem:[%s1 + $0xe4] sm:$0xf]
    %v146 = vld [vmem:[%s1 + $0xe8] sm:$0xf]
    %v147 = vld [vmem:[%s1 + $0xec] sm:$0xf]
    %v148 = vld [vmem:[%s1 + $0xf0] sm:$0xf]
    %v149 = vld [vmem:[%s1 + $0xf4] sm:$0xf]
    %v150 = vld [vmem:[%s1 + $0xf8] sm:$0xf]
    %v151 = vld [vmem:[%s1 + $0xfc] sm:$0xf]
    %v152 = vld [vmem:[%s1 + $0x100] sm:$0xf]
    %v153 = vld [vmem:[%s1 + $0x104] sm:$0xf]
    %v154 = vld [vmem:[%s1 + $0x108] sm:$0xf]
    %v155 = vld [vmem:[%s1 + $0x10c] sm:$0xf]
    %v156 = vld [vmem:[%s1 + $0x110] sm:$0xf]
    %v157 = vld [vmem:[%s1 + $0x114] sm:$0xf]
    %v158 = vld [vmem:[%s1 + $0x118] sm:$0xf]
    %v159 = vld [vmem:[%s1 + $0x11c] sm:$0xf]
    %v160 = vld [vmem:[%s1 + $0x120] sm:$0xf]
    %v161 = vld [vmem:[%s1 + $0x124] sm:$0xf]
    %v162 = vld [vmem:[%s1 + $0x128] sm:$0xf]
    %v163 = vld [vmem:[%s1 + $0x12c] sm:$0xf]
    %v164 = vld [vmem:[%s1 + $0x130] sm:$0xf]
    %v165 = vld [vmem:[%s1 + $0x134] sm:$0xf]
    %v166 = vld [vmem:[%s1 + $0x138] sm:$0xf]
    %v167 = vld [vmem:[%s1 + $0x13c] sm:$0xf]
    %v168 = vld [vmem:[%s1 + $0x140] sm:$0xf]
    %v169 = vld [vmem:[%s1 + $0x144] sm:$0xf]
    %v170 = vld [vmem:[%s1 + $0x148] sm:$0xf]
    %v171 = vld [vmem:[%s1 + $0x14c] sm:$0xf]
    %v172 = vld [vmem:[%s1 + $0x150] sm:$0xf]
    %v173 = vld [vmem:[%s1 + $0x154] sm:$0xf]
    %v174 = vld [vmem:[%s1 + $0x158] sm:$0xf]
    %v175 = vld [vmem:[%s1 + $0x15c] sm:$0xf]
    %v176 = vld [vmem:[%s1 + $0x160] sm:$0xf]
    %v177 = vld [vmem:[%s1 + $0x164] sm:$0xf]
    %v178 = vld [vmem:[%s1 + $0x168] sm:$0xf]
    %v179 = vld [vmem:[%s1 + $0x16c] sm:$0xf]
    %v180 = vld [vmem:[%s1 + $0x170] sm:$0xf]
    %v181 = vld [vmem:[%s1 + $0x174] sm:$0xf]
    %v182 = vld [vmem:[%s1 + $0x178] sm:$0xf]
    %v183 = vld [vmem:[%s1 + $0x17c] sm:$0xf]
    %v184 = vld [vmem:[%s1 + $0x180] sm:$0xf]
    %v185 = vld [vmem:[%s1 + $0x184] sm:$0xf]
    %v186 = vld [vmem:[%s1 + $0x188] sm:$0xf]
    %v187 = vld [vmem:[%s1 + $0x18c] sm:$0xf]
    %v188 = vld [vmem:[%s2] sm:$0x1]
    %v190 = vlaneseq
    %v191 = vshrl.u32 %v190, 7
    %v192 = vsub.s32 0, %v191
    %v193 = vrot.slane %v188, %v192
    %v259 = vunpack.c.l.b16 %v24
    %v260 = vunpack.c.h.b16 %v24
    %v261 = vunpack.c.l.b16 %v25
    %v262 = vunpack.c.h.b16 %v25
    %v263 = vunpack.c.l.b16 %v26
    %v264 = vunpack.c.h.b16 %v26
    %v265 = vunpack.c.l.b16 %v27
    %v266 = vunpack.c.l.b16 %v28
    %v267 = vunpack.c.h.b16 %v28
    %v268 = vunpack.c.l.b16 %v29
    %v269 = vunpack.c.h.b16 %v29
    %v270 = vunpack.c.l.b16 %v30
    %v271 = vunpack.c.h.b16 %v30
    %v272 = vunpack.c.l.b16 %v31
    %v273 = vunpack.c.l.b16 %v32
    %v274 = vunpack.c.h.b16 %v32
    %v275 = vunpack.c.l.b16 %v33
    %v276 = vunpack.c.h.b16 %v33
    %v277 = vunpack.c.l.b16 %v34
    %v278 = vunpack.c.h.b16 %v34
    %v279 = vunpack.c.l.b16 %v35
    %v280 = vunpack.c.l.b16 %v36
    %v281 = vunpack.c.h.b16 %v36
    %v282 = vunpack.c.l.b16 %v37
    %v283 = vunpack.c.h.b16 %v37
    %v284 = vunpack.c.l.b16 %v38
    %v285 = vunpack.c.h.b16 %v38
    %v286 = vunpack.c.l.b16 %v39
    %v287 = vunpack.c.l.b16 %v40
    %v288 = vunpack.c.h.b16 %v40
    %v289 = vunpack.c.l.b16 %v41
    %v290 = vunpack.c.h.b16 %v41
    %v291 = vunpack.c.l.b16 %v42
    %v292 = vunpack.c.h.b16 %v42
    %v293 = vunpack.c.l.b16 %v43
    %v294 = vunpack.c.l.b16 %v44
    %v295 = vunpack.c.h.b16 %v44
    %v296 = vunpack.c.l.b16 %v45
    %v297 = vunpack.c.h.b16 %v45
    %v298 = vunpack.c.l.b16 %v46
    %v299 = vunpack.c.h.b16 %v46
    %v300 = vunpack.c.l.b16 %v47
    %v301 = vunpack.c.l.b16 %v48
    %v302 = vunpack.c.h.b16 %v48
    %v303 = vunpack.c.l.b16 %v49
    %v304 = vunpack.c.h.b16 %v49
    %v305 = vunpack.c.l.b16 %v50
    %v306 = vunpack.c.h.b16 %v50
    %v307 = vunpack.c.l.b16 %v51
    %v308 = vunpack.c.l.b16 %v52
    %v309 = vunpack.c.h.b16 %v52
    %v310 = vunpack.c.l.b16 %v53
    %v311 = vunpack.c.h.b16 %v53
    %v312 = vunpack.c.l.b16 %v54
    %v313 = vunpack.c.h.b16 %v54
    %v314 = vunpack.c.l.b16 %v55
    %v315 = vunpack.c.l.b16 %v56
    %v316 = vunpack.c.h.b16 %v56
    %v317 = vunpack.c.l.b16 %v57
    %v318 = vunpack.c.h.b16 %v57
    %v319 = vunpack.c.l.b16 %v58
    %v320 = vunpack.c.h.b16 %v58
    %v321 = vunpack.c.l.b16 %v59
    %v322 = vunpack.c.l.b16 %v60
    %v323 = vunpack.c.h.b16 %v60
    %v324 = vunpack.c.l.b16 %v61
    %v325 = vunpack.c.h.b16 %v61
    %v326 = vunpack.c.l.b16 %v62
    %v327 = vunpack.c.h.b16 %v62
    %v328 = vunpack.c.l.b16 %v63
    %v329 = vunpack.c.l.b16 %v64
    %v330 = vunpack.c.h.b16 %v64
    %v331 = vunpack.c.l.b16 %v65
    %v332 = vunpack.c.h.b16 %v65
    %v333 = vunpack.c.l.b16 %v66
    %v334 = vunpack.c.h.b16 %v66
    %v335 = vunpack.c.l.b16 %v67
    %v336 = vunpack.c.l.b16 %v68
    %v337 = vunpack.c.h.b16 %v68
    %v338 = vunpack.c.l.b16 %v69
    %v339 = vunpack.c.h.b16 %v69
    %v340 = vunpack.c.l.b16 %v70
    %v341 = vunpack.c.h.b16 %v70
    %v342 = vunpack.c.l.b16 %v71
    %v343 = vunpack.c.l.b16 %v72
    %v344 = vunpack.c.h.b16 %v72
    %v345 = vunpack.c.l.b16 %v73
    %v346 = vunpack.c.h.b16 %v73
    %v347 = vunpack.c.l.b16 %v74
    %v348 = vunpack.c.h.b16 %v74
    %v349 = vunpack.c.l.b16 %v75
    %v350 = vunpack.c.l.b16 %v76
    %v351 = vunpack.c.h.b16 %v76
    %v352 = vunpack.c.l.b16 %v77
    %v353 = vunpack.c.h.b16 %v77
    %v354 = vunpack.c.l.b16 %v78
    %v355 = vunpack.c.h.b16 %v78
    %v356 = vunpack.c.l.b16 %v79
    %v357 = vunpack.c.l.b16 %v80
    %v358 = vunpack.c.h.b16 %v80
    %v359 = vunpack.c.l.b16 %v81
    %v360 = vunpack.c.h.b16 %v81
    %v361 = vunpack.c.l.b16 %v82
    %v362 = vunpack.c.h.b16 %v82
    %v363 = vunpack.c.l.b16 %v83
    %v364 = vunpack.c.l.b16 %v84
    %v365 = vunpack.c.h.b16 %v84
    %v366 = vunpack.c.l.b16 %v85
    %v367 = vunpack.c.h.b16 %v85
    %v368 = vunpack.c.l.b16 %v86
    %v369 = vunpack.c.h.b16 %v86
    %v370 = vunpack.c.l.b16 %v87
    %v371 = vpack.c.b16 %v266, %v259
    %v372 = vpack.c.b16 %v267, %v260
    %v373 = vpack.c.b16 %v268, %v261
    %v374 = vpack.c.b16 %v269, %v262
    %v375 = vpack.c.b16 %v270, %v263
    %v376 = vpack.c.b16 %v271, %v264
    %v377 = vpack.c.b16 %v272, %v265
    %v378 = vpack.c.b16 %v280, %v273
    %v379 = vpack.c.b16 %v281, %v274
    %v380 = vpack.c.b16 %v282, %v275
    %v381 = vpack.c.b16 %v283, %v276
    %v382 = vpack.c.b16 %v284, %v277
    %v383 = vpack.c.b16 %v285, %v278
    %v384 = vpack.c.b16 %v286, %v279
    %v385 = vpack.c.b16 %v294, %v287
    %v386 = vpack.c.b16 %v295, %v288
    %v387 = vpack.c.b16 %v296, %v289
    %v388 = vpack.c.b16 %v297, %v290
    %v389 = vpack.c.b16 %v298, %v291
    %v390 = vpack.c.b16 %v299, %v292
    %v391 = vpack.c.b16 %v300, %v293
    %v392 = vpack.c.b16 %v308, %v301
    %v393 = vpack.c.b16 %v309, %v302
    %v394 = vpack.c.b16 %v310, %v303
    %v395 = vpack.c.b16 %v311, %v304
    %v396 = vpack.c.b16 %v312, %v305
    %v397 = vpack.c.b16 %v313, %v306
    %v398 = vpack.c.b16 %v314, %v307
    %v399 = vpack.c.b16 %v322, %v315
    %v400 = vpack.c.b16 %v323, %v316
    %v401 = vpack.c.b16 %v324, %v317
    %v402 = vpack.c.b16 %v325, %v318
    %v403 = vpack.c.b16 %v326, %v319
    %v404 = vpack.c.b16 %v327, %v320
    %v405 = vpack.c.b16 %v328, %v321
    %v406 = vpack.c.b16 %v336, %v329
    %v407 = vpack.c.b16 %v337, %v330
    %v408 = vpack.c.b16 %v338, %v331
    %v409 = vpack.c.b16 %v339, %v332
    %v410 = vpack.c.b16 %v340, %v333
    %v411 = vpack.c.b16 %v341, %v334
    %v412 = vpack.c.b16 %v342, %v335
    %v413 = vpack.c.b16 %v350, %v343
    %v414 = vpack.c.b16 %v351, %v344
    %v415 = vpack.c.b16 %v352, %v345
    %v416 = vpack.c.b16 %v353, %v346
    %v417 = vpack.c.b16 %v354, %v347
    %v418 = vpack.c.b16 %v355, %v348
    %v419 = vpack.c.b16 %v356, %v349
    %v420 = vpack.c.b16 %v364, %v357
    %v421 = vpack.c.b16 %v365, %v358
    %v422 = vpack.c.b16 %v366, %v359
    %v423 = vpack.c.b16 %v367, %v360
    %v424 = vpack.c.b16 %v368, %v361
    %v425 = vpack.c.b16 %v369, %v362
    %v426 = vpack.c.b16 %v370, %v363
    %v575 = vunpack.c.l.b16 %v88
    %v576 = vunpack.c.l.b16 %v89
    %v577 = vunpack.c.l.b16 %v90
    %v578 = vunpack.c.l.b16 %v91
    %v579 = vunpack.c.l.b16 %v92
    %v580 = vunpack.c.l.b16 %v93
    %v581 = vunpack.c.l.b16 %v94
    %v582 = vunpack.c.l.b16 %v95
    %v583 = vunpack.c.l.b16 %v96
    %v584 = vunpack.c.l.b16 %v97
    %v585 = vunpack.c.l.b16 %v98
    %v586 = vunpack.c.l.b16 %v99
    %v587 = vunpack.c.l.b16 %v100
    %v588 = vunpack.c.l.b16 %v101
    %v589 = vunpack.c.l.b16 %v102
    %v590 = vunpack.c.l.b16 %v103
    %v591 = vunpack.c.l.b16 %v104
    %v592 = vunpack.c.l.b16 %v105
    %v593 = vunpack.c.l.b16 %v106
    %v594 = vunpack.c.l.b16 %v107
    %v595 = vunpack.c.l.b16 %v108
    %v596 = vunpack.c.l.b16 %v109
    %v597 = vunpack.c.l.b16 %v110
    %v598 = vunpack.c.l.b16 %v111
    %v599 = vunpack.c.l.b16 %v112
    %v600 = vunpack.c.l.b16 %v113
    %v601 = vunpack.c.l.b16 %v114
    %v602 = vunpack.c.l.b16 %v115
    %v603 = vunpack.c.l.b16 %v116
    %v604 = vunpack.c.l.b16 %v117
    %v605 = vunpack.c.l.b16 %v118
    %v606 = vunpack.c.l.b16 %v119
    %v607 = vunpack.c.l.b16 %v120
    %v608 = vunpack.c.l.b16 %v121
    %v609 = vunpack.c.l.b16 %v122
    %v610 = vunpack.c.l.b16 %v123
    %v611 = vunpack.c.l.b16 %v124
    %v612 = vunpack.c.l.b16 %v125
    %v613 = vunpack.c.l.b16 %v126
    %v614 = vunpack.c.l.b16 %v127
    %v615 = vunpack.c.l.b16 %v128
    %v616 = vunpack.c.l.b16 %v129
    %v617 = vunpack.c.l.b16 %v130
    %v618 = vunpack.c.l.b16 %v131
    %v619 = vunpack.c.l.b16 %v132
    %v620 = vunpack.c.l.b16 %v133
    %v621 = vunpack.c.l.b16 %v134
    %v622 = vunpack.c.l.b16 %v135
    %v623 = vunpack.c.l.b16 %v136
    %v624 = vunpack.c.l.b16 %v137
    %v625 = vunpack.c.l.b16 %v138
    %v626 = vunpack.c.l.b16 %v139
    %v627 = vunpack.c.l.b16 %v140
    %v628 = vunpack.c.l.b16 %v141
    %v629 = vunpack.c.l.b16 %v142
    %v630 = vunpack.c.l.b16 %v143
    %v631 = vunpack.c.l.b16 %v144
    %v632 = vunpack.c.l.b16 %v145
    %v633 = vunpack.c.l.b16 %v146
    %v634 = vunpack.c.l.b16 %v147
    %v635 = vunpack.c.l.b16 %v148
    %v636 = vunpack.c.l.b16 %v149
    %v637 = vunpack.c.l.b16 %v150
    %v638 = vunpack.c.l.b16 %v151
    %v639 = vunpack.c.l.b16 %v152
    %v640 = vunpack.c.l.b16 %v153
    %v641 = vunpack.c.l.b16 %v154
    %v642 = vunpack.c.l.b16 %v155
    %v643 = vunpack.c.l.b16 %v156
    %v644 = vunpack.c.l.b16 %v157
    %v645 = vunpack.c.l.b16 %v158
    %v646 = vunpack.c.l.b16 %v159
    %v647 = vunpack.c.l.b16 %v160
    %v648 = vunpack.c.l.b16 %v161
    %v649 = vunpack.c.l.b16 %v162
    %v650 = vunpack.c.l.b16 %v163
    %v651 = vunpack.c.l.b16 %v164
    %v652 = vunpack.c.l.b16 %v165
    %v653 = vunpack.c.l.b16 %v166
    %v654 = vunpack.c.l.b16 %v167
    %v655 = vunpack.c.l.b16 %v168
    %v656 = vunpack.c.l.b16 %v169
    %v657 = vunpack.c.l.b16 %v170
    %v658 = vunpack.c.l.b16 %v171
    %v659 = vunpack.c.l.b16 %v172
    %v660 = vunpack.c.l.b16 %v173
    %v661 = vunpack.c.l.b16 %v174
    %v662 = vunpack.c.l.b16 %v175
    %v663 = vunpack.c.l.b16 %v176
    %v664 = vunpack.c.l.b16 %v177
    %v665 = vunpack.c.l.b16 %v178
    %v666 = vunpack.c.l.b16 %v179
    %v667 = vunpack.c.l.b16 %v180
    %v668 = vunpack.c.l.b16 %v181
    %v669 = vunpack.c.l.b16 %v182
    %v670 = vunpack.c.l.b16 %v183
    %v671 = vunpack.c.l.b16 %v184
    %v672 = vunpack.c.l.b16 %v185
    %v673 = vunpack.c.l.b16 %v186
    %v674 = vunpack.c.l.b16 %v187
    %v675 = vpack.c.b16 %v576, %v575
    %v676 = vpack.c.b16 %v578, %v577
    %v677 = vpack.c.b16 %v580, %v579
    %v678 = vpack.c.b16 %v582, %v581
    %v679 = vpack.c.b16 %v584, %v583
    %v680 = vpack.c.b16 %v586, %v585
    %v681 = vpack.c.b16 %v588, %v587
    %v682 = vpack.c.b16 %v590, %v589
    %v683 = vpack.c.b16 %v592, %v591
    %v684 = vpack.c.b16 %v594, %v593
    %v685 = vpack.c.b16 %v596, %v595
    %v686 = vpack.c.b16 %v598, %v597
    %v687 = vpack.c.b16 %v600, %v599
    %v688 = vpack.c.b16 %v602, %v601
    %v689 = vpack.c.b16 %v604, %v603
    %v690 = vpack.c.b16 %v606, %v605
    %v691 = vpack.c.b16 %v608, %v607
    %v692 = vpack.c.b16 %v610, %v609
    %v693 = vpack.c.b16 %v612, %v611
    %v694 = vpack.c.b16 %v614, %v613
    %v695 = vpack.c.b16 %v616, %v615
    %v696 = vpack.c.b16 %v618, %v617
    %v697 = vpack.c.b16 %v620, %v619
    %v698 = vpack.c.b16 %v622, %v621
    %v699 = vpack.c.b16 %v624, %v623
    %v700 = vpack.c.b16 %v626, %v625
    %v701 = vpack.c.b16 %v628, %v627
    %v702 = vpack.c.b16 %v630, %v629
    %v703 = vpack.c.b16 %v632, %v631
    %v704 = vpack.c.b16 %v634, %v633
    %v705 = vpack.c.b16 %v636, %v635
    %v706 = vpack.c.b16 %v638, %v637
    %v707 = vpack.c.b16 %v640, %v639
    %v708 = vpack.c.b16 %v642, %v641
    %v709 = vpack.c.b16 %v644, %v643
    %v710 = vpack.c.b16 %v646, %v645
    %v711 = vpack.c.b16 %v648, %v647
    %v712 = vpack.c.b16 %v650, %v649
    %v713 = vpack.c.b16 %v652, %v651
    %v714 = vpack.c.b16 %v654, %v653
    %v715 = vpack.c.b16 %v656, %v655
    %v716 = vpack.c.b16 %v658, %v657
    %v717 = vpack.c.b16 %v660, %v659
    %v718 = vpack.c.b16 %v662, %v661
    %v719 = vpack.c.b16 %v664, %v663
    %v720 = vpack.c.b16 %v666, %v665
    %v721 = vpack.c.b16 %v668, %v667
    %v722 = vpack.c.b16 %v670, %v669
    %v723 = vpack.c.b16 %v672, %v671
    %v724 = vpack.c.b16 %v674, %v673
    %vm775 = vcmask 261120
    %v777 = vsel %vm775, %v377, 0
    %v780 = vsel %vm775, %v384, 0
    %v783 = vsel %vm775, %v391, 0
    %v786 = vsel %vm775, %v398, 0
    %v789 = vsel %vm775, %v405, 0
    %v792 = vsel %vm775, %v412, 0
    %v795 = vsel %vm775, %v419, 0
    %v798 = vsel %vm775, %v426, 0
    %800 = vmatprep.subr.bf16.mxu0 0
    %801 = vmatpush1.bf16.msra.mxu0 %v675
    %802 = vmatprep.subr.bf16.mxu0 0
    %803 = vmatpush1.bf16.msra.mxu0 %v676
    %804 = vmatprep.subr.bf16.mxu0 0
    %805 = vmatpush1.bf16.msra.mxu0 %v677
    %806 = vmatprep.subr.bf16.mxu0 0
    %807 = vmatpush1.bf16.msra.mxu0 %v678
    %808 = vmatprep.subr.bf16.mxu0 0
    %809 = vmatpush1.bf16.msra.mxu0 %v679
    %810 = vmatprep.subr.bf16.mxu0 0
    %811 = vmatpush1.bf16.msra.mxu0 %v680
    %812 = vmatprep.subr.bf16.mxu0 0
    %813 = vmatpush1.bf16.msra.mxu0 %v681
    %814 = vmatprep.subr.bf16.mxu0 0
    %815 = vmatpush1.bf16.msra.mxu0 %v682
    %816 = vmatprep.subr.bf16.mxu0 0
    %817 = vmatpush1.bf16.msra.mxu0 %v683
    %818 = vmatprep.subr.bf16.mxu0 0
    %819 = vmatpush1.bf16.msra.mxu0 %v684
    %820 = vmatprep.subr.bf16.mxu0 0
    %821 = vmatpush1.bf16.msra.mxu0 %v685
    %822 = vmatprep.subr.bf16.mxu0 0
    %823 = vmatpush1.bf16.msra.mxu0 %v686
    %824 = vmatprep.subr.bf16.mxu0 0
    %825 = vmatpush1.bf16.msra.mxu0 %v687
    %826 = vmatprep.subr.bf16.mxu0 0
    %827 = vmatpush1.bf16.msra.mxu0 %v688
    %828 = vmatprep.subr.bf16.mxu0 0
    %829 = vmatpush1.bf16.msra.mxu0 %v689
    %830 = vmatprep.subr.bf16.mxu0 0
    %831 = vmatpush1.bf16.msra.mxu0 %v690
    %832 = vmatprep.mubr.bf16.mxu0 %v372
    %833 = vmatmul.mubr.bf16.gmra.mrb[0].mxu0 %v371
    %v834 = vpop.f32.mrb[0].mxu0
    %v835 = vadd.f32 %v193, %v834
    %v836 = vpop.f32.mrb[0].mxu0
    %v837 = vpop.f32.mrb[0].mxu0
    %v838 = vadd.f32 %v193, %v837
    %v839 = vpop.f32.mrb[0].mxu0
    %840 = vmatprep.mubr.bf16.mxu0 %v379
    %841 = vmatmul.mubr.bf16.gmra.mrb[0].mxu0 %v378
    %v842 = vpop.f32.mrb[0].mxu0
    %v843 = vadd.f32 %v193, %v842
    %v844 = vpop.f32.mrb[0].mxu0
    %v845 = vpop.f32.mrb[0].mxu0
    %v846 = vadd.f32 %v193, %v845
    %v847 = vpop.f32.mrb[0].mxu0
    %848 = vmatprep.mubr.bf16.mxu0 %v386
    %849 = vmatmul.mubr.bf16.gmra.mrb[0].mxu0 %v385
    %v850 = vpop.f32.mrb[0].mxu0
    %v851 = vadd.f32 %v193, %v850
    %v852 = vpop.f32.mrb[0].mxu0
    %v853 = vpop.f32.mrb[0].mxu0
    %v854 = vadd.f32 %v193, %v853
    %v855 = vpop.f32.mrb[0].mxu0
    %856 = vmatprep.mubr.bf16.mxu0 %v393
    %857 = vmatmul.mubr.bf16.gmra.mrb[0].mxu0 %v392
    %v858 = vpop.f32.mrb[0].mxu0
    %v859 = vadd.f32 %v193, %v858
    %v860 = vpop.f32.mrb[0].mxu0
    %v861 = vpop.f32.mrb[0].mxu0
    %v862 = vadd.f32 %v193, %v861
    %v863 = vpop.f32.mrb[0].mxu0
    %864 = vmatprep.mubr.bf16.mxu0 %v400
    %865 = vmatmul.mubr.bf16.gmra.mrb[0].mxu0 %v399
    %v866 = vpop.f32.mrb[0].mxu0
    %v867 = vadd.f32 %v193, %v866
    %v868 = vpop.f32.mrb[0].mxu0
    %v869 = vpop.f32.mrb[0].mxu0
    %v870 = vadd.f32 %v193, %v869
    %v871 = vpop.f32.mrb[0].mxu0
    %872 = vmatprep.mubr.bf16.mxu0 %v407
    %873 = vmatmul.mubr.bf16.gmra.mrb[0].mxu0 %v406
    %v874 = vpop.f32.mrb[0].mxu0
    %v875 = vadd.f32 %v193, %v874
    %v876 = vpop.f32.mrb[0].mxu0
    %v877 = vpop.f32.mrb[0].mxu0
    %v878 = vadd.f32 %v193, %v877
    %v879 = vpop.f32.mrb[0].mxu0
    %880 = vmatprep.mubr.bf16.mxu0 %v414
    %881 = vmatmul.mubr.bf16.gmra.mrb[0].mxu0 %v413
    %v882 = vpop.f32.mrb[0].mxu0
    %v883 = vadd.f32 %v193, %v882
    %v884 = vpop.f32.mrb[0].mxu0
    %v885 = vpop.f32.mrb[0].mxu0
    %v886 = vadd.f32 %v193, %v885
    %v887 = vpop.f32.mrb[0].mxu0
    %888 = vmatprep.mubr.bf16.mxu0 %v421
    %889 = vmatmul.mubr.bf16.gmra.mrb[0].mxu0 %v420
    %v890 = vpop.f32.mrb[0].mxu0
    %v891 = vadd.f32 %v193, %v890
    %v892 = vpop.f32.mrb[0].mxu0
    %v893 = vpop.f32.mrb[0].mxu0
    %v894 = vadd.f32 %v193, %v893
    %v895 = vpop.f32.mrb[0].mxu0
    %896 = vdwg.mxu0
    %897 = vmatprep.subr.bf16.mxu0 0
    %898 = vmatpush1.bf16.msra.mxu0 %v691
    %899 = vmatprep.subr.bf16.mxu0 0
    %900 = vmatpush1.bf16.msra.mxu0 %v692
    %901 = vmatprep.subr.bf16.mxu0 0
    %902 = vmatpush1.bf16.msra.mxu0 %v693
    %903 = vmatprep.subr.bf16.mxu0 0
    %904 = vmatpush1.bf16.msra.mxu0 %v694
    %905 = vmatprep.subr.bf16.mxu0 0
    %906 = vmatpush1.bf16.msra.mxu0 %v695
    %907 = vmatprep.subr.bf16.mxu0 0
    %908 = vmatpush1.bf16.msra.mxu0 %v696
    %909 = vmatprep.subr.bf16.mxu0 0
    %910 = vmatpush1.bf16.msra.mxu0 %v697
    %911 = vmatprep.subr.bf16.mxu0 0
    %912 = vmatpush1.bf16.msra.mxu0 %v698
    %913 = vmatprep.subr.bf16.mxu0 0
    %914 = vmatpush1.bf16.msra.mxu0 %v699
    %915 = vmatprep.subr.bf16.mxu0 0
    %916 = vmatpush1.bf16.msra.mxu0 %v700
    %917 = vmatprep.subr.bf16.mxu0 0
    %918 = vmatpush1.bf16.msra.mxu0 %v701
    %919 = vmatprep.subr.bf16.mxu0 0
    %920 = vmatpush1.bf16.msra.mxu0 %v702
    %921 = vmatprep.subr.bf16.mxu0 0
    %922 = vmatpush1.bf16.msra.mxu0 %v703
    %923 = vmatprep.subr.bf16.mxu0 0
    %924 = vmatpush1.bf16.msra.mxu0 %v704
    %925 = vmatprep.subr.bf16.mxu0 0
    %926 = vmatpush1.bf16.msra.mxu0 %v705
    %927 = vmatprep.subr.bf16.mxu0 0
    %928 = vmatpush1.bf16.msra.mxu0 %v706
    %929 = vmatprep.mubr.bf16.mxu0 %v374
    %930 = vmatmul.mubr.bf16.gmra.mrb[0].mxu0 %v373
    %v931 = vpop.f32.mrb[0].mxu0
    %v932 = vadd.f32 %v835, %v931
    %v933 = vpop.f32.mrb[0].mxu0
    %v934 = vpop.f32.mrb[0].mxu0
    %v935 = vadd.f32 %v838, %v934
    %v936 = vpop.f32.mrb[0].mxu0
    %937 = vmatprep.mubr.bf16.mxu0 %v381
    %938 = vmatmul.mubr.bf16.gmra.mrb[0].mxu0 %v380
    %v939 = vpop.f32.mrb[0].mxu0
    %v940 = vadd.f32 %v843, %v939
    %v941 = vpop.f32.mrb[0].mxu0
    %v942 = vpop.f32.mrb[0].mxu0
    %v943 = vadd.f32 %v846, %v942
    %v944 = vpop.f32.mrb[0].mxu0
    %945 = vmatprep.mubr.bf16.mxu0 %v388
    %946 = vmatmul.mubr.bf16.gmra.mrb[0].mxu0 %v387
    %v947 = vpop.f32.mrb[0].mxu0
    %v948 = vadd.f32 %v851, %v947
    %v949 = vpop.f32.mrb[0].mxu0
    %v950 = vpop.f32.mrb[0].mxu0
    %v951 = vadd.f32 %v854, %v950
    %v952 = vpop.f32.mrb[0].mxu0
    %953 = vmatprep.mubr.bf16.mxu0 %v395
    %954 = vmatmul.mubr.bf16.gmra.mrb[0].mxu0 %v394
    %v955 = vpop.f32.mrb[0].mxu0
    %v956 = vadd.f32 %v859, %v955
    %v957 = vpop.f32.mrb[0].mxu0
    %v958 = vpop.f32.mrb[0].mxu0
    %v959 = vadd.f32 %v862, %v958
    %v960 = vpop.f32.mrb[0].mxu0
    %961 = vmatprep.mubr.bf16.mxu0 %v402
    %962 = vmatmul.mubr.bf16.gmra.mrb[0].mxu0 %v401
    %v963 = vpop.f32.mrb[0].mxu0
    %v964 = vadd.f32 %v867, %v963
    %v965 = vpop.f32.mrb[0].mxu0
    %v966 = vpop.f32.mrb[0].mxu0
    %v967 = vadd.f32 %v870, %v966
    %v968 = vpop.f32.mrb[0].mxu0
    %969 = vmatprep.mubr.bf16.mxu0 %v409
    %970 = vmatmul.mubr.bf16.gmra.mrb[0].mxu0 %v408
    %v971 = vpop.f32.mrb[0].mxu0
    %v972 = vadd.f32 %v875, %v971
    %v973 = vpop.f32.mrb[0].mxu0
    %v974 = vpop.f32.mrb[0].mxu0
    %v975 = vadd.f32 %v878, %v974
    %v976 = vpop.f32.mrb[0].mxu0
    %977 = vmatprep.mubr.bf16.mxu0 %v416
    %978 = vmatmul.mubr.bf16.gmra.mrb[0].mxu0 %v415
    %v979 = vpop.f32.mrb[0].mxu0
    %v980 = vadd.f32 %v883, %v979
    %v981 = vpop.f32.mrb[0].mxu0
    %v982 = vpop.f32.mrb[0].mxu0
    %v983 = vadd.f32 %v886, %v982
    %v984 = vpop.f32.mrb[0].mxu0
    %985 = vmatprep.mubr.bf16.mxu0 %v423
    %986 = vmatmul.mubr.bf16.gmra.mrb[0].mxu0 %v422
    %v987 = vpop.f32.mrb[0].mxu0
    %v988 = vadd.f32 %v891, %v987
    %v989 = vpop.f32.mrb[0].mxu0
    %v990 = vpop.f32.mrb[0].mxu0
    %v991 = vadd.f32 %v894, %v990
    %v992 = vpop.f32.mrb[0].mxu0
    %993 = vdwg.mxu0
    %994 = vmatprep.subr.bf16.mxu0 0
    %995 = vmatpush1.bf16.msra.mxu0 %v707
    %996 = vmatprep.subr.bf16.mxu0 0
    %997 = vmatpush1.bf16.msra.mxu0 %v708
    %998 = vmatprep.subr.bf16.mxu0 0
    %999 = vmatpush1.bf16.msra.mxu0 %v709
    %1000 = vmatprep.subr.bf16.mxu0 0
    %1001 = vmatpush1.bf16.msra.mxu0 %v710
    %1002 = vmatprep.subr.bf16.mxu0 0
    %1003 = vmatpush1.bf16.msra.mxu0 %v711
    %1004 = vmatprep.subr.bf16.mxu0 0
    %1005 = vmatpush1.bf16.msra.mxu0 %v712
    %1006 = vmatprep.subr.bf16.mxu0 0
    %1007 = vmatpush1.bf16.msra.mxu0 %v713
    %1008 = vmatprep.subr.bf16.mxu0 0
    %1009 = vmatpush1.bf16.msra.mxu0 %v714
    %1010 = vmatprep.subr.bf16.mxu0 0
    %1011 = vmatpush1.bf16.msra.mxu0 %v715
    %1012 = vmatprep.subr.bf16.mxu0 0
    %1013 = vmatpush1.bf16.msra.mxu0 %v716
    %1014 = vmatprep.subr.bf16.mxu0 0
    %1015 = vmatpush1.bf16.msra.mxu0 %v717
    %1016 = vmatprep.subr.bf16.mxu0 0
    %1017 = vmatpush1.bf16.msra.mxu0 %v718
    %1018 = vmatprep.subr.bf16.mxu0 0
    %1019 = vmatpush1.bf16.msra.mxu0 %v719
    %1020 = vmatprep.subr.bf16.mxu0 0
    %1021 = vmatpush1.bf16.msra.mxu0 %v720
    %1022 = vmatprep.subr.bf16.mxu0 0
    %1023 = vmatpush1.bf16.msra.mxu0 %v721
    %1024 = vmatprep.subr.bf16.mxu0 0
    %1025 = vmatpush1.bf16.msra.mxu0 %v722
    %1026 = vmatprep.mubr.bf16.mxu0 %v376
    %1027 = vmatmul.mubr.bf16.gmra.mrb[0].mxu0 %v375
    %v1028 = vpop.f32.mrb[0].mxu0
    %v1029 = vadd.f32 %v932, %v1028
    %v1030 = vpop.f32.mrb[0].mxu0
    %v1031 = vpop.f32.mrb[0].mxu0
    %v1032 = vadd.f32 %v935, %v1031
    %v1033 = vpop.f32.mrb[0].mxu0
    %1034 = vmatprep.mubr.bf16.mxu0 %v383
    %1035 = vmatmul.mubr.bf16.gmra.mrb[0].mxu0 %v382
    %v1036 = vpop.f32.mrb[0].mxu0
    %v1037 = vadd.f32 %v940, %v1036
    %v1038 = vpop.f32.mrb[0].mxu0
    %v1039 = vpop.f32.mrb[0].mxu0
    %v1040 = vadd.f32 %v943, %v1039
    %v1041 = vpop.f32.mrb[0].mxu0
    %1042 = vmatprep.mubr.bf16.mxu0 %v390
    %1043 = vmatmul.mubr.bf16.gmra.mrb[0].mxu0 %v389
    %v1044 = vpop.f32.mrb[0].mxu0
    %v1045 = vadd.f32 %v948, %v1044
    %v1046 = vpop.f32.mrb[0].mxu0
    %v1047 = vpop.f32.mrb[0].mxu0
    %v1048 = vadd.f32 %v951, %v1047
    %v1049 = vpop.f32.mrb[0].mxu0
    %1050 = vmatprep.mubr.bf16.mxu0 %v397
    %1051 = vmatmul.mubr.bf16.gmra.mrb[0].mxu0 %v396
    %v1052 = vpop.f32.mrb[0].mxu0
    %v1053 = vadd.f32 %v956, %v1052
    %v1054 = vpop.f32.mrb[0].mxu0
    %v1055 = vpop.f32.mrb[0].mxu0
    %v1056 = vadd.f32 %v959, %v1055
    %v1057 = vpop.f32.mrb[0].mxu0
    %1058 = vmatprep.mubr.bf16.mxu0 %v404
    %1059 = vmatmul.mubr.bf16.gmra.mrb[0].mxu0 %v403
    %v1060 = vpop.f32.mrb[0].mxu0
    %v1061 = vadd.f32 %v964, %v1060
    %v1062 = vpop.f32.mrb[0].mxu0
    %v1063 = vpop.f32.mrb[0].mxu0
    %v1064 = vadd.f32 %v967, %v1063
    %v1065 = vpop.f32.mrb[0].mxu0
    %1066 = vmatprep.mubr.bf16.mxu0 %v411
    %1067 = vmatmul.mubr.bf16.gmra.mrb[0].mxu0 %v410
    %v1068 = vpop.f32.mrb[0].mxu0
    %v1069 = vadd.f32 %v972, %v1068
    %v1070 = vpop.f32.mrb[0].mxu0
    %v1071 = vpop.f32.mrb[0].mxu0
    %v1072 = vadd.f32 %v975, %v1071
    %v1073 = vpop.f32.mrb[0].mxu0
    %1074 = vmatprep.mubr.bf16.mxu0 %v418
    %1075 = vmatmul.mubr.bf16.gmra.mrb[0].mxu0 %v417
    %v1076 = vpop.f32.mrb[0].mxu0
    %v1077 = vadd.f32 %v980, %v1076
    %v1078 = vpop.f32.mrb[0].mxu0
    %v1079 = vpop.f32.mrb[0].mxu0
    %v1080 = vadd.f32 %v983, %v1079
    %v1081 = vpop.f32.mrb[0].mxu0
    %1082 = vmatprep.mubr.bf16.mxu0 %v425
    %1083 = vmatmul.mubr.bf16.gmra.mrb[0].mxu0 %v424
    %v1084 = vpop.f32.mrb[0].mxu0
    %v1085 = vadd.f32 %v988, %v1084
    %v1086 = vpop.f32.mrb[0].mxu0
    %v1087 = vpop.f32.mrb[0].mxu0
    %v1088 = vadd.f32 %v991, %v1087
    %v1089 = vpop.f32.mrb[0].mxu0
    %1090 = vdwg.mxu0
    %1091 = vmatprep.subr.bf16.mxu0 0
    %1092 = vmatpush1.bf16.msra.mxu0 %v723
    %1093 = vmatprep.subr.bf16.mxu0 0
    %1094 = vmatpush1.bf16.msra.mxu0 %v724
    %1095 = vmatprep.subr.bf16.mxu0 0
    %1096 = vmatpush1.bf16.msra.mxu0 0
    %1097 = vmatprep.subr.bf16.mxu0 0
    %1098 = vmatpush1.bf16.msra.mxu0 0
    %1099 = vmatprep.subr.bf16.mxu0 0
    %1100 = vmatpush1.bf16.msra.mxu0 0
    %1101 = vmatprep.subr.bf16.mxu0 0
    %1102 = vmatpush1.bf16.msra.mxu0 0
    %1103 = vmatprep.subr.bf16.mxu0 0
    %1104 = vmatpush1.bf16.msra.mxu0 0
    %1105 = vmatprep.subr.bf16.mxu0 0
    %1106 = vmatpush1.bf16.msra.mxu0 0
    %1107 = vmatprep.subr.bf16.mxu0 0
    %1108 = vmatpush1.bf16.msra.mxu0 0
    %1109 = vmatprep.subr.bf16.mxu0 0
    %1110 = vmatpush1.bf16.msra.mxu0 0
    %1111 = vmatprep.subr.bf16.mxu0 0
    %1112 = vmatpush1.bf16.msra.mxu0 0
    %1113 = vmatprep.subr.bf16.mxu0 0
    %1114 = vmatpush1.bf16.msra.mxu0 0
    %1115 = vmatprep.subr.bf16.mxu0 0
    %1116 = vmatpush1.bf16.msra.mxu0 0
    %1117 = vmatprep.subr.bf16.mxu0 0
    %1118 = vmatpush1.bf16.msra.mxu0 0
    %1119 = vmatprep.subr.bf16.mxu0 0
    %1120 = vmatpush1.bf16.msra.mxu0 0
    %1121 = vmatprep.subr.bf16.mxu0 0
    %1122 = vmatpush1.bf16.msra.mxu0 0
    %1123 = vmatprep.mubr.bf16.mxu0 0
    %1124 = vmatmul.mubr.bf16.gmra.mrb[0].mxu0 %v777
    %v1125 = vpop.f32.mrb[0].mxu0
    %v1126 = vadd.f32 %v1029, %v1125
    %v1127 = vpop.f32.mrb[0].mxu0
    %v1128 = vpop.f32.mrb[0].mxu0
    %v1129 = vadd.f32 %v1032, %v1128
    %v1130 = vpop.f32.mrb[0].mxu0
    %1131 = vmatprep.mubr.bf16.mxu0 0
    %1132 = vmatmul.mubr.bf16.gmra.mrb[0].mxu0 %v780
    %v1133 = vpop.f32.mrb[0].mxu0
    %v1134 = vadd.f32 %v1037, %v1133
    %v1135 = vpop.f32.mrb[0].mxu0
    %v1136 = vpop.f32.mrb[0].mxu0
    %v1137 = vadd.f32 %v1040, %v1136
    %v1138 = vpop.f32.mrb[0].mxu0
    %1139 = vmatprep.mubr.bf16.mxu0 0
    %1140 = vmatmul.mubr.bf16.gmra.mrb[0].mxu0 %v783
    %v1141 = vpop.f32.mrb[0].mxu0
    %v1142 = vadd.f32 %v1045, %v1141
    %v1143 = vpop.f32.mrb[0].mxu0
    %v1144 = vpop.f32.mrb[0].mxu0
    %v1145 = vadd.f32 %v1048, %v1144
    %v1146 = vpop.f32.mrb[0].mxu0
    %1147 = vmatprep.mubr.bf16.mxu0 0
    %1148 = vmatmul.mubr.bf16.gmra.mrb[0].mxu0 %v786
    %v1149 = vpop.f32.mrb[0].mxu0
    %v1150 = vadd.f32 %v1053, %v1149
    %v1151 = vpop.f32.mrb[0].mxu0
    %v1152 = vpop.f32.mrb[0].mxu0
    %v1153 = vadd.f32 %v1056, %v1152
    %v1154 = vpop.f32.mrb[0].mxu0
    %1155 = vmatprep.mubr.bf16.mxu0 0
    %1156 = vmatmul.mubr.bf16.gmra.mrb[0].mxu0 %v789
    %v1157 = vpop.f32.mrb[0].mxu0
    %v1158 = vadd.f32 %v1061, %v1157
    %v1159 = vpop.f32.mrb[0].mxu0
    %v1160 = vpop.f32.mrb[0].mxu0
    %v1161 = vadd.f32 %v1064, %v1160
    %v1162 = vpop.f32.mrb[0].mxu0
    %1163 = vmatprep.mubr.bf16.mxu0 0
    %1164 = vmatmul.mubr.bf16.gmra.mrb[0].mxu0 %v792
    %v1165 = vpop.f32.mrb[0].mxu0
    %v1166 = vadd.f32 %v1069, %v1165
    %v1167 = vpop.f32.mrb[0].mxu0
    %v1168 = vpop.f32.mrb[0].mxu0
    %v1169 = vadd.f32 %v1072, %v1168
    %v1170 = vpop.f32.mrb[0].mxu0
    %1171 = vmatprep.mubr.bf16.mxu0 0
    %1172 = vmatmul.mubr.bf16.gmra.mrb[0].mxu0 %v795
    %v1173 = vpop.f32.mrb[0].mxu0
    %v1174 = vadd.f32 %v1077, %v1173
    %v1175 = vpop.f32.mrb[0].mxu0
    %v1176 = vpop.f32.mrb[0].mxu0
    %v1177 = vadd.f32 %v1080, %v1176
    %v1178 = vpop.f32.mrb[0].mxu0
    %1179 = vmatprep.mubr.bf16.mxu0 0
    %1180 = vmatmul.mubr.bf16.gmra.mrb[0].mxu0 %v798
    %v1181 = vpop.f32.mrb[0].mxu0
    %v1182 = vadd.f32 %v1085, %v1181
    %v1183 = vpop.f32.mrb[0].mxu0
    %v1184 = vpop.f32.mrb[0].mxu0
    %v1185 = vadd.f32 %v1088, %v1184
    %v1186 = vpop.f32.mrb[0].mxu0
    %1187 = vdwg.mxu0
    %v1188 = vld [vmem:[%s4] sm:$0xff]
    %v1189 = vld [vmem:[%s4 + $0x8] sm:$0xff]
    %v1190 = vld [vmem:[%s4 + $0x10] sm:$0xff]
    %v1191 = vld [vmem:[%s4 + $0x18] sm:$0xff]
    %v1192 = vld [vmem:[%s4 + $0x20] sm:$0xff]
    %v1193 = vld [vmem:[%s4 + $0x28] sm:$0xff]
    %v1194 = vld [vmem:[%s4 + $0x30] sm:$0xff]
    %v1195 = vld [vmem:[%s4 + $0x38] sm:$0xff]
    %v1196 = vld [vmem:[%s4 + $0x40] sm:$0xff]
    %v1197 = vld [vmem:[%s4 + $0x48] sm:$0xff]
    %v1198 = vld [vmem:[%s4 + $0x50] sm:$0xff]
    %v1199 = vld [vmem:[%s4 + $0x58] sm:$0xff]
    %v1200 = vld [vmem:[%s4 + $0x60] sm:$0xff]
    %v1201 = vld [vmem:[%s4 + $0x68] sm:$0xff]
    %v1202 = vld [vmem:[%s4 + $0x70] sm:$0xff]
    %v1203 = vld [vmem:[%s4 + $0x78] sm:$0xff]
    %v1204 = vmul.f32 %v1188, 0.96
    %v1205 = vmul.f32 %v1189, 0.96
    %v1206 = vmul.f32 %v1190, 0.96
    %v1207 = vmul.f32 %v1191, 0.96
    %v1208 = vmul.f32 %v1192, 0.96
    %v1209 = vmul.f32 %v1193, 0.96
    %v1210 = vmul.f32 %v1194, 0.96
    %v1211 = vmul.f32 %v1195, 0.96
    %v1212 = vmul.f32 %v1196, 0.96
    %v1213 = vmul.f32 %v1197, 0.96
    %v1214 = vmul.f32 %v1198, 0.96
    %v1215 = vmul.f32 %v1199, 0.96
    %v1216 = vmul.f32 %v1200, 0.96
    %v1217 = vmul.f32 %v1201, 0.96
    %v1218 = vmul.f32 %v1202, 0.96
    %v1219 = vmul.f32 %v1203, 0.96
    %v1220 = vld [vmem:[%s3] sm:$0xff]
    %v1221 = vld [vmem:[%s3 + $0x8] sm:$0xff]
    %v1222 = vld [vmem:[%s3 + $0x10] sm:$0xff]
    %v1223 = vld [vmem:[%s3 + $0x18] sm:$0xff]
    %v1224 = vld [vmem:[%s3 + $0x20] sm:$0xff]
    %v1225 = vld [vmem:[%s3 + $0x28] sm:$0xff]
    %v1226 = vld [vmem:[%s3 + $0x30] sm:$0xff]
    %v1227 = vld [vmem:[%s3 + $0x38] sm:$0xff]
    %v1228 = vld [vmem:[%s3 + $0x40] sm:$0xff]
    %v1229 = vld [vmem:[%s3 + $0x48] sm:$0xff]
    %v1230 = vld [vmem:[%s3 + $0x50] sm:$0xff]
    %v1231 = vld [vmem:[%s3 + $0x58] sm:$0xff]
    %v1232 = vld [vmem:[%s3 + $0x60] sm:$0xff]
    %v1233 = vld [vmem:[%s3 + $0x68] sm:$0xff]
    %v1234 = vld [vmem:[%s3 + $0x70] sm:$0xff]
    %v1235 = vld [vmem:[%s3 + $0x78] sm:$0xff]
    %v1236 = vmul.f32 %v1220, 0.04
    %v1237 = vmul.f32 %v1221, 0.04
    %v1238 = vmul.f32 %v1222, 0.04
    %v1239 = vmul.f32 %v1223, 0.04
    %v1240 = vmul.f32 %v1224, 0.04
    %v1241 = vmul.f32 %v1225, 0.04
    %v1242 = vmul.f32 %v1226, 0.04
    %v1243 = vmul.f32 %v1227, 0.04
    %v1244 = vmul.f32 %v1228, 0.04
    %v1245 = vmul.f32 %v1229, 0.04
    %v1246 = vmul.f32 %v1230, 0.04
    %v1247 = vmul.f32 %v1231, 0.04
    %v1248 = vmul.f32 %v1232, 0.04
    %v1249 = vmul.f32 %v1233, 0.04
    %v1250 = vmul.f32 %v1234, 0.04
    %v1251 = vmul.f32 %v1235, 0.04
    %v1252 = vadd.f32 %v1204, %v1236
    %v1253 = vadd.f32 %v1205, %v1237
    %v1254 = vadd.f32 %v1206, %v1238
    %v1255 = vadd.f32 %v1207, %v1239
    %v1256 = vadd.f32 %v1208, %v1240
    %v1257 = vadd.f32 %v1209, %v1241
    %v1258 = vadd.f32 %v1210, %v1242
    %v1259 = vadd.f32 %v1211, %v1243
    %v1260 = vadd.f32 %v1212, %v1244
    %v1261 = vadd.f32 %v1213, %v1245
    %v1262 = vadd.f32 %v1214, %v1246
    %v1263 = vadd.f32 %v1215, %v1247
    %v1264 = vadd.f32 %v1216, %v1248
    %v1265 = vadd.f32 %v1217, %v1249
    %v1266 = vadd.f32 %v1218, %v1250
    %v1267 = vadd.f32 %v1219, %v1251
    %1268 = vst.msk [vmem:[#allocation2] sm:$0xff] %vm775, %v1252
    %1269 = vst.msk [vmem:[#allocation2 + $0x8] sm:$0xff] %vm775, %v1253
    %1270 = vst.msk [vmem:[#allocation2 + $0x10] sm:$0xff] %vm775, %v1254
    %1271 = vst.msk [vmem:[#allocation2 + $0x18] sm:$0xff] %vm775, %v1255
    %1272 = vst.msk [vmem:[#allocation2 + $0x20] sm:$0xff] %vm775, %v1256
    %1273 = vst.msk [vmem:[#allocation2 + $0x28] sm:$0xff] %vm775, %v1257
    %1274 = vst.msk [vmem:[#allocation2 + $0x30] sm:$0xff] %vm775, %v1258
    %1275 = vst.msk [vmem:[#allocation2 + $0x38] sm:$0xff] %vm775, %v1259
    %1276 = vst.msk [vmem:[#allocation2 + $0x40] sm:$0xff] %vm775, %v1260
    %1277 = vst.msk [vmem:[#allocation2 + $0x48] sm:$0xff] %vm775, %v1261
    %1278 = vst.msk [vmem:[#allocation2 + $0x50] sm:$0xff] %vm775, %v1262
    %1279 = vst.msk [vmem:[#allocation2 + $0x58] sm:$0xff] %vm775, %v1263
    %1280 = vst.msk [vmem:[#allocation2 + $0x60] sm:$0xff] %vm775, %v1264
    %1281 = vst.msk [vmem:[#allocation2 + $0x68] sm:$0xff] %vm775, %v1265
    %1282 = vst.msk [vmem:[#allocation2 + $0x70] sm:$0xff] %vm775, %v1266
    %1283 = vst.msk [vmem:[#allocation2 + $0x78] sm:$0xff] %vm775, %v1267
    %v1284 = vmul.f32 %v1252, 0.7
    %v1285 = vmul.f32 %v1253, 0.7
    %v1286 = vmul.f32 %v1254, 0.7
    %v1287 = vmul.f32 %v1255, 0.7
    %v1288 = vmul.f32 %v1256, 0.7
    %v1289 = vmul.f32 %v1257, 0.7
    %v1290 = vmul.f32 %v1258, 0.7
    %v1291 = vmul.f32 %v1259, 0.7
    %v1292 = vmul.f32 %v1260, 0.7
    %v1293 = vmul.f32 %v1261, 0.7
    %v1294 = vmul.f32 %v1262, 0.7
    %v1295 = vmul.f32 %v1263, 0.7
    %v1296 = vmul.f32 %v1264, 0.7
    %v1297 = vmul.f32 %v1265, 0.7
    %v1298 = vmul.f32 %v1266, 0.7
    %v1299 = vmul.f32 %v1267, 0.7
    %v1300 = vsub.f32 %v1126, %v1284
    %v1301 = vsub.f32 %v1129, %v1285
    %v1302 = vsub.f32 %v1134, %v1286
    %v1303 = vsub.f32 %v1137, %v1287
    %v1304 = vsub.f32 %v1142, %v1288
    %v1305 = vsub.f32 %v1145, %v1289
    %v1306 = vsub.f32 %v1150, %v1290
    %v1307 = vsub.f32 %v1153, %v1291
    %v1308 = vsub.f32 %v1158, %v1292
    %v1309 = vsub.f32 %v1161, %v1293
    %v1310 = vsub.f32 %v1166, %v1294
    %v1311 = vsub.f32 %v1169, %v1295
    %v1312 = vsub.f32 %v1174, %v1296
    %v1313 = vsub.f32 %v1177, %v1297
    %v1314 = vsub.f32 %v1182, %v1298
    %v1315 = vsub.f32 %v1185, %v1299
    %v1316 = vmax.f32 %v1300, 0.0
    %v1317 = vmax.f32 %v1301, 0.0
    %v1318 = vmax.f32 %v1302, 0.0
    %v1319 = vmax.f32 %v1303, 0.0
    %v1320 = vmax.f32 %v1304, 0.0
    %v1321 = vmax.f32 %v1305, 0.0
    %v1322 = vmax.f32 %v1306, 0.0
    %v1323 = vmax.f32 %v1307, 0.0
    %v1324 = vmax.f32 %v1308, 0.0
    %v1325 = vmax.f32 %v1309, 0.0
    %v1326 = vmax.f32 %v1310, 0.0
    %v1327 = vmax.f32 %v1311, 0.0
    %v1328 = vmax.f32 %v1312, 0.0
    %v1329 = vmax.f32 %v1313, 0.0
    %v1330 = vmax.f32 %v1314, 0.0
    %v1331 = vmax.f32 %v1315, 0.0
    %1332 = vst.msk [vmem:[%s5] sm:$0xff] %vm775, %v1316
    %1333 = vst.msk [vmem:[%s5 + $0x8] sm:$0xff] %vm775, %v1317
    %1334 = vst.msk [vmem:[%s5 + $0x10] sm:$0xff] %vm775, %v1318
    %1335 = vst.msk [vmem:[%s5 + $0x18] sm:$0xff] %vm775, %v1319
    %1336 = vst.msk [vmem:[%s5 + $0x20] sm:$0xff] %vm775, %v1320
    %1337 = vst.msk [vmem:[%s5 + $0x28] sm:$0xff] %vm775, %v1321
    %1338 = vst.msk [vmem:[%s5 + $0x30] sm:$0xff] %vm775, %v1322
    %1339 = vst.msk [vmem:[%s5 + $0x38] sm:$0xff] %vm775, %v1323
    %1340 = vst.msk [vmem:[%s5 + $0x40] sm:$0xff] %vm775, %v1324
    %1341 = vst.msk [vmem:[%s5 + $0x48] sm:$0xff] %vm775, %v1325
    %1342 = vst.msk [vmem:[%s5 + $0x50] sm:$0xff] %vm775, %v1326
    %1343 = vst.msk [vmem:[%s5 + $0x58] sm:$0xff] %vm775, %v1327
    %1344 = vst.msk [vmem:[%s5 + $0x60] sm:$0xff] %vm775, %v1328
    %1345 = vst.msk [vmem:[%s5 + $0x68] sm:$0xff] %vm775, %v1329
    %1346 = vst.msk [vmem:[%s5 + $0x70] sm:$0xff] %vm775, %v1330
    %1347 = vst.msk [vmem:[%s5 + $0x78] sm:$0xff] %vm775, %v1331
    // Predicated region
    $region22: #{forward.21} parent=1 // pred_check
      _
    $region23: #{forward.21} parent=1 // pred_check_branch
      %1349 = sbr.rel (0) target = $region25
    $region24: #{forward.21} parent=1 // pred_region
      _
    $region25: #{forward.21} parent=1 // pred_fallthru
      _
    // Predicated region
    $region26: #{forward.21} parent=1 // pred_check
      _
    $region27: #{forward.21} parent=1 // pred_check_branch
      %1351 = sbr.rel (0) target = $region29
    $region28: #{forward.21} parent=1 // pred_region
      %s1353 = ssub.s32 2048, 2048
      %1354 = vsyncadd [#allocation3], %s1353
      %s1355 = sshll.u32 [#allocation2], 4
      %s1356 = int_to_ptr.vmem [resolvable:$true] %s1355
      %1361 = dma.vmem_to_hbm [thread:$0]  %s1356, 2048, %s6, [#allocation3], 128, 128, 8
    $region29: #{forward.21} parent=1 // pred_fallthru
      _
    // Predicated region
    $region30: #{forward.21} parent=1 // pred_check
      _
    $region31: #{forward.21} parent=1 // pred_check_branch
      %1363 = sbr.rel (0) target = $region33
    $region32: #{forward.21} parent=1 // pred_region
      _
    $region33: #{forward.21} parent=1 // pred_fallthru
      _
    // Predicated region
    $region34: #{forward.21} parent=1 // pred_check
      _
    $region35: #{forward.21} parent=1 // pred_check_branch
      %1365 = sbr.rel (0) target = $region37
    $region36: #{forward.21} parent=1 // pred_region
      %1366 = dma.done [#allocation3], 2048
    $region37: #{forward.21} parent=1 // pred_fallthru
      _
    %1367 = vsyncpa [#allocation3], 1

// kernel: forward.20
$region0: #{forward.20}
  #allocation0 [shape = 'u32[]', space=smem, size = 0x4, offset = 0x4, fixed_abs, tag = 'smem constant byte address 0x4 - core index']
  #allocation1 [shape = 'u32[144,128]{1,0:T(1,128)}', space=vmem, size = 0x12000, scoped, tag = 'internal scratch']
  %s0 = inlined_call_operand.vmem [shape: f32[1152,32], index: 0, kind: input, shape index: {}]
  %s1 = inlined_call_operand.vmem [shape: f32[1152,32], index: 1, kind: input, shape index: {}]
  %s2 = inlined_call_operand.vmem [shape: f32[1152,32], index: 2, kind: input, shape index: {}]
  %s3 = inlined_call_operand.vmem [shape: f32[1152,32], index: 3, kind: output, shape index: {0}]
  %s4 = inlined_call_operand.hbm [shape: f32[1152,32], index: 4, kind: output, shape index: {1}]
  %5 = xla_tuple %s3, %s4
  %s6 = sld [smem:[#allocation0]]
  $region30: #{forward.20} parent=0
    _
  %s8 = ssub.s32 1, %s6
  %s9 = scalar_select 0, %s8, %s6
  $region1: #{forward.20} parent=0
    #allocation2 [shape = 'u8[589824]{0}', space=vmem, size = 0x90000, scoped, tag = 'output window, operand 1, single buffered']
    #allocation3 [shape = 's32[1]{0}', space=sflag, size = 0x4, scoped, tag = 'scoped memory for forward.20']
    %10 = vsyncpa [#allocation3], 0
    // Predicated region
    $region2: #{forward.20} parent=1 // pred_check
      _
    $region3: #{forward.20} parent=1 // pred_check_branch
      %12 = sbr.rel (0) target = $region5
    $region4: #{forward.20} parent=1 // pred_region
      _
    $region5: #{forward.20} parent=1 // pred_fallthru
      _
    // Predicated region
    $region6: #{forward.20} parent=1 // pred_check
      _
    $region7: #{forward.20} parent=1 // pred_check_branch
      %14 = sbr.rel (0) target = $region9
    $region8: #{forward.20} parent=1 // pred_region
      _
    $region9: #{forward.20} parent=1 // pred_fallthru
      _
    // Predicated region
    $region10: #{forward.20} parent=1 // pred_check
      _
    $region11: #{forward.20} parent=1 // pred_check_branch
      %16 = sbr.rel (0) target = $region13
    $region12: #{forward.20} parent=1 // pred_region
      _
    $region13: #{forward.20} parent=1 // pred_fallthru
      _
    %v17 = vld [vmem:[%s2] sm:$0xff]
    %v18 = vld [vmem:[%s2 + $0x8] sm:$0xff]
    %v19 = vld [vmem:[%s2 + $0x10] sm:$0xff]
    %v20 = vld [vmem:[%s2 + $0x18] sm:$0xff]
    %v21 = vld [vmem:[%s2 + $0x20] sm:$0xff]
    %v22 = vld [vmem:[%s2 + $0x28] sm:$0xff]
    %v23 = vld [vmem:[%s2 + $0x30] sm:$0xff]
    %v24 = vld [vmem:[%s2 + $0x38] sm:$0xff]
    %v25 = vld [vmem:[%s2 + $0x40] sm:$0xff]
    %v26 = vld [vmem:[%s2 + $0x48] sm:$0xff]
    %v27 = vld [vmem:[%s2 + $0x50] sm:$0xff]
    %v28 = vld [vmem:[%s2 + $0x58] sm:$0xff]
    %v29 = vld [vmem:[%s2 + $0x60] sm:$0xff]
    %v30 = vld [vmem:[%s2 + $0x68] sm:$0xff]
    %v31 = vld [vmem:[%s2 + $0x70] sm:$0xff]
    %v32 = vld [vmem:[%s2 + $0x78] sm:$0xff]
    %v33 = vld [vmem:[%s2 + $0x80] sm:$0xff]
    %v34 = vld [vmem:[%s2 + $0x88] sm:$0xff]
    %v35 = vld [vmem:[%s2 + $0x90] sm:$0xff]
    %v36 = vld [vmem:[%s2 + $0x98] sm:$0xff]
    %v37 = vld [vmem:[%s2 + $0xa0] sm:$0xff]
    %v38 = vld [vmem:[%s2 + $0xa8] sm:$0xff]
    %v39 = vld [vmem:[%s2 + $0xb0] sm:$0xff]
    %v40 = vld [vmem:[%s2 + $0xb8] sm:$0xff]
    %v41 = vld [vmem:[%s2 + $0xc0] sm:$0xff]
    %v42 = vld [vmem:[%s2 + $0xc8] sm:$0xff]
    %v43 = vld [vmem:[%s2 + $0xd0] sm:$0xff]
    %v44 = vld [vmem:[%s2 + $0xd8] sm:$0xff]
    %v45 = vld [vmem:[%s2 + $0xe0] sm:$0xff]
    %v46 = vld [vmem:[%s2 + $0xe8] sm:$0xff]
    %v47 = vld [vmem:[%s2 + $0xf0] sm:$0xff]
    %v48 = vld [vmem:[%s2 + $0xf8] sm:$0xff]
    %v49 = vld [vmem:[%s2 + $0x100] sm:$0xff]
    %v50 = vld [vmem:[%s2 + $0x108] sm:$0xff]
    %v51 = vld [vmem:[%s2 + $0x110] sm:$0xff]
    %v52 = vld [vmem:[%s2 + $0x118] sm:$0xff]
    %v53 = vld [vmem:[%s2 + $0x120] sm:$0xff]
    %v54 = vld [vmem:[%s2 + $0x128] sm:$0xff]
    %v55 = vld [vmem:[%s2 + $0x130] sm:$0xff]
    %v56 = vld [vmem:[%s2 + $0x138] sm:$0xff]
    %v57 = vld [vmem:[%s2 + $0x140] sm:$0xff]
    %v58 = vld [vmem:[%s2 + $0x148] sm:$0xff]
    %v59 = vld [vmem:[%s2 + $0x150] sm:$0xff]
    %v60 = vld [vmem:[%s2 + $0x158] sm:$0xff]
    %v61 = vld [vmem:[%s2 + $0x160] sm:$0xff]
    %v62 = vld [vmem:[%s2 + $0x168] sm:$0xff]
    %v63 = vld [vmem:[%s2 + $0x170] sm:$0xff]
    %v64 = vld [vmem:[%s2 + $0x178] sm:$0xff]
    %v65 = vld [vmem:[%s2 + $0x180] sm:$0xff]
    %v66 = vld [vmem:[%s2 + $0x188] sm:$0xff]
    %v67 = vld [vmem:[%s2 + $0x190] sm:$0xff]
    %v68 = vld [vmem:[%s2 + $0x198] sm:$0xff]
    %v69 = vld [vmem:[%s2 + $0x1a0] sm:$0xff]
    %v70 = vld [vmem:[%s2 + $0x1a8] sm:$0xff]
    %v71 = vld [vmem:[%s2 + $0x1b0] sm:$0xff]
    %v72 = vld [vmem:[%s2 + $0x1b8] sm:$0xff]
    %v73 = vld [vmem:[%s2 + $0x1c0] sm:$0xff]
    %v74 = vld [vmem:[%s2 + $0x1c8] sm:$0xff]
    %v75 = vld [vmem:[%s2 + $0x1d0] sm:$0xff]
    %v76 = vld [vmem:[%s2 + $0x1d8] sm:$0xff]
    %v77 = vld [vmem:[%s2 + $0x1e0] sm:$0xff]
    %v78 = vld [vmem:[%s2 + $0x1e8] sm:$0xff]
    %v79 = vld [vmem:[%s2 + $0x1f0] sm:$0xff]
    %v80 = vld [vmem:[%s2 + $0x1f8] sm:$0xff]
    %v81 = vld [vmem:[%s2 + $0x200] sm:$0xff]
    %v82 = vld [vmem:[%s2 + $0x208] sm:$0xff]
    %v83 = vld [vmem:[%s2 + $0x210] sm:$0xff]
    %v84 = vld [vmem:[%s2 + $0x218] sm:$0xff]
    %v85 = vld [vmem:[%s2 + $0x220] sm:$0xff]
    %v86 = vld [vmem:[%s2 + $0x228] sm:$0xff]
    %v87 = vld [vmem:[%s2 + $0x230] sm:$0xff]
    %v88 = vld [vmem:[%s2 + $0x238] sm:$0xff]
    %v89 = vld [vmem:[%s2 + $0x240] sm:$0xff]
    %v90 = vld [vmem:[%s2 + $0x248] sm:$0xff]
    %v91 = vld [vmem:[%s2 + $0x250] sm:$0xff]
    %v92 = vld [vmem:[%s2 + $0x258] sm:$0xff]
    %v93 = vld [vmem:[%s2 + $0x260] sm:$0xff]
    %v94 = vld [vmem:[%s2 + $0x268] sm:$0xff]
    %v95 = vld [vmem:[%s2 + $0x270] sm:$0xff]
    %v96 = vld [vmem:[%s2 + $0x278] sm:$0xff]
    %v97 = vld [vmem:[%s2 + $0x280] sm:$0xff]
    %v98 = vld [vmem:[%s2 + $0x288] sm:$0xff]
    %v99 = vld [vmem:[%s2 + $0x290] sm:$0xff]
    %v100 = vld [vmem:[%s2 + $0x298] sm:$0xff]
    %v101 = vld [vmem:[%s2 + $0x2a0] sm:$0xff]
    %v102 = vld [vmem:[%s2 + $0x2a8] sm:$0xff]
    %v103 = vld [vmem:[%s2 + $0x2b0] sm:$0xff]
    %v104 = vld [vmem:[%s2 + $0x2b8] sm:$0xff]
    %v105 = vld [vmem:[%s2 + $0x2c0] sm:$0xff]
    %v106 = vld [vmem:[%s2 + $0x2c8] sm:$0xff]
    %v107 = vld [vmem:[%s2 + $0x2d0] sm:$0xff]
    %v108 = vld [vmem:[%s2 + $0x2d8] sm:$0xff]
    %v109 = vld [vmem:[%s2 + $0x2e0] sm:$0xff]
    %v110 = vld [vmem:[%s2 + $0x2e8] sm:$0xff]
    %v111 = vld [vmem:[%s2 + $0x2f0] sm:$0xff]
    %v112 = vld [vmem:[%s2 + $0x2f8] sm:$0xff]
    %v113 = vld [vmem:[%s2 + $0x300] sm:$0xff]
    %v114 = vld [vmem:[%s2 + $0x308] sm:$0xff]
    %v115 = vld [vmem:[%s2 + $0x310] sm:$0xff]
    %v116 = vld [vmem:[%s2 + $0x318] sm:$0xff]
    %v117 = vld [vmem:[%s2 + $0x320] sm:$0xff]
    %v118 = vld [vmem:[%s2 + $0x328] sm:$0xff]
    %v119 = vld [vmem:[%s2 + $0x330] sm:$0xff]
    %v120 = vld [vmem:[%s2 + $0x338] sm:$0xff]
    %v121 = vld [vmem:[%s2 + $0x340] sm:$0xff]
    %v122 = vld [vmem:[%s2 + $0x348] sm:$0xff]
    %v123 = vld [vmem:[%s2 + $0x350] sm:$0xff]
    %v124 = vld [vmem:[%s2 + $0x358] sm:$0xff]
    %v125 = vld [vmem:[%s2 + $0x360] sm:$0xff]
    %v126 = vld [vmem:[%s2 + $0x368] sm:$0xff]
    %v127 = vld [vmem:[%s2 + $0x370] sm:$0xff]
    %v128 = vld [vmem:[%s2 + $0x378] sm:$0xff]
    %v129 = vld [vmem:[%s2 + $0x380] sm:$0xff]
    %v130 = vld [vmem:[%s2 + $0x388] sm:$0xff]
    %v131 = vld [vmem:[%s2 + $0x390] sm:$0xff]
    %v132 = vld [vmem:[%s2 + $0x398] sm:$0xff]
    %v133 = vld [vmem:[%s2 + $0x3a0] sm:$0xff]
    %v134 = vld [vmem:[%s2 + $0x3a8] sm:$0xff]
    %v135 = vld [vmem:[%s2 + $0x3b0] sm:$0xff]
    %v136 = vld [vmem:[%s2 + $0x3b8] sm:$0xff]
    %v137 = vld [vmem:[%s2 + $0x3c0] sm:$0xff]
    %v138 = vld [vmem:[%s2 + $0x3c8] sm:$0xff]
    %v139 = vld [vmem:[%s2 + $0x3d0] sm:$0xff]
    %v140 = vld [vmem:[%s2 + $0x3d8] sm:$0xff]
    %v141 = vld [vmem:[%s2 + $0x3e0] sm:$0xff]
    %v142 = vld [vmem:[%s2 + $0x3e8] sm:$0xff]
    %v143 = vld [vmem:[%s2 + $0x3f0] sm:$0xff]
    %v144 = vld [vmem:[%s2 + $0x3f8] sm:$0xff]
    %v145 = vld [vmem:[%s2 + $0x400] sm:$0xff]
    %v146 = vld [vmem:[%s2 + $0x408] sm:$0xff]
    %v147 = vld [vmem:[%s2 + $0x410] sm:$0xff]
    %v148 = vld [vmem:[%s2 + $0x418] sm:$0xff]
    %v149 = vld [vmem:[%s2 + $0x420] sm:$0xff]
    %v150 = vld [vmem:[%s2 + $0x428] sm:$0xff]
    %v151 = vld [vmem:[%s2 + $0x430] sm:$0xff]
    %v152 = vld [vmem:[%s2 + $0x438] sm:$0xff]
    %v153 = vld [vmem:[%s2 + $0x440] sm:$0xff]
    %v154 = vld [vmem:[%s2 + $0x448] sm:$0xff]
    %v155 = vld [vmem:[%s2 + $0x450] sm:$0xff]
    %v156 = vld [vmem:[%s2 + $0x458] sm:$0xff]
    %v157 = vld [vmem:[%s2 + $0x460] sm:$0xff]
    %v158 = vld [vmem:[%s2 + $0x468] sm:$0xff]
    %v159 = vld [vmem:[%s2 + $0x470] sm:$0xff]
    %v160 = vld [vmem:[%s2 + $0x478] sm:$0xff]
    %v161 = vmul.f32 %v17, 0.96
    %v162 = vmul.f32 %v18, 0.96
    %v163 = vmul.f32 %v19, 0.96
    %v164 = vmul.f32 %v20, 0.96
    %v165 = vmul.f32 %v21, 0.96
    %v166 = vmul.f32 %v22, 0.96
    %v167 = vmul.f32 %v23, 0.96
    %v168 = vmul.f32 %v24, 0.96
    %v169 = vmul.f32 %v25, 0.96
    %v170 = vmul.f32 %v26, 0.96
    %v171 = vmul.f32 %v27, 0.96
    %v172 = vmul.f32 %v28, 0.96
    %v173 = vmul.f32 %v29, 0.96
    %v174 = vmul.f32 %v30, 0.96
    %v175 = vmul.f32 %v31, 0.96
    %v176 = vmul.f32 %v32, 0.96
    %v177 = vmul.f32 %v33, 0.96
    %v178 = vmul.f32 %v34, 0.96
    %v179 = vmul.f32 %v35, 0.96
    %v180 = vmul.f32 %v36, 0.96
    %v181 = vmul.f32 %v37, 0.96
    %v182 = vmul.f32 %v38, 0.96
    %v183 = vmul.f32 %v39, 0.96
    %v184 = vmul.f32 %v40, 0.96
    %v185 = vmul.f32 %v41, 0.96
    %v186 = vmul.f32 %v42, 0.96
    %v187 = vmul.f32 %v43, 0.96
    %v188 = vmul.f32 %v44, 0.96
    %v189 = vmul.f32 %v45, 0.96
    %v190 = vmul.f32 %v46, 0.96
    %v191 = vmul.f32 %v47, 0.96
    %v192 = vmul.f32 %v48, 0.96
    %v193 = vmul.f32 %v49, 0.96
    %v194 = vmul.f32 %v50, 0.96
    %v195 = vmul.f32 %v51, 0.96
    %v196 = vmul.f32 %v52, 0.96
    %v197 = vmul.f32 %v53, 0.96
    %v198 = vmul.f32 %v54, 0.96
    %v199 = vmul.f32 %v55, 0.96
    %v200 = vmul.f32 %v56, 0.96
    %v201 = vmul.f32 %v57, 0.96
    %v202 = vmul.f32 %v58, 0.96
    %v203 = vmul.f32 %v59, 0.96
    %v204 = vmul.f32 %v60, 0.96
    %v205 = vmul.f32 %v61, 0.96
    %v206 = vmul.f32 %v62, 0.96
    %v207 = vmul.f32 %v63, 0.96
    %v208 = vmul.f32 %v64, 0.96
    %v209 = vmul.f32 %v65, 0.96
    %v210 = vmul.f32 %v66, 0.96
    %v211 = vmul.f32 %v67, 0.96
    %v212 = vmul.f32 %v68, 0.96
    %v213 = vmul.f32 %v69, 0.96
    %v214 = vmul.f32 %v70, 0.96
    %v215 = vmul.f32 %v71, 0.96
    %v216 = vmul.f32 %v72, 0.96
    %v217 = vmul.f32 %v73, 0.96
    %v218 = vmul.f32 %v74, 0.96
    %v219 = vmul.f32 %v75, 0.96
    %v220 = vmul.f32 %v76, 0.96
    %v221 = vmul.f32 %v77, 0.96
    %v222 = vmul.f32 %v78, 0.96
    %v223 = vmul.f32 %v79, 0.96
    %v224 = vmul.f32 %v80, 0.96
    %v225 = vmul.f32 %v81, 0.96
    %v226 = vmul.f32 %v82, 0.96
    %v227 = vmul.f32 %v83, 0.96
    %v228 = vmul.f32 %v84, 0.96
    %v229 = vmul.f32 %v85, 0.96
    %v230 = vmul.f32 %v86, 0.96
    %v231 = vmul.f32 %v87, 0.96
    %v232 = vmul.f32 %v88, 0.96
    %v233 = vmul.f32 %v89, 0.96
    %v234 = vmul.f32 %v90, 0.96
    %v235 = vmul.f32 %v91, 0.96
    %v236 = vmul.f32 %v92, 0.96
    %v237 = vmul.f32 %v93, 0.96
    %v238 = vmul.f32 %v94, 0.96
    %v239 = vmul.f32 %v95, 0.96
    %v240 = vmul.f32 %v96, 0.96
    %v241 = vmul.f32 %v97, 0.96
    %v242 = vmul.f32 %v98, 0.96
    %v243 = vmul.f32 %v99, 0.96
    %v244 = vmul.f32 %v100, 0.96
    %v245 = vmul.f32 %v101, 0.96
    %v246 = vmul.f32 %v102, 0.96
    %v247 = vmul.f32 %v103, 0.96
    %v248 = vmul.f32 %v104, 0.96
    %v249 = vmul.f32 %v105, 0.96
    %v250 = vmul.f32 %v106, 0.96
    %v251 = vmul.f32 %v107, 0.96
    %v252 = vmul.f32 %v108, 0.96
    %v253 = vmul.f32 %v109, 0.96
    %v254 = vmul.f32 %v110, 0.96
    %v255 = vmul.f32 %v111, 0.96
    %v256 = vmul.f32 %v112, 0.96
    %v257 = vmul.f32 %v113, 0.96
    %v258 = vmul.f32 %v114, 0.96
    %v259 = vmul.f32 %v115, 0.96
    %v260 = vmul.f32 %v116, 0.96
    %v261 = vmul.f32 %v117, 0.96
    %v262 = vmul.f32 %v118, 0.96
    %v263 = vmul.f32 %v119, 0.96
    %v264 = vmul.f32 %v120, 0.96
    %v265 = vmul.f32 %v121, 0.96
    %v266 = vmul.f32 %v122, 0.96
    %v267 = vmul.f32 %v123, 0.96
    %v268 = vmul.f32 %v124, 0.96
    %v269 = vmul.f32 %v125, 0.96
    %v270 = vmul.f32 %v126, 0.96
    %v271 = vmul.f32 %v127, 0.96
    %v272 = vmul.f32 %v128, 0.96
    %v273 = vmul.f32 %v129, 0.96
    %v274 = vmul.f32 %v130, 0.96
    %v275 = vmul.f32 %v131, 0.96
    %v276 = vmul.f32 %v132, 0.96
    %v277 = vmul.f32 %v133, 0.96
    %v278 = vmul.f32 %v134, 0.96
    %v279 = vmul.f32 %v135, 0.96
    %v280 = vmul.f32 %v136, 0.96
    %v281 = vmul.f32 %v137, 0.96
    %v282 = vmul.f32 %v138, 0.96
    %v283 = vmul.f32 %v139, 0.96
    %v284 = vmul.f32 %v140, 0.96
    %v285 = vmul.f32 %v141, 0.96
    %v286 = vmul.f32 %v142, 0.96
    %v287 = vmul.f32 %v143, 0.96
    %v288 = vmul.f32 %v144, 0.96
    %v289 = vmul.f32 %v145, 0.96
    %v290 = vmul.f32 %v146, 0.96
    %v291 = vmul.f32 %v147, 0.96
    %v292 = vmul.f32 %v148, 0.96
    %v293 = vmul.f32 %v149, 0.96
    %v294 = vmul.f32 %v150, 0.96
    %v295 = vmul.f32 %v151, 0.96
    %v296 = vmul.f32 %v152, 0.96
    %v297 = vmul.f32 %v153, 0.96
    %v298 = vmul.f32 %v154, 0.96
    %v299 = vmul.f32 %v155, 0.96
    %v300 = vmul.f32 %v156, 0.96
    %v301 = vmul.f32 %v157, 0.96
    %v302 = vmul.f32 %v158, 0.96
    %v303 = vmul.f32 %v159, 0.96
    %v304 = vmul.f32 %v160, 0.96
    %v305 = vld [vmem:[%s1] sm:$0xff]
    %v306 = vld [vmem:[%s1 + $0x8] sm:$0xff]
    %v307 = vld [vmem:[%s1 + $0x10] sm:$0xff]
    %v308 = vld [vmem:[%s1 + $0x18] sm:$0xff]
    %v309 = vld [vmem:[%s1 + $0x20] sm:$0xff]
    %v310 = vld [vmem:[%s1 + $0x28] sm:$0xff]
    %v311 = vld [vmem:[%s1 + $0x30] sm:$0xff]
    %v312 = vld [vmem:[%s1 + $0x38] sm:$0xff]
    %v313 = vld [vmem:[%s1 + $0x40] sm:$0xff]
    %v314 = vld [vmem:[%s1 + $0x48] sm:$0xff]
    %v315 = vld [vmem:[%s1 + $0x50] sm:$0xff]
    %v316 = vld [vmem:[%s1 + $0x58] sm:$0xff]
    %v317 = vld [vmem:[%s1 + $0x60] sm:$0xff]
    %v318 = vld [vmem:[%s1 + $0x68] sm:$0xff]
    %v319 = vld [vmem:[%s1 + $0x70] sm:$0xff]
    %v320 = vld [vmem:[%s1 + $0x78] sm:$0xff]
    %v321 = vld [vmem:[%s1 + $0x80] sm:$0xff]
    %v322 = vld [vmem:[%s1 + $0x88] sm:$0xff]
    %v323 = vld [vmem:[%s1 + $0x90] sm:$0xff]
    %v324 = vld [vmem:[%s1 + $0x98] sm:$0xff]
    %v325 = vld [vmem:[%s1 + $0xa0] sm:$0xff]
    %v326 = vld [vmem:[%s1 + $0xa8] sm:$0xff]
    %v327 = vld [vmem:[%s1 + $0xb0] sm:$0xff]
    %v328 = vld [vmem:[%s1 + $0xb8] sm:$0xff]
    %v329 = vld [vmem:[%s1 + $0xc0] sm:$0xff]
    %v330 = vld [vmem:[%s1 + $0xc8] sm:$0xff]
    %v331 = vld [vmem:[%s1 + $0xd0] sm:$0xff]
    %v332 = vld [vmem:[%s1 + $0xd8] sm:$0xff]
    %v333 = vld [vmem:[%s1 + $0xe0] sm:$0xff]
    %v334 = vld [vmem:[%s1 + $0xe8] sm:$0xff]
    %v335 = vld [vmem:[%s1 + $0xf0] sm:$0xff]
    %v336 = vld [vmem:[%s1 + $0xf8] sm:$0xff]
    %v337 = vld [vmem:[%s1 + $0x100] sm:$0xff]
    %v338 = vld [vmem:[%s1 + $0x108] sm:$0xff]
    %v339 = vld [vmem:[%s1 + $0x110] sm:$0xff]
    %v340 = vld [vmem:[%s1 + $0x118] sm:$0xff]
    %v341 = vld [vmem:[%s1 + $0x120] sm:$0xff]
    %v342 = vld [vmem:[%s1 + $0x128] sm:$0xff]
    %v343 = vld [vmem:[%s1 + $0x130] sm:$0xff]
    %v344 = vld [vmem:[%s1 + $0x138] sm:$0xff]
    %v345 = vld [vmem:[%s1 + $0x140] sm:$0xff]
    %v346 = vld [vmem:[%s1 + $0x148] sm:$0xff]
    %v347 = vld [vmem:[%s1 + $0x150] sm:$0xff]
    %v348 = vld [vmem:[%s1 + $0x158] sm:$0xff]
    %v349 = vld [vmem:[%s1 + $0x160] sm:$0xff]
    %v350 = vld [vmem:[%s1 + $0x168] sm:$0xff]
    %v351 = vld [vmem:[%s1 + $0x170] sm:$0xff]
    %v352 = vld [vmem:[%s1 + $0x178] sm:$0xff]
    %v353 = vld [vmem:[%s1 + $0x180] sm:$0xff]
    %v354 = vld [vmem:[%s1 + $0x188] sm:$0xff]
    %v355 = vld [vmem:[%s1 + $0x190] sm:$0xff]
    %v356 = vld [vmem:[%s1 + $0x198] sm:$0xff]
    %v357 = vld [vmem:[%s1 + $0x1a0] sm:$0xff]
    %v358 = vld [vmem:[%s1 + $0x1a8] sm:$0xff]
    %v359 = vld [vmem:[%s1 + $0x1b0] sm:$0xff]
    %v360 = vld [vmem:[%s1 + $0x1b8] sm:$0xff]
    %v361 = vld [vmem:[%s1 + $0x1c0] sm:$0xff]
    %v362 = vld [vmem:[%s1 + $0x1c8] sm:$0xff]
    %v363 = vld [vmem:[%s1 + $0x1d0] sm:$0xff]
    %v364 = vld [vmem:[%s1 + $0x1d8] sm:$0xff]
    %v365 = vld [vmem:[%s1 + $0x1e0] sm:$0xff]
    %v366 = vld [vmem:[%s1 + $0x1e8] sm:$0xff]
    %v367 = vld [vmem:[%s1 + $0x1f0] sm:$0xff]
    %v368 = vld [vmem:[%s1 + $0x1f8] sm:$0xff]
    %v369 = vld [vmem:[%s1 + $0x200] sm:$0xff]
    %v370 = vld [vmem:[%s1 + $0x208] sm:$0xff]
    %v371 = vld [vmem:[%s1 + $0x210] sm:$0xff]
    %v372 = vld [vmem:[%s1 + $0x218] sm:$0xff]
    %v373 = vld [vmem:[%s1 + $0x220] sm:$0xff]
    %v374 = vld [vmem:[%s1 + $0x228] sm:$0xff]
    %v375 = vld [vmem:[%s1 + $0x230] sm:$0xff]
    %v376 = vld [vmem:[%s1 + $0x238] sm:$0xff]
    %v377 = vld [vmem:[%s1 + $0x240] sm:$0xff]
    %v378 = vld [vmem:[%s1 + $0x248] sm:$0xff]
    %v379 = vld [vmem:[%s1 + $0x250] sm:$0xff]
    %v380 = vld [vmem:[%s1 + $0x258] sm:$0xff]
    %v381 = vld [vmem:[%s1 + $0x260] sm:$0xff]
    %v382 = vld [vmem:[%s1 + $0x268] sm:$0xff]
    %v383 = vld [vmem:[%s1 + $0x270] sm:$0xff]
    %v384 = vld [vmem:[%s1 + $0x278] sm:$0xff]
    %v385 = vld [vmem:[%s1 + $0x280] sm:$0xff]
    %v386 = vld [vmem:[%s1 + $0x288] sm:$0xff]
    %v387 = vld [vmem:[%s1 + $0x290] sm:$0xff]
    %v388 = vld [vmem:[%s1 + $0x298] sm:$0xff]
    %v389 = vld [vmem:[%s1 + $0x2a0] sm:$0xff]
    %v390 = vld [vmem:[%s1 + $0x2a8] sm:$0xff]
    %v391 = vld [vmem:[%s1 + $0x2b0] sm:$0xff]
    %v392 = vld [vmem:[%s1 + $0x2b8] sm:$0xff]
    %v393 = vld [vmem:[%s1 + $0x2c0] sm:$0xff]
    %v394 = vld [vmem:[%s1 + $0x2c8] sm:$0xff]
    %v395 = vld [vmem:[%s1 + $0x2d0] sm:$0xff]
    %v396 = vld [vmem:[%s1 + $0x2d8] sm:$0xff]
    %v397 = vld [vmem:[%s1 + $0x2e0] sm:$0xff]
    %v398 = vld [vmem:[%s1 + $0x2e8] sm:$0xff]
    %v399 = vld [vmem:[%s1 + $0x2f0] sm:$0xff]
    %v400 = vld [vmem:[%s1 + $0x2f8] sm:$0xff]
    %v401 = vld [vmem:[%s1 + $0x300] sm:$0xff]
    %v402 = vld [vmem:[%s1 + $0x308] sm:$0xff]
    %v403 = vld [vmem:[%s1 + $0x310] sm:$0xff]
    %v404 = vld [vmem:[%s1 + $0x318] sm:$0xff]
    %v405 = vld [vmem:[%s1 + $0x320] sm:$0xff]
    %v406 = vld [vmem:[%s1 + $0x328] sm:$0xff]
    %v407 = vld [vmem:[%s1 + $0x330] sm:$0xff]
    %v408 = vld [vmem:[%s1 + $0x338] sm:$0xff]
    %v409 = vld [vmem:[%s1 + $0x340] sm:$0xff]
    %v410 = vld [vmem:[%s1 + $0x348] sm:$0xff]
    %v411 = vld [vmem:[%s1 + $0x350] sm:$0xff]
    %v412 = vld [vmem:[%s1 + $0x358] sm:$0xff]
    %v413 = vld [vmem:[%s1 + $0x360] sm:$0xff]
    %v414 = vld [vmem:[%s1 + $0x368] sm:$0xff]
    %v415 = vld [vmem:[%s1 + $0x370] sm:$0xff]
    %v416 = vld [vmem:[%s1 + $0x378] sm:$0xff]
    %v417 = vld [vmem:[%s1 + $0x380] sm:$0xff]
    %v418 = vld [vmem:[%s1 + $0x388] sm:$0xff]
    %v419 = vld [vmem:[%s1 + $0x390] sm:$0xff]
    %v420 = vld [vmem:[%s1 + $0x398] sm:$0xff]
    %v421 = vld [vmem:[%s1 + $0x3a0] sm:$0xff]
    %v422 = vld [vmem:[%s1 + $0x3a8] sm:$0xff]
    %v423 = vld [vmem:[%s1 + $0x3b0] sm:$0xff]
    %v424 = vld [vmem:[%s1 + $0x3b8] sm:$0xff]
    %v425 = vld [vmem:[%s1 + $0x3c0] sm:$0xff]
    %v426 = vld [vmem:[%s1 + $0x3c8] sm:$0xff]
    %v427 = vld [vmem:[%s1 + $0x3d0] sm:$0xff]
    %v428 = vld [vmem:[%s1 + $0x3d8] sm:$0xff]
    %v429 = vld [vmem:[%s1 + $0x3e0] sm:$0xff]
    %v430 = vld [vmem:[%s1 + $0x3e8] sm:$0xff]
    %v431 = vld [vmem:[%s1 + $0x3f0] sm:$0xff]
    %v432 = vld [vmem:[%s1 + $0x3f8] sm:$0xff]
    %v433 = vld [vmem:[%s1 + $0x400] sm:$0xff]
    %v434 = vld [vmem:[%s1 + $0x408] sm:$0xff]
    %v435 = vld [vmem:[%s1 + $0x410] sm:$0xff]
    %v436 = vld [vmem:[%s1 + $0x418] sm:$0xff]
    %v437 = vld [vmem:[%s1 + $0x420] sm:$0xff]
    %v438 = vld [vmem:[%s1 + $0x428] sm:$0xff]
    %v439 = vld [vmem:[%s1 + $0x430] sm:$0xff]
    %v440 = vld [vmem:[%s1 + $0x438] sm:$0xff]
    %v441 = vld [vmem:[%s1 + $0x440] sm:$0xff]
    %v442 = vld [vmem:[%s1 + $0x448] sm:$0xff]
    %v443 = vld [vmem:[%s1 + $0x450] sm:$0xff]
    %v444 = vld [vmem:[%s1 + $0x458] sm:$0xff]
    %v445 = vld [vmem:[%s1 + $0x460] sm:$0xff]
    %v446 = vld [vmem:[%s1 + $0x468] sm:$0xff]
    %v447 = vld [vmem:[%s1 + $0x470] sm:$0xff]
    %v448 = vld [vmem:[%s1 + $0x478] sm:$0xff]
    %v449 = vmul.f32 %v305, 0.04
    %v450 = vmul.f32 %v306, 0.04
    %v451 = vmul.f32 %v307, 0.04
    %v452 = vmul.f32 %v308, 0.04
    %v453 = vmul.f32 %v309, 0.04
    %v454 = vmul.f32 %v310, 0.04
    %v455 = vmul.f32 %v311, 0.04
    %v456 = vmul.f32 %v312, 0.04
    %v457 = vmul.f32 %v313, 0.04
    %v458 = vmul.f32 %v314, 0.04
    %v459 = vmul.f32 %v315, 0.04
    %v460 = vmul.f32 %v316, 0.04
    %v461 = vmul.f32 %v317, 0.04
    %v462 = vmul.f32 %v318, 0.04
    %v463 = vmul.f32 %v319, 0.04
    %v464 = vmul.f32 %v320, 0.04
    %v465 = vmul.f32 %v321, 0.04
    %v466 = vmul.f32 %v322, 0.04
    %v467 = vmul.f32 %v323, 0.04
    %v468 = vmul.f32 %v324, 0.04
    %v469 = vmul.f32 %v325, 0.04
    %v470 = vmul.f32 %v326, 0.04
    %v471 = vmul.f32 %v327, 0.04
    %v472 = vmul.f32 %v328, 0.04
    %v473 = vmul.f32 %v329, 0.04
    %v474 = vmul.f32 %v330, 0.04
    %v475 = vmul.f32 %v331, 0.04
    %v476 = vmul.f32 %v332, 0.04
    %v477 = vmul.f32 %v333, 0.04
    %v478 = vmul.f32 %v334, 0.04
    %v479 = vmul.f32 %v335, 0.04
    %v480 = vmul.f32 %v336, 0.04
    %v481 = vmul.f32 %v337, 0.04
    %v482 = vmul.f32 %v338, 0.04
    %v483 = vmul.f32 %v339, 0.04
    %v484 = vmul.f32 %v340, 0.04
    %v485 = vmul.f32 %v341, 0.04
    %v486 = vmul.f32 %v342, 0.04
    %v487 = vmul.f32 %v343, 0.04
    %v488 = vmul.f32 %v344, 0.04
    %v489 = vmul.f32 %v345, 0.04
    %v490 = vmul.f32 %v346, 0.04
    %v491 = vmul.f32 %v347, 0.04
    %v492 = vmul.f32 %v348, 0.04
    %v493 = vmul.f32 %v349, 0.04
    %v494 = vmul.f32 %v350, 0.04
    %v495 = vmul.f32 %v351, 0.04
    %v496 = vmul.f32 %v352, 0.04
    %v497 = vmul.f32 %v353, 0.04
    %v498 = vmul.f32 %v354, 0.04
    %v499 = vmul.f32 %v355, 0.04
    %v500 = vmul.f32 %v356, 0.04
    %v501 = vmul.f32 %v357, 0.04
    %v502 = vmul.f32 %v358, 0.04
    %v503 = vmul.f32 %v359, 0.04
    %v504 = vmul.f32 %v360, 0.04
    %v505 = vmul.f32 %v361, 0.04
    %v506 = vmul.f32 %v362, 0.04
    %v507 = vmul.f32 %v363, 0.04
    %v508 = vmul.f32 %v364, 0.04
    %v509 = vmul.f32 %v365, 0.04
    %v510 = vmul.f32 %v366, 0.04
    %v511 = vmul.f32 %v367, 0.04
    %v512 = vmul.f32 %v368, 0.04
    %v513 = vmul.f32 %v369, 0.04
    %v514 = vmul.f32 %v370, 0.04
    %v515 = vmul.f32 %v371, 0.04
    %v516 = vmul.f32 %v372, 0.04
    %v517 = vmul.f32 %v373, 0.04
    %v518 = vmul.f32 %v374, 0.04
    %v519 = vmul.f32 %v375, 0.04
    %v520 = vmul.f32 %v376, 0.04
    %v521 = vmul.f32 %v377, 0.04
    %v522 = vmul.f32 %v378, 0.04
    %v523 = vmul.f32 %v379, 0.04
    %v524 = vmul.f32 %v380, 0.04
    %v525 = vmul.f32 %v381, 0.04
    %v526 = vmul.f32 %v382, 0.04
    %v527 = vmul.f32 %v383, 0.04
    %v528 = vmul.f32 %v384, 0.04
    %v529 = vmul.f32 %v385, 0.04
    %v530 = vmul.f32 %v386, 0.04
    %v531 = vmul.f32 %v387, 0.04
    %v532 = vmul.f32 %v388, 0.04
    %v533 = vmul.f32 %v389, 0.04
    %v534 = vmul.f32 %v390, 0.04
    %v535 = vmul.f32 %v391, 0.04
    %v536 = vmul.f32 %v392, 0.04
    %v537 = vmul.f32 %v393, 0.04
    %v538 = vmul.f32 %v394, 0.04
    %v539 = vmul.f32 %v395, 0.04
    %v540 = vmul.f32 %v396, 0.04
    %v541 = vmul.f32 %v397, 0.04
    %v542 = vmul.f32 %v398, 0.04
    %v543 = vmul.f32 %v399, 0.04
    %v544 = vmul.f32 %v400, 0.04
    %v545 = vmul.f32 %v401, 0.04
    %v546 = vmul.f32 %v402, 0.04
    %v547 = vmul.f32 %v403, 0.04
    %v548 = vmul.f32 %v404, 0.04
    %v549 = vmul.f32 %v405, 0.04
    %v550 = vmul.f32 %v406, 0.04
    %v551 = vmul.f32 %v407, 0.04
    %v552 = vmul.f32 %v408, 0.04
    %v553 = vmul.f32 %v409, 0.04
    %v554 = vmul.f32 %v410, 0.04
    %v555 = vmul.f32 %v411, 0.04
    %v556 = vmul.f32 %v412, 0.04
    %v557 = vmul.f32 %v413, 0.04
    %v558 = vmul.f32 %v414, 0.04
    %v559 = vmul.f32 %v415, 0.04
    %v560 = vmul.f32 %v416, 0.04
    %v561 = vmul.f32 %v417, 0.04
    %v562 = vmul.f32 %v418, 0.04
    %v563 = vmul.f32 %v419, 0.04
    %v564 = vmul.f32 %v420, 0.04
    %v565 = vmul.f32 %v421, 0.04
    %v566 = vmul.f32 %v422, 0.04
    %v567 = vmul.f32 %v423, 0.04
    %v568 = vmul.f32 %v424, 0.04
    %v569 = vmul.f32 %v425, 0.04
    %v570 = vmul.f32 %v426, 0.04
    %v571 = vmul.f32 %v427, 0.04
    %v572 = vmul.f32 %v428, 0.04
    %v573 = vmul.f32 %v429, 0.04
    %v574 = vmul.f32 %v430, 0.04
    %v575 = vmul.f32 %v431, 0.04
    %v576 = vmul.f32 %v432, 0.04
    %v577 = vmul.f32 %v433, 0.04
    %v578 = vmul.f32 %v434, 0.04
    %v579 = vmul.f32 %v435, 0.04
    %v580 = vmul.f32 %v436, 0.04
    %v581 = vmul.f32 %v437, 0.04
    %v582 = vmul.f32 %v438, 0.04
    %v583 = vmul.f32 %v439, 0.04
    %v584 = vmul.f32 %v440, 0.04
    %v585 = vmul.f32 %v441, 0.04
    %v586 = vmul.f32 %v442, 0.04
    %v587 = vmul.f32 %v443, 0.04
    %v588 = vmul.f32 %v444, 0.04
    %v589 = vmul.f32 %v445, 0.04
    %v590 = vmul.f32 %v446, 0.04
    %v591 = vmul.f32 %v447, 0.04
    %v592 = vmul.f32 %v448, 0.04
    %v593 = vadd.f32 %v161, %v449
    %v594 = vadd.f32 %v162, %v450
    %v595 = vadd.f32 %v163, %v451
    %v596 = vadd.f32 %v164, %v452
    %v597 = vadd.f32 %v165, %v453
    %v598 = vadd.f32 %v166, %v454
    %v599 = vadd.f32 %v167, %v455
    %v600 = vadd.f32 %v168, %v456
    %v601 = vadd.f32 %v169, %v457
    %v602 = vadd.f32 %v170, %v458
    %v603 = vadd.f32 %v171, %v459
    %v604 = vadd.f32 %v172, %v460
    %v605 = vadd.f32 %v173, %v461
    %v606 = vadd.f32 %v174, %v462
    %v607 = vadd.f32 %v175, %v463
    %v608 = vadd.f32 %v176, %v464
    %v609 = vadd.f32 %v177, %v465
    %v610 = vadd.f32 %v178, %v466
    %v611 = vadd.f32 %v179, %v467
    %v612 = vadd.f32 %v180, %v468
    %v613 = vadd.f32 %v181, %v469
    %v614 = vadd.f32 %v182, %v470
    %v615 = vadd.f32 %v183, %v471
    %v616 = vadd.f32 %v184, %v472
    %v617 = vadd.f32 %v185, %v473
    %v618 = vadd.f32 %v186, %v474
    %v619 = vadd.f32 %v187, %v475
    %v620 = vadd.f32 %v188, %v476
    %v621 = vadd.f32 %v189, %v477
    %v622 = vadd.f32 %v190, %v478
    %v623 = vadd.f32 %v191, %v479
    %v624 = vadd.f32 %v192, %v480
    %v625 = vadd.f32 %v193, %v481
    %v626 = vadd.f32 %v194, %v482
    %v627 = vadd.f32 %v195, %v483
    %v628 = vadd.f32 %v196, %v484
    %v629 = vadd.f32 %v197, %v485
    %v630 = vadd.f32 %v198, %v486
    %v631 = vadd.f32 %v199, %v487
    %v632 = vadd.f32 %v200, %v488
    %v633 = vadd.f32 %v201, %v489
    %v634 = vadd.f32 %v202, %v490
    %v635 = vadd.f32 %v203, %v491
    %v636 = vadd.f32 %v204, %v492
    %v637 = vadd.f32 %v205, %v493
    %v638 = vadd.f32 %v206, %v494
    %v639 = vadd.f32 %v207, %v495
    %v640 = vadd.f32 %v208, %v496
    %v641 = vadd.f32 %v209, %v497
    %v642 = vadd.f32 %v210, %v498
    %v643 = vadd.f32 %v211, %v499
    %v644 = vadd.f32 %v212, %v500
    %v645 = vadd.f32 %v213, %v501
    %v646 = vadd.f32 %v214, %v502
    %v647 = vadd.f32 %v215, %v503
    %v648 = vadd.f32 %v216, %v504
    %v649 = vadd.f32 %v217, %v505
    %v650 = vadd.f32 %v218, %v506
    %v651 = vadd.f32 %v219, %v507
    %v652 = vadd.f32 %v220, %v508
    %v653 = vadd.f32 %v221, %v509
    %v654 = vadd.f32 %v222, %v510
    %v655 = vadd.f32 %v223, %v511
    %v656 = vadd.f32 %v224, %v512
    %v657 = vadd.f32 %v225, %v513
    %v658 = vadd.f32 %v226, %v514
    %v659 = vadd.f32 %v227, %v515
    %v660 = vadd.f32 %v228, %v516
    %v661 = vadd.f32 %v229, %v517
    %v662 = vadd.f32 %v230, %v518
    %v663 = vadd.f32 %v231, %v519
    %v664 = vadd.f32 %v232, %v520
    %v665 = vadd.f32 %v233, %v521
    %v666 = vadd.f32 %v234, %v522
    %v667 = vadd.f32 %v235, %v523
    %v668 = vadd.f32 %v236, %v524
    %v669 = vadd.f32 %v237, %v525
    %v670 = vadd.f32 %v238, %v526
    %v671 = vadd.f32 %v239, %v527
    %v672 = vadd.f32 %v240, %v528
    %v673 = vadd.f32 %v241, %v529
    %v674 = vadd.f32 %v242, %v530
    %v675 = vadd.f32 %v243, %v531
    %v676 = vadd.f32 %v244, %v532
    %v677 = vadd.f32 %v245, %v533
    %v678 = vadd.f32 %v246, %v534
    %v679 = vadd.f32 %v247, %v535
    %v680 = vadd.f32 %v248, %v536
    %v681 = vadd.f32 %v249, %v537
    %v682 = vadd.f32 %v250, %v538
    %v683 = vadd.f32 %v251, %v539
    %v684 = vadd.f32 %v252, %v540
    %v685 = vadd.f32 %v253, %v541
    %v686 = vadd.f32 %v254, %v542
    %v687 = vadd.f32 %v255, %v543
    %v688 = vadd.f32 %v256, %v544
    %v689 = vadd.f32 %v257, %v545
    %v690 = vadd.f32 %v258, %v546
    %v691 = vadd.f32 %v259, %v547
    %v692 = vadd.f32 %v260, %v548
    %v693 = vadd.f32 %v261, %v549
    %v694 = vadd.f32 %v262, %v550
    %v695 = vadd.f32 %v263, %v551
    %v696 = vadd.f32 %v264, %v552
    %v697 = vadd.f32 %v265, %v553
    %v698 = vadd.f32 %v266, %v554
    %v699 = vadd.f32 %v267, %v555
    %v700 = vadd.f32 %v268, %v556
    %v701 = vadd.f32 %v269, %v557
    %v702 = vadd.f32 %v270, %v558
    %v703 = vadd.f32 %v271, %v559
    %v704 = vadd.f32 %v272, %v560
    %v705 = vadd.f32 %v273, %v561
    %v706 = vadd.f32 %v274, %v562
    %v707 = vadd.f32 %v275, %v563
    %v708 = vadd.f32 %v276, %v564
    %v709 = vadd.f32 %v277, %v565
    %v710 = vadd.f32 %v278, %v566
    %v711 = vadd.f32 %v279, %v567
    %v712 = vadd.f32 %v280, %v568
    %v713 = vadd.f32 %v281, %v569
    %v714 = vadd.f32 %v282, %v570
    %v715 = vadd.f32 %v283, %v571
    %v716 = vadd.f32 %v284, %v572
    %v717 = vadd.f32 %v285, %v573
    %v718 = vadd.f32 %v286, %v574
    %v719 = vadd.f32 %v287, %v575
    %v720 = vadd.f32 %v288, %v576
    %v721 = vadd.f32 %v289, %v577
    %v722 = vadd.f32 %v290, %v578
    %v723 = vadd.f32 %v291, %v579
    %v724 = vadd.f32 %v292, %v580
    %v725 = vadd.f32 %v293, %v581
    %v726 = vadd.f32 %v294, %v582
    %v727 = vadd.f32 %v295, %v583
    %v728 = vadd.f32 %v296, %v584
    %v729 = vadd.f32 %v297, %v585
    %v730 = vadd.f32 %v298, %v586
    %v731 = vadd.f32 %v299, %v587
    %v732 = vadd.f32 %v300, %v588
    %v733 = vadd.f32 %v301, %v589
    %v734 = vadd.f32 %v302, %v590
    %v735 = vadd.f32 %v303, %v591
    %v736 = vadd.f32 %v304, %v592
    %vm737 = vcmask 261120
    %738 = vst.msk [vmem:[#allocation2] sm:$0xff] %vm737, %v593
    %739 = vst.msk [vmem:[#allocation2 + $0x8] sm:$0xff] %vm737, %v594
    %740 = vst.msk [vmem:[#allocation2 + $0x10] sm:$0xff] %vm737, %v595
    %741 = vst.msk [vmem:[#allocation2 + $0x18] sm:$0xff] %vm737, %v596
    %742 = vst.msk [vmem:[#allocation2 + $0x20] sm:$0xff] %vm737, %v597
    %743 = vst.msk [vmem:[#allocation2 + $0x28] sm:$0xff] %vm737, %v598
    %744 = vst.msk [vmem:[#allocation2 + $0x30] sm:$0xff] %vm737, %v599
    %745 = vst.msk [vmem:[#allocation2 + $0x38] sm:$0xff] %vm737, %v600
    %746 = vst.msk [vmem:[#allocation2 + $0x40] sm:$0xff] %vm737, %v601
    %747 = vst.msk [vmem:[#allocation2 + $0x48] sm:$0xff] %vm737, %v602
    %748 = vst.msk [vmem:[#allocation2 + $0x50] sm:$0xff] %vm737, %v603
    %749 = vst.msk [vmem:[#allocation2 + $0x58] sm:$0xff] %vm737, %v604
    %750 = vst.msk [vmem:[#allocation2 + $0x60] sm:$0xff] %vm737, %v605
    %751 = vst.msk [vmem:[#allocation2 + $0x68] sm:$0xff] %vm737, %v606
    %752 = vst.msk [vmem:[#allocation2 + $0x70] sm:$0xff] %vm737, %v607
    %753 = vst.msk [vmem:[#allocation2 + $0x78] sm:$0xff] %vm737, %v608
    %754 = vst.msk [vmem:[#allocation2 + $0x80] sm:$0xff] %vm737, %v609
    %755 = vst.msk [vmem:[#allocation2 + $0x88] sm:$0xff] %vm737, %v610
    %756 = vst.msk [vmem:[#allocation2 + $0x90] sm:$0xff] %vm737, %v611
    %757 = vst.msk [vmem:[#allocation2 + $0x98] sm:$0xff] %vm737, %v612
    %758 = vst.msk [vmem:[#allocation2 + $0xa0] sm:$0xff] %vm737, %v613
    %759 = vst.msk [vmem:[#allocation2 + $0xa8] sm:$0xff] %vm737, %v614
    %760 = vst.msk [vmem:[#allocation2 + $0xb0] sm:$0xff] %vm737, %v615
    %761 = vst.msk [vmem:[#allocation2 + $0xb8] sm:$0xff] %vm737, %v616
    %762 = vst.msk [vmem:[#allocation2 + $0xc0] sm:$0xff] %vm737, %v617
    %763 = vst.msk [vmem:[#allocation2 + $0xc8] sm:$0xff] %vm737, %v618
    %764 = vst.msk [vmem:[#allocation2 + $0xd0] sm:$0xff] %vm737, %v619
    %765 = vst.msk [vmem:[#allocation2 + $0xd8] sm:$0xff] %vm737, %v620
    %766 = vst.msk [vmem:[#allocation2 + $0xe0] sm:$0xff] %vm737, %v621
    %767 = vst.msk [vmem:[#allocation2 + $0xe8] sm:$0xff] %vm737, %v622
    %768 = vst.msk [vmem:[#allocation2 + $0xf0] sm:$0xff] %vm737, %v623
    %769 = vst.msk [vmem:[#allocation2 + $0xf8] sm:$0xff] %vm737, %v624
    %770 = vst.msk [vmem:[#allocation2 + $0x100] sm:$0xff] %vm737, %v625
    %771 = vst.msk [vmem:[#allocation2 + $0x108] sm:$0xff] %vm737, %v626
    %772 = vst.msk [vmem:[#allocation2 + $0x110] sm:$0xff] %vm737, %v627
    %773 = vst.msk [vmem:[#allocation2 + $0x118] sm:$0xff] %vm737, %v628
    %774 = vst.msk [vmem:[#allocation2 + $0x120] sm:$0xff] %vm737, %v629
    %775 = vst.msk [vmem:[#allocation2 + $0x128] sm:$0xff] %vm737, %v630
    %776 = vst.msk [vmem:[#allocation2 + $0x130] sm:$0xff] %vm737, %v631
    %777 = vst.msk [vmem:[#allocation2 + $0x138] sm:$0xff] %vm737, %v632
    %778 = vst.msk [vmem:[#allocation2 + $0x140] sm:$0xff] %vm737, %v633
    %779 = vst.msk [vmem:[#allocation2 + $0x148] sm:$0xff] %vm737, %v634
    %780 = vst.msk [vmem:[#allocation2 + $0x150] sm:$0xff] %vm737, %v635
    %781 = vst.msk [vmem:[#allocation2 + $0x158] sm:$0xff] %vm737, %v636
    %782 = vst.msk [vmem:[#allocation2 + $0x160] sm:$0xff] %vm737, %v637
    %783 = vst.msk [vmem:[#allocation2 + $0x168] sm:$0xff] %vm737, %v638
    %784 = vst.msk [vmem:[#allocation2 + $0x170] sm:$0xff] %vm737, %v639
    %785 = vst.msk [vmem:[#allocation2 + $0x178] sm:$0xff] %vm737, %v640
    %786 = vst.msk [vmem:[#allocation2 + $0x180] sm:$0xff] %vm737, %v641
    %787 = vst.msk [vmem:[#allocation2 + $0x188] sm:$0xff] %vm737, %v642
    %788 = vst.msk [vmem:[#allocation2 + $0x190] sm:$0xff] %vm737, %v643
    %789 = vst.msk [vmem:[#allocation2 + $0x198] sm:$0xff] %vm737, %v644
    %790 = vst.msk [vmem:[#allocation2 + $0x1a0] sm:$0xff] %vm737, %v645
    %791 = vst.msk [vmem:[#allocation2 + $0x1a8] sm:$0xff] %vm737, %v646
    %792 = vst.msk [vmem:[#allocation2 + $0x1b0] sm:$0xff] %vm737, %v647
    %793 = vst.msk [vmem:[#allocation2 + $0x1b8] sm:$0xff] %vm737, %v648
    %794 = vst.msk [vmem:[#allocation2 + $0x1c0] sm:$0xff] %vm737, %v649
    %795 = vst.msk [vmem:[#allocation2 + $0x1c8] sm:$0xff] %vm737, %v650
    %796 = vst.msk [vmem:[#allocation2 + $0x1d0] sm:$0xff] %vm737, %v651
    %797 = vst.msk [vmem:[#allocation2 + $0x1d8] sm:$0xff] %vm737, %v652
    %798 = vst.msk [vmem:[#allocation2 + $0x1e0] sm:$0xff] %vm737, %v653
    %799 = vst.msk [vmem:[#allocation2 + $0x1e8] sm:$0xff] %vm737, %v654
    %800 = vst.msk [vmem:[#allocation2 + $0x1f0] sm:$0xff] %vm737, %v655
    %801 = vst.msk [vmem:[#allocation2 + $0x1f8] sm:$0xff] %vm737, %v656
    %802 = vst.msk [vmem:[#allocation2 + $0x200] sm:$0xff] %vm737, %v657
    %803 = vst.msk [vmem:[#allocation2 + $0x208] sm:$0xff] %vm737, %v658
    %804 = vst.msk [vmem:[#allocation2 + $0x210] sm:$0xff] %vm737, %v659
    %805 = vst.msk [vmem:[#allocation2 + $0x218] sm:$0xff] %vm737, %v660
    %806 = vst.msk [vmem:[#allocation2 + $0x220] sm:$0xff] %vm737, %v661
    %807 = vst.msk [vmem:[#allocation2 + $0x228] sm:$0xff] %vm737, %v662
    %808 = vst.msk [vmem:[#allocation2 + $0x230] sm:$0xff] %vm737, %v663
    %809 = vst.msk [vmem:[#allocation2 + $0x238] sm:$0xff] %vm737, %v664
    %810 = vst.msk [vmem:[#allocation2 + $0x240] sm:$0xff] %vm737, %v665
    %811 = vst.msk [vmem:[#allocation2 + $0x248] sm:$0xff] %vm737, %v666
    %812 = vst.msk [vmem:[#allocation2 + $0x250] sm:$0xff] %vm737, %v667
    %813 = vst.msk [vmem:[#allocation2 + $0x258] sm:$0xff] %vm737, %v668
    %814 = vst.msk [vmem:[#allocation2 + $0x260] sm:$0xff] %vm737, %v669
    %815 = vst.msk [vmem:[#allocation2 + $0x268] sm:$0xff] %vm737, %v670
    %816 = vst.msk [vmem:[#allocation2 + $0x270] sm:$0xff] %vm737, %v671
    %817 = vst.msk [vmem:[#allocation2 + $0x278] sm:$0xff] %vm737, %v672
    %818 = vst.msk [vmem:[#allocation2 + $0x280] sm:$0xff] %vm737, %v673
    %819 = vst.msk [vmem:[#allocation2 + $0x288] sm:$0xff] %vm737, %v674
    %820 = vst.msk [vmem:[#allocation2 + $0x290] sm:$0xff] %vm737, %v675
    %821 = vst.msk [vmem:[#allocation2 + $0x298] sm:$0xff] %vm737, %v676
    %822 = vst.msk [vmem:[#allocation2 + $0x2a0] sm:$0xff] %vm737, %v677
    %823 = vst.msk [vmem:[#allocation2 + $0x2a8] sm:$0xff] %vm737, %v678
    %824 = vst.msk [vmem:[#allocation2 + $0x2b0] sm:$0xff] %vm737, %v679
    %825 = vst.msk [vmem:[#allocation2 + $0x2b8] sm:$0xff] %vm737, %v680
    %826 = vst.msk [vmem:[#allocation2 + $0x2c0] sm:$0xff] %vm737, %v681
    %827 = vst.msk [vmem:[#allocation2 + $0x2c8] sm:$0xff] %vm737, %v682
    %828 = vst.msk [vmem:[#allocation2 + $0x2d0] sm:$0xff] %vm737, %v683
    %829 = vst.msk [vmem:[#allocation2 + $0x2d8] sm:$0xff] %vm737, %v684
    %830 = vst.msk [vmem:[#allocation2 + $0x2e0] sm:$0xff] %vm737, %v685
    %831 = vst.msk [vmem:[#allocation2 + $0x2e8] sm:$0xff] %vm737, %v686
    %832 = vst.msk [vmem:[#allocation2 + $0x2f0] sm:$0xff] %vm737, %v687
    %833 = vst.msk [vmem:[#allocation2 + $0x2f8] sm:$0xff] %vm737, %v688
    %834 = vst.msk [vmem:[#allocation2 + $0x300] sm:$0xff] %vm737, %v689
    %835 = vst.msk [vmem:[#allocation2 + $0x308] sm:$0xff] %vm737, %v690
    %836 = vst.msk [vmem:[#allocation2 + $0x310] sm:$0xff] %vm737, %v691
    %837 = vst.msk [vmem:[#allocation2 + $0x318] sm:$0xff] %vm737, %v692
    %838 = vst.msk [vmem:[#allocation2 + $0x320] sm:$0xff] %vm737, %v693
    %839 = vst.msk [vmem:[#allocation2 + $0x328] sm:$0xff] %vm737, %v694
    %840 = vst.msk [vmem:[#allocation2 + $0x330] sm:$0xff] %vm737, %v695
    %841 = vst.msk [vmem:[#allocation2 + $0x338] sm:$0xff] %vm737, %v696
    %842 = vst.msk [vmem:[#allocation2 + $0x340] sm:$0xff] %vm737, %v697
    %843 = vst.msk [vmem:[#allocation2 + $0x348] sm:$0xff] %vm737, %v698
    %844 = vst.msk [vmem:[#allocation2 + $0x350] sm:$0xff] %vm737, %v699
    %845 = vst.msk [vmem:[#allocation2 + $0x358] sm:$0xff] %vm737, %v700
    %846 = vst.msk [vmem:[#allocation2 + $0x360] sm:$0xff] %vm737, %v701
    %847 = vst.msk [vmem:[#allocation2 + $0x368] sm:$0xff] %vm737, %v702
    %848 = vst.msk [vmem:[#allocation2 + $0x370] sm:$0xff] %vm737, %v703
    %849 = vst.msk [vmem:[#allocation2 + $0x378] sm:$0xff] %vm737, %v704
    %850 = vst.msk [vmem:[#allocation2 + $0x380] sm:$0xff] %vm737, %v705
    %851 = vst.msk [vmem:[#allocation2 + $0x388] sm:$0xff] %vm737, %v706
    %852 = vst.msk [vmem:[#allocation2 + $0x390] sm:$0xff] %vm737, %v707
    %853 = vst.msk [vmem:[#allocation2 + $0x398] sm:$0xff] %vm737, %v708
    %854 = vst.msk [vmem:[#allocation2 + $0x3a0] sm:$0xff] %vm737, %v709
    %855 = vst.msk [vmem:[#allocation2 + $0x3a8] sm:$0xff] %vm737, %v710
    %856 = vst.msk [vmem:[#allocation2 + $0x3b0] sm:$0xff] %vm737, %v711
    %857 = vst.msk [vmem:[#allocation2 + $0x3b8] sm:$0xff] %vm737, %v712
    %858 = vst.msk [vmem:[#allocation2 + $0x3c0] sm:$0xff] %vm737, %v713
    %859 = vst.msk [vmem:[#allocation2 + $0x3c8] sm:$0xff] %vm737, %v714
    %860 = vst.msk [vmem:[#allocation2 + $0x3d0] sm:$0xff] %vm737, %v715
    %861 = vst.msk [vmem:[#allocation2 + $0x3d8] sm:$0xff] %vm737, %v716
    %862 = vst.msk [vmem:[#allocation2 + $0x3e0] sm:$0xff] %vm737, %v717
    %863 = vst.msk [vmem:[#allocation2 + $0x3e8] sm:$0xff] %vm737, %v718
    %864 = vst.msk [vmem:[#allocation2 + $0x3f0] sm:$0xff] %vm737, %v719
    %865 = vst.msk [vmem:[#allocation2 + $0x3f8] sm:$0xff] %vm737, %v720
    %866 = vst.msk [vmem:[#allocation2 + $0x400] sm:$0xff] %vm737, %v721
    %867 = vst.msk [vmem:[#allocation2 + $0x408] sm:$0xff] %vm737, %v722
    %868 = vst.msk [vmem:[#allocation2 + $0x410] sm:$0xff] %vm737, %v723
    %869 = vst.msk [vmem:[#allocation2 + $0x418] sm:$0xff] %vm737, %v724
    %870 = vst.msk [vmem:[#allocation2 + $0x420] sm:$0xff] %vm737, %v725
    %871 = vst.msk [vmem:[#allocation2 + $0x428] sm:$0xff] %vm737, %v726
    %872 = vst.msk [vmem:[#allocation2 + $0x430] sm:$0xff] %vm737, %v727
    %873 = vst.msk [vmem:[#allocation2 + $0x438] sm:$0xff] %vm737, %v728
    %874 = vst.msk [vmem:[#allocation2 + $0x440] sm:$0xff] %vm737, %v729
    %875 = vst.msk [vmem:[#allocation2 + $0x448] sm:$0xff] %vm737, %v730
    %876 = vst.msk [vmem:[#allocation2 + $0x450] sm:$0xff] %vm737, %v731
    %877 = vst.msk [vmem:[#allocation2 + $0x458] sm:$0xff] %vm737, %v732
    %878 = vst.msk [vmem:[#allocation2 + $0x460] sm:$0xff] %vm737, %v733
    %879 = vst.msk [vmem:[#allocation2 + $0x468] sm:$0xff] %vm737, %v734
    %880 = vst.msk [vmem:[#allocation2 + $0x470] sm:$0xff] %vm737, %v735
    %881 = vst.msk [vmem:[#allocation2 + $0x478] sm:$0xff] %vm737, %v736
    %v882 = vld [vmem:[%s0] sm:$0xff]
    %v883 = vld [vmem:[%s0 + $0x8] sm:$0xff]
    %v884 = vld [vmem:[%s0 + $0x10] sm:$0xff]
    %v885 = vld [vmem:[%s0 + $0x18] sm:$0xff]
    %v886 = vld [vmem:[%s0 + $0x20] sm:$0xff]
    %v887 = vld [vmem:[%s0 + $0x28] sm:$0xff]
    %v888 = vld [vmem:[%s0 + $0x30] sm:$0xff]
    %v889 = vld [vmem:[%s0 + $0x38] sm:$0xff]
    %v890 = vld [vmem:[%s0 + $0x40] sm:$0xff]
    %v891 = vld [vmem:[%s0 + $0x48] sm:$0xff]
    %v892 = vld [vmem:[%s0 + $0x50] sm:$0xff]
    %v893 = vld [vmem:[%s0 + $0x58] sm:$0xff]
    %v894 = vld [vmem:[%s0 + $0x60] sm:$0xff]
    %v895 = vld [vmem:[%s0 + $0x68] sm:$0xff]
    %v896 = vld [vmem:[%s0 + $0x70] sm:$0xff]
    %v897 = vld [vmem:[%s0 + $0x78] sm:$0xff]
    %v898 = vld [vmem:[%s0 + $0x80] sm:$0xff]
    %v899 = vld [vmem:[%s0 + $0x88] sm:$0xff]
    %v900 = vld [vmem:[%s0 + $0x90] sm:$0xff]
    %v901 = vld [vmem:[%s0 + $0x98] sm:$0xff]
    %v902 = vld [vmem:[%s0 + $0xa0] sm:$0xff]
    %v903 = vld [vmem:[%s0 + $0xa8] sm:$0xff]
    %v904 = vld [vmem:[%s0 + $0xb0] sm:$0xff]
    %v905 = vld [vmem:[%s0 + $0xb8] sm:$0xff]
    %v906 = vld [vmem:[%s0 + $0xc0] sm:$0xff]
    %v907 = vld [vmem:[%s0 + $0xc8] sm:$0xff]
    %v908 = vld [vmem:[%s0 + $0xd0] sm:$0xff]
    %v909 = vld [vmem:[%s0 + $0xd8] sm:$0xff]
    %v910 = vld [vmem:[%s0 + $0xe0] sm:$0xff]
    %v911 = vld [vmem:[%s0 + $0xe8] sm:$0xff]
    %v912 = vld [vmem:[%s0 + $0xf0] sm:$0xff]
    %v913 = vld [vmem:[%s0 + $0xf8] sm:$0xff]
    %v914 = vld [vmem:[%s0 + $0x100] sm:$0xff]
    %v915 = vld [vmem:[%s0 + $0x108] sm:$0xff]
    %v916 = vld [vmem:[%s0 + $0x110] sm:$0xff]
    %v917 = vld [vmem:[%s0 + $0x118] sm:$0xff]
    %v918 = vld [vmem:[%s0 + $0x120] sm:$0xff]
    %v919 = vld [vmem:[%s0 + $0x128] sm:$0xff]
    %v920 = vld [vmem:[%s0 + $0x130] sm:$0xff]
    %v921 = vld [vmem:[%s0 + $0x138] sm:$0xff]
    %v922 = vld [vmem:[%s0 + $0x140] sm:$0xff]
    %v923 = vld [vmem:[%s0 + $0x148] sm:$0xff]
    %v924 = vld [vmem:[%s0 + $0x150] sm:$0xff]
    %v925 = vld [vmem:[%s0 + $0x158] sm:$0xff]
    %v926 = vld [vmem:[%s0 + $0x160] sm:$0xff]
    %v927 = vld [vmem:[%s0 + $0x168] sm:$0xff]
    %v928 = vld [vmem:[%s0 + $0x170] sm:$0xff]
    %v929 = vld [vmem:[%s0 + $0x178] sm:$0xff]
    %v930 = vld [vmem:[%s0 + $0x180] sm:$0xff]
    %v931 = vld [vmem:[%s0 + $0x188] sm:$0xff]
    %v932 = vld [vmem:[%s0 + $0x190] sm:$0xff]
    %v933 = vld [vmem:[%s0 + $0x198] sm:$0xff]
    %v934 = vld [vmem:[%s0 + $0x1a0] sm:$0xff]
    %v935 = vld [vmem:[%s0 + $0x1a8] sm:$0xff]
    %v936 = vld [vmem:[%s0 + $0x1b0] sm:$0xff]
    %v937 = vld [vmem:[%s0 + $0x1b8] sm:$0xff]
    %v938 = vld [vmem:[%s0 + $0x1c0] sm:$0xff]
    %v939 = vld [vmem:[%s0 + $0x1c8] sm:$0xff]
    %v940 = vld [vmem:[%s0 + $0x1d0] sm:$0xff]
    %v941 = vld [vmem:[%s0 + $0x1d8] sm:$0xff]
    %v942 = vld [vmem:[%s0 + $0x1e0] sm:$0xff]
    %v943 = vld [vmem:[%s0 + $0x1e8] sm:$0xff]
    %v944 = vld [vmem:[%s0 + $0x1f0] sm:$0xff]
    %v945 = vld [vmem:[%s0 + $0x1f8] sm:$0xff]
    %v946 = vld [vmem:[%s0 + $0x200] sm:$0xff]
    %v947 = vld [vmem:[%s0 + $0x208] sm:$0xff]
    %v948 = vld [vmem:[%s0 + $0x210] sm:$0xff]
    %v949 = vld [vmem:[%s0 + $0x218] sm:$0xff]
    %v950 = vld [vmem:[%s0 + $0x220] sm:$0xff]
    %v951 = vld [vmem:[%s0 + $0x228] sm:$0xff]
    %v952 = vld [vmem:[%s0 + $0x230] sm:$0xff]
    %v953 = vld [vmem:[%s0 + $0x238] sm:$0xff]
    %v954 = vld [vmem:[%s0 + $0x240] sm:$0xff]
    %v955 = vld [vmem:[%s0 + $0x248] sm:$0xff]
    %v956 = vld [vmem:[%s0 + $0x250] sm:$0xff]
    %v957 = vld [vmem:[%s0 + $0x258] sm:$0xff]
    %v958 = vld [vmem:[%s0 + $0x260] sm:$0xff]
    %v959 = vld [vmem:[%s0 + $0x268] sm:$0xff]
    %v960 = vld [vmem:[%s0 + $0x270] sm:$0xff]
    %v961 = vld [vmem:[%s0 + $0x278] sm:$0xff]
    %v962 = vld [vmem:[%s0 + $0x280] sm:$0xff]
    %v963 = vld [vmem:[%s0 + $0x288] sm:$0xff]
    %v964 = vld [vmem:[%s0 + $0x290] sm:$0xff]
    %v965 = vld [vmem:[%s0 + $0x298] sm:$0xff]
    %v966 = vld [vmem:[%s0 + $0x2a0] sm:$0xff]
    %v967 = vld [vmem:[%s0 + $0x2a8] sm:$0xff]
    %v968 = vld [vmem:[%s0 + $0x2b0] sm:$0xff]
    %v969 = vld [vmem:[%s0 + $0x2b8] sm:$0xff]
    %v970 = vld [vmem:[%s0 + $0x2c0] sm:$0xff]
    %v971 = vld [vmem:[%s0 + $0x2c8] sm:$0xff]
    %v972 = vld [vmem:[%s0 + $0x2d0] sm:$0xff]
    %v973 = vld [vmem:[%s0 + $0x2d8] sm:$0xff]
    %v974 = vld [vmem:[%s0 + $0x2e0] sm:$0xff]
    %v975 = vld [vmem:[%s0 + $0x2e8] sm:$0xff]
    %v976 = vld [vmem:[%s0 + $0x2f0] sm:$0xff]
    %v977 = vld [vmem:[%s0 + $0x2f8] sm:$0xff]
    %v978 = vld [vmem:[%s0 + $0x300] sm:$0xff]
    %v979 = vld [vmem:[%s0 + $0x308] sm:$0xff]
    %v980 = vld [vmem:[%s0 + $0x310] sm:$0xff]
    %v981 = vld [vmem:[%s0 + $0x318] sm:$0xff]
    %v982 = vld [vmem:[%s0 + $0x320] sm:$0xff]
    %v983 = vld [vmem:[%s0 + $0x328] sm:$0xff]
    %v984 = vld [vmem:[%s0 + $0x330] sm:$0xff]
    %v985 = vld [vmem:[%s0 + $0x338] sm:$0xff]
    %v986 = vld [vmem:[%s0 + $0x340] sm:$0xff]
    %v987 = vld [vmem:[%s0 + $0x348] sm:$0xff]
    %v988 = vld [vmem:[%s0 + $0x350] sm:$0xff]
    %v989 = vld [vmem:[%s0 + $0x358] sm:$0xff]
    %v990 = vld [vmem:[%s0 + $0x360] sm:$0xff]
    %v991 = vld [vmem:[%s0 + $0x368] sm:$0xff]
    %v992 = vld [vmem:[%s0 + $0x370] sm:$0xff]
    %v993 = vld [vmem:[%s0 + $0x378] sm:$0xff]
    %v994 = vld [vmem:[%s0 + $0x380] sm:$0xff]
    %v995 = vld [vmem:[%s0 + $0x388] sm:$0xff]
    %v996 = vld [vmem:[%s0 + $0x390] sm:$0xff]
    %v997 = vld [vmem:[%s0 + $0x398] sm:$0xff]
    %v998 = vld [vmem:[%s0 + $0x3a0] sm:$0xff]
    %v999 = vld [vmem:[%s0 + $0x3a8] sm:$0xff]
    %v1000 = vld [vmem:[%s0 + $0x3b0] sm:$0xff]
    %v1001 = vld [vmem:[%s0 + $0x3b8] sm:$0xff]
    %v1002 = vld [vmem:[%s0 + $0x3c0] sm:$0xff]
    %v1003 = vld [vmem:[%s0 + $0x3c8] sm:$0xff]
    %v1004 = vld [vmem:[%s0 + $0x3d0] sm:$0xff]
    %v1005 = vld [vmem:[%s0 + $0x3d8] sm:$0xff]
    %v1006 = vld [vmem:[%s0 + $0x3e0] sm:$0xff]
    %v1007 = vld [vmem:[%s0 + $0x3e8] sm:$0xff]
    %v1008 = vld [vmem:[%s0 + $0x3f0] sm:$0xff]
    %v1009 = vld [vmem:[%s0 + $0x3f8] sm:$0xff]
    %v1010 = vld [vmem:[%s0 + $0x400] sm:$0xff]
    %v1011 = vld [vmem:[%s0 + $0x408] sm:$0xff]
    %v1012 = vld [vmem:[%s0 + $0x410] sm:$0xff]
    %v1013 = vld [vmem:[%s0 + $0x418] sm:$0xff]
    %v1014 = vld [vmem:[%s0 + $0x420] sm:$0xff]
    %v1015 = vld [vmem:[%s0 + $0x428] sm:$0xff]
    %v1016 = vld [vmem:[%s0 + $0x430] sm:$0xff]
    %v1017 = vld [vmem:[%s0 + $0x438] sm:$0xff]
    %v1018 = vld [vmem:[%s0 + $0x440] sm:$0xff]
    %v1019 = vld [vmem:[%s0 + $0x448] sm:$0xff]
    %v1020 = vld [vmem:[%s0 + $0x450] sm:$0xff]
    %v1021 = vld [vmem:[%s0 + $0x458] sm:$0xff]
    %v1022 = vld [vmem:[%s0 + $0x460] sm:$0xff]
    %v1023 = vld [vmem:[%s0 + $0x468] sm:$0xff]
    %v1024 = vld [vmem:[%s0 + $0x470] sm:$0xff]
    %v1025 = vld [vmem:[%s0 + $0x478] sm:$0xff]
    %v1026 = vmul.f32 %v593, 0.7
    %v1027 = vmul.f32 %v594, 0.7
    %v1028 = vmul.f32 %v595, 0.7
    %v1029 = vmul.f32 %v596, 0.7
    %v1030 = vmul.f32 %v597, 0.7
    %v1031 = vmul.f32 %v598, 0.7
    %v1032 = vmul.f32 %v599, 0.7
    %v1033 = vmul.f32 %v600, 0.7
    %v1034 = vmul.f32 %v601, 0.7
    %v1035 = vmul.f32 %v602, 0.7
    %v1036 = vmul.f32 %v603, 0.7
    %v1037 = vmul.f32 %v604, 0.7
    %v1038 = vmul.f32 %v605, 0.7
    %v1039 = vmul.f32 %v606, 0.7
    %v1040 = vmul.f32 %v607, 0.7
    %v1041 = vmul.f32 %v608, 0.7
    %v1042 = vmul.f32 %v609, 0.7
    %v1043 = vmul.f32 %v610, 0.7
    %v1044 = vmul.f32 %v611, 0.7
    %v1045 = vmul.f32 %v612, 0.7
    %v1046 = vmul.f32 %v613, 0.7
    %v1047 = vmul.f32 %v614, 0.7
    %v1048 = vmul.f32 %v615, 0.7
    %v1049 = vmul.f32 %v616, 0.7
    %v1050 = vmul.f32 %v617, 0.7
    %v1051 = vmul.f32 %v618, 0.7
    %v1052 = vmul.f32 %v619, 0.7
    %v1053 = vmul.f32 %v620, 0.7
    %v1054 = vmul.f32 %v621, 0.7
    %v1055 = vmul.f32 %v622, 0.7
    %v1056 = vmul.f32 %v623, 0.7
    %v1057 = vmul.f32 %v624, 0.7
    %v1058 = vmul.f32 %v625, 0.7
    %v1059 = vmul.f32 %v626, 0.7
    %v1060 = vmul.f32 %v627, 0.7
    %v1061 = vmul.f32 %v628, 0.7
    %v1062 = vmul.f32 %v629, 0.7
    %v1063 = vmul.f32 %v630, 0.7
    %v1064 = vmul.f32 %v631, 0.7
    %v1065 = vmul.f32 %v632, 0.7
    %v1066 = vmul.f32 %v633, 0.7
    %v1067 = vmul.f32 %v634, 0.7
    %v1068 = vmul.f32 %v635, 0.7
    %v1069 = vmul.f32 %v636, 0.7
    %v1070 = vmul.f32 %v637, 0.7
    %v1071 = vmul.f32 %v638, 0.7
    %v1072 = vmul.f32 %v639, 0.7
    %v1073 = vmul.f32 %v640, 0.7
    %v1074 = vmul.f32 %v641, 0.7
    %v1075 = vmul.f32 %v642, 0.7
    %v1076 = vmul.f32 %v643, 0.7
    %v1077 = vmul.f32 %v644, 0.7
    %v1078 = vmul.f32 %v645, 0.7
    %v1079 = vmul.f32 %v646, 0.7
    %v1080 = vmul.f32 %v647, 0.7
    %v1081 = vmul.f32 %v648, 0.7
    %v1082 = vmul.f32 %v649, 0.7
    %v1083 = vmul.f32 %v650, 0.7
    %v1084 = vmul.f32 %v651, 0.7
    %v1085 = vmul.f32 %v652, 0.7
    %v1086 = vmul.f32 %v653, 0.7
    %v1087 = vmul.f32 %v654, 0.7
    %v1088 = vmul.f32 %v655, 0.7
    %v1089 = vmul.f32 %v656, 0.7
    %v1090 = vmul.f32 %v657, 0.7
    %v1091 = vmul.f32 %v658, 0.7
    %v1092 = vmul.f32 %v659, 0.7
    %v1093 = vmul.f32 %v660, 0.7
    %v1094 = vmul.f32 %v661, 0.7
    %v1095 = vmul.f32 %v662, 0.7
    %v1096 = vmul.f32 %v663, 0.7
    %v1097 = vmul.f32 %v664, 0.7
    %v1098 = vmul.f32 %v665, 0.7
    %v1099 = vmul.f32 %v666, 0.7
    %v1100 = vmul.f32 %v667, 0.7
    %v1101 = vmul.f32 %v668, 0.7
    %v1102 = vmul.f32 %v669, 0.7
    %v1103 = vmul.f32 %v670, 0.7
    %v1104 = vmul.f32 %v671, 0.7
    %v1105 = vmul.f32 %v672, 0.7
    %v1106 = vmul.f32 %v673, 0.7
    %v1107 = vmul.f32 %v674, 0.7
    %v1108 = vmul.f32 %v675, 0.7
    %v1109 = vmul.f32 %v676, 0.7
    %v1110 = vmul.f32 %v677, 0.7
    %v1111 = vmul.f32 %v678, 0.7
    %v1112 = vmul.f32 %v679, 0.7
    %v1113 = vmul.f32 %v680, 0.7
    %v1114 = vmul.f32 %v681, 0.7
    %v1115 = vmul.f32 %v682, 0.7
    %v1116 = vmul.f32 %v683, 0.7
    %v1117 = vmul.f32 %v684, 0.7
    %v1118 = vmul.f32 %v685, 0.7
    %v1119 = vmul.f32 %v686, 0.7
    %v1120 = vmul.f32 %v687, 0.7
    %v1121 = vmul.f32 %v688, 0.7
    %v1122 = vmul.f32 %v689, 0.7
    %v1123 = vmul.f32 %v690, 0.7
    %v1124 = vmul.f32 %v691, 0.7
    %v1125 = vmul.f32 %v692, 0.7
    %v1126 = vmul.f32 %v693, 0.7
    %v1127 = vmul.f32 %v694, 0.7
    %v1128 = vmul.f32 %v695, 0.7
    %v1129 = vmul.f32 %v696, 0.7
    %v1130 = vmul.f32 %v697, 0.7
    %v1131 = vmul.f32 %v698, 0.7
    %v1132 = vmul.f32 %v699, 0.7
    %v1133 = vmul.f32 %v700, 0.7
    %v1134 = vmul.f32 %v701, 0.7
    %v1135 = vmul.f32 %v702, 0.7
    %v1136 = vmul.f32 %v703, 0.7
    %v1137 = vmul.f32 %v704, 0.7
    %v1138 = vmul.f32 %v705, 0.7
    %v1139 = vmul.f32 %v706, 0.7
    %v1140 = vmul.f32 %v707, 0.7
    %v1141 = vmul.f32 %v708, 0.7
    %v1142 = vmul.f32 %v709, 0.7
    %v1143 = vmul.f32 %v710, 0.7
    %v1144 = vmul.f32 %v711, 0.7
    %v1145 = vmul.f32 %v712, 0.7
    %v1146 = vmul.f32 %v713, 0.7
    %v1147 = vmul.f32 %v714, 0.7
    %v1148 = vmul.f32 %v715, 0.7
    %v1149 = vmul.f32 %v716, 0.7
    %v1150 = vmul.f32 %v717, 0.7
    %v1151 = vmul.f32 %v718, 0.7
    %v1152 = vmul.f32 %v719, 0.7
    %v1153 = vmul.f32 %v720, 0.7
    %v1154 = vmul.f32 %v721, 0.7
    %v1155 = vmul.f32 %v722, 0.7
    %v1156 = vmul.f32 %v723, 0.7
    %v1157 = vmul.f32 %v724, 0.7
    %v1158 = vmul.f32 %v725, 0.7
    %v1159 = vmul.f32 %v726, 0.7
    %v1160 = vmul.f32 %v727, 0.7
    %v1161 = vmul.f32 %v728, 0.7
    %v1162 = vmul.f32 %v729, 0.7
    %v1163 = vmul.f32 %v730, 0.7
    %v1164 = vmul.f32 %v731, 0.7
    %v1165 = vmul.f32 %v732, 0.7
    %v1166 = vmul.f32 %v733, 0.7
    %v1167 = vmul.f32 %v734, 0.7
    %v1168 = vmul.f32 %v735, 0.7
    %v1169 = vmul.f32 %v736, 0.7
    %v1170 = vsub.f32 %v882, %v1026
    %v1171 = vsub.f32 %v883, %v1027
    %v1172 = vsub.f32 %v884, %v1028
    %v1173 = vsub.f32 %v885, %v1029
    %v1174 = vsub.f32 %v886, %v1030
    %v1175 = vsub.f32 %v887, %v1031
    %v1176 = vsub.f32 %v888, %v1032
    %v1177 = vsub.f32 %v889, %v1033
    %v1178 = vsub.f32 %v890, %v1034
    %v1179 = vsub.f32 %v891, %v1035
    %v1180 = vsub.f32 %v892, %v1036
    %v1181 = vsub.f32 %v893, %v1037
    %v1182 = vsub.f32 %v894, %v1038
    %v1183 = vsub.f32 %v895, %v1039
    %v1184 = vsub.f32 %v896, %v1040
    %v1185 = vsub.f32 %v897, %v1041
    %v1186 = vsub.f32 %v898, %v1042
    %v1187 = vsub.f32 %v899, %v1043
    %v1188 = vsub.f32 %v900, %v1044
    %v1189 = vsub.f32 %v901, %v1045
    %v1190 = vsub.f32 %v902, %v1046
    %v1191 = vsub.f32 %v903, %v1047
    %v1192 = vsub.f32 %v904, %v1048
    %v1193 = vsub.f32 %v905, %v1049
    %v1194 = vsub.f32 %v906, %v1050
    %v1195 = vsub.f32 %v907, %v1051
    %v1196 = vsub.f32 %v908, %v1052
    %v1197 = vsub.f32 %v909, %v1053
    %v1198 = vsub.f32 %v910, %v1054
    %v1199 = vsub.f32 %v911, %v1055
    %v1200 = vsub.f32 %v912, %v1056
    %v1201 = vsub.f32 %v913, %v1057
    %v1202 = vsub.f32 %v914, %v1058
    %v1203 = vsub.f32 %v915, %v1059
    %v1204 = vsub.f32 %v916, %v1060
    %v1205 = vsub.f32 %v917, %v1061
    %v1206 = vsub.f32 %v918, %v1062
    %v1207 = vsub.f32 %v919, %v1063
    %v1208 = vsub.f32 %v920, %v1064
    %v1209 = vsub.f32 %v921, %v1065
    %v1210 = vsub.f32 %v922, %v1066
    %v1211 = vsub.f32 %v923, %v1067
    %v1212 = vsub.f32 %v924, %v1068
    %v1213 = vsub.f32 %v925, %v1069
    %v1214 = vsub.f32 %v926, %v1070
    %v1215 = vsub.f32 %v927, %v1071
    %v1216 = vsub.f32 %v928, %v1072
    %v1217 = vsub.f32 %v929, %v1073
    %v1218 = vsub.f32 %v930, %v1074
    %v1219 = vsub.f32 %v931, %v1075
    %v1220 = vsub.f32 %v932, %v1076
    %v1221 = vsub.f32 %v933, %v1077
    %v1222 = vsub.f32 %v934, %v1078
    %v1223 = vsub.f32 %v935, %v1079
    %v1224 = vsub.f32 %v936, %v1080
    %v1225 = vsub.f32 %v937, %v1081
    %v1226 = vsub.f32 %v938, %v1082
    %v1227 = vsub.f32 %v939, %v1083
    %v1228 = vsub.f32 %v940, %v1084
    %v1229 = vsub.f32 %v941, %v1085
    %v1230 = vsub.f32 %v942, %v1086
    %v1231 = vsub.f32 %v943, %v1087
    %v1232 = vsub.f32 %v944, %v1088
    %v1233 = vsub.f32 %v945, %v1089
    %v1234 = vsub.f32 %v946, %v1090
    %v1235 = vsub.f32 %v947, %v1091
    %v1236 = vsub.f32 %v948, %v1092
    %v1237 = vsub.f32 %v949, %v1093
    %v1238 = vsub.f32 %v950, %v1094
    %v1239 = vsub.f32 %v951, %v1095
    %v1240 = vsub.f32 %v952, %v1096
    %v1241 = vsub.f32 %v953, %v1097
    %v1242 = vsub.f32 %v954, %v1098
    %v1243 = vsub.f32 %v955, %v1099
    %v1244 = vsub.f32 %v956, %v1100
    %v1245 = vsub.f32 %v957, %v1101
    %v1246 = vsub.f32 %v958, %v1102
    %v1247 = vsub.f32 %v959, %v1103
    %v1248 = vsub.f32 %v960, %v1104
    %v1249 = vsub.f32 %v961, %v1105
    %v1250 = vsub.f32 %v962, %v1106
    %v1251 = vsub.f32 %v963, %v1107
    %v1252 = vsub.f32 %v964, %v1108
    %v1253 = vsub.f32 %v965, %v1109
    %v1254 = vsub.f32 %v966, %v1110
    %v1255 = vsub.f32 %v967, %v1111
    %v1256 = vsub.f32 %v968, %v1112
    %v1257 = vsub.f32 %v969, %v1113
    %v1258 = vsub.f32 %v970, %v1114
    %v1259 = vsub.f32 %v971, %v1115
    %v1260 = vsub.f32 %v972, %v1116
    %v1261 = vsub.f32 %v973, %v1117
    %v1262 = vsub.f32 %v974, %v1118
    %v1263 = vsub.f32 %v975, %v1119
    %v1264 = vsub.f32 %v976, %v1120
    %v1265 = vsub.f32 %v977, %v1121
    %v1266 = vsub.f32 %v978, %v1122
    %v1267 = vsub.f32 %v979, %v1123
    %v1268 = vsub.f32 %v980, %v1124
    %v1269 = vsub.f32 %v981, %v1125
    %v1270 = vsub.f32 %v982, %v1126
    %v1271 = vsub.f32 %v983, %v1127
    %v1272 = vsub.f32 %v984, %v1128
    %v1273 = vsub.f32 %v985, %v1129
    %v1274 = vsub.f32 %v986, %v1130
    %v1275 = vsub.f32 %v987, %v1131
    %v1276 = vsub.f32 %v988, %v1132
    %v1277 = vsub.f32 %v989, %v1133
    %v1278 = vsub.f32 %v990, %v1134
    %v1279 = vsub.f32 %v991, %v1135
    %v1280 = vsub.f32 %v992, %v1136
    %v1281 = vsub.f32 %v993, %v1137
    %v1282 = vsub.f32 %v994, %v1138
    %v1283 = vsub.f32 %v995, %v1139
    %v1284 = vsub.f32 %v996, %v1140
    %v1285 = vsub.f32 %v997, %v1141
    %v1286 = vsub.f32 %v998, %v1142
    %v1287 = vsub.f32 %v999, %v1143
    %v1288 = vsub.f32 %v1000, %v1144
    %v1289 = vsub.f32 %v1001, %v1145
    %v1290 = vsub.f32 %v1002, %v1146
    %v1291 = vsub.f32 %v1003, %v1147
    %v1292 = vsub.f32 %v1004, %v1148
    %v1293 = vsub.f32 %v1005, %v1149
    %v1294 = vsub.f32 %v1006, %v1150
    %v1295 = vsub.f32 %v1007, %v1151
    %v1296 = vsub.f32 %v1008, %v1152
    %v1297 = vsub.f32 %v1009, %v1153
    %v1298 = vsub.f32 %v1010, %v1154
    %v1299 = vsub.f32 %v1011, %v1155
    %v1300 = vsub.f32 %v1012, %v1156
    %v1301 = vsub.f32 %v1013, %v1157
    %v1302 = vsub.f32 %v1014, %v1158
    %v1303 = vsub.f32 %v1015, %v1159
    %v1304 = vsub.f32 %v1016, %v1160
    %v1305 = vsub.f32 %v1017, %v1161
    %v1306 = vsub.f32 %v1018, %v1162
    %v1307 = vsub.f32 %v1019, %v1163
    %v1308 = vsub.f32 %v1020, %v1164
    %v1309 = vsub.f32 %v1021, %v1165
    %v1310 = vsub.f32 %v1022, %v1166
    %v1311 = vsub.f32 %v1023, %v1167
    %v1312 = vsub.f32 %v1024, %v1168
    %v1313 = vsub.f32 %v1025, %v1169
    %v1314 = vmax.f32 %v1170, 0.0
    %v1315 = vmax.f32 %v1171, 0.0
    %v1316 = vmax.f32 %v1172, 0.0
    %v1317 = vmax.f32 %v1173, 0.0
    %v1318 = vmax.f32 %v1174, 0.0
    %v1319 = vmax.f32 %v1175, 0.0
    %v1320 = vmax.f32 %v1176, 0.0
    %v1321 = vmax.f32 %v1177, 0.0
    %v1322 = vmax.f32 %v1178, 0.0
    %v1323 = vmax.f32 %v1179, 0.0
    %v1324 = vmax.f32 %v1180, 0.0
    %v1325 = vmax.f32 %v1181, 0.0
    %v1326 = vmax.f32 %v1182, 0.0
    %v1327 = vmax.f32 %v1183, 0.0
    %v1328 = vmax.f32 %v1184, 0.0
    %v1329 = vmax.f32 %v1185, 0.0
    %v1330 = vmax.f32 %v1186, 0.0
    %v1331 = vmax.f32 %v1187, 0.0
    %v1332 = vmax.f32 %v1188, 0.0
    %v1333 = vmax.f32 %v1189, 0.0
    %v1334 = vmax.f32 %v1190, 0.0
    %v1335 = vmax.f32 %v1191, 0.0
    %v1336 = vmax.f32 %v1192, 0.0
    %v1337 = vmax.f32 %v1193, 0.0
    %v1338 = vmax.f32 %v1194, 0.0
    %v1339 = vmax.f32 %v1195, 0.0
    %v1340 = vmax.f32 %v1196, 0.0
    %v1341 = vmax.f32 %v1197, 0.0
    %v1342 = vmax.f32 %v1198, 0.0
    %v1343 = vmax.f32 %v1199, 0.0
    %v1344 = vmax.f32 %v1200, 0.0
    %v1345 = vmax.f32 %v1201, 0.0
    %v1346 = vmax.f32 %v1202, 0.0
    %v1347 = vmax.f32 %v1203, 0.0
    %v1348 = vmax.f32 %v1204, 0.0
    %v1349 = vmax.f32 %v1205, 0.0
    %v1350 = vmax.f32 %v1206, 0.0
    %v1351 = vmax.f32 %v1207, 0.0
    %v1352 = vmax.f32 %v1208, 0.0
    %v1353 = vmax.f32 %v1209, 0.0
    %v1354 = vmax.f32 %v1210, 0.0
    %v1355 = vmax.f32 %v1211, 0.0
    %v1356 = vmax.f32 %v1212, 0.0
    %v1357 = vmax.f32 %v1213, 0.0
    %v1358 = vmax.f32 %v1214, 0.0
    %v1359 = vmax.f32 %v1215, 0.0
    %v1360 = vmax.f32 %v1216, 0.0
    %v1361 = vmax.f32 %v1217, 0.0
    %v1362 = vmax.f32 %v1218, 0.0
    %v1363 = vmax.f32 %v1219, 0.0
    %v1364 = vmax.f32 %v1220, 0.0
    %v1365 = vmax.f32 %v1221, 0.0
    %v1366 = vmax.f32 %v1222, 0.0
    %v1367 = vmax.f32 %v1223, 0.0
    %v1368 = vmax.f32 %v1224, 0.0
    %v1369 = vmax.f32 %v1225, 0.0
    %v1370 = vmax.f32 %v1226, 0.0
    %v1371 = vmax.f32 %v1227, 0.0
    %v1372 = vmax.f32 %v1228, 0.0
    %v1373 = vmax.f32 %v1229, 0.0
    %v1374 = vmax.f32 %v1230, 0.0
    %v1375 = vmax.f32 %v1231, 0.0
    %v1376 = vmax.f32 %v1232, 0.0
    %v1377 = vmax.f32 %v1233, 0.0
    %v1378 = vmax.f32 %v1234, 0.0
    %v1379 = vmax.f32 %v1235, 0.0
    %v1380 = vmax.f32 %v1236, 0.0
    %v1381 = vmax.f32 %v1237, 0.0
    %v1382 = vmax.f32 %v1238, 0.0
    %v1383 = vmax.f32 %v1239, 0.0
    %v1384 = vmax.f32 %v1240, 0.0
    %v1385 = vmax.f32 %v1241, 0.0
    %v1386 = vmax.f32 %v1242, 0.0
    %v1387 = vmax.f32 %v1243, 0.0
    %v1388 = vmax.f32 %v1244, 0.0
    %v1389 = vmax.f32 %v1245, 0.0
    %v1390 = vmax.f32 %v1246, 0.0
    %v1391 = vmax.f32 %v1247, 0.0
    %v1392 = vmax.f32 %v1248, 0.0
    %v1393 = vmax.f32 %v1249, 0.0
    %v1394 = vmax.f32 %v1250, 0.0
    %v1395 = vmax.f32 %v1251, 0.0
    %v1396 = vmax.f32 %v1252, 0.0
    %v1397 = vmax.f32 %v1253, 0.0
    %v1398 = vmax.f32 %v1254, 0.0
    %v1399 = vmax.f32 %v1255, 0.0
    %v1400 = vmax.f32 %v1256, 0.0
    %v1401 = vmax.f32 %v1257, 0.0
    %v1402 = vmax.f32 %v1258, 0.0
    %v1403 = vmax.f32 %v1259, 0.0
    %v1404 = vmax.f32 %v1260, 0.0
    %v1405 = vmax.f32 %v1261, 0.0
    %v1406 = vmax.f32 %v1262, 0.0
    %v1407 = vmax.f32 %v1263, 0.0
    %v1408 = vmax.f32 %v1264, 0.0
    %v1409 = vmax.f32 %v1265, 0.0
    %v1410 = vmax.f32 %v1266, 0.0
    %v1411 = vmax.f32 %v1267, 0.0
    %v1412 = vmax.f32 %v1268, 0.0
    %v1413 = vmax.f32 %v1269, 0.0
    %v1414 = vmax.f32 %v1270, 0.0
    %v1415 = vmax.f32 %v1271, 0.0
    %v1416 = vmax.f32 %v1272, 0.0
    %v1417 = vmax.f32 %v1273, 0.0
    %v1418 = vmax.f32 %v1274, 0.0
    %v1419 = vmax.f32 %v1275, 0.0
    %v1420 = vmax.f32 %v1276, 0.0
    %v1421 = vmax.f32 %v1277, 0.0
    %v1422 = vmax.f32 %v1278, 0.0
    %v1423 = vmax.f32 %v1279, 0.0
    %v1424 = vmax.f32 %v1280, 0.0
    %v1425 = vmax.f32 %v1281, 0.0
    %v1426 = vmax.f32 %v1282, 0.0
    %v1427 = vmax.f32 %v1283, 0.0
    %v1428 = vmax.f32 %v1284, 0.0
    %v1429 = vmax.f32 %v1285, 0.0
    %v1430 = vmax.f32 %v1286, 0.0
    %v1431 = vmax.f32 %v1287, 0.0
    %v1432 = vmax.f32 %v1288, 0.0
    %v1433 = vmax.f32 %v1289, 0.0
    %v1434 = vmax.f32 %v1290, 0.0
    %v1435 = vmax.f32 %v1291, 0.0
    %v1436 = vmax.f32 %v1292, 0.0
    %v1437 = vmax.f32 %v1293, 0.0
    %v1438 = vmax.f32 %v1294, 0.0
    %v1439 = vmax.f32 %v1295, 0.0
    %v1440 = vmax.f32 %v1296, 0.0
    %v1441 = vmax.f32 %v1297, 0.0
    %v1442 = vmax.f32 %v1298, 0.0
    %v1443 = vmax.f32 %v1299, 0.0
    %v1444 = vmax.f32 %v1300, 0.0
    %v1445 = vmax.f32 %v1301, 0.0
    %v1446 = vmax.f32 %v1302, 0.0
    %v1447 = vmax.f32 %v1303, 0.0
    %v1448 = vmax.f32 %v1304, 0.0
    %v1449 = vmax.f32 %v1305, 0.0
    %v1450 = vmax.f32 %v1306, 0.0
    %v1451 = vmax.f32 %v1307, 0.0
    %v1452 = vmax.f32 %v1308, 0.0
    %v1453 = vmax.f32 %v1309, 0.0
    %v1454 = vmax.f32 %v1310, 0.0
    %v1455 = vmax.f32 %v1311, 0.0
    %v1456 = vmax.f32 %v1312, 0.0
    %v1457 = vmax.f32 %v1313, 0.0
    %1458 = vst.msk [vmem:[%s3] sm:$0xff] %vm737, %v1314
    %1459 = vst.msk [vmem:[%s3 + $0x8] sm:$0xff] %vm737, %v1315
    %1460 = vst.msk [vmem:[%s3 + $0x10] sm:$0xff] %vm737, %v1316
    %1461 = vst.msk [vmem:[%s3 + $0x18] sm:$0xff] %vm737, %v1317
    %1462 = vst.msk [vmem:[%s3 + $0x20] sm:$0xff] %vm737, %v1318
    %1463 = vst.msk [vmem:[%s3 + $0x28] sm:$0xff] %vm737, %v1319
    %1464 = vst.msk [vmem:[%s3 + $0x30] sm:$0xff] %vm737, %v1320
    %1465 = vst.msk [vmem:[%s3 + $0x38] sm:$0xff] %vm737, %v1321
    %1466 = vst.msk [vmem:[%s3 + $0x40] sm:$0xff] %vm737, %v1322
    %1467 = vst.msk [vmem:[%s3 + $0x48] sm:$0xff] %vm737, %v1323
    %1468 = vst.msk [vmem:[%s3 + $0x50] sm:$0xff] %vm737, %v1324
    %1469 = vst.msk [vmem:[%s3 + $0x58] sm:$0xff] %vm737, %v1325
    %1470 = vst.msk [vmem:[%s3 + $0x60] sm:$0xff] %vm737, %v1326
    %1471 = vst.msk [vmem:[%s3 + $0x68] sm:$0xff] %vm737, %v1327
    %1472 = vst.msk [vmem:[%s3 + $0x70] sm:$0xff] %vm737, %v1328
    %1473 = vst.msk [vmem:[%s3 + $0x78] sm:$0xff] %vm737, %v1329
    %1474 = vst.msk [vmem:[%s3 + $0x80] sm:$0xff] %vm737, %v1330
    %1475 = vst.msk [vmem:[%s3 + $0x88] sm:$0xff] %vm737, %v1331
    %1476 = vst.msk [vmem:[%s3 + $0x90] sm:$0xff] %vm737, %v1332
    %1477 = vst.msk [vmem:[%s3 + $0x98] sm:$0xff] %vm737, %v1333
    %1478 = vst.msk [vmem:[%s3 + $0xa0] sm:$0xff] %vm737, %v1334
    %1479 = vst.msk [vmem:[%s3 + $0xa8] sm:$0xff] %vm737, %v1335
    %1480 = vst.msk [vmem:[%s3 + $0xb0] sm:$0xff] %vm737, %v1336
    %1481 = vst.msk [vmem:[%s3 + $0xb8] sm:$0xff] %vm737, %v1337
    %1482 = vst.msk [vmem:[%s3 + $0xc0] sm:$0xff] %vm737, %v1338
    %1483 = vst.msk [vmem:[%s3 + $0xc8] sm:$0xff] %vm737, %v1339
    %1484 = vst.msk [vmem:[%s3 + $0xd0] sm:$0xff] %vm737, %v1340
    %1485 = vst.msk [vmem:[%s3 + $0xd8] sm:$0xff] %vm737, %v1341
    %1486 = vst.msk [vmem:[%s3 + $0xe0] sm:$0xff] %vm737, %v1342
    %1487 = vst.msk [vmem:[%s3 + $0xe8] sm:$0xff] %vm737, %v1343
    %1488 = vst.msk [vmem:[%s3 + $0xf0] sm:$0xff] %vm737, %v1344
    %1489 = vst.msk [vmem:[%s3 + $0xf8] sm:$0xff] %vm737, %v1345
    %1490 = vst.msk [vmem:[%s3 + $0x100] sm:$0xff] %vm737, %v1346
    %1491 = vst.msk [vmem:[%s3 + $0x108] sm:$0xff] %vm737, %v1347
    %1492 = vst.msk [vmem:[%s3 + $0x110] sm:$0xff] %vm737, %v1348
    %1493 = vst.msk [vmem:[%s3 + $0x118] sm:$0xff] %vm737, %v1349
    %1494 = vst.msk [vmem:[%s3 + $0x120] sm:$0xff] %vm737, %v1350
    %1495 = vst.msk [vmem:[%s3 + $0x128] sm:$0xff] %vm737, %v1351
    %1496 = vst.msk [vmem:[%s3 + $0x130] sm:$0xff] %vm737, %v1352
    %1497 = vst.msk [vmem:[%s3 + $0x138] sm:$0xff] %vm737, %v1353
    %1498 = vst.msk [vmem:[%s3 + $0x140] sm:$0xff] %vm737, %v1354
    %1499 = vst.msk [vmem:[%s3 + $0x148] sm:$0xff] %vm737, %v1355
    %1500 = vst.msk [vmem:[%s3 + $0x150] sm:$0xff] %vm737, %v1356
    %1501 = vst.msk [vmem:[%s3 + $0x158] sm:$0xff] %vm737, %v1357
    %1502 = vst.msk [vmem:[%s3 + $0x160] sm:$0xff] %vm737, %v1358
    %1503 = vst.msk [vmem:[%s3 + $0x168] sm:$0xff] %vm737, %v1359
    %1504 = vst.msk [vmem:[%s3 + $0x170] sm:$0xff] %vm737, %v1360
    %1505 = vst.msk [vmem:[%s3 + $0x178] sm:$0xff] %vm737, %v1361
    %1506 = vst.msk [vmem:[%s3 + $0x180] sm:$0xff] %vm737, %v1362
    %1507 = vst.msk [vmem:[%s3 + $0x188] sm:$0xff] %vm737, %v1363
    %1508 = vst.msk [vmem:[%s3 + $0x190] sm:$0xff] %vm737, %v1364
    %1509 = vst.msk [vmem:[%s3 + $0x198] sm:$0xff] %vm737, %v1365
    %1510 = vst.msk [vmem:[%s3 + $0x1a0] sm:$0xff] %vm737, %v1366
    %1511 = vst.msk [vmem:[%s3 + $0x1a8] sm:$0xff] %vm737, %v1367
    %1512 = vst.msk [vmem:[%s3 + $0x1b0] sm:$0xff] %vm737, %v1368
    %1513 = vst.msk [vmem:[%s3 + $0x1b8] sm:$0xff] %vm737, %v1369
    %1514 = vst.msk [vmem:[%s3 + $0x1c0] sm:$0xff] %vm737, %v1370
    %1515 = vst.msk [vmem:[%s3 + $0x1c8] sm:$0xff] %vm737, %v1371
    %1516 = vst.msk [vmem:[%s3 + $0x1d0] sm:$0xff] %vm737, %v1372
    %1517 = vst.msk [vmem:[%s3 + $0x1d8] sm:$0xff] %vm737, %v1373
    %1518 = vst.msk [vmem:[%s3 + $0x1e0] sm:$0xff] %vm737, %v1374
    %1519 = vst.msk [vmem:[%s3 + $0x1e8] sm:$0xff] %vm737, %v1375
    %1520 = vst.msk [vmem:[%s3 + $0x1f0] sm:$0xff] %vm737, %v1376
    %1521 = vst.msk [vmem:[%s3 + $0x1f8] sm:$0xff] %vm737, %v1377
    %1522 = vst.msk [vmem:[%s3 + $0x200] sm:$0xff] %vm737, %v1378
    %1523 = vst.msk [vmem:[%s3 + $0x208] sm:$0xff] %vm737, %v1379
    %1524 = vst.msk [vmem:[%s3 + $0x210] sm:$0xff] %vm737, %v1380
    %1525 = vst.msk [vmem:[%s3 + $0x218] sm:$0xff] %vm737, %v1381
    %1526 = vst.msk [vmem:[%s3 + $0x220] sm:$0xff] %vm737, %v1382
    %1527 = vst.msk [vmem:[%s3 + $0x228] sm:$0xff] %vm737, %v1383
    %1528 = vst.msk [vmem:[%s3 + $0x230] sm:$0xff] %vm737, %v1384
    %1529 = vst.msk [vmem:[%s3 + $0x238] sm:$0xff] %vm737, %v1385
    %1530 = vst.msk [vmem:[%s3 + $0x240] sm:$0xff] %vm737, %v1386
    %1531 = vst.msk [vmem:[%s3 + $0x248] sm:$0xff] %vm737, %v1387
    %1532 = vst.msk [vmem:[%s3 + $0x250] sm:$0xff] %vm737, %v1388
    %1533 = vst.msk [vmem:[%s3 + $0x258] sm:$0xff] %vm737, %v1389
    %1534 = vst.msk [vmem:[%s3 + $0x260] sm:$0xff] %vm737, %v1390
    %1535 = vst.msk [vmem:[%s3 + $0x268] sm:$0xff] %vm737, %v1391
    %1536 = vst.msk [vmem:[%s3 + $0x270] sm:$0xff] %vm737, %v1392
    %1537 = vst.msk [vmem:[%s3 + $0x278] sm:$0xff] %vm737, %v1393
    %1538 = vst.msk [vmem:[%s3 + $0x280] sm:$0xff] %vm737, %v1394
    %1539 = vst.msk [vmem:[%s3 + $0x288] sm:$0xff] %vm737, %v1395
    %1540 = vst.msk [vmem:[%s3 + $0x290] sm:$0xff] %vm737, %v1396
    %1541 = vst.msk [vmem:[%s3 + $0x298] sm:$0xff] %vm737, %v1397
    %1542 = vst.msk [vmem:[%s3 + $0x2a0] sm:$0xff] %vm737, %v1398
    %1543 = vst.msk [vmem:[%s3 + $0x2a8] sm:$0xff] %vm737, %v1399
    %1544 = vst.msk [vmem:[%s3 + $0x2b0] sm:$0xff] %vm737, %v1400
    %1545 = vst.msk [vmem:[%s3 + $0x2b8] sm:$0xff] %vm737, %v1401
    %1546 = vst.msk [vmem:[%s3 + $0x2c0] sm:$0xff] %vm737, %v1402
    %1547 = vst.msk [vmem:[%s3 + $0x2c8] sm:$0xff] %vm737, %v1403
    %1548 = vst.msk [vmem:[%s3 + $0x2d0] sm:$0xff] %vm737, %v1404
    %1549 = vst.msk [vmem:[%s3 + $0x2d8] sm:$0xff] %vm737, %v1405
    %1550 = vst.msk [vmem:[%s3 + $0x2e0] sm:$0xff] %vm737, %v1406
    %1551 = vst.msk [vmem:[%s3 + $0x2e8] sm:$0xff] %vm737, %v1407
    %1552 = vst.msk [vmem:[%s3 + $0x2f0] sm:$0xff] %vm737, %v1408
    %1553 = vst.msk [vmem:[%s3 + $0x2f8] sm:$0xff] %vm737, %v1409
    %1554 = vst.msk [vmem:[%s3 + $0x300] sm:$0xff] %vm737, %v1410
    %1555 = vst.msk [vmem:[%s3 + $0x308] sm:$0xff] %vm737, %v1411
    %1556 = vst.msk [vmem:[%s3 + $0x310] sm:$0xff] %vm737, %v1412
    %1557 = vst.msk [vmem:[%s3 + $0x318] sm:$0xff] %vm737, %v1413
    %1558 = vst.msk [vmem:[%s3 + $0x320] sm:$0xff] %vm737, %v1414
    %1559 = vst.msk [vmem:[%s3 + $0x328] sm:$0xff] %vm737, %v1415
    %1560 = vst.msk [vmem:[%s3 + $0x330] sm:$0xff] %vm737, %v1416
    %1561 = vst.msk [vmem:[%s3 + $0x338] sm:$0xff] %vm737, %v1417
    %1562 = vst.msk [vmem:[%s3 + $0x340] sm:$0xff] %vm737, %v1418
    %1563 = vst.msk [vmem:[%s3 + $0x348] sm:$0xff] %vm737, %v1419
    %1564 = vst.msk [vmem:[%s3 + $0x350] sm:$0xff] %vm737, %v1420
    %1565 = vst.msk [vmem:[%s3 + $0x358] sm:$0xff] %vm737, %v1421
    %1566 = vst.msk [vmem:[%s3 + $0x360] sm:$0xff] %vm737, %v1422
    %1567 = vst.msk [vmem:[%s3 + $0x368] sm:$0xff] %vm737, %v1423
    %1568 = vst.msk [vmem:[%s3 + $0x370] sm:$0xff] %vm737, %v1424
    %1569 = vst.msk [vmem:[%s3 + $0x378] sm:$0xff] %vm737, %v1425
    %1570 = vst.msk [vmem:[%s3 + $0x380] sm:$0xff] %vm737, %v1426
    %1571 = vst.msk [vmem:[%s3 + $0x388] sm:$0xff] %vm737, %v1427
    %1572 = vst.msk [vmem:[%s3 + $0x390] sm:$0xff] %vm737, %v1428
    %1573 = vst.msk [vmem:[%s3 + $0x398] sm:$0xff] %vm737, %v1429
    %1574 = vst.msk [vmem:[%s3 + $0x3a0] sm:$0xff] %vm737, %v1430
    %1575 = vst.msk [vmem:[%s3 + $0x3a8] sm:$0xff] %vm737, %v1431
    %1576 = vst.msk [vmem:[%s3 + $0x3b0] sm:$0xff] %vm737, %v1432
    %1577 = vst.msk [vmem:[%s3 + $0x3b8] sm:$0xff] %vm737, %v1433
    %1578 = vst.msk [vmem:[%s3 + $0x3c0] sm:$0xff] %vm737, %v1434
    %1579 = vst.msk [vmem:[%s3 + $0x3c8] sm:$0xff] %vm737, %v1435
    %1580 = vst.msk [vmem:[%s3 + $0x3d0] sm:$0xff] %vm737, %v1436
    %1581 = vst.msk [vmem:[%s3 + $0x3d8] sm:$0xff] %vm737, %v1437
    %1582 = vst.msk [vmem:[%s3 + $0x3e0] sm:$0xff] %vm737, %v1438
    %1583 = vst.msk [vmem:[%s3 + $0x3e8] sm:$0xff] %vm737, %v1439
    %1584 = vst.msk [vmem:[%s3 + $0x3f0] sm:$0xff] %vm737, %v1440
    %1585 = vst.msk [vmem:[%s3 + $0x3f8] sm:$0xff] %vm737, %v1441
    %1586 = vst.msk [vmem:[%s3 + $0x400] sm:$0xff] %vm737, %v1442
    %1587 = vst.msk [vmem:[%s3 + $0x408] sm:$0xff] %vm737, %v1443
    %1588 = vst.msk [vmem:[%s3 + $0x410] sm:$0xff] %vm737, %v1444
    %1589 = vst.msk [vmem:[%s3 + $0x418] sm:$0xff] %vm737, %v1445
    %1590 = vst.msk [vmem:[%s3 + $0x420] sm:$0xff] %vm737, %v1446
    %1591 = vst.msk [vmem:[%s3 + $0x428] sm:$0xff] %vm737, %v1447
    %1592 = vst.msk [vmem:[%s3 + $0x430] sm:$0xff] %vm737, %v1448
    %1593 = vst.msk [vmem:[%s3 + $0x438] sm:$0xff] %vm737, %v1449
    %1594 = vst.msk [vmem:[%s3 + $0x440] sm:$0xff] %vm737, %v1450
    %1595 = vst.msk [vmem:[%s3 + $0x448] sm:$0xff] %vm737, %v1451
    %1596 = vst.msk [vmem:[%s3 + $0x450] sm:$0xff] %vm737, %v1452
    %1597 = vst.msk [vmem:[%s3 + $0x458] sm:$0xff] %vm737, %v1453
    %1598 = vst.msk [vmem:[%s3 + $0x460] sm:$0xff] %vm737, %v1454
    %1599 = vst.msk [vmem:[%s3 + $0x468] sm:$0xff] %vm737, %v1455
    %1600 = vst.msk [vmem:[%s3 + $0x470] sm:$0xff] %vm737, %v1456
    %1601 = vst.msk [vmem:[%s3 + $0x478] sm:$0xff] %vm737, %v1457
    // Predicated region
    $region14: #{forward.20} parent=1 // pred_check
      _
    $region15: #{forward.20} parent=1 // pred_check_branch
      %1603 = sbr.rel (0) target = $region17
    $region16: #{forward.20} parent=1 // pred_region
      _
    $region17: #{forward.20} parent=1 // pred_fallthru
      _
    // Predicated region
    $region18: #{forward.20} parent=1 // pred_check
      _
    $region19: #{forward.20} parent=1 // pred_check_branch
      %1605 = sbr.rel (0) target = $region21
    $region20: #{forward.20} parent=1 // pred_region
      %s1607 = ssub.s32 18432, 18432
      %1608 = vsyncadd [#allocation3], %s1607
      %s1609 = sshll.u32 [#allocation2], 4
      %s1610 = int_to_ptr.vmem [resolvable:$true] %s1609
      %1615 = dma.vmem_to_hbm [thread:$0]  %s1610, 18432, %s4, [#allocation3], 128, 128, 8
    $region21: #{forward.20} parent=1 // pred_fallthru
      _
    // Predicated region
    $region22: #{forward.20} parent=1 // pred_check
      _
    $region23: #{forward.20} parent=1 // pred_check_branch
      %1617 = sbr.rel (0) target = $region25
    $region24: #{forward.20} parent=1 // pred_region
      _
    $region25: #{forward.20} parent=1 // pred_fallthru
      _
    // Predicated region
    $region26: #{forward.20} parent=1 // pred_check
      _
    $region27: #{forward.20} parent=1 // pred_check_branch
      %1619 = sbr.rel (0) target = $region29
    $region28: #{forward.20} parent=1 // pred_region
      %1620 = dma.done [#allocation3], 18432
    $region29: #{forward.20} parent=1 // pred_fallthru
      _
    %1621 = vsyncpa [#allocation3], 1

// kernel: forward.23
$region0: #{forward.23}
  #allocation0 [shape = 'u32[]', space=smem, size = 0x4, offset = 0x4, fixed_abs, tag = 'smem constant byte address 0x4 - core index']
  #allocation1 [shape = 'u32[144,128]{1,0:T(1,128)}', space=vmem, size = 0x12000, scoped, tag = 'internal scratch']
  %s0 = inlined_call_operand.vmem [shape: bf16[2,128], index: 0, kind: input, shape index: {}]
  %s1 = inlined_call_operand.vmem [shape: bf16[128,1024], index: 1, kind: input, shape index: {}]
  %s2 = inlined_call_operand.vmem [shape: f32[1,1024], index: 2, kind: input, shape index: {}]
  %s3 = inlined_call_operand.vmem [shape: f32[2,1024], index: 3, kind: input, shape index: {}]
  %s4 = inlined_call_operand.vmem [shape: f32[2,1024], index: 4, kind: input, shape index: {}]
  %s5 = inlined_call_operand.vmem [shape: bf16[1024,10], index: 5, kind: input, shape index: {}]
  %s6 = inlined_call_operand.vmem [shape: f32[1,10], index: 6, kind: input, shape index: {}]
  %s7 = inlined_call_operand.hbm [shape: f32[2,1024], index: 7, kind: output, shape index: {0}]
  %s8 = inlined_call_operand.hbm [shape: f32[2,1024], index: 8, kind: output, shape index: {1}]
  %s9 = inlined_call_operand.hbm [shape: f32[2,10], index: 9, kind: output, shape index: {2}]
  %10 = xla_tuple %s7, %s8, %s9
  %s11 = sld [smem:[#allocation0]]
  $region54: #{forward.23} parent=0
    _
  %s13 = ssub.s32 1, %s11
  %s14 = scalar_select 0, %s13, %s11
  $region1: #{forward.23} parent=0
    #allocation2 [shape = 'u8[8192]{0}', space=vmem, size = 0x2000, scoped, tag = 'output window, operand 0, single buffered']
    #allocation3 [shape = 's32[1]{0}', space=sflag, size = 0x4, scoped, tag = 'scoped memory for forward.23']
    #allocation4 [shape = 'u8[8192]{0}', space=vmem, size = 0x2000, scoped, tag = 'output window, operand 1, single buffered']
    #allocation5 [shape = 's32[1]{0}', space=sflag, size = 0x4, scoped, tag = 'scoped memory for forward.23']
    #allocation6 [shape = 'u8[1024]{0}', space=vmem, size = 0x400, scoped, tag = 'output window, operand 2, single buffered']
    %15 = vsyncpa [#allocation3], 0
    %16 = vsyncpa [#allocation5], 0
    // Predicated region
    $region2: #{forward.23} parent=1 // pred_check
      _
    $region3: #{forward.23} parent=1 // pred_check_branch
      %18 = sbr.rel (0) target = $region5
    $region4: #{forward.23} parent=1 // pred_region
      _
    $region5: #{forward.23} parent=1 // pred_fallthru
      _
    // Predicated region
    $region6: #{forward.23} parent=1 // pred_check
      _
    $region7: #{forward.23} parent=1 // pred_check_branch
      %20 = sbr.rel (0) target = $region9
    $region8: #{forward.23} parent=1 // pred_region
      _
    $region9: #{forward.23} parent=1 // pred_fallthru
      _
    // Predicated region
    $region10: #{forward.23} parent=1 // pred_check
      _
    $region11: #{forward.23} parent=1 // pred_check_branch
      %22 = sbr.rel (0) target = $region13
    $region12: #{forward.23} parent=1 // pred_region
      _
    $region13: #{forward.23} parent=1 // pred_fallthru
      _
    // Predicated region
    $region14: #{forward.23} parent=1 // pred_check
      _
    $region15: #{forward.23} parent=1 // pred_check_branch
      %24 = sbr.rel (0) target = $region17
    $region16: #{forward.23} parent=1 // pred_region
      _
    $region17: #{forward.23} parent=1 // pred_fallthru
      _
    // Predicated region
    $region18: #{forward.23} parent=1 // pred_check
      _
    $region19: #{forward.23} parent=1 // pred_check_branch
      %26 = sbr.rel (0) target = $region21
    $region20: #{forward.23} parent=1 // pred_region
      _
    $region21: #{forward.23} parent=1 // pred_fallthru
      _
    // Predicated region
    $region22: #{forward.23} parent=1 // pred_check
      _
    $region23: #{forward.23} parent=1 // pred_check_branch
      %28 = sbr.rel (0) target = $region25
    $region24: #{forward.23} parent=1 // pred_region
      _
    $region25: #{forward.23} parent=1 // pred_fallthru
      _
    // Predicated region
    $region26: #{forward.23} parent=1 // pred_check
      _
    $region27: #{forward.23} parent=1 // pred_check_branch
      %30 = sbr.rel (0) target = $region29
    $region28: #{forward.23} parent=1 // pred_region
      _
    $region29: #{forward.23} parent=1 // pred_fallthru
      _
    %v32 = vld [vmem:[%s0] sm:$0x1]
    %v33 = vld [vmem:[%s1] sm:$0xff]
    %v34 = vld [vmem:[%s1 + $0x8] sm:$0xff]
    %v35 = vld [vmem:[%s1 + $0x10] sm:$0xff]
    %v36 = vld [vmem:[%s1 + $0x18] sm:$0xff]
    %v37 = vld [vmem:[%s1 + $0x20] sm:$0xff]
    %v38 = vld [vmem:[%s1 + $0x28] sm:$0xff]
    %v39 = vld [vmem:[%s1 + $0x30] sm:$0xff]
    %v40 = vld [vmem:[%s1 + $0x38] sm:$0xff]
    %v41 = vld [vmem:[%s1 + $0x40] sm:$0xff]
    %v42 = vld [vmem:[%s1 + $0x48] sm:$0xff]
    %v43 = vld [vmem:[%s1 + $0x50] sm:$0xff]
    %v44 = vld [vmem:[%s1 + $0x58] sm:$0xff]
    %v45 = vld [vmem:[%s1 + $0x60] sm:$0xff]
    %v46 = vld [vmem:[%s1 + $0x68] sm:$0xff]
    %v47 = vld [vmem:[%s1 + $0x70] sm:$0xff]
    %v48 = vld [vmem:[%s1 + $0x78] sm:$0xff]
    %v49 = vld [vmem:[%s1 + $0x80] sm:$0xff]
    %v50 = vld [vmem:[%s1 + $0x88] sm:$0xff]
    %v51 = vld [vmem:[%s1 + $0x90] sm:$0xff]
    %v52 = vld [vmem:[%s1 + $0x98] sm:$0xff]
    %v53 = vld [vmem:[%s1 + $0xa0] sm:$0xff]
    %v54 = vld [vmem:[%s1 + $0xa8] sm:$0xff]
    %v55 = vld [vmem:[%s1 + $0xb0] sm:$0xff]
    %v56 = vld [vmem:[%s1 + $0xb8] sm:$0xff]
    %v57 = vld [vmem:[%s1 + $0xc0] sm:$0xff]
    %v58 = vld [vmem:[%s1 + $0xc8] sm:$0xff]
    %v59 = vld [vmem:[%s1 + $0xd0] sm:$0xff]
    %v60 = vld [vmem:[%s1 + $0xd8] sm:$0xff]
    %v61 = vld [vmem:[%s1 + $0xe0] sm:$0xff]
    %v62 = vld [vmem:[%s1 + $0xe8] sm:$0xff]
    %v63 = vld [vmem:[%s1 + $0xf0] sm:$0xff]
    %v64 = vld [vmem:[%s1 + $0xf8] sm:$0xff]
    %v65 = vld [vmem:[%s1 + $0x100] sm:$0xff]
    %v66 = vld [vmem:[%s1 + $0x108] sm:$0xff]
    %v67 = vld [vmem:[%s1 + $0x110] sm:$0xff]
    %v68 = vld [vmem:[%s1 + $0x118] sm:$0xff]
    %v69 = vld [vmem:[%s1 + $0x120] sm:$0xff]
    %v70 = vld [vmem:[%s1 + $0x128] sm:$0xff]
    %v71 = vld [vmem:[%s1 + $0x130] sm:$0xff]
    %v72 = vld [vmem:[%s1 + $0x138] sm:$0xff]
    %v73 = vld [vmem:[%s1 + $0x140] sm:$0xff]
    %v74 = vld [vmem:[%s1 + $0x148] sm:$0xff]
    %v75 = vld [vmem:[%s1 + $0x150] sm:$0xff]
    %v76 = vld [vmem:[%s1 + $0x158] sm:$0xff]
    %v77 = vld [vmem:[%s1 + $0x160] sm:$0xff]
    %v78 = vld [vmem:[%s1 + $0x168] sm:$0xff]
    %v79 = vld [vmem:[%s1 + $0x170] sm:$0xff]
    %v80 = vld [vmem:[%s1 + $0x178] sm:$0xff]
    %v81 = vld [vmem:[%s1 + $0x180] sm:$0xff]
    %v82 = vld [vmem:[%s1 + $0x188] sm:$0xff]
    %v83 = vld [vmem:[%s1 + $0x190] sm:$0xff]
    %v84 = vld [vmem:[%s1 + $0x198] sm:$0xff]
    %v85 = vld [vmem:[%s1 + $0x1a0] sm:$0xff]
    %v86 = vld [vmem:[%s1 + $0x1a8] sm:$0xff]
    %v87 = vld [vmem:[%s1 + $0x1b0] sm:$0xff]
    %v88 = vld [vmem:[%s1 + $0x1b8] sm:$0xff]
    %v89 = vld [vmem:[%s1 + $0x1c0] sm:$0xff]
    %v90 = vld [vmem:[%s1 + $0x1c8] sm:$0xff]
    %v91 = vld [vmem:[%s1 + $0x1d0] sm:$0xff]
    %v92 = vld [vmem:[%s1 + $0x1d8] sm:$0xff]
    %v93 = vld [vmem:[%s1 + $0x1e0] sm:$0xff]
    %v94 = vld [vmem:[%s1 + $0x1e8] sm:$0xff]
    %v95 = vld [vmem:[%s1 + $0x1f0] sm:$0xff]
    %v96 = vld [vmem:[%s1 + $0x1f8] sm:$0xff]
    %v97 = vld [vmem:[%s2] sm:$0xff]
    %v99 = vlaneseq
    %v100 = vshrl.u32 %v99, 7
    %v101 = vsub.s32 0, %v100
    %v102 = vrot.slane %v97, %v101
    %v103 = vlaneseq
    %v104 = vshrl.u32 %v103, 7
    %v105 = vsub.s32 1, %v104
    %v106 = vrot.slane %v97, %v105
    %v107 = vlaneseq
    %v108 = vshrl.u32 %v107, 7
    %v109 = vsub.s32 2, %v108
    %v110 = vrot.slane %v97, %v109
    %v111 = vlaneseq
    %v112 = vshrl.u32 %v111, 7
    %v113 = vsub.s32 3, %v112
    %v114 = vrot.slane %v97, %v113
    %v115 = vlaneseq
    %v116 = vshrl.u32 %v115, 7
    %v117 = vsub.s32 4, %v116
    %v118 = vrot.slane %v97, %v117
    %v119 = vlaneseq
    %v120 = vshrl.u32 %v119, 7
    %v121 = vsub.s32 5, %v120
    %v122 = vrot.slane %v97, %v121
    %v123 = vlaneseq
    %v124 = vshrl.u32 %v123, 7
    %v125 = vsub.s32 6, %v124
    %v126 = vrot.slane %v97, %v125
    %v127 = vlaneseq
    %v128 = vshrl.u32 %v127, 7
    %v129 = vsub.s32 7, %v128
    %v130 = vrot.slane %v97, %v129
    %v203 = vunpack.c.l.b16 %v33
    %v204 = vunpack.c.h.b16 %v33
    %v205 = vunpack.c.l.b16 %v34
    %v206 = vunpack.c.h.b16 %v34
    %v207 = vunpack.c.l.b16 %v35
    %v208 = vunpack.c.h.b16 %v35
    %v209 = vunpack.c.l.b16 %v36
    %v210 = vunpack.c.h.b16 %v36
    %v211 = vunpack.c.l.b16 %v37
    %v212 = vunpack.c.h.b16 %v37
    %v213 = vunpack.c.l.b16 %v38
    %v214 = vunpack.c.h.b16 %v38
    %v215 = vunpack.c.l.b16 %v39
    %v216 = vunpack.c.h.b16 %v39
    %v217 = vunpack.c.l.b16 %v40
    %v218 = vunpack.c.h.b16 %v40
    %v219 = vunpack.c.l.b16 %v41
    %v220 = vunpack.c.h.b16 %v41
    %v221 = vunpack.c.l.b16 %v42
    %v222 = vunpack.c.h.b16 %v42
    %v223 = vunpack.c.l.b16 %v43
    %v224 = vunpack.c.h.b16 %v43
    %v225 = vunpack.c.l.b16 %v44
    %v226 = vunpack.c.h.b16 %v44
    %v227 = vunpack.c.l.b16 %v45
    %v228 = vunpack.c.h.b16 %v45
    %v229 = vunpack.c.l.b16 %v46
    %v230 = vunpack.c.h.b16 %v46
    %v231 = vunpack.c.l.b16 %v47
    %v232 = vunpack.c.h.b16 %v47
    %v233 = vunpack.c.l.b16 %v48
    %v234 = vunpack.c.h.b16 %v48
    %v235 = vunpack.c.l.b16 %v49
    %v236 = vunpack.c.h.b16 %v49
    %v237 = vunpack.c.l.b16 %v50
    %v238 = vunpack.c.h.b16 %v50
    %v239 = vunpack.c.l.b16 %v51
    %v240 = vunpack.c.h.b16 %v51
    %v241 = vunpack.c.l.b16 %v52
    %v242 = vunpack.c.h.b16 %v52
    %v243 = vunpack.c.l.b16 %v53
    %v244 = vunpack.c.h.b16 %v53
    %v245 = vunpack.c.l.b16 %v54
    %v246 = vunpack.c.h.b16 %v54
    %v247 = vunpack.c.l.b16 %v55
    %v248 = vunpack.c.h.b16 %v55
    %v249 = vunpack.c.l.b16 %v56
    %v250 = vunpack.c.h.b16 %v56
    %v251 = vunpack.c.l.b16 %v57
    %v252 = vunpack.c.h.b16 %v57
    %v253 = vunpack.c.l.b16 %v58
    %v254 = vunpack.c.h.b16 %v58
    %v255 = vunpack.c.l.b16 %v59
    %v256 = vunpack.c.h.b16 %v59
    %v257 = vunpack.c.l.b16 %v60
    %v258 = vunpack.c.h.b16 %v60
    %v259 = vunpack.c.l.b16 %v61
    %v260 = vunpack.c.h.b16 %v61
    %v261 = vunpack.c.l.b16 %v62
    %v262 = vunpack.c.h.b16 %v62
    %v263 = vunpack.c.l.b16 %v63
    %v264 = vunpack.c.h.b16 %v63
    %v265 = vunpack.c.l.b16 %v64
    %v266 = vunpack.c.h.b16 %v64
    %v267 = vunpack.c.l.b16 %v65
    %v268 = vunpack.c.h.b16 %v65
    %v269 = vunpack.c.l.b16 %v66
    %v270 = vunpack.c.h.b16 %v66
    %v271 = vunpack.c.l.b16 %v67
    %v272 = vunpack.c.h.b16 %v67
    %v273 = vunpack.c.l.b16 %v68
    %v274 = vunpack.c.h.b16 %v68
    %v275 = vunpack.c.l.b16 %v69
    %v276 = vunpack.c.h.b16 %v69
    %v277 = vunpack.c.l.b16 %v70
    %v278 = vunpack.c.h.b16 %v70
    %v279 = vunpack.c.l.b16 %v71
    %v280 = vunpack.c.h.b16 %v71
    %v281 = vunpack.c.l.b16 %v72
    %v282 = vunpack.c.h.b16 %v72
    %v283 = vunpack.c.l.b16 %v73
    %v284 = vunpack.c.h.b16 %v73
    %v285 = vunpack.c.l.b16 %v74
    %v286 = vunpack.c.h.b16 %v74
    %v287 = vunpack.c.l.b16 %v75
    %v288 = vunpack.c.h.b16 %v75
    %v289 = vunpack.c.l.b16 %v76
    %v290 = vunpack.c.h.b16 %v76
    %v291 = vunpack.c.l.b16 %v77
    %v292 = vunpack.c.h.b16 %v77
    %v293 = vunpack.c.l.b16 %v78
    %v294 = vunpack.c.h.b16 %v78
    %v295 = vunpack.c.l.b16 %v79
    %v296 = vunpack.c.h.b16 %v79
    %v297 = vunpack.c.l.b16 %v80
    %v298 = vunpack.c.h.b16 %v80
    %v299 = vunpack.c.l.b16 %v81
    %v300 = vunpack.c.h.b16 %v81
    %v301 = vunpack.c.l.b16 %v82
    %v302 = vunpack.c.h.b16 %v82
    %v303 = vunpack.c.l.b16 %v83
    %v304 = vunpack.c.h.b16 %v83
    %v305 = vunpack.c.l.b16 %v84
    %v306 = vunpack.c.h.b16 %v84
    %v307 = vunpack.c.l.b16 %v85
    %v308 = vunpack.c.h.b16 %v85
    %v309 = vunpack.c.l.b16 %v86
    %v310 = vunpack.c.h.b16 %v86
    %v311 = vunpack.c.l.b16 %v87
    %v312 = vunpack.c.h.b16 %v87
    %v313 = vunpack.c.l.b16 %v88
    %v314 = vunpack.c.h.b16 %v88
    %v315 = vunpack.c.l.b16 %v89
    %v316 = vunpack.c.h.b16 %v89
    %v317 = vunpack.c.l.b16 %v90
    %v318 = vunpack.c.h.b16 %v90
    %v319 = vunpack.c.l.b16 %v91
    %v320 = vunpack.c.h.b16 %v91
    %v321 = vunpack.c.l.b16 %v92
    %v322 = vunpack.c.h.b16 %v92
    %v323 = vunpack.c.l.b16 %v93
    %v324 = vunpack.c.h.b16 %v93
    %v325 = vunpack.c.l.b16 %v94
    %v326 = vunpack.c.h.b16 %v94
    %v327 = vunpack.c.l.b16 %v95
    %v328 = vunpack.c.h.b16 %v95
    %v329 = vunpack.c.l.b16 %v96
    %v330 = vunpack.c.h.b16 %v96
    %v331 = vpack.c.b16 %v211, %v203
    %v332 = vpack.c.b16 %v212, %v204
    %v333 = vpack.c.b16 %v213, %v205
    %v334 = vpack.c.b16 %v214, %v206
    %v335 = vpack.c.b16 %v215, %v207
    %v336 = vpack.c.b16 %v216, %v208
    %v337 = vpack.c.b16 %v217, %v209
    %v338 = vpack.c.b16 %v218, %v210
    %v339 = vpack.c.b16 %v227, %v219
    %v340 = vpack.c.b16 %v228, %v220
    %v341 = vpack.c.b16 %v229, %v221
    %v342 = vpack.c.b16 %v230, %v222
    %v343 = vpack.c.b16 %v231, %v223
    %v344 = vpack.c.b16 %v232, %v224
    %v345 = vpack.c.b16 %v233, %v225
    %v346 = vpack.c.b16 %v234, %v226
    %v347 = vpack.c.b16 %v243, %v235
    %v348 = vpack.c.b16 %v244, %v236
    %v349 = vpack.c.b16 %v245, %v237
    %v350 = vpack.c.b16 %v246, %v238
    %v351 = vpack.c.b16 %v247, %v239
    %v352 = vpack.c.b16 %v248, %v240
    %v353 = vpack.c.b16 %v249, %v241
    %v354 = vpack.c.b16 %v250, %v242
    %v355 = vpack.c.b16 %v259, %v251
    %v356 = vpack.c.b16 %v260, %v252
    %v357 = vpack.c.b16 %v261, %v253
    %v358 = vpack.c.b16 %v262, %v254
    %v359 = vpack.c.b16 %v263, %v255
    %v360 = vpack.c.b16 %v264, %v256
    %v361 = vpack.c.b16 %v265, %v257
    %v362 = vpack.c.b16 %v266, %v258
    %v363 = vpack.c.b16 %v275, %v267
    %v364 = vpack.c.b16 %v276, %v268
    %v365 = vpack.c.b16 %v277, %v269
    %v366 = vpack.c.b16 %v278, %v270
    %v367 = vpack.c.b16 %v279, %v271
    %v368 = vpack.c.b16 %v280, %v272
    %v369 = vpack.c.b16 %v281, %v273
    %v370 = vpack.c.b16 %v282, %v274
    %v371 = vpack.c.b16 %v291, %v283
    %v372 = vpack.c.b16 %v292, %v284
    %v373 = vpack.c.b16 %v293, %v285
    %v374 = vpack.c.b16 %v294, %v286
    %v375 = vpack.c.b16 %v295, %v287
    %v376 = vpack.c.b16 %v296, %v288
    %v377 = vpack.c.b16 %v297, %v289
    %v378 = vpack.c.b16 %v298, %v290
    %v379 = vpack.c.b16 %v307, %v299
    %v380 = vpack.c.b16 %v308, %v300
    %v381 = vpack.c.b16 %v309, %v301
    %v382 = vpack.c.b16 %v310, %v302
    %v383 = vpack.c.b16 %v311, %v303
    %v384 = vpack.c.b16 %v312, %v304
    %v385 = vpack.c.b16 %v313, %v305
    %v386 = vpack.c.b16 %v314, %v306
    %v387 = vpack.c.b16 %v323, %v315
    %v388 = vpack.c.b16 %v324, %v316
    %v389 = vpack.c.b16 %v325, %v317
    %v390 = vpack.c.b16 %v326, %v318
    %v391 = vpack.c.b16 %v327, %v319
    %v392 = vpack.c.b16 %v328, %v320
    %v393 = vpack.c.b16 %v329, %v321
    %v394 = vpack.c.b16 %v330, %v322
    %459 = vmatprep.subr.bf16.mxu0 %v332
    %460 = vmatpush1.bf16.msra.mxu0 %v331
    %461 = vmatprep.subr.bf16.mxu0 %v340
    %462 = vmatpush1.bf16.msra.mxu0 %v339
    %463 = vmatprep.subr.bf16.mxu0 %v348
    %464 = vmatpush1.bf16.msra.mxu0 %v347
    %465 = vmatprep.subr.bf16.mxu0 %v356
    %466 = vmatpush1.bf16.msra.mxu0 %v355
    %467 = vmatprep.subr.bf16.mxu0 %v364
    %468 = vmatpush1.bf16.msra.mxu0 %v363
    %469 = vmatprep.subr.bf16.mxu0 %v372
    %470 = vmatpush1.bf16.msra.mxu0 %v371
    %471 = vmatprep.subr.bf16.mxu0 %v380
    %472 = vmatpush1.bf16.msra.mxu0 %v379
    %473 = vmatprep.subr.bf16.mxu0 %v388
    %474 = vmatpush1.bf16.msra.mxu0 %v387
    %475 = vmatprep.subr.bf16.mxu0 0
    %476 = vmatpush1.bf16.msra.mxu0 0
    %477 = vmatprep.subr.bf16.mxu0 0
    %478 = vmatpush1.bf16.msra.mxu0 0
    %479 = vmatprep.subr.bf16.mxu0 0
    %480 = vmatpush1.bf16.msra.mxu0 0
    %481 = vmatprep.subr.bf16.mxu0 0
    %482 = vmatpush1.bf16.msra.mxu0 0
    %483 = vmatprep.subr.bf16.mxu0 0
    %484 = vmatpush1.bf16.msra.mxu0 0
    %485 = vmatprep.subr.bf16.mxu0 0
    %486 = vmatpush1.bf16.msra.mxu0 0
    %487 = vmatprep.subr.bf16.mxu0 0
    %488 = vmatpush1.bf16.msra.mxu0 0
    %489 = vmatprep.subr.bf16.mxu0 0
    %490 = vmatpush1.bf16.msra.mxu0 0
    %491 = vmatprep.mubr.bf16.mxu0 0
    %492 = vmatmul.mubr.bf16.gmra.mrb[0].mxu0 %v32
    %v493 = vpop.f32.mrb[0].mxu0
    %v494 = vadd.f32 %v102, %v493
    %v495 = vpop.f32.mrb[0].mxu0
    %v496 = vadd.f32 %v106, %v495
    %v497 = vpop.f32.mrb[0].mxu0
    %v498 = vpop.f32.mrb[0].mxu0
    %499 = vdwg.mxu0
    %500 = vmatprep.subr.bf16.mxu0 %v334
    %501 = vmatpush1.bf16.msra.mxu0 %v333
    %502 = vmatprep.subr.bf16.mxu0 %v342
    %503 = vmatpush1.bf16.msra.mxu0 %v341
    %504 = vmatprep.subr.bf16.mxu0 %v350
    %505 = vmatpush1.bf16.msra.mxu0 %v349
    %506 = vmatprep.subr.bf16.mxu0 %v358
    %507 = vmatpush1.bf16.msra.mxu0 %v357
    %508 = vmatprep.subr.bf16.mxu0 %v366
    %509 = vmatpush1.bf16.msra.mxu0 %v365
    %510 = vmatprep.subr.bf16.mxu0 %v374
    %511 = vmatpush1.bf16.msra.mxu0 %v373
    %512 = vmatprep.subr.bf16.mxu0 %v382
    %513 = vmatpush1.bf16.msra.mxu0 %v381
    %514 = vmatprep.subr.bf16.mxu0 %v390
    %515 = vmatpush1.bf16.msra.mxu0 %v389
    %516 = vmatprep.subr.bf16.mxu0 0
    %517 = vmatpush1.bf16.msra.mxu0 0
    %518 = vmatprep.subr.bf16.mxu0 0
    %519 = vmatpush1.bf16.msra.mxu0 0
    %520 = vmatprep.subr.bf16.mxu0 0
    %521 = vmatpush1.bf16.msra.mxu0 0
    %522 = vmatprep.subr.bf16.mxu0 0
    %523 = vmatpush1.bf16.msra.mxu0 0
    %524 = vmatprep.subr.bf16.mxu0 0
    %525 = vmatpush1.bf16.msra.mxu0 0
    %526 = vmatprep.subr.bf16.mxu0 0
    %527 = vmatpush1.bf16.msra.mxu0 0
    %528 = vmatprep.subr.bf16.mxu0 0
    %529 = vmatpush1.bf16.msra.mxu0 0
    %530 = vmatprep.subr.bf16.mxu0 0
    %531 = vmatpush1.bf16.msra.mxu0 0
    %532 = vmatprep.mubr.bf16.mxu0 0
    %533 = vmatmul.mubr.bf16.gmra.mrb[0].mxu0 %v32
    %v534 = vpop.f32.mrb[0].mxu0
    %v535 = vadd.f32 %v110, %v534
    %v536 = vpop.f32.mrb[0].mxu0
    %v537 = vadd.f32 %v114, %v536
    %v538 = vpop.f32.mrb[0].mxu0
    %v539 = vpop.f32.mrb[0].mxu0
    %540 = vdwg.mxu0
    %541 = vmatprep.subr.bf16.mxu0 %v336
    %542 = vmatpush1.bf16.msra.mxu0 %v335
    %543 = vmatprep.subr.bf16.mxu0 %v344
    %544 = vmatpush1.bf16.msra.mxu0 %v343
    %545 = vmatprep.subr.bf16.mxu0 %v352
    %546 = vmatpush1.bf16.msra.mxu0 %v351
    %547 = vmatprep.subr.bf16.mxu0 %v360
    %548 = vmatpush1.bf16.msra.mxu0 %v359
    %549 = vmatprep.subr.bf16.mxu0 %v368
    %550 = vmatpush1.bf16.msra.mxu0 %v367
    %551 = vmatprep.subr.bf16.mxu0 %v376
    %552 = vmatpush1.bf16.msra.mxu0 %v375
    %553 = vmatprep.subr.bf16.mxu0 %v384
    %554 = vmatpush1.bf16.msra.mxu0 %v383
    %555 = vmatprep.subr.bf16.mxu0 %v392
    %556 = vmatpush1.bf16.msra.mxu0 %v391
    %557 = vmatprep.subr.bf16.mxu0 0
    %558 = vmatpush1.bf16.msra.mxu0 0
    %559 = vmatprep.subr.bf16.mxu0 0
    %560 = vmatpush1.bf16.msra.mxu0 0
    %561 = vmatprep.subr.bf16.mxu0 0
    %562 = vmatpush1.bf16.msra.mxu0 0
    %563 = vmatprep.subr.bf16.mxu0 0
    %564 = vmatpush1.bf16.msra.mxu0 0
    %565 = vmatprep.subr.bf16.mxu0 0
    %566 = vmatpush1.bf16.msra.mxu0 0
    %567 = vmatprep.subr.bf16.mxu0 0
    %568 = vmatpush1.bf16.msra.mxu0 0
    %569 = vmatprep.subr.bf16.mxu0 0
    %570 = vmatpush1.bf16.msra.mxu0 0
    %571 = vmatprep.subr.bf16.mxu0 0
    %572 = vmatpush1.bf16.msra.mxu0 0
    %573 = vmatprep.mubr.bf16.mxu0 0
    %574 = vmatmul.mubr.bf16.gmra.mrb[0].mxu0 %v32
    %v575 = vpop.f32.mrb[0].mxu0
    %v576 = vadd.f32 %v118, %v575
    %v577 = vpop.f32.mrb[0].mxu0
    %v578 = vadd.f32 %v122, %v577
    %v579 = vpop.f32.mrb[0].mxu0
    %v580 = vpop.f32.mrb[0].mxu0
    %581 = vdwg.mxu0
    %582 = vmatprep.subr.bf16.mxu0 %v338
    %583 = vmatpush1.bf16.msra.mxu0 %v337
    %584 = vmatprep.subr.bf16.mxu0 %v346
    %585 = vmatpush1.bf16.msra.mxu0 %v345
    %586 = vmatprep.subr.bf16.mxu0 %v354
    %587 = vmatpush1.bf16.msra.mxu0 %v353
    %588 = vmatprep.subr.bf16.mxu0 %v362
    %589 = vmatpush1.bf16.msra.mxu0 %v361
    %590 = vmatprep.subr.bf16.mxu0 %v370
    %591 = vmatpush1.bf16.msra.mxu0 %v369
    %592 = vmatprep.subr.bf16.mxu0 %v378
    %593 = vmatpush1.bf16.msra.mxu0 %v377
    %594 = vmatprep.subr.bf16.mxu0 %v386
    %595 = vmatpush1.bf16.msra.mxu0 %v385
    %596 = vmatprep.subr.bf16.mxu0 %v394
    %597 = vmatpush1.bf16.msra.mxu0 %v393
    %598 = vmatprep.subr.bf16.mxu0 0
    %599 = vmatpush1.bf16.msra.mxu0 0
    %600 = vmatprep.subr.bf16.mxu0 0
    %601 = vmatpush1.bf16.msra.mxu0 0
    %602 = vmatprep.subr.bf16.mxu0 0
    %603 = vmatpush1.bf16.msra.mxu0 0
    %604 = vmatprep.subr.bf16.mxu0 0
    %605 = vmatpush1.bf16.msra.mxu0 0
    %606 = vmatprep.subr.bf16.mxu0 0
    %607 = vmatpush1.bf16.msra.mxu0 0
    %608 = vmatprep.subr.bf16.mxu0 0
    %609 = vmatpush1.bf16.msra.mxu0 0
    %610 = vmatprep.subr.bf16.mxu0 0
    %611 = vmatpush1.bf16.msra.mxu0 0
    %612 = vmatprep.subr.bf16.mxu0 0
    %613 = vmatpush1.bf16.msra.mxu0 0
    %614 = vmatprep.mubr.bf16.mxu0 0
    %615 = vmatmul.mubr.bf16.gmra.mrb[0].mxu0 %v32
    %v616 = vpop.f32.mrb[0].mxu0
    %v617 = vadd.f32 %v126, %v616
    %v618 = vpop.f32.mrb[0].mxu0
    %v619 = vadd.f32 %v130, %v618
    %v620 = vpop.f32.mrb[0].mxu0
    %v621 = vpop.f32.mrb[0].mxu0
    %622 = vdwg.mxu0
    %v623 = vld [vmem:[%s4] sm:$0xff]
    %v624 = vld [vmem:[%s4 + $0x8] sm:$0xff]
    %v625 = vmul.f32 %v623, 0.96
    %v626 = vmul.f32 %v624, 0.96
    %v627 = vld [vmem:[%s3] sm:$0xff]
    %v628 = vld [vmem:[%s3 + $0x8] sm:$0xff]
    %v629 = vmul.f32 %v627, 0.04
    %v630 = vmul.f32 %v628, 0.04
    %v631 = vadd.f32 %v625, %v629
    %v632 = vadd.f32 %v626, %v630
    %633 = vst [vmem:[#allocation4] sm:$0xff] %v631
    %634 = vst [vmem:[#allocation4 + $0x8] sm:$0xff] %v632
    %v635 = vmul.f32 %v631, 0.7
    %v636 = vmul.f32 %v632, 0.7
    %v639 = vcombine.high %v635, %v635
    %v641 = vunpack.c.l.s4 1983009808
    %v642 = vunpack.c.0.s8 %v641
    %v643 = vlaneseq
    %v644 = vshrl.u32 %v643, 7
    %v645 = vsub.s32 %v642, %v644
    %v646 = vrot.slane %v635, %v645
    %v648 = vunpack.c.l.s4 1983009808
    %v649 = vunpack.c.0.s8 %v648
    %v650 = vlaneseq
    %v651 = vshrl.u32 %v650, 7
    %v652 = vsub.s32 %v649, %v651
    %v653 = vrot.slane %v639, %v652
    %v654 = vcombine.high %v646, %v646
    %v655 = vcombine.high %v653, %v653
    %v656 = vcombine.high %v636, %v636
    %v658 = vunpack.c.l.s4 1983009808
    %v659 = vunpack.c.0.s8 %v658
    %v660 = vlaneseq
    %v661 = vshrl.u32 %v660, 7
    %v662 = vsub.s32 %v659, %v661
    %v663 = vrot.slane %v636, %v662
    %v665 = vunpack.c.l.s4 1983009808
    %v666 = vunpack.c.0.s8 %v665
    %v667 = vlaneseq
    %v668 = vshrl.u32 %v667, 7
    %v669 = vsub.s32 %v666, %v668
    %v670 = vrot.slane %v656, %v669
    %v671 = vcombine.high %v663, %v663
    %v672 = vcombine.high %v670, %v670
    %v681 = vsub.f32 %v494, %v646
    %v682 = vsub.f32 %v496, %v654
    %v683 = vsub.f32 %v535, %v653
    %v684 = vsub.f32 %v537, %v655
    %v685 = vsub.f32 %v576, %v663
    %v686 = vsub.f32 %v578, %v671
    %v687 = vsub.f32 %v617, %v670
    %v688 = vsub.f32 %v619, %v672
    %v697 = vcombine.low %v681, %v682
    %v698 = vcombine.low %v683, %v684
    %v700 = vunpack.c.l.s4 1983009808
    %v701 = vunpack.c.0.s8 %v700
    %v702 = vlaneseq
    %v703 = vshrl.u32 %v702, 7
    %v704 = vsub.s32 %v701, %v703
    %v705 = vrot.slane %v697, %v704
    %v707 = vunpack.c.l.s4 1983009808
    %v708 = vunpack.c.0.s8 %v707
    %v709 = vlaneseq
    %v710 = vshrl.u32 %v709, 7
    %v711 = vsub.s32 %v708, %v710
    %v712 = vrot.slane %v698, %v711
    %v713 = vcombine.low %v705, %v712
    %v714 = vcombine.low %v685, %v686
    %v715 = vcombine.low %v687, %v688
    %v717 = vunpack.c.l.s4 1983009808
    %v718 = vunpack.c.0.s8 %v717
    %v719 = vlaneseq
    %v720 = vshrl.u32 %v719, 7
    %v721 = vsub.s32 %v718, %v720
    %v722 = vrot.slane %v714, %v721
    %v724 = vunpack.c.l.s4 1983009808
    %v725 = vunpack.c.0.s8 %v724
    %v726 = vlaneseq
    %v727 = vshrl.u32 %v726, 7
    %v728 = vsub.s32 %v725, %v727
    %v729 = vrot.slane %v715, %v728
    %v730 = vcombine.low %v722, %v729
    %733 = vst [vmem:[#allocation2] sm:$0xff] %v713
    %734 = vst [vmem:[#allocation2 + $0x8] sm:$0xff] %v730
    %v735 = vpack.c.bf16 %v681, %v681
    %v736 = vpack.c.bf16 %v682, %v682
    %v737 = vpack.c.bf16 %v683, %v683
    %v738 = vpack.c.bf16 %v684, %v684
    %v739 = vpack.c.bf16 %v685, %v685
    %v740 = vpack.c.bf16 %v686, %v686
    %v741 = vpack.c.bf16 %v687, %v687
    %v742 = vpack.c.bf16 %v688, %v688
    %v743 = vld [vmem:[%s5] sm:$0xf]
    %v744 = vld [vmem:[%s5 + $0x4] sm:$0xf]
    %v745 = vld [vmem:[%s5 + $0x8] sm:$0xf]
    %v746 = vld [vmem:[%s5 + $0xc] sm:$0xf]
    %v747 = vld [vmem:[%s5 + $0x10] sm:$0xf]
    %v748 = vld [vmem:[%s5 + $0x14] sm:$0xf]
    %v749 = vld [vmem:[%s5 + $0x18] sm:$0xf]
    %v750 = vld [vmem:[%s5 + $0x1c] sm:$0xf]
    %v751 = vld [vmem:[%s5 + $0x20] sm:$0xf]
    %v752 = vld [vmem:[%s5 + $0x24] sm:$0xf]
    %v753 = vld [vmem:[%s5 + $0x28] sm:$0xf]
    %v754 = vld [vmem:[%s5 + $0x2c] sm:$0xf]
    %v755 = vld [vmem:[%s5 + $0x30] sm:$0xf]
    %v756 = vld [vmem:[%s5 + $0x34] sm:$0xf]
    %v757 = vld [vmem:[%s5 + $0x38] sm:$0xf]
    %v758 = vld [vmem:[%s5 + $0x3c] sm:$0xf]
    %v759 = vld [vmem:[%s5 + $0x40] sm:$0xf]
    %v760 = vld [vmem:[%s5 + $0x44] sm:$0xf]
    %v761 = vld [vmem:[%s5 + $0x48] sm:$0xf]
    %v762 = vld [vmem:[%s5 + $0x4c] sm:$0xf]
    %v763 = vld [vmem:[%s5 + $0x50] sm:$0xf]
    %v764 = vld [vmem:[%s5 + $0x54] sm:$0xf]
    %v765 = vld [vmem:[%s5 + $0x58] sm:$0xf]
    %v766 = vld [vmem:[%s5 + $0x5c] sm:$0xf]
    %v767 = vld [vmem:[%s5 + $0x60] sm:$0xf]
    %v768 = vld [vmem:[%s5 + $0x64] sm:$0xf]
    %v769 = vld [vmem:[%s5 + $0x68] sm:$0xf]
    %v770 = vld [vmem:[%s5 + $0x6c] sm:$0xf]
    %v771 = vld [vmem:[%s5 + $0x70] sm:$0xf]
    %v772 = vld [vmem:[%s5 + $0x74] sm:$0xf]
    %v773 = vld [vmem:[%s5 + $0x78] sm:$0xf]
    %v774 = vld [vmem:[%s5 + $0x7c] sm:$0xf]
    %v775 = vld [vmem:[%s5 + $0x80] sm:$0xf]
    %v776 = vld [vmem:[%s5 + $0x84] sm:$0xf]
    %v777 = vld [vmem:[%s5 + $0x88] sm:$0xf]
    %v778 = vld [vmem:[%s5 + $0x8c] sm:$0xf]
    %v779 = vld [vmem:[%s5 + $0x90] sm:$0xf]
    %v780 = vld [vmem:[%s5 + $0x94] sm:$0xf]
    %v781 = vld [vmem:[%s5 + $0x98] sm:$0xf]
    %v782 = vld [vmem:[%s5 + $0x9c] sm:$0xf]
    %v783 = vld [vmem:[%s5 + $0xa0] sm:$0xf]
    %v784 = vld [vmem:[%s5 + $0xa4] sm:$0xf]
    %v785 = vld [vmem:[%s5 + $0xa8] sm:$0xf]
    %v786 = vld [vmem:[%s5 + $0xac] sm:$0xf]
    %v787 = vld [vmem:[%s5 + $0xb0] sm:$0xf]
    %v788 = vld [vmem:[%s5 + $0xb4] sm:$0xf]
    %v789 = vld [vmem:[%s5 + $0xb8] sm:$0xf]
    %v790 = vld [vmem:[%s5 + $0xbc] sm:$0xf]
    %v791 = vld [vmem:[%s5 + $0xc0] sm:$0xf]
    %v792 = vld [vmem:[%s5 + $0xc4] sm:$0xf]
    %v793 = vld [vmem:[%s5 + $0xc8] sm:$0xf]
    %v794 = vld [vmem:[%s5 + $0xcc] sm:$0xf]
    %v795 = vld [vmem:[%s5 + $0xd0] sm:$0xf]
    %v796 = vld [vmem:[%s5 + $0xd4] sm:$0xf]
    %v797 = vld [vmem:[%s5 + $0xd8] sm:$0xf]
    %v798 = vld [vmem:[%s5 + $0xdc] sm:$0xf]
    %v799 = vld [vmem:[%s5 + $0xe0] sm:$0xf]
    %v800 = vld [vmem:[%s5 + $0xe4] sm:$0xf]
    %v801 = vld [vmem:[%s5 + $0xe8] sm:$0xf]
    %v802 = vld [vmem:[%s5 + $0xec] sm:$0xf]
    %v803 = vld [vmem:[%s5 + $0xf0] sm:$0xf]
    %v804 = vld [vmem:[%s5 + $0xf4] sm:$0xf]
    %v805 = vld [vmem:[%s5 + $0xf8] sm:$0xf]
    %v806 = vld [vmem:[%s5 + $0xfc] sm:$0xf]
    %v807 = vld [vmem:[%s5 + $0x100] sm:$0xf]
    %v808 = vld [vmem:[%s5 + $0x104] sm:$0xf]
    %v809 = vld [vmem:[%s5 + $0x108] sm:$0xf]
    %v810 = vld [vmem:[%s5 + $0x10c] sm:$0xf]
    %v811 = vld [vmem:[%s5 + $0x110] sm:$0xf]
    %v812 = vld [vmem:[%s5 + $0x114] sm:$0xf]
    %v813 = vld [vmem:[%s5 + $0x118] sm:$0xf]
    %v814 = vld [vmem:[%s5 + $0x11c] sm:$0xf]
    %v815 = vld [vmem:[%s5 + $0x120] sm:$0xf]
    %v816 = vld [vmem:[%s5 + $0x124] sm:$0xf]
    %v817 = vld [vmem:[%s5 + $0x128] sm:$0xf]
    %v818 = vld [vmem:[%s5 + $0x12c] sm:$0xf]
    %v819 = vld [vmem:[%s5 + $0x130] sm:$0xf]
    %v820 = vld [vmem:[%s5 + $0x134] sm:$0xf]
    %v821 = vld [vmem:[%s5 + $0x138] sm:$0xf]
    %v822 = vld [vmem:[%s5 + $0x13c] sm:$0xf]
    %v823 = vld [vmem:[%s5 + $0x140] sm:$0xf]
    %v824 = vld [vmem:[%s5 + $0x144] sm:$0xf]
    %v825 = vld [vmem:[%s5 + $0x148] sm:$0xf]
    %v826 = vld [vmem:[%s5 + $0x14c] sm:$0xf]
    %v827 = vld [vmem:[%s5 + $0x150] sm:$0xf]
    %v828 = vld [vmem:[%s5 + $0x154] sm:$0xf]
    %v829 = vld [vmem:[%s5 + $0x158] sm:$0xf]
    %v830 = vld [vmem:[%s5 + $0x15c] sm:$0xf]
    %v831 = vld [vmem:[%s5 + $0x160] sm:$0xf]
    %v832 = vld [vmem:[%s5 + $0x164] sm:$0xf]
    %v833 = vld [vmem:[%s5 + $0x168] sm:$0xf]
    %v834 = vld [vmem:[%s5 + $0x16c] sm:$0xf]
    %v835 = vld [vmem:[%s5 + $0x170] sm:$0xf]
    %v836 = vld [vmem:[%s5 + $0x174] sm:$0xf]
    %v837 = vld [vmem:[%s5 + $0x178] sm:$0xf]
    %v838 = vld [vmem:[%s5 + $0x17c] sm:$0xf]
    %v839 = vld [vmem:[%s5 + $0x180] sm:$0xf]
    %v840 = vld [vmem:[%s5 + $0x184] sm:$0xf]
    %v841 = vld [vmem:[%s5 + $0x188] sm:$0xf]
    %v842 = vld [vmem:[%s5 + $0x18c] sm:$0xf]
    %v843 = vld [vmem:[%s5 + $0x190] sm:$0xf]
    %v844 = vld [vmem:[%s5 + $0x194] sm:$0xf]
    %v845 = vld [vmem:[%s5 + $0x198] sm:$0xf]
    %v846 = vld [vmem:[%s5 + $0x19c] sm:$0xf]
    %v847 = vld [vmem:[%s5 + $0x1a0] sm:$0xf]
    %v848 = vld [vmem:[%s5 + $0x1a4] sm:$0xf]
    %v849 = vld [vmem:[%s5 + $0x1a8] sm:$0xf]
    %v850 = vld [vmem:[%s5 + $0x1ac] sm:$0xf]
    %v851 = vld [vmem:[%s5 + $0x1b0] sm:$0xf]
    %v852 = vld [vmem:[%s5 + $0x1b4] sm:$0xf]
    %v853 = vld [vmem:[%s5 + $0x1b8] sm:$0xf]
    %v854 = vld [vmem:[%s5 + $0x1bc] sm:$0xf]
    %v855 = vld [vmem:[%s5 + $0x1c0] sm:$0xf]
    %v856 = vld [vmem:[%s5 + $0x1c4] sm:$0xf]
    %v857 = vld [vmem:[%s5 + $0x1c8] sm:$0xf]
    %v858 = vld [vmem:[%s5 + $0x1cc] sm:$0xf]
    %v859 = vld [vmem:[%s5 + $0x1d0] sm:$0xf]
    %v860 = vld [vmem:[%s5 + $0x1d4] sm:$0xf]
    %v861 = vld [vmem:[%s5 + $0x1d8] sm:$0xf]
    %v862 = vld [vmem:[%s5 + $0x1dc] sm:$0xf]
    %v863 = vld [vmem:[%s5 + $0x1e0] sm:$0xf]
    %v864 = vld [vmem:[%s5 + $0x1e4] sm:$0xf]
    %v865 = vld [vmem:[%s5 + $0x1e8] sm:$0xf]
    %v866 = vld [vmem:[%s5 + $0x1ec] sm:$0xf]
    %v867 = vld [vmem:[%s5 + $0x1f0] sm:$0xf]
    %v868 = vld [vmem:[%s5 + $0x1f4] sm:$0xf]
    %v869 = vld [vmem:[%s5 + $0x1f8] sm:$0xf]
    %v870 = vld [vmem:[%s5 + $0x1fc] sm:$0xf]
    %v871 = vld [vmem:[%s6] sm:$0x1]
    %v873 = vlaneseq
    %v874 = vshrl.u32 %v873, 7
    %v875 = vsub.s32 0, %v874
    %v876 = vrot.slane %v871, %v875
    %v1006 = vunpack.c.l.b16 %v743
    %v1007 = vunpack.c.l.b16 %v744
    %v1008 = vunpack.c.l.b16 %v745
    %v1009 = vunpack.c.l.b16 %v746
    %v1010 = vunpack.c.l.b16 %v747
    %v1011 = vunpack.c.l.b16 %v748
    %v1012 = vunpack.c.l.b16 %v749
    %v1013 = vunpack.c.l.b16 %v750
    %v1014 = vunpack.c.l.b16 %v751
    %v1015 = vunpack.c.l.b16 %v752
    %v1016 = vunpack.c.l.b16 %v753
    %v1017 = vunpack.c.l.b16 %v754
    %v1018 = vunpack.c.l.b16 %v755
    %v1019 = vunpack.c.l.b16 %v756
    %v1020 = vunpack.c.l.b16 %v757
    %v1021 = vunpack.c.l.b16 %v758
    %v1022 = vunpack.c.l.b16 %v759
    %v1023 = vunpack.c.l.b16 %v760
    %v1024 = vunpack.c.l.b16 %v761
    %v1025 = vunpack.c.l.b16 %v762
    %v1026 = vunpack.c.l.b16 %v763
    %v1027 = vunpack.c.l.b16 %v764
    %v1028 = vunpack.c.l.b16 %v765
    %v1029 = vunpack.c.l.b16 %v766
    %v1030 = vunpack.c.l.b16 %v767
    %v1031 = vunpack.c.l.b16 %v768
    %v1032 = vunpack.c.l.b16 %v769
    %v1033 = vunpack.c.l.b16 %v770
    %v1034 = vunpack.c.l.b16 %v771
    %v1035 = vunpack.c.l.b16 %v772
    %v1036 = vunpack.c.l.b16 %v773
    %v1037 = vunpack.c.l.b16 %v774
    %v1038 = vunpack.c.l.b16 %v775
    %v1039 = vunpack.c.l.b16 %v776
    %v1040 = vunpack.c.l.b16 %v777
    %v1041 = vunpack.c.l.b16 %v778
    %v1042 = vunpack.c.l.b16 %v779
    %v1043 = vunpack.c.l.b16 %v780
    %v1044 = vunpack.c.l.b16 %v781
    %v1045 = vunpack.c.l.b16 %v782
    %v1046 = vunpack.c.l.b16 %v783
    %v1047 = vunpack.c.l.b16 %v784
    %v1048 = vunpack.c.l.b16 %v785
    %v1049 = vunpack.c.l.b16 %v786
    %v1050 = vunpack.c.l.b16 %v787
    %v1051 = vunpack.c.l.b16 %v788
    %v1052 = vunpack.c.l.b16 %v789
    %v1053 = vunpack.c.l.b16 %v790
    %v1054 = vunpack.c.l.b16 %v791
    %v1055 = vunpack.c.l.b16 %v792
    %v1056 = vunpack.c.l.b16 %v793
    %v1057 = vunpack.c.l.b16 %v794
    %v1058 = vunpack.c.l.b16 %v795
    %v1059 = vunpack.c.l.b16 %v796
    %v1060 = vunpack.c.l.b16 %v797
    %v1061 = vunpack.c.l.b16 %v798
    %v1062 = vunpack.c.l.b16 %v799
    %v1063 = vunpack.c.l.b16 %v800
    %v1064 = vunpack.c.l.b16 %v801
    %v1065 = vunpack.c.l.b16 %v802
    %v1066 = vunpack.c.l.b16 %v803
    %v1067 = vunpack.c.l.b16 %v804
    %v1068 = vunpack.c.l.b16 %v805
    %v1069 = vunpack.c.l.b16 %v806
    %v1070 = vunpack.c.l.b16 %v807
    %v1071 = vunpack.c.l.b16 %v808
    %v1072 = vunpack.c.l.b16 %v809
    %v1073 = vunpack.c.l.b16 %v810
    %v1074 = vunpack.c.l.b16 %v811
    %v1075 = vunpack.c.l.b16 %v812
    %v1076 = vunpack.c.l.b16 %v813
    %v1077 = vunpack.c.l.b16 %v814
    %v1078 = vunpack.c.l.b16 %v815
    %v1079 = vunpack.c.l.b16 %v816
    %v1080 = vunpack.c.l.b16 %v817
    %v1081 = vunpack.c.l.b16 %v818
    %v1082 = vunpack.c.l.b16 %v819
    %v1083 = vunpack.c.l.b16 %v820
    %v1084 = vunpack.c.l.b16 %v821
    %v1085 = vunpack.c.l.b16 %v822
    %v1086 = vunpack.c.l.b16 %v823
    %v1087 = vunpack.c.l.b16 %v824
    %v1088 = vunpack.c.l.b16 %v825
    %v1089 = vunpack.c.l.b16 %v826
    %v1090 = vunpack.c.l.b16 %v827
    %v1091 = vunpack.c.l.b16 %v828
    %v1092 = vunpack.c.l.b16 %v829
    %v1093 = vunpack.c.l.b16 %v830
    %v1094 = vunpack.c.l.b16 %v831
    %v1095 = vunpack.c.l.b16 %v832
    %v1096 = vunpack.c.l.b16 %v833
    %v1097 = vunpack.c.l.b16 %v834
    %v1098 = vunpack.c.l.b16 %v835
    %v1099 = vunpack.c.l.b16 %v836
    %v1100 = vunpack.c.l.b16 %v837
    %v1101 = vunpack.c.l.b16 %v838
    %v1102 = vunpack.c.l.b16 %v839
    %v1103 = vunpack.c.l.b16 %v840
    %v1104 = vunpack.c.l.b16 %v841
    %v1105 = vunpack.c.l.b16 %v842
    %v1106 = vunpack.c.l.b16 %v843
    %v1107 = vunpack.c.l.b16 %v844
    %v1108 = vunpack.c.l.b16 %v845
    %v1109 = vunpack.c.l.b16 %v846
    %v1110 = vunpack.c.l.b16 %v847
    %v1111 = vunpack.c.l.b16 %v848
    %v1112 = vunpack.c.l.b16 %v849
    %v1113 = vunpack.c.l.b16 %v850
    %v1114 = vunpack.c.l.b16 %v851
    %v1115 = vunpack.c.l.b16 %v852
    %v1116 = vunpack.c.l.b16 %v853
    %v1117 = vunpack.c.l.b16 %v854
    %v1118 = vunpack.c.l.b16 %v855
    %v1119 = vunpack.c.l.b16 %v856
    %v1120 = vunpack.c.l.b16 %v857
    %v1121 = vunpack.c.l.b16 %v858
    %v1122 = vunpack.c.l.b16 %v859
    %v1123 = vunpack.c.l.b16 %v860
    %v1124 = vunpack.c.l.b16 %v861
    %v1125 = vunpack.c.l.b16 %v862
    %v1126 = vunpack.c.l.b16 %v863
    %v1127 = vunpack.c.l.b16 %v864
    %v1128 = vunpack.c.l.b16 %v865
    %v1129 = vunpack.c.l.b16 %v866
    %v1130 = vunpack.c.l.b16 %v867
    %v1131 = vunpack.c.l.b16 %v868
    %v1132 = vunpack.c.l.b16 %v869
    %v1133 = vunpack.c.l.b16 %v870
    %v1134 = vpack.c.b16 %v1007, %v1006
    %v1135 = vpack.c.b16 %v1009, %v1008
    %v1136 = vpack.c.b16 %v1011, %v1010
    %v1137 = vpack.c.b16 %v1013, %v1012
    %v1138 = vpack.c.b16 %v1015, %v1014
    %v1139 = vpack.c.b16 %v1017, %v1016
    %v1140 = vpack.c.b16 %v1019, %v1018
    %v1141 = vpack.c.b16 %v1021, %v1020
    %v1142 = vpack.c.b16 %v1023, %v1022
    %v1143 = vpack.c.b16 %v1025, %v1024
    %v1144 = vpack.c.b16 %v1027, %v1026
    %v1145 = vpack.c.b16 %v1029, %v1028
    %v1146 = vpack.c.b16 %v1031, %v1030
    %v1147 = vpack.c.b16 %v1033, %v1032
    %v1148 = vpack.c.b16 %v1035, %v1034
    %v1149 = vpack.c.b16 %v1037, %v1036
    %v1150 = vpack.c.b16 %v1039, %v1038
    %v1151 = vpack.c.b16 %v1041, %v1040
    %v1152 = vpack.c.b16 %v1043, %v1042
    %v1153 = vpack.c.b16 %v1045, %v1044
    %v1154 = vpack.c.b16 %v1047, %v1046
    %v1155 = vpack.c.b16 %v1049, %v1048
    %v1156 = vpack.c.b16 %v1051, %v1050
    %v1157 = vpack.c.b16 %v1053, %v1052
    %v1158 = vpack.c.b16 %v1055, %v1054
    %v1159 = vpack.c.b16 %v1057, %v1056
    %v1160 = vpack.c.b16 %v1059, %v1058
    %v1161 = vpack.c.b16 %v1061, %v1060
    %v1162 = vpack.c.b16 %v1063, %v1062
    %v1163 = vpack.c.b16 %v1065, %v1064
    %v1164 = vpack.c.b16 %v1067, %v1066
    %v1165 = vpack.c.b16 %v1069, %v1068
    %v1166 = vpack.c.b16 %v1071, %v1070
    %v1167 = vpack.c.b16 %v1073, %v1072
    %v1168 = vpack.c.b16 %v1075, %v1074
    %v1169 = vpack.c.b16 %v1077, %v1076
    %v1170 = vpack.c.b16 %v1079, %v1078
    %v1171 = vpack.c.b16 %v1081, %v1080
    %v1172 = vpack.c.b16 %v1083, %v1082
    %v1173 = vpack.c.b16 %v1085, %v1084
    %v1174 = vpack.c.b16 %v1087, %v1086
    %v1175 = vpack.c.b16 %v1089, %v1088
    %v1176 = vpack.c.b16 %v1091, %v1090
    %v1177 = vpack.c.b16 %v1093, %v1092
    %v1178 = vpack.c.b16 %v1095, %v1094
    %v1179 = vpack.c.b16 %v1097, %v1096
    %v1180 = vpack.c.b16 %v1099, %v1098
    %v1181 = vpack.c.b16 %v1101, %v1100
    %v1182 = vpack.c.b16 %v1103, %v1102
    %v1183 = vpack.c.b16 %v1105, %v1104
    %v1184 = vpack.c.b16 %v1107, %v1106
    %v1185 = vpack.c.b16 %v1109, %v1108
    %v1186 = vpack.c.b16 %v1111, %v1110
    %v1187 = vpack.c.b16 %v1113, %v1112
    %v1188 = vpack.c.b16 %v1115, %v1114
    %v1189 = vpack.c.b16 %v1117, %v1116
    %v1190 = vpack.c.b16 %v1119, %v1118
    %v1191 = vpack.c.b16 %v1121, %v1120
    %v1192 = vpack.c.b16 %v1123, %v1122
    %v1193 = vpack.c.b16 %v1125, %v1124
    %v1194 = vpack.c.b16 %v1127, %v1126
    %v1195 = vpack.c.b16 %v1129, %v1128
    %v1196 = vpack.c.b16 %v1131, %v1130
    %v1197 = vpack.c.b16 %v1133, %v1132
    %1262 = vmatprep.subr.bf16.mxu0 0
    %1263 = vmatpush1.bf16.msra.mxu0 %v1134
    %1264 = vmatprep.subr.bf16.mxu0 0
    %1265 = vmatpush1.bf16.msra.mxu0 %v1135
    %1266 = vmatprep.subr.bf16.mxu0 0
    %1267 = vmatpush1.bf16.msra.mxu0 %v1136
    %1268 = vmatprep.subr.bf16.mxu0 0
    %1269 = vmatpush1.bf16.msra.mxu0 %v1137
    %1270 = vmatprep.subr.bf16.mxu0 0
    %1271 = vmatpush1.bf16.msra.mxu0 %v1138
    %1272 = vmatprep.subr.bf16.mxu0 0
    %1273 = vmatpush1.bf16.msra.mxu0 %v1139
    %1274 = vmatprep.subr.bf16.mxu0 0
    %1275 = vmatpush1.bf16.msra.mxu0 %v1140
    %1276 = vmatprep.subr.bf16.mxu0 0
    %1277 = vmatpush1.bf16.msra.mxu0 %v1141
    %1278 = vmatprep.subr.bf16.mxu0 0
    %1279 = vmatpush1.bf16.msra.mxu0 %v1142
    %1280 = vmatprep.subr.bf16.mxu0 0
    %1281 = vmatpush1.bf16.msra.mxu0 %v1143
    %1282 = vmatprep.subr.bf16.mxu0 0
    %1283 = vmatpush1.bf16.msra.mxu0 %v1144
    %1284 = vmatprep.subr.bf16.mxu0 0
    %1285 = vmatpush1.bf16.msra.mxu0 %v1145
    %1286 = vmatprep.subr.bf16.mxu0 0
    %1287 = vmatpush1.bf16.msra.mxu0 %v1146
    %1288 = vmatprep.subr.bf16.mxu0 0
    %1289 = vmatpush1.bf16.msra.mxu0 %v1147
    %1290 = vmatprep.subr.bf16.mxu0 0
    %1291 = vmatpush1.bf16.msra.mxu0 %v1148
    %1292 = vmatprep.subr.bf16.mxu0 0
    %1293 = vmatpush1.bf16.msra.mxu0 %v1149
    %1294 = vmatprep.mubr.bf16.mxu0 %v736
    %1295 = vmatmul.mubr.bf16.gmra.mrb[0].mxu0 %v735
    %v1296 = vpop.f32.mrb[0].mxu0
    %v1297 = vadd.f32 %v876, %v1296
    %v1298 = vpop.f32.mrb[0].mxu0
    %v1299 = vpop.f32.mrb[0].mxu0
    %v1300 = vpop.f32.mrb[0].mxu0
    %1301 = vdwg.mxu0
    %1302 = vmatprep.subr.bf16.mxu0 0
    %1303 = vmatpush1.bf16.msra.mxu0 %v1150
    %1304 = vmatprep.subr.bf16.mxu0 0
    %1305 = vmatpush1.bf16.msra.mxu0 %v1151
    %1306 = vmatprep.subr.bf16.mxu0 0
    %1307 = vmatpush1.bf16.msra.mxu0 %v1152
    %1308 = vmatprep.subr.bf16.mxu0 0
    %1309 = vmatpush1.bf16.msra.mxu0 %v1153
    %1310 = vmatprep.subr.bf16.mxu0 0
    %1311 = vmatpush1.bf16.msra.mxu0 %v1154
    %1312 = vmatprep.subr.bf16.mxu0 0
    %1313 = vmatpush1.bf16.msra.mxu0 %v1155
    %1314 = vmatprep.subr.bf16.mxu0 0
    %1315 = vmatpush1.bf16.msra.mxu0 %v1156
    %1316 = vmatprep.subr.bf16.mxu0 0
    %1317 = vmatpush1.bf16.msra.mxu0 %v1157
    %1318 = vmatprep.subr.bf16.mxu0 0
    %1319 = vmatpush1.bf16.msra.mxu0 %v1158
    %1320 = vmatprep.subr.bf16.mxu0 0
    %1321 = vmatpush1.bf16.msra.mxu0 %v1159
    %1322 = vmatprep.subr.bf16.mxu0 0
    %1323 = vmatpush1.bf16.msra.mxu0 %v1160
    %1324 = vmatprep.subr.bf16.mxu0 0
    %1325 = vmatpush1.bf16.msra.mxu0 %v1161
    %1326 = vmatprep.subr.bf16.mxu0 0
    %1327 = vmatpush1.bf16.msra.mxu0 %v1162
    %1328 = vmatprep.subr.bf16.mxu0 0
    %1329 = vmatpush1.bf16.msra.mxu0 %v1163
    %1330 = vmatprep.subr.bf16.mxu0 0
    %1331 = vmatpush1.bf16.msra.mxu0 %v1164
    %1332 = vmatprep.subr.bf16.mxu0 0
    %1333 = vmatpush1.bf16.msra.mxu0 %v1165
    %1334 = vmatprep.mubr.bf16.mxu0 %v738
    %1335 = vmatmul.mubr.bf16.gmra.mrb[0].mxu0 %v737
    %v1336 = vpop.f32.mrb[0].mxu0
    %v1337 = vadd.f32 %v1297, %v1336
    %v1338 = vpop.f32.mrb[0].mxu0
    %v1339 = vpop.f32.mrb[0].mxu0
    %v1340 = vpop.f32.mrb[0].mxu0
    %1341 = vdwg.mxu0
    %1342 = vmatprep.subr.bf16.mxu0 0
    %1343 = vmatpush1.bf16.msra.mxu0 %v1166
    %1344 = vmatprep.subr.bf16.mxu0 0
    %1345 = vmatpush1.bf16.msra.mxu0 %v1167
    %1346 = vmatprep.subr.bf16.mxu0 0
    %1347 = vmatpush1.bf16.msra.mxu0 %v1168
    %1348 = vmatprep.subr.bf16.mxu0 0
    %1349 = vmatpush1.bf16.msra.mxu0 %v1169
    %1350 = vmatprep.subr.bf16.mxu0 0
    %1351 = vmatpush1.bf16.msra.mxu0 %v1170
    %1352 = vmatprep.subr.bf16.mxu0 0
    %1353 = vmatpush1.bf16.msra.mxu0 %v1171
    %1354 = vmatprep.subr.bf16.mxu0 0
    %1355 = vmatpush1.bf16.msra.mxu0 %v1172
    %1356 = vmatprep.subr.bf16.mxu0 0
    %1357 = vmatpush1.bf16.msra.mxu0 %v1173
    %1358 = vmatprep.subr.bf16.mxu0 0
    %1359 = vmatpush1.bf16.msra.mxu0 %v1174
    %1360 = vmatprep.subr.bf16.mxu0 0
    %1361 = vmatpush1.bf16.msra.mxu0 %v1175
    %1362 = vmatprep.subr.bf16.mxu0 0
    %1363 = vmatpush1.bf16.msra.mxu0 %v1176
    %1364 = vmatprep.subr.bf16.mxu0 0
    %1365 = vmatpush1.bf16.msra.mxu0 %v1177
    %1366 = vmatprep.subr.bf16.mxu0 0
    %1367 = vmatpush1.bf16.msra.mxu0 %v1178
    %1368 = vmatprep.subr.bf16.mxu0 0
    %1369 = vmatpush1.bf16.msra.mxu0 %v1179
    %1370 = vmatprep.subr.bf16.mxu0 0
    %1371 = vmatpush1.bf16.msra.mxu0 %v1180
    %1372 = vmatprep.subr.bf16.mxu0 0
    %1373 = vmatpush1.bf16.msra.mxu0 %v1181
    %1374 = vmatprep.mubr.bf16.mxu0 %v740
    %1375 = vmatmul.mubr.bf16.gmra.mrb[0].mxu0 %v739
    %v1376 = vpop.f32.mrb[0].mxu0
    %v1377 = vadd.f32 %v1337, %v1376
    %v1378 = vpop.f32.mrb[0].mxu0
    %v1379 = vpop.f32.mrb[0].mxu0
    %v1380 = vpop.f32.mrb[0].mxu0
    %1381 = vdwg.mxu0
    %1382 = vmatprep.subr.bf16.mxu0 0
    %1383 = vmatpush1.bf16.msra.mxu0 %v1182
    %1384 = vmatprep.subr.bf16.mxu0 0
    %1385 = vmatpush1.bf16.msra.mxu0 %v1183
    %1386 = vmatprep.subr.bf16.mxu0 0
    %1387 = vmatpush1.bf16.msra.mxu0 %v1184
    %1388 = vmatprep.subr.bf16.mxu0 0
    %1389 = vmatpush1.bf16.msra.mxu0 %v1185
    %1390 = vmatprep.subr.bf16.mxu0 0
    %1391 = vmatpush1.bf16.msra.mxu0 %v1186
    %1392 = vmatprep.subr.bf16.mxu0 0
    %1393 = vmatpush1.bf16.msra.mxu0 %v1187
    %1394 = vmatprep.subr.bf16.mxu0 0
    %1395 = vmatpush1.bf16.msra.mxu0 %v1188
    %1396 = vmatprep.subr.bf16.mxu0 0
    %1397 = vmatpush1.bf16.msra.mxu0 %v1189
    %1398 = vmatprep.subr.bf16.mxu0 0
    %1399 = vmatpush1.bf16.msra.mxu0 %v1190
    %1400 = vmatprep.subr.bf16.mxu0 0
    %1401 = vmatpush1.bf16.msra.mxu0 %v1191
    %1402 = vmatprep.subr.bf16.mxu0 0
    %1403 = vmatpush1.bf16.msra.mxu0 %v1192
    %1404 = vmatprep.subr.bf16.mxu0 0
    %1405 = vmatpush1.bf16.msra.mxu0 %v1193
    %1406 = vmatprep.subr.bf16.mxu0 0
    %1407 = vmatpush1.bf16.msra.mxu0 %v1194
    %1408 = vmatprep.subr.bf16.mxu0 0
    %1409 = vmatpush1.bf16.msra.mxu0 %v1195
    %1410 = vmatprep.subr.bf16.mxu0 0
    %1411 = vmatpush1.bf16.msra.mxu0 %v1196
    %1412 = vmatprep.subr.bf16.mxu0 0
    %1413 = vmatpush1.bf16.msra.mxu0 %v1197
    %1414 = vmatprep.mubr.bf16.mxu0 %v742
    %1415 = vmatmul.mubr.bf16.gmra.mrb[0].mxu0 %v741
    %v1416 = vpop.f32.mrb[0].mxu0
    %v1417 = vadd.f32 %v1377, %v1416
    %v1418 = vpop.f32.mrb[0].mxu0
    %v1419 = vpop.f32.mrb[0].mxu0
    %v1420 = vpop.f32.mrb[0].mxu0
    %1421 = vdwg.mxu0
    %vm1422 = vcmask 74752
    %1423 = vst.msk [vmem:[#allocation6] sm:$0x3] %vm1422, %v1417
    // Predicated region
    $region30: #{forward.23} parent=1 // pred_check
      _
    $region31: #{forward.23} parent=1 // pred_check_branch
      %1425 = sbr.rel (0) target = $region33
    $region32: #{forward.23} parent=1 // pred_region
      %s1427 = ssub.s32 256, 256
      %1428 = vsyncadd [#allocation3], %s1427
      %s1430 = sshll.u32 [#allocation2], 4
      %s1431 = int_to_ptr.vmem [resolvable:$true] %s1430
      %1433 = dma.vmem_to_hbm [thread:$0]  %s1431, 256, %s7, [#allocation3]
    $region33: #{forward.23} parent=1 // pred_fallthru
      _
    // Predicated region
    $region34: #{forward.23} parent=1 // pred_check
      _
    $region35: #{forward.23} parent=1 // pred_check_branch
      %1435 = sbr.rel (0) target = $region37
    $region36: #{forward.23} parent=1 // pred_region
      %s1437 = ssub.s32 256, 256
      %1438 = vsyncadd [#allocation5], %s1437
      %s1440 = sshll.u32 [#allocation4], 4
      %s1441 = int_to_ptr.vmem [resolvable:$true] %s1440
      %1443 = dma.vmem_to_hbm [thread:$0]  %s1441, 256, %s8, [#allocation5]
    $region37: #{forward.23} parent=1 // pred_fallthru
      _
    // Predicated region
    $region38: #{forward.23} parent=1 // pred_check
      _
    $region39: #{forward.23} parent=1 // pred_check_branch
      %1445 = sbr.rel (0) target = $region41
    $region40: #{forward.23} parent=1 // pred_region
      %s1447 = ssub.s32 32, 32
      %1448 = vsyncadd [#allocation5], %s1447
      %s1450 = sshll.u32 [#allocation6], 4
      %s1451 = int_to_ptr.vmem [resolvable:$true] %s1450
      %1453 = dma.vmem_to_hbm [thread:$0]  %s1451, 32, %s9, [#allocation5]
    $region41: #{forward.23} parent=1 // pred_fallthru
      _
    // Predicated region
    $region42: #{forward.23} parent=1 // pred_check
      _
    $region43: #{forward.23} parent=1 // pred_check_branch
      %1455 = sbr.rel (0) target = $region45
    $region44: #{forward.23} parent=1 // pred_region
      %1456 = dma.done [#allocation3], 256
    $region45: #{forward.23} parent=1 // pred_fallthru
      _
    // Predicated region
    $region46: #{forward.23} parent=1 // pred_check
      _
    $region47: #{forward.23} parent=1 // pred_check_branch
      %1458 = sbr.rel (0) target = $region49
    $region48: #{forward.23} parent=1 // pred_region
      %1459 = dma.done [#allocation5], 256
    $region49: #{forward.23} parent=1 // pred_fallthru
      _
    // Predicated region
    $region50: #{forward.23} parent=1 // pred_check
      _
    $region51: #{forward.23} parent=1 // pred_check_branch
      %1461 = sbr.rel (0) target = $region53
    $region52: #{forward.23} parent=1 // pred_region
      %1462 = dma.done [#allocation5], 32
    $region53: #{forward.23} parent=1 // pred_fallthru
      _
    %1463 = vsyncpa [#allocation3], 1
    %1464 = vsyncpa [#allocation5], 1

</llo_original>
